<compile_context>
chip_gen: v6e
topology: v6e:2x2x1
jax: 0.10.0
libtpu: 0.0.40
codegen_flags: <defaults>
</compile_context>

<pallas_src>
import functools

import jax
import jax.numpy as jnp
from jax import lax
from jax.experimental import pallas as pl
from jax.experimental.pallas import tpu as pltpu

# Trailing slack rows in the padded-flat layout so the (dy=2, dx>0) tap bands
# stay in bounds; the extra reads land only in masked junk columns.
_SLACK = 2


def _vmem_limit_bytes():
    """Explicit scoped-VMEM limit: ~3/4 of physical (96 MiB v5e/v6e, 48 MiB v7x)."""
    try:
        cap = int(pltpu.get_tpu_info().vmem_capacity_bytes)
    except Exception:
        cap = 64 * 1024 * 1024
    return min(cap * 3 // 4, 96 * 1024 * 1024)


_VMEM_LIMIT = _vmem_limit_bytes()


def _pick_images_per_step(n, h, w):
    """Batch small images per grid step (amortize ~0.35us/step overhead) while
    keeping >= 2 grid steps so v7x's two TensorCores both get work."""
    if h * w > 64 * 64:
        return 1
    for cand in (8, 4, 2):
        if n % cand == 0 and n // cand >= 2:
            return cand
    return 1


# ----------------------------- Pallas kernels ------------------------------

def _conv3x3_kernel(*refs, H, W, Bt, apply_input_act):
    """One grid step = Bt images in the padded-flat layout (P_alloc, C) with
    P_alloc = (H+2)*(W+2) + _SLACK.

    Per image:
      * (block 2 only) fused BN1-affine + ReLU on the input, padding rows
        re-zeroed, staged once to a bf16 VMEM scratch.
      * 3x3 SAME conv as 9 contiguous row-band MXU matmuls accumulated in a
        local f32 value (no accumulator scratch, no strided-window copies).
      * wrap-around junk columns masked once; result written back in the same
        padded-flat layout (ready to be the next conv's input) plus
        per-channel BN partial statistics.
    """
    if apply_input_act:
        (x_ref, insc_ref, insh_ref, w_ref,
         out_ref, s_ref, q_ref, stage_ref) = refs
    else:
        x_ref, w_ref, out_ref, s_ref, q_ref = refs
        insc_ref = insh_ref = stage_ref = None

    Wp = W + 2
    M = H * Wp                        # accumulator rows per image (incl. junk)
    p_alloc = x_ref.shape[1]
    Cout = w_ref.shape[-1]

    # Row masks (static, hoisted out of the per-image loop).
    r_m = lax.broadcasted_iota(jnp.int32, (M, 1), 0)
    valid_col = (r_m % Wp) < W        # False on the 2 wrap-around junk columns

    if apply_input_act:
        r_p = lax.broadcasted_iota(jnp.int32, (p_alloc, 1), 0)
        col_p = r_p % Wp
        interior = ((r_p >= Wp) & (r_p < (H + 1) * Wp)
                    & (col_p >= 1) & (col_p <= W))
        in_scale = insc_ref[...]      # (1, Cin) f32
        in_shift = insh_ref[...]

    zeros_edge = jnp.zeros((Wp + 1, Cout), out_ref.dtype)

    s_acc = jnp.zeros((1, Cout), jnp.float32)
    q_acc = jnp.zeros((1, Cout), jnp.float32)

    for b in range(Bt):
        if apply_input_act:
            # Previous block's folded BN + ReLU; padding (and slack) rows are
            # forced back to zero so SAME-padding semantics hold for this conv.
            xin = x_ref[b].astype(jnp.float32)                 # (P_alloc, Cin)
            act = jnp.maximum(xin * in_scale + in_shift, 0.0)
            act = jnp.where(interior, act, 0.0)
            stage_ref[...] = act.astype(stage_ref.dtype)

        # 3x3 conv: 9 contiguous row-band matmuls, f32 vreg accumulation.
        acc = jnp.zeros((M, Cout), jnp.float32)
        for k in range(9):
            dy, dx = divmod(k, 3)
            start = dy * Wp + dx
            if apply_input_act:
                band = stage_ref[pl.ds(start, M), :]           # (M, Cin) bf16
            else:
                band = x_ref[b, pl.ds(start, M), :]            # (M, Cin) bf16
            acc = acc + jnp.dot(band, w_ref[k],
                                preferred_element_type=jnp.float32)

        # Junk columns become the next conv's zero padding.
        acc = jnp.where(valid_col, acc, 0.0)

        # Write back in the padded-flat layout of the *next* conv's input:
        # interior shifted by (Wp + 1) rows, borders / slack zeroed.
        out_ref[b, pl.ds(0, Wp + 1), :] = zeros_edge
        out_ref[b, pl.ds(Wp + 1, M), :] = acc.astype(out_ref.dtype)
        out_ref[b, pl.ds((H + 1) * Wp + 1, Wp + 1), :] = zeros_edge

        # Fused BatchNorm partial statistics over the valid positions only
        # (junk columns are zero above; borders never enter `acc`).
        # NOTE: E[x^2]-E[x]^2 in f32 can cancel for very large counts; fine at
        # these sizes, switch to centered accumulation if sizes grow.
        s_acc = s_acc + jnp.sum(acc, axis=0, keepdims=True)
        q_acc = q_acc + jnp.sum(acc * acc, axis=0, keepdims=True)

    s_ref[0] = s_acc
    q_ref[0] = q_acc


def _bn_relu_kernel(x_ref, sc_ref, sh_ref, o_ref):
    C = x_ref.shape[-1]
    sc = sc_ref[...].reshape(1, 1, C)
    sh = sh_ref[...].reshape(1, 1, C)
    x = x_ref[...].astype(jnp.float32)
    o_ref[...] = jnp.maximum(x * sc + sh, 0.0)


# ----------------------------- Pallas wrappers ------------------------------

def conv3x3_bn_stats(x_flat, w9, H, W, bt, in_scale=None, in_shift=None):
    """3x3 SAME conv (bias-free) on the padded-flat layout + fused partial BN
    statistics.  If in_scale/in_shift are given, the previous block's folded
    BatchNorm + ReLU is applied to the input inside the kernel prologue.

    x_flat: (N, (H+2)*(W+2)+_SLACK, Cin) bf16, zero at padding/slack rows.
    w9:     (9, Cin, Cout) bf16.
    Returns conv (N, P_alloc, Cout) bf16 (same layout), sum, sumsq.
    """
    N, p_alloc, Cin = x_flat.shape
    assert p_alloc == (H + 2) * (W + 2) + _SLACK
    assert N % bt == 0
    _, _, Cout = w9.shape
    steps = N // bt
    apply_act = in_scale is not None
    kernel = functools.partial(_conv3x3_kernel, H=H, W=W, Bt=bt,
                               apply_input_act=apply_act)

    in_specs = [pl.BlockSpec((bt, p_alloc, Cin), lambda n: (n, 0, 0))]
    args = [x_flat]
    if apply_act:
        in_specs += [pl.BlockSpec((1, Cin), lambda n: (0, 0)),
                     pl.BlockSpec((1, Cin), lambda n: (0, 0))]
        args += [in_scale.reshape(1, Cin), in_shift.reshape(1, Cin)]
    # Weights are grid-resident (constant index_map).  Single-buffering them
    # (pipeline_mode=pl.Buffered(1)) would save one weight copy of VMEM at
    # large channel counts; left at the default here.
    in_specs += [pl.BlockSpec((9, Cin, Cout), lambda n: (0, 0, 0))]
    args += [w9]

    scratch = []
    if apply_act:
        scratch.append(pltpu.VMEM((p_alloc, Cin), jnp.bfloat16))

    conv, s, q = pl.pallas_call(
        kernel,
        out_shape=(jax.ShapeDtypeStruct((N, p_alloc, Cout), jnp.bfloat16),
                   jax.ShapeDtypeStruct((steps, 1, Cout), jnp.float32),
                   jax.ShapeDtypeStruct((steps, 1, Cout), jnp.float32)),
        grid_spec=pltpu.PrefetchScalarGridSpec(
            num_scalar_prefetch=0,
            grid=(steps,),
            in_specs=in_specs,
            out_specs=(pl.BlockSpec((bt, p_alloc, Cout), lambda n: (n, 0, 0)),
                       pl.BlockSpec((1, 1, Cout), lambda n: (n, 0, 0)),
                       pl.BlockSpec((1, 1, Cout), lambda n: (n, 0, 0))),
            scratch_shapes=scratch),
        compiler_params=pltpu.CompilerParams(
            dimension_semantics=("parallel",),
            vmem_limit_bytes=_VMEM_LIMIT),
    )(*args)
    return conv, s, q


def bn_relu(x_flat, scale, shift, bt):
    """Fused folded-BatchNorm affine + ReLU on the padded-flat bf16 layout."""
    N, p_alloc, C = x_flat.shape
    steps = N // bt
    return pl.pallas_call(
        _bn_relu_kernel,
        out_shape=jax.ShapeDtypeStruct((N, p_alloc, C), jnp.float32),
        grid_spec=pltpu.PrefetchScalarGridSpec(
            num_scalar_prefetch=0,
            grid=(steps,),
            in_specs=[pl.BlockSpec((bt, p_alloc, C), lambda n: (n, 0, 0)),
                      pl.BlockSpec((1, C), lambda n: (0, 0)),
                      pl.BlockSpec((1, C), lambda n: (0, 0))],
            out_specs=pl.BlockSpec((bt, p_alloc, C), lambda n: (n, 0, 0))),
        compiler_params=pltpu.CompilerParams(
            dimension_semantics=("parallel",),
            vmem_limit_bytes=_VMEM_LIMIT),
    )(x_flat, scale.reshape(1, C), shift.reshape(1, C))


# ------------------------------ JAX glue ----------------------------------

def _prep_weight(w):
    """PyTorch (Cout, Cin, 3, 3) -> (9, Cin, Cout) bf16 (no channel padding)."""
    wt = jnp.transpose(w, (2, 3, 1, 0))                    # (3, 3, Cin, Cout)
    _, _, Cin, Cout = wt.shape
    return wt.reshape(9, Cin, Cout).astype(jnp.bfloat16)


def _bn_scale_shift(s, q, count, gamma, beta, eps):
    """Fold training-mode (biased) batch statistics into per-channel affine."""
    total = jnp.sum(s, axis=(0, 1))                        # (C,)
    total_sq = jnp.sum(q, axis=(0, 1))
    mean = total / count
    var = jnp.maximum(total_sq / count - mean * mean, 0.0)
    scale = gamma / jnp.sqrt(var + eps)
    shift = beta - mean * scale
    return scale, shift


def conv3x3_forward(x_nchw, params, eps=1e-5):
    """Forward pass of the PyTorch Conv3x3 module.  Input/output are NCHW."""
    N, Cin, H, W = x_nchw.shape
    Cout = params["w1"].shape[0]
    P = (H + 2) * (W + 2)
    count = N * H * W
    bt = _pick_images_per_step(N, H, W)

    # One-time prep: NHWC, spatial SAME-pad, flatten, add slack rows, bf16.
    x = jnp.transpose(x_nchw, (0, 2, 3, 1)).astype(jnp.float32)
    x = jnp.pad(x, ((0, 0), (1, 1), (1, 1), (0, 0)))
    x_flat = jnp.pad(x.reshape(N, P, Cin), ((0, 0), (0, _SLACK), (0, 0)))
    x_flat = x_flat.astype(jnp.bfloat16)

    w1 = _prep_weight(params["w1"])
    w2 = _prep_weight(params["w2"])

    # Block 1: conv (bias dropped: cancelled by training-mode BN) + BN partials.
    conv1, s1, q1 = conv3x3_bn_stats(x_flat, w1, H, W, bt)
    sc1, sh1 = _bn_scale_shift(s1, q1, count, params["g1"], params["beta1"], eps)

    # Block 2: BN1-apply + ReLU fused into conv2's input path, conv + BN partials.
    conv2, s2, q2 = conv3x3_bn_stats(conv1, w2, H, W, bt,
                                     in_scale=sc1, in_shift=sh1)
    sc2, sh2 = _bn_scale_shift(s2, q2, count, params["g2"], params["beta2"], eps)

    # Final BN2-apply + ReLU (still in the padded-flat layout).
    y_flat = bn_relu(conv2, sc2, sh2, bt)                  # (N, P+_SLACK, C) f32

    # Un-pad + NCHW transpose on the small final tensor (kept in XLA).
    # TODO(synk): fuse this un-pad/NCHW transpose into bn_relu's output path if
    # profiling shows the extra XLA pass matters at production sizes.
    y = y_flat[:, :P, :].reshape(N, H + 2, W + 2, Cout)[:, 1:H + 1, 1:W + 1, :]
    return jnp.transpose(y, (0, 3, 1, 2))                  # -> NCHW


# --------------------------- reference (pure JAX) ---------------------------

def _ref_block(x_nhwc, w, gamma, beta, eps=1e-5):
    wh = jnp.transpose(w, (2, 3, 1, 0))                    # HWIO
    y = lax.conv_general_dilated(x_nhwc, wh, (1, 1), "SAME",
                                 dimension_numbers=("NHWC", "HWIO", "NHWC"))
    mean = jnp.mean(y, axis=(0, 1, 2))
    var = jnp.mean((y - mean) ** 2, axis=(0, 1, 2))
    yn = (y - mean) / jnp.sqrt(var + eps) * gamma + beta
    return jnp.maximum(yn, 0.0)


def conv3x3_reference(x_nchw, params):
    x = jnp.transpose(x_nchw, (0, 2, 3, 1)).astype(jnp.float32)
    y = _ref_block(x, params["w1"], params["g1"], params["beta1"])
    y = _ref_block(y, params["w2"], params["g2"], params["beta2"])
    return jnp.transpose(y, (0, 3, 1, 2))


# ------------------------------- params -------------------------------------

def init_params(key, in_feat, out_feat):
    """Deterministic synthetic parameters (PyTorch-like uniform fan-in init)."""
    ks = jax.random.split(key, 4)
    fan1 = in_feat * 9
    fan2 = out_feat * 9
    b1 = 1.0 / jnp.sqrt(fan1)
    b2 = 1.0 / jnp.sqrt(fan2)
    return {
        "w1": jax.random.uniform(ks[0], (out_feat, in_feat, 3, 3),
                                 jnp.float32, -b1, b1),
        # conv biases are kept for module fidelity but are unused: a
        # per-channel bias is exactly cancelled by training-mode BatchNorm.
        "b1": jax.random.uniform(ks[1], (out_feat,), jnp.float32, -b1, b1),
        "g1": jnp.ones((out_feat,), jnp.float32),
        "beta1": jnp.zeros((out_feat,), jnp.float32),
        "w2": jax.random.uniform(ks[2], (out_feat, out_feat, 3, 3),
                                 jnp.float32, -b2, b2),
        "b2": jax.random.uniform(ks[3], (out_feat,), jnp.float32, -b2, b2),
        "g2": jnp.ones((out_feat,), jnp.float32),
        "beta2": jnp.zeros((out_feat,), jnp.float32),
    }


if __name__ == "__main__":
    key = jax.random.PRNGKey(0)
    k_x, k_p = jax.random.split(key)

    in_feat, out_feat = 4, 8
    N, H, W = 2, 16, 16
    x = jax.random.normal(k_x, (N, in_feat, H, W), dtype=jnp.float32)  # NCHW
    params = init_params(k_p, in_feat, out_feat)

    out = jax.jit(conv3x3_forward)(x, params)
    out = jax.block_until_ready(out)

    assert out.shape == (N, out_feat, H, W)
    assert bool(jnp.all(out >= 0.0))              # ReLU output is non-negative
    assert bool(jnp.all(jnp.isfinite(out)))

    ref = conv3x3_reference(x, params)
    assert bool(jnp.allclose(out, ref, atol=1e-1, rtol=0.0))  # bf16-MXU tolerance

    print("KERNEL_OK")
</pallas_src>

<mosaic_0001>
module attributes {stable_mosaic.version = 11 : i64} {
  func.func @_conv3x3_kernel(%arg0: i32, %arg1: memref<1x326x4xbf16, #tpu.memory_space<vmem>>, %arg2: memref<9x4x8xbf16, #tpu.memory_space<vmem>>, %arg3: memref<1x326x8xbf16, #tpu.memory_space<vmem>>, %arg4: memref<1x1x8xf32, #tpu.memory_space<vmem>>, %arg5: memref<1x1x8xf32, #tpu.memory_space<vmem>>) attributes {dimension_semantics = [#tpu.dimension_semantics<parallel>], iteration_bounds = array<i64: 2>, scalar_prefetch = 0 : i64, scratch_operands = 0 : i64, tpu.core_type = #tpu.core_type<tc>, window_params = [{transform_indices = @transform_0, window_bounds = array<i64: 1, 326, 4>}, {pipeline_mode = #tpu.pipeline_mode<synchronous>, transform_indices = @transform_1, window_bounds = array<i64: 9, 4, 8>}, {transform_indices = @transform_2, window_bounds = array<i64: 1, 326, 8>}, {transform_indices = @transform_3, window_bounds = array<i64: 1, 1, 8>}, {transform_indices = @transform_4, window_bounds = array<i64: 1, 1, 8>}]} {
    %0 = tpu.iota {dimensions = array<i32: 0>} : vector<288x1xi32>
    %c18_i32 = arith.constant 18 : i32
    %c0_i32 = arith.constant 0 : i32
    %1 = arith.cmpi eq, %c18_i32, %c0_i32 : i32
    %c1_i32 = arith.constant 1 : i32
    %2 = arith.select %1, %c1_i32, %c18_i32 : i32
    %3 = vector.broadcast %2 : i32 to vector<288x1xi32>
    %4 = arith.remsi %0, %3 : vector<288x1xi32>
    %c0_i32_0 = arith.constant 0 : i32
    %5 = vector.broadcast %c0_i32_0 : i32 to vector<288x1xi32>
    %6 = arith.cmpi ne, %4, %5 : vector<288x1xi32>
    %c0_i32_1 = arith.constant 0 : i32
    %7 = vector.broadcast %c0_i32_1 : i32 to vector<288x1xi32>
    %8 = arith.cmpi slt, %4, %7 : vector<288x1xi32>
    %c0_i32_2 = arith.constant 0 : i32
    %9 = arith.cmpi slt, %2, %c0_i32_2 : i32
    %10 = vector.broadcast %9 : i1 to vector<288x1xi1>
    %11 = vector.broadcast %10 : vector<288x1xi1> to vector<288x1xi1>
    %12 = arith.xori %8, %11 : vector<288x1xi1>
    %13 = arith.andi %12, %6 : vector<288x1xi1>
    %14 = vector.broadcast %2 : i32 to vector<288x1xi32>
    %15 = arith.addi %4, %14 : vector<288x1xi32>
    %16 = arith.select %13, %15, %4 : vector<288x1xi1>, vector<288x1xi32>
    %c16_i32 = arith.constant 16 : i32
    %17 = vector.broadcast %c16_i32 : i32 to vector<288x1xi32>
    %18 = arith.cmpi slt, %16, %17 : vector<288x1xi32>
    %cst = arith.constant 0.000000e+00 : bf16
    %19 = vector.broadcast %cst : bf16 to vector<19x8xbf16>
    %cst_3 = arith.constant 0.000000e+00 : f32
    %20 = vector.broadcast %cst_3 : f32 to vector<1x8xf32>
    %cst_4 = arith.constant 0.000000e+00 : f32
    %21 = vector.broadcast %cst_4 : f32 to vector<1x8xf32>
    %cst_5 = arith.constant 0.000000e+00 : f32
    %22 = vector.broadcast %cst_5 : f32 to vector<288x8xf32>
    %c0 = arith.constant 0 : index
    %c0_6 = arith.constant 0 : index
    %c0_7 = arith.constant 0 : index
    %23 = vector.load %arg1[%c0, %c0_6, %c0_7] : memref<1x326x4xbf16, #tpu.memory_space<vmem>>, vector<1x288x4xbf16>
    %24 = vector.shape_cast %23 : vector<1x288x4xbf16> to vector<288x4xbf16>
    %c0_8 = arith.constant 0 : index
    %c0_9 = arith.constant 0 : index
    %c0_10 = arith.constant 0 : index
    %25 = vector.load %arg2[%c0_8, %c0_9, %c0_10] : memref<9x4x8xbf16, #tpu.memory_space<vmem>>, vector<1x4x8xbf16>
    %26 = vector.shape_cast %25 : vector<1x4x8xbf16> to vector<4x8xbf16>
    %cst_11 = arith.constant dense<0.000000e+00> : vector<288x8xf32>
    %27 = tpu.matmul %24, %26, %cst_11 {dimension_numbers = #tpu.dot_dimension_numbers<[1], [0], [0], [1], [0, 0, 1, 1], [], []>} : vector<288x4xbf16>, vector<4x8xbf16>, vector<288x8xf32> -> vector<288x8xf32>
    %28 = arith.addf %22, %27 : vector<288x8xf32>
    %c0_12 = arith.constant 0 : index
    %c1 = arith.constant 1 : index
    %c0_13 = arith.constant 0 : index
    %29 = vector.load %arg1[%c0_12, %c1, %c0_13] : memref<1x326x4xbf16, #tpu.memory_space<vmem>>, vector<1x288x4xbf16>
    %30 = vector.shape_cast %29 : vector<1x288x4xbf16> to vector<288x4xbf16>
    %c1_14 = arith.constant 1 : index
    %c0_15 = arith.constant 0 : index
    %c0_16 = arith.constant 0 : index
    %31 = vector.load %arg2[%c1_14, %c0_15, %c0_16] : memref<9x4x8xbf16, #tpu.memory_space<vmem>>, vector<1x4x8xbf16>
    %32 = vector.shape_cast %31 : vector<1x4x8xbf16> to vector<4x8xbf16>
    %cst_17 = arith.constant dense<0.000000e+00> : vector<288x8xf32>
    %33 = tpu.matmul %30, %32, %cst_17 {dimension_numbers = #tpu.dot_dimension_numbers<[1], [0], [0], [1], [0, 0, 1, 1], [], []>} : vector<288x4xbf16>, vector<4x8xbf16>, vector<288x8xf32> -> vector<288x8xf32>
    %34 = arith.addf %28, %33 : vector<288x8xf32>
    %c0_18 = arith.constant 0 : index
    %c2 = arith.constant 2 : index
    %c0_19 = arith.constant 0 : index
    %35 = vector.load %arg1[%c0_18, %c2, %c0_19] : memref<1x326x4xbf16, #tpu.memory_space<vmem>>, vector<1x288x4xbf16>
    %36 = vector.shape_cast %35 : vector<1x288x4xbf16> to vector<288x4xbf16>
    %c2_20 = arith.constant 2 : index
    %c0_21 = arith.constant 0 : index
    %c0_22 = arith.constant 0 : index
    %37 = vector.load %arg2[%c2_20, %c0_21, %c0_22] : memref<9x4x8xbf16, #tpu.memory_space<vmem>>, vector<1x4x8xbf16>
    %38 = vector.shape_cast %37 : vector<1x4x8xbf16> to vector<4x8xbf16>
    %cst_23 = arith.constant dense<0.000000e+00> : vector<288x8xf32>
    %39 = tpu.matmul %36, %38, %cst_23 {dimension_numbers = #tpu.dot_dimension_numbers<[1], [0], [0], [1], [0, 0, 1, 1], [], []>} : vector<288x4xbf16>, vector<4x8xbf16>, vector<288x8xf32> -> vector<288x8xf32>
    %40 = arith.addf %34, %39 : vector<288x8xf32>
    %c0_24 = arith.constant 0 : index
    %c18 = arith.constant 18 : index
    %c0_25 = arith.constant 0 : index
    %41 = vector.load %arg1[%c0_24, %c18, %c0_25] : memref<1x326x4xbf16, #tpu.memory_space<vmem>>, vector<1x288x4xbf16>
    %42 = vector.shape_cast %41 : vector<1x288x4xbf16> to vector<288x4xbf16>
    %c3 = arith.constant 3 : index
    %c0_26 = arith.constant 0 : index
    %c0_27 = arith.constant 0 : index
    %43 = vector.load %arg2[%c3, %c0_26, %c0_27] : memref<9x4x8xbf16, #tpu.memory_space<vmem>>, vector<1x4x8xbf16>
    %44 = vector.shape_cast %43 : vector<1x4x8xbf16> to vector<4x8xbf16>
    %cst_28 = arith.constant dense<0.000000e+00> : vector<288x8xf32>
    %45 = tpu.matmul %42, %44, %cst_28 {dimension_numbers = #tpu.dot_dimension_numbers<[1], [0], [0], [1], [0, 0, 1, 1], [], []>} : vector<288x4xbf16>, vector<4x8xbf16>, vector<288x8xf32> -> vector<288x8xf32>
    %46 = arith.addf %40, %45 : vector<288x8xf32>
    %c0_29 = arith.constant 0 : index
    %c19 = arith.constant 19 : index
    %c0_30 = arith.constant 0 : index
    %47 = vector.load %arg1[%c0_29, %c19, %c0_30] : memref<1x326x4xbf16, #tpu.memory_space<vmem>>, vector<1x288x4xbf16>
    %48 = vector.shape_cast %47 : vector<1x288x4xbf16> to vector<288x4xbf16>
    %c4 = arith.constant 4 : index
    %c0_31 = arith.constant 0 : index
    %c0_32 = arith.constant 0 : index
    %49 = vector.load %arg2[%c4, %c0_31, %c0_32] : memref<9x4x8xbf16, #tpu.memory_space<vmem>>, vector<1x4x8xbf16>
    %50 = vector.shape_cast %49 : vector<1x4x8xbf16> to vector<4x8xbf16>
    %cst_33 = arith.constant dense<0.000000e+00> : vector<288x8xf32>
    %51 = tpu.matmul %48, %50, %cst_33 {dimension_numbers = #tpu.dot_dimension_numbers<[1], [0], [0], [1], [0, 0, 1, 1], [], []>} : vector<288x4xbf16>, vector<4x8xbf16>, vector<288x8xf32> -> vector<288x8xf32>
    %52 = arith.addf %46, %51 : vector<288x8xf32>
    %c0_34 = arith.constant 0 : index
    %c20 = arith.constant 20 : index
    %c0_35 = arith.constant 0 : index
    %53 = vector.load %arg1[%c0_34, %c20, %c0_35] : memref<1x326x4xbf16, #tpu.memory_space<vmem>>, vector<1x288x4xbf16>
    %54 = vector.shape_cast %53 : vector<1x288x4xbf16> to vector<288x4xbf16>
    %c5 = arith.constant 5 : index
    %c0_36 = arith.constant 0 : index
    %c0_37 = arith.constant 0 : index
    %55 = vector.load %arg2[%c5, %c0_36, %c0_37] : memref<9x4x8xbf16, #tpu.memory_space<vmem>>, vector<1x4x8xbf16>
    %56 = vector.shape_cast %55 : vector<1x4x8xbf16> to vector<4x8xbf16>
    %cst_38 = arith.constant dense<0.000000e+00> : vector<288x8xf32>
    %57 = tpu.matmul %54, %56, %cst_38 {dimension_numbers = #tpu.dot_dimension_numbers<[1], [0], [0], [1], [0, 0, 1, 1], [], []>} : vector<288x4xbf16>, vector<4x8xbf16>, vector<288x8xf32> -> vector<288x8xf32>
    %58 = arith.addf %52, %57 : vector<288x8xf32>
    %c0_39 = arith.constant 0 : index
    %c36 = arith.constant 36 : index
    %c0_40 = arith.constant 0 : index
    %59 = vector.load %arg1[%c0_39, %c36, %c0_40] : memref<1x326x4xbf16, #tpu.memory_space<vmem>>, vector<1x288x4xbf16>
    %60 = vector.shape_cast %59 : vector<1x288x4xbf16> to vector<288x4xbf16>
    %c6 = arith.constant 6 : index
    %c0_41 = arith.constant 0 : index
    %c0_42 = arith.constant 0 : index
    %61 = vector.load %arg2[%c6, %c0_41, %c0_42] : memref<9x4x8xbf16, #tpu.memory_space<vmem>>, vector<1x4x8xbf16>
    %62 = vector.shape_cast %61 : vector<1x4x8xbf16> to vector<4x8xbf16>
    %cst_43 = arith.constant dense<0.000000e+00> : vector<288x8xf32>
    %63 = tpu.matmul %60, %62, %cst_43 {dimension_numbers = #tpu.dot_dimension_numbers<[1], [0], [0], [1], [0, 0, 1, 1], [], []>} : vector<288x4xbf16>, vector<4x8xbf16>, vector<288x8xf32> -> vector<288x8xf32>
    %64 = arith.addf %58, %63 : vector<288x8xf32>
    %c0_44 = arith.constant 0 : index
    %c37 = arith.constant 37 : index
    %c0_45 = arith.constant 0 : index
    %65 = vector.load %arg1[%c0_44, %c37, %c0_45] : memref<1x326x4xbf16, #tpu.memory_space<vmem>>, vector<1x288x4xbf16>
    %66 = vector.shape_cast %65 : vector<1x288x4xbf16> to vector<288x4xbf16>
    %c7 = arith.constant 7 : index
    %c0_46 = arith.constant 0 : index
    %c0_47 = arith.constant 0 : index
    %67 = vector.load %arg2[%c7, %c0_46, %c0_47] : memref<9x4x8xbf16, #tpu.memory_space<vmem>>, vector<1x4x8xbf16>
    %68 = vector.shape_cast %67 : vector<1x4x8xbf16> to vector<4x8xbf16>
    %cst_48 = arith.constant dense<0.000000e+00> : vector<288x8xf32>
    %69 = tpu.matmul %66, %68, %cst_48 {dimension_numbers = #tpu.dot_dimension_numbers<[1], [0], [0], [1], [0, 0, 1, 1], [], []>} : vector<288x4xbf16>, vector<4x8xbf16>, vector<288x8xf32> -> vector<288x8xf32>
    %70 = arith.addf %64, %69 : vector<288x8xf32>
    %c0_49 = arith.constant 0 : index
    %c38 = arith.constant 38 : index
    %c0_50 = arith.constant 0 : index
    %71 = vector.load %arg1[%c0_49, %c38, %c0_50] : memref<1x326x4xbf16, #tpu.memory_space<vmem>>, vector<1x288x4xbf16>
    %72 = vector.shape_cast %71 : vector<1x288x4xbf16> to vector<288x4xbf16>
    %c8 = arith.constant 8 : index
    %c0_51 = arith.constant 0 : index
    %c0_52 = arith.constant 0 : index
    %73 = vector.load %arg2[%c8, %c0_51, %c0_52] : memref<9x4x8xbf16, #tpu.memory_space<vmem>>, vector<1x4x8xbf16>
    %74 = vector.shape_cast %73 : vector<1x4x8xbf16> to vector<4x8xbf16>
    %cst_53 = arith.constant dense<0.000000e+00> : vector<288x8xf32>
    %75 = tpu.matmul %72, %74, %cst_53 {dimension_numbers = #tpu.dot_dimension_numbers<[1], [0], [0], [1], [0, 0, 1, 1], [], []>} : vector<288x4xbf16>, vector<4x8xbf16>, vector<288x8xf32> -> vector<288x8xf32>
    %76 = arith.addf %70, %75 : vector<288x8xf32>
    %cst_54 = arith.constant 0.000000e+00 : f32
    %77 = vector.shape_cast %18 : vector<288x1xi1> to vector<288x1xi1>
    %78 = vector.broadcast %77 : vector<288x1xi1> to vector<288x8xi1>
    %79 = vector.broadcast %cst_54 : f32 to vector<288x8xf32>
    %80 = arith.select %78, %76, %79 : vector<288x8xi1>, vector<288x8xf32>
    %c0_55 = arith.constant 0 : index
    %c0_56 = arith.constant 0 : index
    %c0_57 = arith.constant 0 : index
    %81 = vector.load %arg3[%c0_55, %c0_56, %c0_57] : memref<1x326x8xbf16, #tpu.memory_space<vmem>>, vector<1x19x8xbf16>
    %82 = vector.shape_cast %81 : vector<1x19x8xbf16> to vector<19x8xbf16>
    %83 = vector.shape_cast %19 : vector<19x8xbf16> to vector<1x19x8xbf16>
    tpu.vector_store %arg3[%c0_55, %c0_56, %c0_57], %83 {strides = array<i32>} : memref<1x326x8xbf16, #tpu.memory_space<vmem>>, vector<1x19x8xbf16>,
    %84 = arith.truncf %80 : vector<288x8xf32> to vector<288x8xbf16>
    %c0_58 = arith.constant 0 : index
    %c19_59 = arith.constant 19 : index
    %c0_60 = arith.constant 0 : index
    %85 = vector.load %arg3[%c0_58, %c19_59, %c0_60] : memref<1x326x8xbf16, #tpu.memory_space<vmem>>, vector<1x288x8xbf16>
    %86 = vector.shape_cast %85 : vector<1x288x8xbf16> to vector<288x8xbf16>
    %87 = vector.shape_cast %84 : vector<288x8xbf16> to vector<1x288x8xbf16>
    tpu.vector_store %arg3[%c0_58, %c19_59, %c0_60], %87 {strides = array<i32>} : memref<1x326x8xbf16, #tpu.memory_space<vmem>>, vector<1x288x8xbf16>,
    %c0_61 = arith.constant 0 : index
    %c307 = arith.constant 307 : index
    %c0_62 = arith.constant 0 : index
    %88 = vector.load %arg3[%c0_61, %c307, %c0_62] : memref<1x326x8xbf16, #tpu.memory_space<vmem>>, vector<1x19x8xbf16>
    %89 = vector.shape_cast %88 : vector<1x19x8xbf16> to vector<19x8xbf16>
    %90 = vector.shape_cast %19 : vector<19x8xbf16> to vector<1x19x8xbf16>
    tpu.vector_store %arg3[%c0_61, %c307, %c0_62], %90 {strides = array<i32>} : memref<1x326x8xbf16, #tpu.memory_space<vmem>>, vector<1x19x8xbf16>,
    %cst_63 = arith.constant dense<0.000000e+00> : vector<8xf32>
    %91 = vector.multi_reduction <add>, %80, %cst_63 [0] : vector<288x8xf32> to vector<8xf32>
    %92 = vector.shape_cast %91 : vector<8xf32> to vector<1x8xf32>
    %93 = arith.addf %20, %92 : vector<1x8xf32>
    %94 = arith.mulf %80, %80 : vector<288x8xf32>
    %cst_64 = arith.constant dense<0.000000e+00> : vector<8xf32>
    %95 = vector.multi_reduction <add>, %94, %cst_64 [0] : vector<288x8xf32> to vector<8xf32>
    %96 = vector.shape_cast %95 : vector<8xf32> to vector<1x8xf32>
    %97 = arith.addf %21, %96 : vector<1x8xf32>
    %c0_65 = arith.constant 0 : index
    %c0_66 = arith.constant 0 : index
    %c0_67 = arith.constant 0 : index
    %98 = vector.load %arg4[%c0_65, %c0_66, %c0_67] : memref<1x1x8xf32, #tpu.memory_space<vmem>>, vector<1x1x8xf32>
    %99 = vector.shape_cast %98 : vector<1x1x8xf32> to vector<1x8xf32>
    %100 = vector.shape_cast %93 : vector<1x8xf32> to vector<1x1x8xf32>
    tpu.vector_store %arg4[%c0_65, %c0_66, %c0_67], %100 {strides = array<i32>} : memref<1x1x8xf32, #tpu.memory_space<vmem>>, vector<1x1x8xf32>,
    %c0_68 = arith.constant 0 : index
    %c0_69 = arith.constant 0 : index
    %c0_70 = arith.constant 0 : index
    %101 = vector.load %arg5[%c0_68, %c0_69, %c0_70] : memref<1x1x8xf32, #tpu.memory_space<vmem>>, vector<1x1x8xf32>
    %102 = vector.shape_cast %101 : vector<1x1x8xf32> to vector<1x8xf32>
    %103 = vector.shape_cast %97 : vector<1x8xf32> to vector<1x1x8xf32>
    tpu.vector_store %arg5[%c0_68, %c0_69, %c0_70], %103 {strides = array<i32>} : memref<1x1x8xf32, #tpu.memory_space<vmem>>, vector<1x1x8xf32>,
    return
  }
  func.func @transform_0(%arg0: i32) -> (i32, i32, i32) {
    %c0_i32 = arith.constant 0 : i32
    %c0_i32_0 = arith.constant 0 : i32
    %c0_i32_1 = arith.constant 0 : i32
    return %arg0, %c0_i32, %c0_i32_0 : i32, i32, i32
  }
  func.func @transform_1(%arg0: i32) -> (i32, i32, i32) {
    %c0_i32 = arith.constant 0 : i32
    %c0_i32_0 = arith.constant 0 : i32
    %c0_i32_1 = arith.constant 0 : i32
    %c0_i32_2 = arith.constant 0 : i32
    return %c0_i32, %c0_i32_0, %c0_i32_1 : i32, i32, i32
  }
  func.func @transform_2(%arg0: i32) -> (i32, i32, i32) {
    %c0_i32 = arith.constant 0 : i32
    %c0_i32_0 = arith.constant 0 : i32
    %c0_i32_1 = arith.constant 0 : i32
    return %arg0, %c0_i32, %c0_i32_0 : i32, i32, i32
  }
  func.func @transform_3(%arg0: i32) -> (i32, i32, i32) {
    %c0_i32 = arith.constant 0 : i32
    %c0_i32_0 = arith.constant 0 : i32
    %c0_i32_1 = arith.constant 0 : i32
    return %arg0, %c0_i32, %c0_i32_0 : i32, i32, i32
  }
  func.func @transform_4(%arg0: i32) -> (i32, i32, i32) {
    %c0_i32 = arith.constant 0 : i32
    %c0_i32_0 = arith.constant 0 : i32
    %c0_i32_1 = arith.constant 0 : i32
    return %arg0, %c0_i32, %c0_i32_0 : i32, i32, i32
  }
}

module attributes {stable_mosaic.version = 11 : i64} {
  func.func @_bn_relu_kernel(%arg0: i32, %arg1: memref<1x326x8xbf16, #tpu.memory_space<vmem>>, %arg2: memref<1x8xf32, #tpu.memory_space<vmem>>, %arg3: memref<1x8xf32, #tpu.memory_space<vmem>>, %arg4: memref<1x326x8xf32, #tpu.memory_space<vmem>>) attributes {dimension_semantics = [#tpu.dimension_semantics<parallel>], iteration_bounds = array<i64: 2>, scalar_prefetch = 0 : i64, scratch_operands = 0 : i64, tpu.core_type = #tpu.core_type<tc>, window_params = [{transform_indices = @transform_0, window_bounds = array<i64: 1, 326, 8>}, {pipeline_mode = #tpu.pipeline_mode<synchronous>, transform_indices = @transform_1, window_bounds = array<i64: 1, 8>}, {pipeline_mode = #tpu.pipeline_mode<synchronous>, transform_indices = @transform_2, window_bounds = array<i64: 1, 8>}, {transform_indices = @transform_3, window_bounds = array<i64: 1, 326, 8>}]} {
    %c0 = arith.constant 0 : index
    %c0_0 = arith.constant 0 : index
    %0 = vector.load %arg2[%c0, %c0_0] : memref<1x8xf32, #tpu.memory_space<vmem>>, vector<1x8xf32>
    %1 = vector.shape_cast %0 : vector<1x8xf32> to vector<1x1x8xf32>
    %c0_1 = arith.constant 0 : index
    %c0_2 = arith.constant 0 : index
    %2 = vector.load %arg3[%c0_1, %c0_2] : memref<1x8xf32, #tpu.memory_space<vmem>>, vector<1x8xf32>
    %3 = vector.shape_cast %2 : vector<1x8xf32> to vector<1x1x8xf32>
    %c0_3 = arith.constant 0 : index
    %c0_4 = arith.constant 0 : index
    %c0_5 = arith.constant 0 : index
    %4 = vector.load %arg1[%c0_3, %c0_4, %c0_5] : memref<1x326x8xbf16, #tpu.memory_space<vmem>>, vector<1x326x8xbf16>
    %5 = arith.extf %4 : vector<1x326x8xbf16> to vector<1x326x8xf32>
    %6 = vector.broadcast %1 : vector<1x1x8xf32> to vector<1x326x8xf32>
    %7 = arith.mulf %5, %6 : vector<1x326x8xf32>
    %8 = vector.broadcast %3 : vector<1x1x8xf32> to vector<1x326x8xf32>
    %9 = arith.addf %7, %8 : vector<1x326x8xf32>
    %cst = arith.constant 0.000000e+00 : f32
    %10 = vector.broadcast %cst : f32 to vector<1x326x8xf32>
    %11 = arith.maximumf %9, %10 : vector<1x326x8xf32>
    %c0_6 = arith.constant 0 : index
    %c0_7 = arith.constant 0 : index
    %c0_8 = arith.constant 0 : index
    %12 = vector.load %arg4[%c0_6, %c0_7, %c0_8] : memref<1x326x8xf32, #tpu.memory_space<vmem>>, vector<1x326x8xf32>
    tpu.vector_store %arg4[%c0_6, %c0_7, %c0_8], %11 {strides = array<i32>} : memref<1x326x8xf32, #tpu.memory_space<vmem>>, vector<1x326x8xf32>,
    return
  }
  func.func @transform_0(%arg0: i32) -> (i32, i32, i32) {
    %c0_i32 = arith.constant 0 : i32
    %c0_i32_0 = arith.constant 0 : i32
    %c0_i32_1 = arith.constant 0 : i32
    return %arg0, %c0_i32, %c0_i32_0 : i32, i32, i32
  }
  func.func @transform_1(%arg0: i32) -> (i32, i32) {
    %c0_i32 = arith.constant 0 : i32
    %c0_i32_0 = arith.constant 0 : i32
    %c0_i32_1 = arith.constant 0 : i32
    return %c0_i32, %c0_i32_0 : i32, i32
  }
  func.func @transform_2(%arg0: i32) -> (i32, i32) {
    %c0_i32 = arith.constant 0 : i32
    %c0_i32_0 = arith.constant 0 : i32
    %c0_i32_1 = arith.constant 0 : i32
    return %c0_i32, %c0_i32_0 : i32, i32
  }
  func.func @transform_3(%arg0: i32) -> (i32, i32, i32) {
    %c0_i32 = arith.constant 0 : i32
    %c0_i32_0 = arith.constant 0 : i32
    %c0_i32_1 = arith.constant 0 : i32
    return %arg0, %c0_i32, %c0_i32_0 : i32, i32, i32
  }
}

module attributes {stable_mosaic.version = 11 : i64} {
  func.func @_conv3x3_kernel(%arg0: i32, %arg1: memref<1x326x8xbf16, #tpu.memory_space<vmem>>, %arg2: memref<1x8xf32, #tpu.memory_space<vmem>>, %arg3: memref<1x8xf32, #tpu.memory_space<vmem>>, %arg4: memref<9x8x8xbf16, #tpu.memory_space<vmem>>, %arg5: memref<1x326x8xbf16, #tpu.memory_space<vmem>>, %arg6: memref<1x1x8xf32, #tpu.memory_space<vmem>>, %arg7: memref<1x1x8xf32, #tpu.memory_space<vmem>>, %arg8: memref<326x8xbf16, #tpu.memory_space<vmem>>) attributes {dimension_semantics = [#tpu.dimension_semantics<parallel>], iteration_bounds = array<i64: 2>, scalar_prefetch = 0 : i64, scratch_operands = 1 : i64, tpu.core_type = #tpu.core_type<tc>, window_params = [{transform_indices = @transform_0, window_bounds = array<i64: 1, 326, 8>}, {pipeline_mode = #tpu.pipeline_mode<synchronous>, transform_indices = @transform_1, window_bounds = array<i64: 1, 8>}, {pipeline_mode = #tpu.pipeline_mode<synchronous>, transform_indices = @transform_2, window_bounds = array<i64: 1, 8>}, {pipeline_mode = #tpu.pipeline_mode<synchronous>, transform_indices = @transform_3, window_bounds = array<i64: 9, 8, 8>}, {transform_indices = @transform_4, window_bounds = array<i64: 1, 326, 8>}, {transform_indices = @transform_5, window_bounds = array<i64: 1, 1, 8>}, {transform_indices = @transform_6, window_bounds = array<i64: 1, 1, 8>}]} {
    %0 = tpu.iota {dimensions = array<i32: 0>} : vector<288x1xi32>
    %c18_i32 = arith.constant 18 : i32
    %c0_i32 = arith.constant 0 : i32
    %1 = arith.cmpi eq, %c18_i32, %c0_i32 : i32
    %c1_i32 = arith.constant 1 : i32
    %2 = arith.select %1, %c1_i32, %c18_i32 : i32
    %3 = vector.broadcast %2 : i32 to vector<288x1xi32>
    %4 = arith.remsi %0, %3 : vector<288x1xi32>
    %c0_i32_0 = arith.constant 0 : i32
    %5 = vector.broadcast %c0_i32_0 : i32 to vector<288x1xi32>
    %6 = arith.cmpi ne, %4, %5 : vector<288x1xi32>
    %c0_i32_1 = arith.constant 0 : i32
    %7 = vector.broadcast %c0_i32_1 : i32 to vector<288x1xi32>
    %8 = arith.cmpi slt, %4, %7 : vector<288x1xi32>
    %c0_i32_2 = arith.constant 0 : i32
    %9 = arith.cmpi slt, %2, %c0_i32_2 : i32
    %10 = vector.broadcast %9 : i1 to vector<288x1xi1>
    %11 = vector.broadcast %10 : vector<288x1xi1> to vector<288x1xi1>
    %12 = arith.xori %8, %11 : vector<288x1xi1>
    %13 = arith.andi %12, %6 : vector<288x1xi1>
    %14 = vector.broadcast %2 : i32 to vector<288x1xi32>
    %15 = arith.addi %4, %14 : vector<288x1xi32>
    %16 = arith.select %13, %15, %4 : vector<288x1xi1>, vector<288x1xi32>
    %c16_i32 = arith.constant 16 : i32
    %17 = vector.broadcast %c16_i32 : i32 to vector<288x1xi32>
    %18 = arith.cmpi slt, %16, %17 : vector<288x1xi32>
    %19 = tpu.iota {dimensions = array<i32: 0>} : vector<326x1xi32>
    %c18_i32_3 = arith.constant 18 : i32
    %c0_i32_4 = arith.constant 0 : i32
    %20 = arith.cmpi eq, %c18_i32_3, %c0_i32_4 : i32
    %c1_i32_5 = arith.constant 1 : i32
    %21 = arith.select %20, %c1_i32_5, %c18_i32_3 : i32
    %22 = vector.broadcast %21 : i32 to vector<326x1xi32>
    %23 = arith.remsi %19, %22 : vector<326x1xi32>
    %c0_i32_6 = arith.constant 0 : i32
    %24 = vector.broadcast %c0_i32_6 : i32 to vector<326x1xi32>
    %25 = arith.cmpi ne, %23, %24 : vector<326x1xi32>
    %c0_i32_7 = arith.constant 0 : i32
    %26 = vector.broadcast %c0_i32_7 : i32 to vector<326x1xi32>
    %27 = arith.cmpi slt, %23, %26 : vector<326x1xi32>
    %c0_i32_8 = arith.constant 0 : i32
    %28 = arith.cmpi slt, %21, %c0_i32_8 : i32
    %29 = vector.broadcast %28 : i1 to vector<326x1xi1>
    %30 = vector.broadcast %29 : vector<326x1xi1> to vector<326x1xi1>
    %31 = arith.xori %27, %30 : vector<326x1xi1>
    %32 = arith.andi %31, %25 : vector<326x1xi1>
    %33 = vector.broadcast %21 : i32 to vector<326x1xi32>
    %34 = arith.addi %23, %33 : vector<326x1xi32>
    %35 = arith.select %32, %34, %23 : vector<326x1xi1>, vector<326x1xi32>
    %c18_i32_9 = arith.constant 18 : i32
    %36 = vector.broadcast %c18_i32_9 : i32 to vector<326x1xi32>
    %37 = arith.cmpi sge, %19, %36 : vector<326x1xi32>
    %c306_i32 = arith.constant 306 : i32
    %38 = vector.broadcast %c306_i32 : i32 to vector<326x1xi32>
    %39 = arith.cmpi slt, %19, %38 : vector<326x1xi32>
    %40 = arith.andi %37, %39 : vector<326x1xi1>
    %c1_i32_10 = arith.constant 1 : i32
    %41 = vector.broadcast %c1_i32_10 : i32 to vector<326x1xi32>
    %42 = arith.cmpi sge, %35, %41 : vector<326x1xi32>
    %43 = arith.andi %40, %42 : vector<326x1xi1>
    %c16_i32_11 = arith.constant 16 : i32
    %44 = vector.broadcast %c16_i32_11 : i32 to vector<326x1xi32>
    %45 = arith.cmpi sle, %35, %44 : vector<326x1xi32>
    %46 = arith.andi %43, %45 : vector<326x1xi1>
    %c0 = arith.constant 0 : index
    %c0_12 = arith.constant 0 : index
    %47 = vector.load %arg2[%c0, %c0_12] : memref<1x8xf32, #tpu.memory_space<vmem>>, vector<1x8xf32>
    %c0_13 = arith.constant 0 : index
    %c0_14 = arith.constant 0 : index
    %48 = vector.load %arg3[%c0_13, %c0_14] : memref<1x8xf32, #tpu.memory_space<vmem>>, vector<1x8xf32>
    %cst = arith.constant 0.000000e+00 : bf16
    %49 = vector.broadcast %cst : bf16 to vector<19x8xbf16>
    %cst_15 = arith.constant 0.000000e+00 : f32
    %50 = vector.broadcast %cst_15 : f32 to vector<1x8xf32>
    %cst_16 = arith.constant 0.000000e+00 : f32
    %51 = vector.broadcast %cst_16 : f32 to vector<1x8xf32>
    %c0_17 = arith.constant 0 : index
    %c0_18 = arith.constant 0 : index
    %c0_19 = arith.constant 0 : index
    %52 = vector.load %arg1[%c0_17, %c0_18, %c0_19] : memref<1x326x8xbf16, #tpu.memory_space<vmem>>, vector<1x326x8xbf16>
    %53 = vector.shape_cast %52 : vector<1x326x8xbf16> to vector<326x8xbf16>
    %54 = arith.extf %53 : vector<326x8xbf16> to vector<326x8xf32>
    %55 = vector.broadcast %47 : vector<1x8xf32> to vector<326x8xf32>
    %56 = arith.mulf %54, %55 : vector<326x8xf32>
    %57 = vector.broadcast %48 : vector<1x8xf32> to vector<326x8xf32>
    %58 = arith.addf %56, %57 : vector<326x8xf32>
    %cst_20 = arith.constant 0.000000e+00 : f32
    %59 = vector.broadcast %cst_20 : f32 to vector<326x8xf32>
    %60 = arith.maximumf %58, %59 : vector<326x8xf32>
    %cst_21 = arith.constant 0.000000e+00 : f32
    %61 = vector.shape_cast %46 : vector<326x1xi1> to vector<326x1xi1>
    %62 = vector.broadcast %61 : vector<326x1xi1> to vector<326x8xi1>
    %63 = vector.broadcast %cst_21 : f32 to vector<326x8xf32>
    %64 = arith.select %62, %60, %63 : vector<326x8xi1>, vector<326x8xf32>
    %65 = arith.truncf %64 : vector<326x8xf32> to vector<326x8xbf16>
    %c0_22 = arith.constant 0 : index
    %c0_23 = arith.constant 0 : index
    %66 = vector.load %arg8[%c0_22, %c0_23] : memref<326x8xbf16, #tpu.memory_space<vmem>>, vector<326x8xbf16>
    tpu.vector_store %arg8[%c0_22, %c0_23], %65 {strides = array<i32>} : memref<326x8xbf16, #tpu.memory_space<vmem>>, vector<326x8xbf16>,
    %cst_24 = arith.constant 0.000000e+00 : f32
    %67 = vector.broadcast %cst_24 : f32 to vector<288x8xf32>
    %c0_25 = arith.constant 0 : index
    %c0_26 = arith.constant 0 : index
    %68 = vector.load %arg8[%c0_25, %c0_26] : memref<326x8xbf16, #tpu.memory_space<vmem>>, vector<288x8xbf16>
    %c0_27 = arith.constant 0 : index
    %c0_28 = arith.constant 0 : index
    %c0_29 = arith.constant 0 : index
    %69 = vector.load %arg4[%c0_27, %c0_28, %c0_29] : memref<9x8x8xbf16, #tpu.memory_space<vmem>>, vector<1x8x8xbf16>
    %70 = vector.shape_cast %69 : vector<1x8x8xbf16> to vector<8x8xbf16>
    %cst_30 = arith.constant dense<0.000000e+00> : vector<288x8xf32>
    %71 = tpu.matmul %68, %70, %cst_30 {dimension_numbers = #tpu.dot_dimension_numbers<[1], [0], [0], [1], [0, 0, 1, 1], [], []>} : vector<288x8xbf16>, vector<8x8xbf16>, vector<288x8xf32> -> vector<288x8xf32>
    %72 = arith.addf %67, %71 : vector<288x8xf32>
    %c1 = arith.constant 1 : index
    %c0_31 = arith.constant 0 : index
    %73 = vector.load %arg8[%c1, %c0_31] : memref<326x8xbf16, #tpu.memory_space<vmem>>, vector<288x8xbf16>
    %c1_32 = arith.constant 1 : index
    %c0_33 = arith.constant 0 : index
    %c0_34 = arith.constant 0 : index
    %74 = vector.load %arg4[%c1_32, %c0_33, %c0_34] : memref<9x8x8xbf16, #tpu.memory_space<vmem>>, vector<1x8x8xbf16>
    %75 = vector.shape_cast %74 : vector<1x8x8xbf16> to vector<8x8xbf16>
    %cst_35 = arith.constant dense<0.000000e+00> : vector<288x8xf32>
    %76 = tpu.matmul %73, %75, %cst_35 {dimension_numbers = #tpu.dot_dimension_numbers<[1], [0], [0], [1], [0, 0, 1, 1], [], []>} : vector<288x8xbf16>, vector<8x8xbf16>, vector<288x8xf32> -> vector<288x8xf32>
    %77 = arith.addf %72, %76 : vector<288x8xf32>
    %c2 = arith.constant 2 : index
    %c0_36 = arith.constant 0 : index
    %78 = vector.load %arg8[%c2, %c0_36] : memref<326x8xbf16, #tpu.memory_space<vmem>>, vector<288x8xbf16>
    %c2_37 = arith.constant 2 : index
    %c0_38 = arith.constant 0 : index
    %c0_39 = arith.constant 0 : index
    %79 = vector.load %arg4[%c2_37, %c0_38, %c0_39] : memref<9x8x8xbf16, #tpu.memory_space<vmem>>, vector<1x8x8xbf16>
    %80 = vector.shape_cast %79 : vector<1x8x8xbf16> to vector<8x8xbf16>
    %cst_40 = arith.constant dense<0.000000e+00> : vector<288x8xf32>
    %81 = tpu.matmul %78, %80, %cst_40 {dimension_numbers = #tpu.dot_dimension_numbers<[1], [0], [0], [1], [0, 0, 1, 1], [], []>} : vector<288x8xbf16>, vector<8x8xbf16>, vector<288x8xf32> -> vector<288x8xf32>
    %82 = arith.addf %77, %81 : vector<288x8xf32>
    %c18 = arith.constant 18 : index
    %c0_41 = arith.constant 0 : index
    %83 = vector.load %arg8[%c18, %c0_41] : memref<326x8xbf16, #tpu.memory_space<vmem>>, vector<288x8xbf16>
    %c3 = arith.constant 3 : index
    %c0_42 = arith.constant 0 : index
    %c0_43 = arith.constant 0 : index
    %84 = vector.load %arg4[%c3, %c0_42, %c0_43] : memref<9x8x8xbf16, #tpu.memory_space<vmem>>, vector<1x8x8xbf16>
    %85 = vector.shape_cast %84 : vector<1x8x8xbf16> to vector<8x8xbf16>
    %cst_44 = arith.constant dense<0.000000e+00> : vector<288x8xf32>
    %86 = tpu.matmul %83, %85, %cst_44 {dimension_numbers = #tpu.dot_dimension_numbers<[1], [0], [0], [1], [0, 0, 1, 1], [], []>} : vector<288x8xbf16>, vector<8x8xbf16>, vector<288x8xf32> -> vector<288x8xf32>
    %87 = arith.addf %82, %86 : vector<288x8xf32>
    %c19 = arith.constant 19 : index
    %c0_45 = arith.constant 0 : index
    %88 = vector.load %arg8[%c19, %c0_45] : memref<326x8xbf16, #tpu.memory_space<vmem>>, vector<288x8xbf16>
    %c4 = arith.constant 4 : index
    %c0_46 = arith.constant 0 : index
    %c0_47 = arith.constant 0 : index
    %89 = vector.load %arg4[%c4, %c0_46, %c0_47] : memref<9x8x8xbf16, #tpu.memory_space<vmem>>, vector<1x8x8xbf16>
    %90 = vector.shape_cast %89 : vector<1x8x8xbf16> to vector<8x8xbf16>
    %cst_48 = arith.constant dense<0.000000e+00> : vector<288x8xf32>
    %91 = tpu.matmul %88, %90, %cst_48 {dimension_numbers = #tpu.dot_dimension_numbers<[1], [0], [0], [1], [0, 0, 1, 1], [], []>} : vector<288x8xbf16>, vector<8x8xbf16>, vector<288x8xf32> -> vector<288x8xf32>
    %92 = arith.addf %87, %91 : vector<288x8xf32>
    %c20 = arith.constant 20 : index
    %c0_49 = arith.constant 0 : index
    %93 = vector.load %arg8[%c20, %c0_49] : memref<326x8xbf16, #tpu.memory_space<vmem>>, vector<288x8xbf16>
    %c5 = arith.constant 5 : index
    %c0_50 = arith.constant 0 : index
    %c0_51 = arith.constant 0 : index
    %94 = vector.load %arg4[%c5, %c0_50, %c0_51] : memref<9x8x8xbf16, #tpu.memory_space<vmem>>, vector<1x8x8xbf16>
    %95 = vector.shape_cast %94 : vector<1x8x8xbf16> to vector<8x8xbf16>
    %cst_52 = arith.constant dense<0.000000e+00> : vector<288x8xf32>
    %96 = tpu.matmul %93, %95, %cst_52 {dimension_numbers = #tpu.dot_dimension_numbers<[1], [0], [0], [1], [0, 0, 1, 1], [], []>} : vector<288x8xbf16>, vector<8x8xbf16>, vector<288x8xf32> -> vector<288x8xf32>
    %97 = arith.addf %92, %96 : vector<288x8xf32>
    %c36 = arith.constant 36 : index
    %c0_53 = arith.constant 0 : index
    %98 = vector.load %arg8[%c36, %c0_53] : memref<326x8xbf16, #tpu.memory_space<vmem>>, vector<288x8xbf16>
    %c6 = arith.constant 6 : index
    %c0_54 = arith.constant 0 : index
    %c0_55 = arith.constant 0 : index
    %99 = vector.load %arg4[%c6, %c0_54, %c0_55] : memref<9x8x8xbf16, #tpu.memory_space<vmem>>, vector<1x8x8xbf16>
    %100 = vector.shape_cast %99 : vector<1x8x8xbf16> to vector<8x8xbf16>
    %cst_56 = arith.constant dense<0.000000e+00> : vector<288x8xf32>
    %101 = tpu.matmul %98, %100, %cst_56 {dimension_numbers = #tpu.dot_dimension_numbers<[1], [0], [0], [1], [0, 0, 1, 1], [], []>} : vector<288x8xbf16>, vector<8x8xbf16>, vector<288x8xf32> -> vector<288x8xf32>
    %102 = arith.addf %97, %101 : vector<288x8xf32>
    %c37 = arith.constant 37 : index
    %c0_57 = arith.constant 0 : index
    %103 = vector.load %arg8[%c37, %c0_57] : memref<326x8xbf16, #tpu.memory_space<vmem>>, vector<288x8xbf16>
    %c7 = arith.constant 7 : index
    %c0_58 = arith.constant 0 : index
    %c0_59 = arith.constant 0 : index
    %104 = vector.load %arg4[%c7, %c0_58, %c0_59] : memref<9x8x8xbf16, #tpu.memory_space<vmem>>, vector<1x8x8xbf16>
    %105 = vector.shape_cast %104 : vector<1x8x8xbf16> to vector<8x8xbf16>
    %cst_60 = arith.constant dense<0.000000e+00> : vector<288x8xf32>
    %106 = tpu.matmul %103, %105, %cst_60 {dimension_numbers = #tpu.dot_dimension_numbers<[1], [0], [0], [1], [0, 0, 1, 1], [], []>} : vector<288x8xbf16>, vector<8x8xbf16>, vector<288x8xf32> -> vector<288x8xf32>
    %107 = arith.addf %102, %106 : vector<288x8xf32>
    %c38 = arith.constant 38 : index
    %c0_61 = arith.constant 0 : index
    %108 = vector.load %arg8[%c38, %c0_61] : memref<326x8xbf16, #tpu.memory_space<vmem>>, vector<288x8xbf16>
    %c8 = arith.constant 8 : index
    %c0_62 = arith.constant 0 : index
    %c0_63 = arith.constant 0 : index
    %109 = vector.load %arg4[%c8, %c0_62, %c0_63] : memref<9x8x8xbf16, #tpu.memory_space<vmem>>, vector<1x8x8xbf16>
    %110 = vector.shape_cast %109 : vector<1x8x8xbf16> to vector<8x8xbf16>
    %cst_64 = arith.constant dense<0.000000e+00> : vector<288x8xf32>
    %111 = tpu.matmul %108, %110, %cst_64 {dimension_numbers = #tpu.dot_dimension_numbers<[1], [0], [0], [1], [0, 0, 1, 1], [], []>} : vector<288x8xbf16>, vector<8x8xbf16>, vector<288x8xf32> -> vector<288x8xf32>
    %112 = arith.addf %107, %111 : vector<288x8xf32>
    %cst_65 = arith.constant 0.000000e+00 : f32
    %113 = vector.shape_cast %18 : vector<288x1xi1> to vector<288x1xi1>
    %114 = vector.broadcast %113 : vector<288x1xi1> to vector<288x8xi1>
    %115 = vector.broadcast %cst_65 : f32 to vector<288x8xf32>
    %116 = arith.select %114, %112, %115 : vector<288x8xi1>, vector<288x8xf32>
    %c0_66 = arith.constant 0 : index
    %c0_67 = arith.constant 0 : index
    %c0_68 = arith.constant 0 : index
    %117 = vector.load %arg5[%c0_66, %c0_67, %c0_68] : memref<1x326x8xbf16, #tpu.memory_space<vmem>>, vector<1x19x8xbf16>
    %118 = vector.shape_cast %117 : vector<1x19x8xbf16> to vector<19x8xbf16>
    %119 = vector.shape_cast %49 : vector<19x8xbf16> to vector<1x19x8xbf16>
    tpu.vector_store %arg5[%c0_66, %c0_67, %c0_68], %119 {strides = array<i32>} : memref<1x326x8xbf16, #tpu.memory_space<vmem>>, vector<1x19x8xbf16>,
    %120 = arith.truncf %116 : vector<288x8xf32> to vector<288x8xbf16>
    %c0_69 = arith.constant 0 : index
    %c19_70 = arith.constant 19 : index
    %c0_71 = arith.constant 0 : index
    %121 = vector.load %arg5[%c0_69, %c19_70, %c0_71] : memref<1x326x8xbf16, #tpu.memory_space<vmem>>, vector<1x288x8xbf16>
    %122 = vector.shape_cast %121 : vector<1x288x8xbf16> to vector<288x8xbf16>
    %123 = vector.shape_cast %120 : vector<288x8xbf16> to vector<1x288x8xbf16>
    tpu.vector_store %arg5[%c0_69, %c19_70, %c0_71], %123 {strides = array<i32>} : memref<1x326x8xbf16, #tpu.memory_space<vmem>>, vector<1x288x8xbf16>,
    %c0_72 = arith.constant 0 : index
    %c307 = arith.constant 307 : index
    %c0_73 = arith.constant 0 : index
    %124 = vector.load %arg5[%c0_72, %c307, %c0_73] : memref<1x326x8xbf16, #tpu.memory_space<vmem>>, vector<1x19x8xbf16>
    %125 = vector.shape_cast %124 : vector<1x19x8xbf16> to vector<19x8xbf16>
    %126 = vector.shape_cast %49 : vector<19x8xbf16> to vector<1x19x8xbf16>
    tpu.vector_store %arg5[%c0_72, %c307, %c0_73], %126 {strides = array<i32>} : memref<1x326x8xbf16, #tpu.memory_space<vmem>>, vector<1x19x8xbf16>,
    %cst_74 = arith.constant dense<0.000000e+00> : vector<8xf32>
    %127 = vector.multi_reduction <add>, %116, %cst_74 [0] : vector<288x8xf32> to vector<8xf32>
    %128 = vector.shape_cast %127 : vector<8xf32> to vector<1x8xf32>
    %129 = arith.addf %50, %128 : vector<1x8xf32>
    %130 = arith.mulf %116, %116 : vector<288x8xf32>
    %cst_75 = arith.constant dense<0.000000e+00> : vector<8xf32>
    %131 = vector.multi_reduction <add>, %130, %cst_75 [0] : vector<288x8xf32> to vector<8xf32>
    %132 = vector.shape_cast %131 : vector<8xf32> to vector<1x8xf32>
    %133 = arith.addf %51, %132 : vector<1x8xf32>
    %c0_76 = arith.constant 0 : index
    %c0_77 = arith.constant 0 : index
    %c0_78 = arith.constant 0 : index
    %134 = vector.load %arg6[%c0_76, %c0_77, %c0_78] : memref<1x1x8xf32, #tpu.memory_space<vmem>>, vector<1x1x8xf32>
    %135 = vector.shape_cast %134 : vector<1x1x8xf32> to vector<1x8xf32>
    %136 = vector.shape_cast %129 : vector<1x8xf32> to vector<1x1x8xf32>
    tpu.vector_store %arg6[%c0_76, %c0_77, %c0_78], %136 {strides = array<i32>} : memref<1x1x8xf32, #tpu.memory_space<vmem>>, vector<1x1x8xf32>,
    %c0_79 = arith.constant 0 : index
    %c0_80 = arith.constant 0 : index
    %c0_81 = arith.constant 0 : index
    %137 = vector.load %arg7[%c0_79, %c0_80, %c0_81] : memref<1x1x8xf32, #tpu.memory_space<vmem>>, vector<1x1x8xf32>
    %138 = vector.shape_cast %137 : vector<1x1x8xf32> to vector<1x8xf32>
    %139 = vector.shape_cast %133 : vector<1x8xf32> to vector<1x1x8xf32>
    tpu.vector_store %arg7[%c0_79, %c0_80, %c0_81], %139 {strides = array<i32>} : memref<1x1x8xf32, #tpu.memory_space<vmem>>, vector<1x1x8xf32>,
    return
  }
  func.func @transform_0(%arg0: i32) -> (i32, i32, i32) {
    %c0_i32 = arith.constant 0 : i32
    %c0_i32_0 = arith.constant 0 : i32
    %c0_i32_1 = arith.constant 0 : i32
    return %arg0, %c0_i32, %c0_i32_0 : i32, i32, i32
  }
  func.func @transform_1(%arg0: i32) -> (i32, i32) {
    %c0_i32 = arith.constant 0 : i32
    %c0_i32_0 = arith.constant 0 : i32
    %c0_i32_1 = arith.constant 0 : i32
    return %c0_i32, %c0_i32_0 : i32, i32
  }
  func.func @transform_2(%arg0: i32) -> (i32, i32) {
    %c0_i32 = arith.constant 0 : i32
    %c0_i32_0 = arith.constant 0 : i32
    %c0_i32_1 = arith.constant 0 : i32
    return %c0_i32, %c0_i32_0 : i32, i32
  }
  func.func @transform_3(%arg0: i32) -> (i32, i32, i32) {
    %c0_i32 = arith.constant 0 : i32
    %c0_i32_0 = arith.constant 0 : i32
    %c0_i32_1 = arith.constant 0 : i32
    %c0_i32_2 = arith.constant 0 : i32
    return %c0_i32, %c0_i32_0, %c0_i32_1 : i32, i32, i32
  }
  func.func @transform_4(%arg0: i32) -> (i32, i32, i32) {
    %c0_i32 = arith.constant 0 : i32
    %c0_i32_0 = arith.constant 0 : i32
    %c0_i32_1 = arith.constant 0 : i32
    return %arg0, %c0_i32, %c0_i32_0 : i32, i32, i32
  }
  func.func @transform_5(%arg0: i32) -> (i32, i32, i32) {
    %c0_i32 = arith.constant 0 : i32
    %c0_i32_0 = arith.constant 0 : i32
    %c0_i32_1 = arith.constant 0 : i32
    return %arg0, %c0_i32, %c0_i32_0 : i32, i32, i32
  }
  func.func @transform_6(%arg0: i32) -> (i32, i32, i32) {
    %c0_i32 = arith.constant 0 : i32
    %c0_i32_0 = arith.constant 0 : i32
    %c0_i32_1 = arith.constant 0 : i32
    return %arg0, %c0_i32, %c0_i32_0 : i32, i32, i32
  }
}

</mosaic_0001>

<llo_original>
// kernel: conv3x3_forward.5
$region0: #{conv3x3_forward.5}
  #allocation0 [shape = 'u32[]', space=smem, size = 0x4, offset = 0x4, fixed_abs, tag = 'smem constant byte address 0x4 - core index']
  #allocation1 [shape = 'u32[144,128]{1,0:T(1,128)}', space=vmem, size = 0x12000, scoped, tag = 'internal scratch']
  %s0 = inlined_call_operand.vmem [shape: bf16[2,326,8], index: 0, kind: input, shape index: {}]
  %s1 = inlined_call_operand.vmem [shape: f32[1,8], index: 1, kind: input, shape index: {}]
  %s2 = inlined_call_operand.vmem [shape: f32[1,8], index: 2, kind: input, shape index: {}]
  %s3 = inlined_call_operand.vmem [shape: f32[2,326,8], index: 3, kind: output, shape index: {}]
  %s4 = sld [smem:[#allocation0]]
  $region45: #{conv3x3_forward.5} parent=0
    _
  %s6 = ssub.s32 1, %s4
  %s7 = scalar_select 0, %s6, %s4
  loop: start=0, step=1, limit=4
  $region2: #{conv3x3_forward.5} parent=0 // loop_pre_header
    _
  $region3: #{conv3x3_forward.5} parent=0 // loop_header
    %s9 = sphi 0, %s13
    %p10 = scmp.ge.s32.totalorder %s9, 4
    %s19 = sphi 0, %s21
    %s22 = sphi 0, %s19
    %s23 = sphi 0, %s22
    %s39 = sphi 0, %s23
    %s43 = sphi 0, %s43
    %s45 = sphi 0, %s43
    %s46 = sphi 0, %s45
    %s60 = sphi 0, %s46
    %s64 = sphi 0, %s64
    %s66 = sphi 0, %s64
    %s67 = sphi 0, %s66
    %s81 = sphi 0, %s67
    %s87 = sphi 0, %s89
    %s90 = sphi 0, %s87
    %s91 = sphi 0, %s90
    %s107 = sphi 0, %s91
  $region4: #{conv3x3_forward.5} parent=0 // loop_header_branch
    %12 = sbr.rel (%p10) target = $region8
  $region5: #{conv3x3_forward.5} parent=0 // loop_body
    %s14 = ssub.s32 %s9, 1
    %s15 = ssub.s32 %s9, 2
    %s16 = sadd.s32 %s9, 1
    %s17 = ssub.s32 %s9, %s16
    %p18 = scmp.eq.s32.totalorder %s17, 0
    %s20 = sadd.s32 %s19, 1
    %s21 = scalar_select %p18, %s19, %s20
    %p24 = pneg %p18
    %p25 = scmp.eq.s32.totalorder %s9, 1
    %p26 = por %p24, %p25
    %p27 = scmp.ne.s32.totalorder %s19, %s22
    %p28 = scmp.eq.s32.totalorder %s9, 0
    %p29 = por %p27, %p28
    %p30 = scmp.ne.s32.totalorder %s19, %s22
    %p31 = scmp.eq.s32.totalorder %s14, 1
    %p32 = por %p30, %p31
    %p33 = scmp.ne.s32.totalorder %s22, %s23
    %p34 = scmp.eq.s32.totalorder %s14, 0
    %p35 = por %p33, %p34
    %p36 = scmp.ne.s32.totalorder %s22, %s23
    %p37 = scmp.eq.s32.totalorder %s15, 1
    %p38 = por %p36, %p37
    %p40 = scmp.ne.s32.totalorder %s23, %s39
    %p41 = scmp.eq.s32.totalorder %s15, 0
    %p42 = por %p40, %p41
    %s44 = sadd.s32 %s43, 1
    %p47 = scmp.eq.s32.totalorder %s9, 1
    %p48 = scmp.ne.s32.totalorder %s43, %s45
    %p49 = scmp.eq.s32.totalorder %s9, 0
    %p50 = por %p48, %p49
    %p51 = scmp.ne.s32.totalorder %s43, %s45
    %p52 = scmp.eq.s32.totalorder %s14, 1
    %p53 = por %p51, %p52
    %p54 = scmp.ne.s32.totalorder %s45, %s46
    %p55 = scmp.eq.s32.totalorder %s14, 0
    %p56 = por %p54, %p55
    %p57 = scmp.ne.s32.totalorder %s45, %s46
    %p58 = scmp.eq.s32.totalorder %s15, 1
    %p59 = por %p57, %p58
    %p61 = scmp.ne.s32.totalorder %s46, %s60
    %p62 = scmp.eq.s32.totalorder %s15, 0
    %p63 = por %p61, %p62
    %s65 = sadd.s32 %s64, 1
    %p68 = scmp.eq.s32.totalorder %s9, 1
    %p69 = scmp.ne.s32.totalorder %s64, %s66
    %p70 = scmp.eq.s32.totalorder %s9, 0
    %p71 = por %p69, %p70
    %p72 = scmp.ne.s32.totalorder %s64, %s66
    %p73 = scmp.eq.s32.totalorder %s14, 1
    %p74 = por %p72, %p73
    %p75 = scmp.ne.s32.totalorder %s66, %s67
    %p76 = scmp.eq.s32.totalorder %s14, 0
    %p77 = por %p75, %p76
    %p78 = scmp.ne.s32.totalorder %s66, %s67
    %p79 = scmp.eq.s32.totalorder %s15, 1
    %p80 = por %p78, %p79
    %p82 = scmp.ne.s32.totalorder %s67, %s81
    %p83 = scmp.eq.s32.totalorder %s15, 0
    %p84 = por %p82, %p83
    %s85 = ssub.s32 %s9, %s16
    %p86 = scmp.eq.s32.totalorder %s85, 0
    %s88 = sadd.s32 %s87, 1
    %s89 = scalar_select %p86, %s87, %s88
    %p92 = pneg %p86
    %p93 = scmp.eq.s32.totalorder %s9, 1
    %p94 = por %p92, %p93
    %p95 = scmp.ne.s32.totalorder %s87, %s90
    %p96 = scmp.eq.s32.totalorder %s9, 0
    %p97 = por %p95, %p96
    %p98 = scmp.ne.s32.totalorder %s87, %s90
    %p99 = scmp.eq.s32.totalorder %s14, 1
    %p100 = por %p98, %p99
    %p101 = scmp.ne.s32.totalorder %s90, %s91
    %p102 = scmp.eq.s32.totalorder %s14, 0
    %p103 = por %p101, %p102
    %p104 = scmp.ne.s32.totalorder %s90, %s91
    %p105 = scmp.eq.s32.totalorder %s15, 1
    %p106 = por %p104, %p105
    %p108 = scmp.ne.s32.totalorder %s91, %s107
    %p109 = scmp.eq.s32.totalorder %s15, 0
    %p110 = por %p108, %p109
    %p111 = scmp.le.s32.totalorder 1, %s9
    %p112 = scmp.lt.s32.totalorder %s9, 3
    %p113 = pnand %p111, %p112
    %p114 = pneg %p113
    // Predicated region
    $region9: #{conv3x3_forward.5} parent=5 // pred_check
      _
    $region10: #{conv3x3_forward.5} parent=5 // pred_check_branch
      %116 = sbr.rel (%p113) target = $region12
    $region11: #{conv3x3_forward.5} parent=5 // pred_region
      %s117 = ssub.s32 %s9, 1
      // Predicated region
      $region13: #{conv3x3_forward.5} parent=11 // pred_check
        %p118 = pneg %p56
      $region14: #{conv3x3_forward.5} parent=11 // pred_check_branch
        %120 = sbr.rel (%p118) target = $region16
      $region15: #{conv3x3_forward.5} parent=11 // pred_region
        _
      $region16: #{conv3x3_forward.5} parent=11 // pred_fallthru
        _
      // Predicated region
      $region17: #{conv3x3_forward.5} parent=11 // pred_check
        %p121 = pneg %p77
      $region18: #{conv3x3_forward.5} parent=11 // pred_check_branch
        %123 = sbr.rel (%p121) target = $region20
      $region19: #{conv3x3_forward.5} parent=11 // pred_region
        _
      $region20: #{conv3x3_forward.5} parent=11 // pred_fallthru
        _
    $region12: #{conv3x3_forward.5} parent=5 // pred_fallthru
      _
    %p124 = scmp.lt.s32.totalorder %s9, 2
    // Predicated region
    $region21: #{conv3x3_forward.5} parent=5 // pred_check
      %p125 = pneg %p124
    $region22: #{conv3x3_forward.5} parent=5 // pred_check_branch
      %127 = sbr.rel (%p125) target = $region24
    $region23: #{conv3x3_forward.5} parent=5 // pred_region
      // Predicated region
      $region25: #{conv3x3_forward.5} parent=23 // pred_check
        %p128 = pneg %p29
      $region26: #{conv3x3_forward.5} parent=23 // pred_check_branch
        %130 = sbr.rel (%p128) target = $region28
      $region27: #{conv3x3_forward.5} parent=23 // pred_region
        %p131 = scmp.lt.s32.totalorder %s9, 1
        %s132 = scalar_select %p131, %s9, 1
        %s133 = smul.addr %s132, 41
        %s134 = smul.addr %s133, 4
        %s135 = scalar_lea.vmem %s0, %s134
      $region28: #{conv3x3_forward.5} parent=23 // pred_fallthru
        _
    $region24: #{conv3x3_forward.5} parent=5 // pred_fallthru
      _
    %p136 = scmp.le.s32.totalorder 1, %s9
    %p137 = scmp.lt.s32.totalorder %s9, 3
    %p138 = pnand %p136, %p137
    %p139 = pneg %p138
    // Predicated region
    $region29: #{conv3x3_forward.5} parent=5 // pred_check
      _
    $region30: #{conv3x3_forward.5} parent=5 // pred_check_branch
      %141 = sbr.rel (%p138) target = $region32
    $region31: #{conv3x3_forward.5} parent=5 // pred_region
      %s142 = ssub.s32 %s9, 1
      %p143 = scmp.lt.s32.totalorder %s14, 1
      %s144 = scalar_select %p143, %s14, 1
      %s145 = smul.addr %s144, 41
      %s146 = smul.addr %s145, 4
      %s147 = scalar_lea.vmem %s0, %s146
      %p148 = pneg %p35
      %p149 = pneg %p32
      %p150 = pneg %p56
      %p151 = pneg %p53
      %p152 = pneg %p77
      %p153 = pneg %p74
      %p154 = pneg %p103
      %p155 = pneg %p100
      %p156 = scmp.lt.s32.totalorder %s14, 1
      %s157 = scalar_select %p156, %s14, 1
      %s158 = smul.addr %s157, 41
      %s159 = smul.addr %s158, 8
      %s160 = scalar_lea.vmem %s3, %s159
      %p161 = scmp.lt.s32.totalorder %s14, 1
      %s162 = scalar_select %p161, %s14, 1
      %s163 = smul.addr %s162, 41
      %s164 = smul.addr %s163, 4
      %s165 = scalar_lea.vmem %s0, %s164
      %p166 = scmp.lt.s32.totalorder %s14, 1
      %s167 = scalar_select %p166, %s14, 1
      %s168 = smul.addr %s167, 41
      %s169 = smul.addr %s168, 8
      %s170 = scalar_lea.vmem %s3, %s169
      %v171 = vld [vmem:[%s1] sm:$0x1]
      %v172 = vld [vmem:[%s2] sm:$0x1]
      %v173 = vld [vmem:[%s165] sm:$0xf]
      %v174 = vld [vmem:[%s165 + $0x4] sm:$0xf]
      %v175 = vld [vmem:[%s165 + $0x8] sm:$0xf]
      %v176 = vld [vmem:[%s165 + $0xc] sm:$0xf]
      %v177 = vld [vmem:[%s165 + $0x10] sm:$0xf]
      %v178 = vld [vmem:[%s165 + $0x14] sm:$0xf]
      %v179 = vld [vmem:[%s165 + $0x18] sm:$0xf]
      %v180 = vld [vmem:[%s165 + $0x1c] sm:$0xf]
      %v181 = vld [vmem:[%s165 + $0x20] sm:$0xf]
      %v182 = vld [vmem:[%s165 + $0x24] sm:$0xf]
      %v183 = vld [vmem:[%s165 + $0x28] sm:$0xf]
      %v184 = vld [vmem:[%s165 + $0x2c] sm:$0xf]
      %v185 = vld [vmem:[%s165 + $0x30] sm:$0xf]
      %v186 = vld [vmem:[%s165 + $0x34] sm:$0xf]
      %v187 = vld [vmem:[%s165 + $0x38] sm:$0xf]
      %v188 = vld [vmem:[%s165 + $0x3c] sm:$0xf]
      %v189 = vld [vmem:[%s165 + $0x40] sm:$0xf]
      %v190 = vld [vmem:[%s165 + $0x44] sm:$0xf]
      %v191 = vld [vmem:[%s165 + $0x48] sm:$0xf]
      %v192 = vld [vmem:[%s165 + $0x4c] sm:$0xf]
      %v193 = vld [vmem:[%s165 + $0x50] sm:$0xf]
      %v194 = vld [vmem:[%s165 + $0x54] sm:$0xf]
      %v195 = vld [vmem:[%s165 + $0x58] sm:$0xf]
      %v196 = vld [vmem:[%s165 + $0x5c] sm:$0xf]
      %v197 = vld [vmem:[%s165 + $0x60] sm:$0xf]
      %v198 = vld [vmem:[%s165 + $0x64] sm:$0xf]
      %v199 = vld [vmem:[%s165 + $0x68] sm:$0xf]
      %v200 = vld [vmem:[%s165 + $0x6c] sm:$0xf]
      %v201 = vld [vmem:[%s165 + $0x70] sm:$0xf]
      %v202 = vld [vmem:[%s165 + $0x74] sm:$0xf]
      %v203 = vld [vmem:[%s165 + $0x78] sm:$0xf]
      %v204 = vld [vmem:[%s165 + $0x7c] sm:$0xf]
      %v205 = vld [vmem:[%s165 + $0x80] sm:$0xf]
      %v206 = vld [vmem:[%s165 + $0x84] sm:$0xf]
      %v207 = vld [vmem:[%s165 + $0x88] sm:$0xf]
      %v208 = vld [vmem:[%s165 + $0x8c] sm:$0xf]
      %v209 = vld [vmem:[%s165 + $0x90] sm:$0xf]
      %v210 = vld [vmem:[%s165 + $0x94] sm:$0xf]
      %v211 = vld [vmem:[%s165 + $0x98] sm:$0xf]
      %v212 = vld [vmem:[%s165 + $0x9c] sm:$0xf]
      %v213 = vld [vmem:[%s165 + $0xa0] sm:$0x7]
      %v214 = vunpack.c.l.bf16 %v173
      %v215 = vunpack.c.l.bf16 %v174
      %v216 = vunpack.c.l.bf16 %v175
      %v217 = vunpack.c.l.bf16 %v176
      %v218 = vunpack.c.l.bf16 %v177
      %v219 = vunpack.c.l.bf16 %v178
      %v220 = vunpack.c.l.bf16 %v179
      %v221 = vunpack.c.l.bf16 %v180
      %v222 = vunpack.c.l.bf16 %v181
      %v223 = vunpack.c.l.bf16 %v182
      %v224 = vunpack.c.l.bf16 %v183
      %v225 = vunpack.c.l.bf16 %v184
      %v226 = vunpack.c.l.bf16 %v185
      %v227 = vunpack.c.l.bf16 %v186
      %v228 = vunpack.c.l.bf16 %v187
      %v229 = vunpack.c.l.bf16 %v188
      %v230 = vunpack.c.l.bf16 %v189
      %v231 = vunpack.c.l.bf16 %v190
      %v232 = vunpack.c.l.bf16 %v191
      %v233 = vunpack.c.l.bf16 %v192
      %v234 = vunpack.c.l.bf16 %v193
      %v235 = vunpack.c.l.bf16 %v194
      %v236 = vunpack.c.l.bf16 %v195
      %v237 = vunpack.c.l.bf16 %v196
      %v238 = vunpack.c.l.bf16 %v197
      %v239 = vunpack.c.l.bf16 %v198
      %v240 = vunpack.c.l.bf16 %v199
      %v241 = vunpack.c.l.bf16 %v200
      %v242 = vunpack.c.l.bf16 %v201
      %v243 = vunpack.c.l.bf16 %v202
      %v244 = vunpack.c.l.bf16 %v203
      %v245 = vunpack.c.l.bf16 %v204
      %v246 = vunpack.c.l.bf16 %v205
      %v247 = vunpack.c.l.bf16 %v206
      %v248 = vunpack.c.l.bf16 %v207
      %v249 = vunpack.c.l.bf16 %v208
      %v250 = vunpack.c.l.bf16 %v209
      %v251 = vunpack.c.l.bf16 %v210
      %v252 = vunpack.c.l.bf16 %v211
      %v253 = vunpack.c.l.bf16 %v212
      %v254 = vunpack.c.l.bf16 %v213
      %v256 = vlaneseq
      %v257 = vshrl.u32 %v256, 7
      %v258 = vsub.s32 0, %v257
      %v259 = vrot.slane %v171, %v258
      %v261 = vmul.f32 %v214, %v259
      %v262 = vmul.f32 %v215, %v259
      %v263 = vmul.f32 %v216, %v259
      %v264 = vmul.f32 %v217, %v259
      %v265 = vmul.f32 %v218, %v259
      %v266 = vmul.f32 %v219, %v259
      %v267 = vmul.f32 %v220, %v259
      %v268 = vmul.f32 %v221, %v259
      %v269 = vmul.f32 %v222, %v259
      %v270 = vmul.f32 %v223, %v259
      %v271 = vmul.f32 %v224, %v259
      %v272 = vmul.f32 %v225, %v259
      %v273 = vmul.f32 %v226, %v259
      %v274 = vmul.f32 %v227, %v259
      %v275 = vmul.f32 %v228, %v259
      %v276 = vmul.f32 %v229, %v259
      %v277 = vmul.f32 %v230, %v259
      %v278 = vmul.f32 %v231, %v259
      %v279 = vmul.f32 %v232, %v259
      %v280 = vmul.f32 %v233, %v259
      %v281 = vmul.f32 %v234, %v259
      %v282 = vmul.f32 %v235, %v259
      %v283 = vmul.f32 %v236, %v259
      %v284 = vmul.f32 %v237, %v259
      %v285 = vmul.f32 %v238, %v259
      %v286 = vmul.f32 %v239, %v259
      %v287 = vmul.f32 %v240, %v259
      %v288 = vmul.f32 %v241, %v259
      %v289 = vmul.f32 %v242, %v259
      %v290 = vmul.f32 %v243, %v259
      %v291 = vmul.f32 %v244, %v259
      %v292 = vmul.f32 %v245, %v259
      %v293 = vmul.f32 %v246, %v259
      %v294 = vmul.f32 %v247, %v259
      %v295 = vmul.f32 %v248, %v259
      %v296 = vmul.f32 %v249, %v259
      %v297 = vmul.f32 %v250, %v259
      %v298 = vmul.f32 %v251, %v259
      %v299 = vmul.f32 %v252, %v259
      %v300 = vmul.f32 %v253, %v259
      %v301 = vmul.f32 %v254, %v259
      %v303 = vlaneseq
      %v304 = vshrl.u32 %v303, 7
      %v305 = vsub.s32 0, %v304
      %v306 = vrot.slane %v172, %v305
      %v308 = vadd.f32 %v261, %v306
      %v309 = vadd.f32 %v262, %v306
      %v310 = vadd.f32 %v263, %v306
      %v311 = vadd.f32 %v264, %v306
      %v312 = vadd.f32 %v265, %v306
      %v313 = vadd.f32 %v266, %v306
      %v314 = vadd.f32 %v267, %v306
      %v315 = vadd.f32 %v268, %v306
      %v316 = vadd.f32 %v269, %v306
      %v317 = vadd.f32 %v270, %v306
      %v318 = vadd.f32 %v271, %v306
      %v319 = vadd.f32 %v272, %v306
      %v320 = vadd.f32 %v273, %v306
      %v321 = vadd.f32 %v274, %v306
      %v322 = vadd.f32 %v275, %v306
      %v323 = vadd.f32 %v276, %v306
      %v324 = vadd.f32 %v277, %v306
      %v325 = vadd.f32 %v278, %v306
      %v326 = vadd.f32 %v279, %v306
      %v327 = vadd.f32 %v280, %v306
      %v328 = vadd.f32 %v281, %v306
      %v329 = vadd.f32 %v282, %v306
      %v330 = vadd.f32 %v283, %v306
      %v331 = vadd.f32 %v284, %v306
      %v332 = vadd.f32 %v285, %v306
      %v333 = vadd.f32 %v286, %v306
      %v334 = vadd.f32 %v287, %v306
      %v335 = vadd.f32 %v288, %v306
      %v336 = vadd.f32 %v289, %v306
      %v337 = vadd.f32 %v290, %v306
      %v338 = vadd.f32 %v291, %v306
      %v339 = vadd.f32 %v292, %v306
      %v340 = vadd.f32 %v293, %v306
      %v341 = vadd.f32 %v294, %v306
      %v342 = vadd.f32 %v295, %v306
      %v343 = vadd.f32 %v296, %v306
      %v344 = vadd.f32 %v297, %v306
      %v345 = vadd.f32 %v298, %v306
      %v346 = vadd.f32 %v299, %v306
      %v347 = vadd.f32 %v300, %v306
      %v348 = vadd.f32 %v301, %v306
      %v349 = vmax.f32 %v308, 0.0
      %v350 = vmax.f32 %v309, 0.0
      %v351 = vmax.f32 %v310, 0.0
      %v352 = vmax.f32 %v311, 0.0
      %v353 = vmax.f32 %v312, 0.0
      %v354 = vmax.f32 %v313, 0.0
      %v355 = vmax.f32 %v314, 0.0
      %v356 = vmax.f32 %v315, 0.0
      %v357 = vmax.f32 %v316, 0.0
      %v358 = vmax.f32 %v317, 0.0
      %v359 = vmax.f32 %v318, 0.0
      %v360 = vmax.f32 %v319, 0.0
      %v361 = vmax.f32 %v320, 0.0
      %v362 = vmax.f32 %v321, 0.0
      %v363 = vmax.f32 %v322, 0.0
      %v364 = vmax.f32 %v323, 0.0
      %v365 = vmax.f32 %v324, 0.0
      %v366 = vmax.f32 %v325, 0.0
      %v367 = vmax.f32 %v326, 0.0
      %v368 = vmax.f32 %v327, 0.0
      %v369 = vmax.f32 %v328, 0.0
      %v370 = vmax.f32 %v329, 0.0
      %v371 = vmax.f32 %v330, 0.0
      %v372 = vmax.f32 %v331, 0.0
      %v373 = vmax.f32 %v332, 0.0
      %v374 = vmax.f32 %v333, 0.0
      %v375 = vmax.f32 %v334, 0.0
      %v376 = vmax.f32 %v335, 0.0
      %v377 = vmax.f32 %v336, 0.0
      %v378 = vmax.f32 %v337, 0.0
      %v379 = vmax.f32 %v338, 0.0
      %v380 = vmax.f32 %v339, 0.0
      %v381 = vmax.f32 %v340, 0.0
      %v382 = vmax.f32 %v341, 0.0
      %v383 = vmax.f32 %v342, 0.0
      %v384 = vmax.f32 %v343, 0.0
      %v385 = vmax.f32 %v344, 0.0
      %v386 = vmax.f32 %v345, 0.0
      %v387 = vmax.f32 %v346, 0.0
      %v388 = vmax.f32 %v347, 0.0
      %v389 = vmax.f32 %v348, 0.0
      %vm390 = vcmask 64512
      %391 = vst.msk [vmem:[%s170] sm:$0xff] %vm390, %v349
      %392 = vst.msk [vmem:[%s170 + $0x8] sm:$0xff] %vm390, %v350
      %393 = vst.msk [vmem:[%s170 + $0x10] sm:$0xff] %vm390, %v351
      %394 = vst.msk [vmem:[%s170 + $0x18] sm:$0xff] %vm390, %v352
      %395 = vst.msk [vmem:[%s170 + $0x20] sm:$0xff] %vm390, %v353
      %396 = vst.msk [vmem:[%s170 + $0x28] sm:$0xff] %vm390, %v354
      %397 = vst.msk [vmem:[%s170 + $0x30] sm:$0xff] %vm390, %v355
      %398 = vst.msk [vmem:[%s170 + $0x38] sm:$0xff] %vm390, %v356
      %399 = vst.msk [vmem:[%s170 + $0x40] sm:$0xff] %vm390, %v357
      %400 = vst.msk [vmem:[%s170 + $0x48] sm:$0xff] %vm390, %v358
      %401 = vst.msk [vmem:[%s170 + $0x50] sm:$0xff] %vm390, %v359
      %402 = vst.msk [vmem:[%s170 + $0x58] sm:$0xff] %vm390, %v360
      %403 = vst.msk [vmem:[%s170 + $0x60] sm:$0xff] %vm390, %v361
      %404 = vst.msk [vmem:[%s170 + $0x68] sm:$0xff] %vm390, %v362
      %405 = vst.msk [vmem:[%s170 + $0x70] sm:$0xff] %vm390, %v363
      %406 = vst.msk [vmem:[%s170 + $0x78] sm:$0xff] %vm390, %v364
      %407 = vst.msk [vmem:[%s170 + $0x80] sm:$0xff] %vm390, %v365
      %408 = vst.msk [vmem:[%s170 + $0x88] sm:$0xff] %vm390, %v366
      %409 = vst.msk [vmem:[%s170 + $0x90] sm:$0xff] %vm390, %v367
      %410 = vst.msk [vmem:[%s170 + $0x98] sm:$0xff] %vm390, %v368
      %411 = vst.msk [vmem:[%s170 + $0xa0] sm:$0xff] %vm390, %v369
      %412 = vst.msk [vmem:[%s170 + $0xa8] sm:$0xff] %vm390, %v370
      %413 = vst.msk [vmem:[%s170 + $0xb0] sm:$0xff] %vm390, %v371
      %414 = vst.msk [vmem:[%s170 + $0xb8] sm:$0xff] %vm390, %v372
      %415 = vst.msk [vmem:[%s170 + $0xc0] sm:$0xff] %vm390, %v373
      %416 = vst.msk [vmem:[%s170 + $0xc8] sm:$0xff] %vm390, %v374
      %417 = vst.msk [vmem:[%s170 + $0xd0] sm:$0xff] %vm390, %v375
      %418 = vst.msk [vmem:[%s170 + $0xd8] sm:$0xff] %vm390, %v376
      %419 = vst.msk [vmem:[%s170 + $0xe0] sm:$0xff] %vm390, %v377
      %420 = vst.msk [vmem:[%s170 + $0xe8] sm:$0xff] %vm390, %v378
      %421 = vst.msk [vmem:[%s170 + $0xf0] sm:$0xff] %vm390, %v379
      %422 = vst.msk [vmem:[%s170 + $0xf8] sm:$0xff] %vm390, %v380
      %423 = vst.msk [vmem:[%s170 + $0x100] sm:$0xff] %vm390, %v381
      %424 = vst.msk [vmem:[%s170 + $0x108] sm:$0xff] %vm390, %v382
      %425 = vst.msk [vmem:[%s170 + $0x110] sm:$0xff] %vm390, %v383
      %426 = vst.msk [vmem:[%s170 + $0x118] sm:$0xff] %vm390, %v384
      %427 = vst.msk [vmem:[%s170 + $0x120] sm:$0xff] %vm390, %v385
      %428 = vst.msk [vmem:[%s170 + $0x128] sm:$0xff] %vm390, %v386
      %429 = vst.msk [vmem:[%s170 + $0x130] sm:$0xff] %vm390, %v387
      %430 = vst.msk [vmem:[%s170 + $0x138] sm:$0xff] %vm390, %v388
      %vm431 = vcmask 62464
      %432 = vst.msk [vmem:[%s170 + $0x140] sm:$0x3f] %vm431, %v389
      %p433 = scmp.lt.s32.totalorder %s14, 1
      %s434 = scalar_select %p433, %s14, 1
      %s435 = smul.addr %s434, 41
      %s436 = smul.addr %s435, 8
      %s437 = scalar_lea.vmem %s3, %s436
      // Predicated region
      $region33: #{conv3x3_forward.5} parent=31 // pred_check
        %p438 = pneg %p100
      $region34: #{conv3x3_forward.5} parent=31 // pred_check_branch
        %440 = sbr.rel (%p438) target = $region36
      $region35: #{conv3x3_forward.5} parent=31 // pred_region
        _
      $region36: #{conv3x3_forward.5} parent=31 // pred_fallthru
        _
    $region32: #{conv3x3_forward.5} parent=5 // pred_fallthru
      _
    %p441 = scmp.le.s32.totalorder 2, %s9
    // Predicated region
    $region37: #{conv3x3_forward.5} parent=5 // pred_check
      %p442 = pneg %p441
    $region38: #{conv3x3_forward.5} parent=5 // pred_check_branch
      %444 = sbr.rel (%p442) target = $region40
    $region39: #{conv3x3_forward.5} parent=5 // pred_region
      %s445 = ssub.s32 %s9, 2
      // Predicated region
      $region41: #{conv3x3_forward.5} parent=39 // pred_check
        %p446 = pneg %p106
      $region42: #{conv3x3_forward.5} parent=39 // pred_check_branch
        %448 = sbr.rel (%p446) target = $region44
      $region43: #{conv3x3_forward.5} parent=39 // pred_region
        %p449 = scmp.lt.s32.totalorder %s15, 1
        %s450 = scalar_select %p449, %s15, 1
        %s451 = smul.addr %s450, 41
        %s452 = smul.addr %s451, 8
        %s453 = scalar_lea.vmem %s3, %s452
      $region44: #{conv3x3_forward.5} parent=39 // pred_fallthru
        _
    $region40: #{conv3x3_forward.5} parent=5 // pred_fallthru
      _
  $region6: #{conv3x3_forward.5} parent=0 // loop_footer
    %s13 = sadd.s32 1, %s9
  $region7: #{conv3x3_forward.5} parent=0 // loop_footer_branch
    %8 = sbr.rel target = $region3
  $region8: #{conv3x3_forward.5} parent=0 // loop_exit
    _

// kernel: conv3x3_forward.3
$region0: #{conv3x3_forward.3}
  #allocation0 [shape = 'u32[]', space=smem, size = 0x4, offset = 0x4, fixed_abs, tag = 'smem constant byte address 0x4 - core index']
  #allocation1 [shape = 'u32[144,128]{1,0:T(1,128)}', space=vmem, size = 0x12000, scoped, tag = 'internal scratch']
  %s0 = inlined_call_operand.vmem [shape: bf16[2,326,4], index: 0, kind: input, shape index: {}]
  %s1 = inlined_call_operand.vmem [shape: bf16[9,4,8], index: 1, kind: input, shape index: {}]
  %s2 = inlined_call_operand.vmem [shape: bf16[2,326,8], index: 2, kind: output, shape index: {0}]
  %s3 = inlined_call_operand.vmem [shape: f32[2,1,8], index: 3, kind: output, shape index: {1}]
  %s4 = inlined_call_operand.vmem [shape: f32[2,1,8], index: 4, kind: output, shape index: {2}]
  %5 = xla_tuple %s2, %s3, %s4
  %s6 = sld [smem:[#allocation0]]
  $region57: #{conv3x3_forward.3} parent=0
    _
  %s8 = ssub.s32 1, %s6
  %s9 = scalar_select 0, %s8, %s6
  loop: start=0, step=1, limit=4
  $region2: #{conv3x3_forward.3} parent=0 // loop_pre_header
    _
  $region3: #{conv3x3_forward.3} parent=0 // loop_header
    %s11 = sphi 0, %s15
    %p12 = scmp.ge.s32.totalorder %s11, 4
    %s21 = sphi 0, %s23
    %s24 = sphi 0, %s21
    %s25 = sphi 0, %s24
    %s41 = sphi 0, %s25
    %s45 = sphi 0, %s45
    %s47 = sphi 0, %s45
    %s48 = sphi 0, %s47
    %s62 = sphi 0, %s48
    %s68 = sphi 0, %s70
    %s71 = sphi 0, %s68
    %s72 = sphi 0, %s71
    %s88 = sphi 0, %s72
    %s94 = sphi 0, %s96
    %s97 = sphi 0, %s94
    %s98 = sphi 0, %s97
    %s114 = sphi 0, %s98
    %s120 = sphi 0, %s122
    %s123 = sphi 0, %s120
    %s124 = sphi 0, %s123
    %s140 = sphi 0, %s124
  $region4: #{conv3x3_forward.3} parent=0 // loop_header_branch
    %14 = sbr.rel (%p12) target = $region8
  $region5: #{conv3x3_forward.3} parent=0 // loop_body
    %s16 = ssub.s32 %s11, 1
    %s17 = ssub.s32 %s11, 2
    %s18 = sadd.s32 %s11, 1
    %s19 = ssub.s32 %s11, %s18
    %p20 = scmp.eq.s32.totalorder %s19, 0
    %s22 = sadd.s32 %s21, 1
    %s23 = scalar_select %p20, %s21, %s22
    %p26 = pneg %p20
    %p27 = scmp.eq.s32.totalorder %s11, 1
    %p28 = por %p26, %p27
    %p29 = scmp.ne.s32.totalorder %s21, %s24
    %p30 = scmp.eq.s32.totalorder %s11, 0
    %p31 = por %p29, %p30
    %p32 = scmp.ne.s32.totalorder %s21, %s24
    %p33 = scmp.eq.s32.totalorder %s16, 1
    %p34 = por %p32, %p33
    %p35 = scmp.ne.s32.totalorder %s24, %s25
    %p36 = scmp.eq.s32.totalorder %s16, 0
    %p37 = por %p35, %p36
    %p38 = scmp.ne.s32.totalorder %s24, %s25
    %p39 = scmp.eq.s32.totalorder %s17, 1
    %p40 = por %p38, %p39
    %p42 = scmp.ne.s32.totalorder %s25, %s41
    %p43 = scmp.eq.s32.totalorder %s17, 0
    %p44 = por %p42, %p43
    %s46 = sadd.s32 %s45, 1
    %p49 = scmp.eq.s32.totalorder %s11, 1
    %p50 = scmp.ne.s32.totalorder %s45, %s47
    %p51 = scmp.eq.s32.totalorder %s11, 0
    %p52 = por %p50, %p51
    %p53 = scmp.ne.s32.totalorder %s45, %s47
    %p54 = scmp.eq.s32.totalorder %s16, 1
    %p55 = por %p53, %p54
    %p56 = scmp.ne.s32.totalorder %s47, %s48
    %p57 = scmp.eq.s32.totalorder %s16, 0
    %p58 = por %p56, %p57
    %p59 = scmp.ne.s32.totalorder %s47, %s48
    %p60 = scmp.eq.s32.totalorder %s17, 1
    %p61 = por %p59, %p60
    %p63 = scmp.ne.s32.totalorder %s48, %s62
    %p64 = scmp.eq.s32.totalorder %s17, 0
    %p65 = por %p63, %p64
    %s66 = ssub.s32 %s11, %s18
    %p67 = scmp.eq.s32.totalorder %s66, 0
    %s69 = sadd.s32 %s68, 1
    %s70 = scalar_select %p67, %s68, %s69
    %p73 = pneg %p67
    %p74 = scmp.eq.s32.totalorder %s11, 1
    %p75 = por %p73, %p74
    %p76 = scmp.ne.s32.totalorder %s68, %s71
    %p77 = scmp.eq.s32.totalorder %s11, 0
    %p78 = por %p76, %p77
    %p79 = scmp.ne.s32.totalorder %s68, %s71
    %p80 = scmp.eq.s32.totalorder %s16, 1
    %p81 = por %p79, %p80
    %p82 = scmp.ne.s32.totalorder %s71, %s72
    %p83 = scmp.eq.s32.totalorder %s16, 0
    %p84 = por %p82, %p83
    %p85 = scmp.ne.s32.totalorder %s71, %s72
    %p86 = scmp.eq.s32.totalorder %s17, 1
    %p87 = por %p85, %p86
    %p89 = scmp.ne.s32.totalorder %s72, %s88
    %p90 = scmp.eq.s32.totalorder %s17, 0
    %p91 = por %p89, %p90
    %s92 = ssub.s32 %s11, %s18
    %p93 = scmp.eq.s32.totalorder %s92, 0
    %s95 = sadd.s32 %s94, 1
    %s96 = scalar_select %p93, %s94, %s95
    %p99 = pneg %p93
    %p100 = scmp.eq.s32.totalorder %s11, 1
    %p101 = por %p99, %p100
    %p102 = scmp.ne.s32.totalorder %s94, %s97
    %p103 = scmp.eq.s32.totalorder %s11, 0
    %p104 = por %p102, %p103
    %p105 = scmp.ne.s32.totalorder %s94, %s97
    %p106 = scmp.eq.s32.totalorder %s16, 1
    %p107 = por %p105, %p106
    %p108 = scmp.ne.s32.totalorder %s97, %s98
    %p109 = scmp.eq.s32.totalorder %s16, 0
    %p110 = por %p108, %p109
    %p111 = scmp.ne.s32.totalorder %s97, %s98
    %p112 = scmp.eq.s32.totalorder %s17, 1
    %p113 = por %p111, %p112
    %p115 = scmp.ne.s32.totalorder %s98, %s114
    %p116 = scmp.eq.s32.totalorder %s17, 0
    %p117 = por %p115, %p116
    %s118 = ssub.s32 %s11, %s18
    %p119 = scmp.eq.s32.totalorder %s118, 0
    %s121 = sadd.s32 %s120, 1
    %s122 = scalar_select %p119, %s120, %s121
    %p125 = pneg %p119
    %p126 = scmp.eq.s32.totalorder %s11, 1
    %p127 = por %p125, %p126
    %p128 = scmp.ne.s32.totalorder %s120, %s123
    %p129 = scmp.eq.s32.totalorder %s11, 0
    %p130 = por %p128, %p129
    %p131 = scmp.ne.s32.totalorder %s120, %s123
    %p132 = scmp.eq.s32.totalorder %s16, 1
    %p133 = por %p131, %p132
    %p134 = scmp.ne.s32.totalorder %s123, %s124
    %p135 = scmp.eq.s32.totalorder %s16, 0
    %p136 = por %p134, %p135
    %p137 = scmp.ne.s32.totalorder %s123, %s124
    %p138 = scmp.eq.s32.totalorder %s17, 1
    %p139 = por %p137, %p138
    %p141 = scmp.ne.s32.totalorder %s124, %s140
    %p142 = scmp.eq.s32.totalorder %s17, 0
    %p143 = por %p141, %p142
    %p144 = scmp.le.s32.totalorder 1, %s11
    %p145 = scmp.lt.s32.totalorder %s11, 3
    %p146 = pnand %p144, %p145
    %p147 = pneg %p146
    // Predicated region
    $region9: #{conv3x3_forward.3} parent=5 // pred_check
      _
    $region10: #{conv3x3_forward.3} parent=5 // pred_check_branch
      %149 = sbr.rel (%p146) target = $region12
    $region11: #{conv3x3_forward.3} parent=5 // pred_region
      %s150 = ssub.s32 %s11, 1
      // Predicated region
      $region13: #{conv3x3_forward.3} parent=11 // pred_check
        %p151 = pneg %p58
      $region14: #{conv3x3_forward.3} parent=11 // pred_check_branch
        %153 = sbr.rel (%p151) target = $region16
      $region15: #{conv3x3_forward.3} parent=11 // pred_region
        _
      $region16: #{conv3x3_forward.3} parent=11 // pred_fallthru
        _
    $region12: #{conv3x3_forward.3} parent=5 // pred_fallthru
      _
    %p154 = scmp.lt.s32.totalorder %s11, 2
    // Predicated region
    $region17: #{conv3x3_forward.3} parent=5 // pred_check
      %p155 = pneg %p154
    $region18: #{conv3x3_forward.3} parent=5 // pred_check_branch
      %157 = sbr.rel (%p155) target = $region20
    $region19: #{conv3x3_forward.3} parent=5 // pred_region
      // Predicated region
      $region21: #{conv3x3_forward.3} parent=19 // pred_check
        %p158 = pneg %p31
      $region22: #{conv3x3_forward.3} parent=19 // pred_check_branch
        %160 = sbr.rel (%p158) target = $region24
      $region23: #{conv3x3_forward.3} parent=19 // pred_region
        %p161 = scmp.lt.s32.totalorder %s11, 1
        %s162 = scalar_select %p161, %s11, 1
        %s163 = smul.addr %s162, 41
        %s164 = smul.addr %s163, 4
        %s165 = scalar_lea.vmem %s0, %s164
      $region24: #{conv3x3_forward.3} parent=19 // pred_fallthru
        _
    $region20: #{conv3x3_forward.3} parent=5 // pred_fallthru
      _
    %p166 = scmp.le.s32.totalorder 1, %s11
    %p167 = scmp.lt.s32.totalorder %s11, 3
    %p168 = pnand %p166, %p167
    %p169 = pneg %p168
    // Predicated region
    $region25: #{conv3x3_forward.3} parent=5 // pred_check
      _
    $region26: #{conv3x3_forward.3} parent=5 // pred_check_branch
      %171 = sbr.rel (%p168) target = $region28
    $region27: #{conv3x3_forward.3} parent=5 // pred_region
      %s172 = ssub.s32 %s11, 1
      %p173 = scmp.lt.s32.totalorder %s16, 1
      %s174 = scalar_select %p173, %s16, 1
      %s175 = smul.addr %s174, 41
      %s176 = smul.addr %s175, 4
      %s177 = scalar_lea.vmem %s0, %s176
      %p178 = pneg %p37
      %p179 = pneg %p34
      %p180 = pneg %p58
      %p181 = pneg %p55
      %p182 = pneg %p84
      %p183 = pneg %p81
      %p184 = scmp.lt.s32.totalorder %s16, 1
      %s185 = scalar_select %p184, %s16, 1
      %s186 = smul.addr %s185, 41
      %s187 = smul.addr %s186, 4
      %s188 = scalar_lea.vmem %s2, %s187
      %p189 = pneg %p110
      %p190 = pneg %p107
      %p191 = scmp.lt.s32.totalorder %s16, 1
      %s192 = scalar_select %p191, %s16, 1
      %s193 = scalar_lea.vmem %s3, %s192
      %p194 = pneg %p136
      %p195 = pneg %p133
      %p196 = scmp.lt.s32.totalorder %s16, 1
      %s197 = scalar_select %p196, %s16, 1
      %s198 = scalar_lea.vmem %s4, %s197
      %p199 = scmp.lt.s32.totalorder %s16, 1
      %s200 = scalar_select %p199, %s16, 1
      %s201 = smul.addr %s200, 41
      %s202 = smul.addr %s201, 4
      %s203 = scalar_lea.vmem %s0, %s202
      %p204 = scmp.lt.s32.totalorder %s16, 1
      %s205 = scalar_select %p204, %s16, 1
      %s206 = smul.addr %s205, 41
      %s207 = smul.addr %s206, 4
      %s208 = scalar_lea.vmem %s2, %s207
      %p209 = scmp.lt.s32.totalorder %s16, 1
      %s210 = scalar_select %p209, %s16, 1
      %s211 = scalar_lea.vmem %s3, %s210
      %p212 = scmp.lt.s32.totalorder %s16, 1
      %s213 = scalar_select %p212, %s16, 1
      %s214 = scalar_lea.vmem %s4, %s213
      %v216 = vlaneseq
      %v217 = vshrl.u32 %v216, 7
      %v218 = vadd.s32 %v217, 8
      %v219 = vadd.s32 %v217, 16
      %v220 = vadd.s32 %v217, 24
      %v221 = vadd.s32 %v217, 32
      %v222 = vadd.s32 %v217, 40
      %v223 = vadd.s32 %v217, 48
      %v224 = vadd.s32 %v217, 56
      %v225 = vadd.s32 %v217, 64
      %v226 = vadd.s32 %v217, 72
      %v227 = vadd.s32 %v217, 80
      %v228 = vadd.s32 %v217, 88
      %v229 = vadd.s32 %v217, 96
      %v230 = vadd.s32 %v217, 104
      %v231 = vadd.s32 %v217, 112
      %v232 = vadd.s32 %v217, 120
      %v233 = vadd.s32 %v217, 128
      %v234 = vadd.s32 %v217, 136
      %v235 = vadd.s32 %v217, 144
      %v236 = vadd.s32 %v217, 152
      %v237 = vadd.s32 %v217, 160
      %v238 = vadd.s32 %v217, 168
      %v239 = vadd.s32 %v217, 176
      %v240 = vadd.s32 %v217, 184
      %v241 = vadd.s32 %v217, 192
      %v242 = vadd.s32 %v217, 200
      %v243 = vadd.s32 %v217, 208
      %v244 = vadd.s32 %v217, 216
      %v245 = vadd.s32 %v217, 224
      %v246 = vadd.s32 %v217, 232
      %v247 = vadd.s32 %v217, 240
      %v248 = vadd.s32 %v217, 248
      %v249 = vadd.s32 %v217, 256
      %v250 = vadd.s32 %v217, 264
      %v251 = vadd.s32 %v217, 272
      %v252 = vadd.s32 %v217, 280
      %vm253 = vcmp.lt.s32.totalorder %v217, 0
      %v254 = vsub.s32 0, %v217
      %v255 = vsel %vm253, %v254, %v217
      %v256 = vmul.u32.u64.compose %v255, 3817748708
      %v257 = vextract.low.u32 %v256
      %v258 = vextract.high.u32 %v256
      %v259 = vshrl.u32 %v258, 4
      %v260 = vmul.u32 %v259, 18
      %v261 = vsub.s32 %v255, %v260
      %v262 = vsub.s32 0, %v261
      %v263 = vsel %vm253, %v262, %v261
      %vm264 = vcmp.lt.s32.totalorder %v218, 0
      %v265 = vsub.s32 0, %v218
      %v266 = vsel %vm264, %v265, %v218
      %v267 = vmul.u32.u64.compose %v266, 3817748708
      %v268 = vextract.low.u32 %v267
      %v269 = vextract.high.u32 %v267
      %v270 = vshrl.u32 %v269, 4
      %v271 = vmul.u32 %v270, 18
      %v272 = vsub.s32 %v266, %v271
      %v273 = vsub.s32 0, %v272
      %v274 = vsel %vm264, %v273, %v272
      %vm275 = vcmp.lt.s32.totalorder %v219, 0
      %v276 = vsub.s32 0, %v219
      %v277 = vsel %vm275, %v276, %v219
      %v278 = vmul.u32.u64.compose %v277, 3817748708
      %v279 = vextract.low.u32 %v278
      %v280 = vextract.high.u32 %v278
      %v281 = vshrl.u32 %v280, 4
      %v282 = vmul.u32 %v281, 18
      %v283 = vsub.s32 %v277, %v282
      %v284 = vsub.s32 0, %v283
      %v285 = vsel %vm275, %v284, %v283
      %vm286 = vcmp.lt.s32.totalorder %v220, 0
      %v287 = vsub.s32 0, %v220
      %v288 = vsel %vm286, %v287, %v220
      %v289 = vmul.u32.u64.compose %v288, 3817748708
      %v290 = vextract.low.u32 %v289
      %v291 = vextract.high.u32 %v289
      %v292 = vshrl.u32 %v291, 4
      %v293 = vmul.u32 %v292, 18
      %v294 = vsub.s32 %v288, %v293
      %v295 = vsub.s32 0, %v294
      %v296 = vsel %vm286, %v295, %v294
      %vm297 = vcmp.lt.s32.totalorder %v221, 0
      %v298 = vsub.s32 0, %v221
      %v299 = vsel %vm297, %v298, %v221
      %v300 = vmul.u32.u64.compose %v299, 3817748708
      %v301 = vextract.low.u32 %v300
      %v302 = vextract.high.u32 %v300
      %v303 = vshrl.u32 %v302, 4
      %v304 = vmul.u32 %v303, 18
      %v305 = vsub.s32 %v299, %v304
      %v306 = vsub.s32 0, %v305
      %v307 = vsel %vm297, %v306, %v305
      %vm308 = vcmp.lt.s32.totalorder %v222, 0
      %v309 = vsub.s32 0, %v222
      %v310 = vsel %vm308, %v309, %v222
      %v311 = vmul.u32.u64.compose %v310, 3817748708
      %v312 = vextract.low.u32 %v311
      %v313 = vextract.high.u32 %v311
      %v314 = vshrl.u32 %v313, 4
      %v315 = vmul.u32 %v314, 18
      %v316 = vsub.s32 %v310, %v315
      %v317 = vsub.s32 0, %v316
      %v318 = vsel %vm308, %v317, %v316
      %vm319 = vcmp.lt.s32.totalorder %v223, 0
      %v320 = vsub.s32 0, %v223
      %v321 = vsel %vm319, %v320, %v223
      %v322 = vmul.u32.u64.compose %v321, 3817748708
      %v323 = vextract.low.u32 %v322
      %v324 = vextract.high.u32 %v322
      %v325 = vshrl.u32 %v324, 4
      %v326 = vmul.u32 %v325, 18
      %v327 = vsub.s32 %v321, %v326
      %v328 = vsub.s32 0, %v327
      %v329 = vsel %vm319, %v328, %v327
      %vm330 = vcmp.lt.s32.totalorder %v224, 0
      %v331 = vsub.s32 0, %v224
      %v332 = vsel %vm330, %v331, %v224
      %v333 = vmul.u32.u64.compose %v332, 3817748708
      %v334 = vextract.low.u32 %v333
      %v335 = vextract.high.u32 %v333
      %v336 = vshrl.u32 %v335, 4
      %v337 = vmul.u32 %v336, 18
      %v338 = vsub.s32 %v332, %v337
      %v339 = vsub.s32 0, %v338
      %v340 = vsel %vm330, %v339, %v338
      %vm341 = vcmp.lt.s32.totalorder %v225, 0
      %v342 = vsub.s32 0, %v225
      %v343 = vsel %vm341, %v342, %v225
      %v344 = vmul.u32.u64.compose %v343, 3817748708
      %v345 = vextract.low.u32 %v344
      %v346 = vextract.high.u32 %v344
      %v347 = vshrl.u32 %v346, 4
      %v348 = vmul.u32 %v347, 18
      %v349 = vsub.s32 %v343, %v348
      %v350 = vsub.s32 0, %v349
      %v351 = vsel %vm341, %v350, %v349
      %vm352 = vcmp.lt.s32.totalorder %v226, 0
      %v353 = vsub.s32 0, %v226
      %v354 = vsel %vm352, %v353, %v226
      %v355 = vmul.u32.u64.compose %v354, 3817748708
      %v356 = vextract.low.u32 %v355
      %v357 = vextract.high.u32 %v355
      %v358 = vshrl.u32 %v357, 4
      %v359 = vmul.u32 %v358, 18
      %v360 = vsub.s32 %v354, %v359
      %v361 = vsub.s32 0, %v360
      %v362 = vsel %vm352, %v361, %v360
      %vm363 = vcmp.lt.s32.totalorder %v227, 0
      %v364 = vsub.s32 0, %v227
      %v365 = vsel %vm363, %v364, %v227
      %v366 = vmul.u32.u64.compose %v365, 3817748708
      %v367 = vextract.low.u32 %v366
      %v368 = vextract.high.u32 %v366
      %v369 = vshrl.u32 %v368, 4
      %v370 = vmul.u32 %v369, 18
      %v371 = vsub.s32 %v365, %v370
      %v372 = vsub.s32 0, %v371
      %v373 = vsel %vm363, %v372, %v371
      %vm374 = vcmp.lt.s32.totalorder %v228, 0
      %v375 = vsub.s32 0, %v228
      %v376 = vsel %vm374, %v375, %v228
      %v377 = vmul.u32.u64.compose %v376, 3817748708
      %v378 = vextract.low.u32 %v377
      %v379 = vextract.high.u32 %v377
      %v380 = vshrl.u32 %v379, 4
      %v381 = vmul.u32 %v380, 18
      %v382 = vsub.s32 %v376, %v381
      %v383 = vsub.s32 0, %v382
      %v384 = vsel %vm374, %v383, %v382
      %vm385 = vcmp.lt.s32.totalorder %v229, 0
      %v386 = vsub.s32 0, %v229
      %v387 = vsel %vm385, %v386, %v229
      %v388 = vmul.u32.u64.compose %v387, 3817748708
      %v389 = vextract.low.u32 %v388
      %v390 = vextract.high.u32 %v388
      %v391 = vshrl.u32 %v390, 4
      %v392 = vmul.u32 %v391, 18
      %v393 = vsub.s32 %v387, %v392
      %v394 = vsub.s32 0, %v393
      %v395 = vsel %vm385, %v394, %v393
      %vm396 = vcmp.lt.s32.totalorder %v230, 0
      %v397 = vsub.s32 0, %v230
      %v398 = vsel %vm396, %v397, %v230
      %v399 = vmul.u32.u64.compose %v398, 3817748708
      %v400 = vextract.low.u32 %v399
      %v401 = vextract.high.u32 %v399
      %v402 = vshrl.u32 %v401, 4
      %v403 = vmul.u32 %v402, 18
      %v404 = vsub.s32 %v398, %v403
      %v405 = vsub.s32 0, %v404
      %v406 = vsel %vm396, %v405, %v404
      %vm407 = vcmp.lt.s32.totalorder %v231, 0
      %v408 = vsub.s32 0, %v231
      %v409 = vsel %vm407, %v408, %v231
      %v410 = vmul.u32.u64.compose %v409, 3817748708
      %v411 = vextract.low.u32 %v410
      %v412 = vextract.high.u32 %v410
      %v413 = vshrl.u32 %v412, 4
      %v414 = vmul.u32 %v413, 18
      %v415 = vsub.s32 %v409, %v414
      %v416 = vsub.s32 0, %v415
      %v417 = vsel %vm407, %v416, %v415
      %vm418 = vcmp.lt.s32.totalorder %v232, 0
      %v419 = vsub.s32 0, %v232
      %v420 = vsel %vm418, %v419, %v232
      %v421 = vmul.u32.u64.compose %v420, 3817748708
      %v422 = vextract.low.u32 %v421
      %v423 = vextract.high.u32 %v421
      %v424 = vshrl.u32 %v423, 4
      %v425 = vmul.u32 %v424, 18
      %v426 = vsub.s32 %v420, %v425
      %v427 = vsub.s32 0, %v426
      %v428 = vsel %vm418, %v427, %v426
      %vm429 = vcmp.lt.s32.totalorder %v233, 0
      %v430 = vsub.s32 0, %v233
      %v431 = vsel %vm429, %v430, %v233
      %v432 = vmul.u32.u64.compose %v431, 3817748708
      %v433 = vextract.low.u32 %v432
      %v434 = vextract.high.u32 %v432
      %v435 = vshrl.u32 %v434, 4
      %v436 = vmul.u32 %v435, 18
      %v437 = vsub.s32 %v431, %v436
      %v438 = vsub.s32 0, %v437
      %v439 = vsel %vm429, %v438, %v437
      %vm440 = vcmp.lt.s32.totalorder %v234, 0
      %v441 = vsub.s32 0, %v234
      %v442 = vsel %vm440, %v441, %v234
      %v443 = vmul.u32.u64.compose %v442, 3817748708
      %v444 = vextract.low.u32 %v443
      %v445 = vextract.high.u32 %v443
      %v446 = vshrl.u32 %v445, 4
      %v447 = vmul.u32 %v446, 18
      %v448 = vsub.s32 %v442, %v447
      %v449 = vsub.s32 0, %v448
      %v450 = vsel %vm440, %v449, %v448
      %vm451 = vcmp.lt.s32.totalorder %v235, 0
      %v452 = vsub.s32 0, %v235
      %v453 = vsel %vm451, %v452, %v235
      %v454 = vmul.u32.u64.compose %v453, 3817748708
      %v455 = vextract.low.u32 %v454
      %v456 = vextract.high.u32 %v454
      %v457 = vshrl.u32 %v456, 4
      %v458 = vmul.u32 %v457, 18
      %v459 = vsub.s32 %v453, %v458
      %v460 = vsub.s32 0, %v459
      %v461 = vsel %vm451, %v460, %v459
      %vm462 = vcmp.lt.s32.totalorder %v236, 0
      %v463 = vsub.s32 0, %v236
      %v464 = vsel %vm462, %v463, %v236
      %v465 = vmul.u32.u64.compose %v464, 3817748708
      %v466 = vextract.low.u32 %v465
      %v467 = vextract.high.u32 %v465
      %v468 = vshrl.u32 %v467, 4
      %v469 = vmul.u32 %v468, 18
      %v470 = vsub.s32 %v464, %v469
      %v471 = vsub.s32 0, %v470
      %v472 = vsel %vm462, %v471, %v470
      %vm473 = vcmp.lt.s32.totalorder %v237, 0
      %v474 = vsub.s32 0, %v237
      %v475 = vsel %vm473, %v474, %v237
      %v476 = vmul.u32.u64.compose %v475, 3817748708
      %v477 = vextract.low.u32 %v476
      %v478 = vextract.high.u32 %v476
      %v479 = vshrl.u32 %v478, 4
      %v480 = vmul.u32 %v479, 18
      %v481 = vsub.s32 %v475, %v480
      %v482 = vsub.s32 0, %v481
      %v483 = vsel %vm473, %v482, %v481
      %vm484 = vcmp.lt.s32.totalorder %v238, 0
      %v485 = vsub.s32 0, %v238
      %v486 = vsel %vm484, %v485, %v238
      %v487 = vmul.u32.u64.compose %v486, 3817748708
      %v488 = vextract.low.u32 %v487
      %v489 = vextract.high.u32 %v487
      %v490 = vshrl.u32 %v489, 4
      %v491 = vmul.u32 %v490, 18
      %v492 = vsub.s32 %v486, %v491
      %v493 = vsub.s32 0, %v492
      %v494 = vsel %vm484, %v493, %v492
      %vm495 = vcmp.lt.s32.totalorder %v239, 0
      %v496 = vsub.s32 0, %v239
      %v497 = vsel %vm495, %v496, %v239
      %v498 = vmul.u32.u64.compose %v497, 3817748708
      %v499 = vextract.low.u32 %v498
      %v500 = vextract.high.u32 %v498
      %v501 = vshrl.u32 %v500, 4
      %v502 = vmul.u32 %v501, 18
      %v503 = vsub.s32 %v497, %v502
      %v504 = vsub.s32 0, %v503
      %v505 = vsel %vm495, %v504, %v503
      %vm506 = vcmp.lt.s32.totalorder %v240, 0
      %v507 = vsub.s32 0, %v240
      %v508 = vsel %vm506, %v507, %v240
      %v509 = vmul.u32.u64.compose %v508, 3817748708
      %v510 = vextract.low.u32 %v509
      %v511 = vextract.high.u32 %v509
      %v512 = vshrl.u32 %v511, 4
      %v513 = vmul.u32 %v512, 18
      %v514 = vsub.s32 %v508, %v513
      %v515 = vsub.s32 0, %v514
      %v516 = vsel %vm506, %v515, %v514
      %vm517 = vcmp.lt.s32.totalorder %v241, 0
      %v518 = vsub.s32 0, %v241
      %v519 = vsel %vm517, %v518, %v241
      %v520 = vmul.u32.u64.compose %v519, 3817748708
      %v521 = vextract.low.u32 %v520
      %v522 = vextract.high.u32 %v520
      %v523 = vshrl.u32 %v522, 4
      %v524 = vmul.u32 %v523, 18
      %v525 = vsub.s32 %v519, %v524
      %v526 = vsub.s32 0, %v525
      %v527 = vsel %vm517, %v526, %v525
      %vm528 = vcmp.lt.s32.totalorder %v242, 0
      %v529 = vsub.s32 0, %v242
      %v530 = vsel %vm528, %v529, %v242
      %v531 = vmul.u32.u64.compose %v530, 3817748708
      %v532 = vextract.low.u32 %v531
      %v533 = vextract.high.u32 %v531
      %v534 = vshrl.u32 %v533, 4
      %v535 = vmul.u32 %v534, 18
      %v536 = vsub.s32 %v530, %v535
      %v537 = vsub.s32 0, %v536
      %v538 = vsel %vm528, %v537, %v536
      %vm539 = vcmp.lt.s32.totalorder %v243, 0
      %v540 = vsub.s32 0, %v243
      %v541 = vsel %vm539, %v540, %v243
      %v542 = vmul.u32.u64.compose %v541, 3817748708
      %v543 = vextract.low.u32 %v542
      %v544 = vextract.high.u32 %v542
      %v545 = vshrl.u32 %v544, 4
      %v546 = vmul.u32 %v545, 18
      %v547 = vsub.s32 %v541, %v546
      %v548 = vsub.s32 0, %v547
      %v549 = vsel %vm539, %v548, %v547
      %vm550 = vcmp.lt.s32.totalorder %v244, 0
      %v551 = vsub.s32 0, %v244
      %v552 = vsel %vm550, %v551, %v244
      %v553 = vmul.u32.u64.compose %v552, 3817748708
      %v554 = vextract.low.u32 %v553
      %v555 = vextract.high.u32 %v553
      %v556 = vshrl.u32 %v555, 4
      %v557 = vmul.u32 %v556, 18
      %v558 = vsub.s32 %v552, %v557
      %v559 = vsub.s32 0, %v558
      %v560 = vsel %vm550, %v559, %v558
      %vm561 = vcmp.lt.s32.totalorder %v245, 0
      %v562 = vsub.s32 0, %v245
      %v563 = vsel %vm561, %v562, %v245
      %v564 = vmul.u32.u64.compose %v563, 3817748708
      %v565 = vextract.low.u32 %v564
      %v566 = vextract.high.u32 %v564
      %v567 = vshrl.u32 %v566, 4
      %v568 = vmul.u32 %v567, 18
      %v569 = vsub.s32 %v563, %v568
      %v570 = vsub.s32 0, %v569
      %v571 = vsel %vm561, %v570, %v569
      %vm572 = vcmp.lt.s32.totalorder %v246, 0
      %v573 = vsub.s32 0, %v246
      %v574 = vsel %vm572, %v573, %v246
      %v575 = vmul.u32.u64.compose %v574, 3817748708
      %v576 = vextract.low.u32 %v575
      %v577 = vextract.high.u32 %v575
      %v578 = vshrl.u32 %v577, 4
      %v579 = vmul.u32 %v578, 18
      %v580 = vsub.s32 %v574, %v579
      %v581 = vsub.s32 0, %v580
      %v582 = vsel %vm572, %v581, %v580
      %vm583 = vcmp.lt.s32.totalorder %v247, 0
      %v584 = vsub.s32 0, %v247
      %v585 = vsel %vm583, %v584, %v247
      %v586 = vmul.u32.u64.compose %v585, 3817748708
      %v587 = vextract.low.u32 %v586
      %v588 = vextract.high.u32 %v586
      %v589 = vshrl.u32 %v588, 4
      %v590 = vmul.u32 %v589, 18
      %v591 = vsub.s32 %v585, %v590
      %v592 = vsub.s32 0, %v591
      %v593 = vsel %vm583, %v592, %v591
      %vm594 = vcmp.lt.s32.totalorder %v248, 0
      %v595 = vsub.s32 0, %v248
      %v596 = vsel %vm594, %v595, %v248
      %v597 = vmul.u32.u64.compose %v596, 3817748708
      %v598 = vextract.low.u32 %v597
      %v599 = vextract.high.u32 %v597
      %v600 = vshrl.u32 %v599, 4
      %v601 = vmul.u32 %v600, 18
      %v602 = vsub.s32 %v596, %v601
      %v603 = vsub.s32 0, %v602
      %v604 = vsel %vm594, %v603, %v602
      %vm605 = vcmp.lt.s32.totalorder %v249, 0
      %v606 = vsub.s32 0, %v249
      %v607 = vsel %vm605, %v606, %v249
      %v608 = vmul.u32.u64.compose %v607, 3817748708
      %v609 = vextract.low.u32 %v608
      %v610 = vextract.high.u32 %v608
      %v611 = vshrl.u32 %v610, 4
      %v612 = vmul.u32 %v611, 18
      %v613 = vsub.s32 %v607, %v612
      %v614 = vsub.s32 0, %v613
      %v615 = vsel %vm605, %v614, %v613
      %vm616 = vcmp.lt.s32.totalorder %v250, 0
      %v617 = vsub.s32 0, %v250
      %v618 = vsel %vm616, %v617, %v250
      %v619 = vmul.u32.u64.compose %v618, 3817748708
      %v620 = vextract.low.u32 %v619
      %v621 = vextract.high.u32 %v619
      %v622 = vshrl.u32 %v621, 4
      %v623 = vmul.u32 %v622, 18
      %v624 = vsub.s32 %v618, %v623
      %v625 = vsub.s32 0, %v624
      %v626 = vsel %vm616, %v625, %v624
      %vm627 = vcmp.lt.s32.totalorder %v251, 0
      %v628 = vsub.s32 0, %v251
      %v629 = vsel %vm627, %v628, %v251
      %v630 = vmul.u32.u64.compose %v629, 3817748708
      %v631 = vextract.low.u32 %v630
      %v632 = vextract.high.u32 %v630
      %v633 = vshrl.u32 %v632, 4
      %v634 = vmul.u32 %v633, 18
      %v635 = vsub.s32 %v629, %v634
      %v636 = vsub.s32 0, %v635
      %v637 = vsel %vm627, %v636, %v635
      %vm638 = vcmp.lt.s32.totalorder %v252, 0
      %v639 = vsub.s32 0, %v252
      %v640 = vsel %vm638, %v639, %v252
      %v641 = vmul.u32.u64.compose %v640, 3817748708
      %v642 = vextract.low.u32 %v641
      %v643 = vextract.high.u32 %v641
      %v644 = vshrl.u32 %v643, 4
      %v645 = vmul.u32 %v644, 18
      %v646 = vsub.s32 %v640, %v645
      %v647 = vsub.s32 0, %v646
      %v648 = vsel %vm638, %v647, %v646
      %vm649 = vcmp.ne.s32.totalorder %v263, 0
      %vm650 = vcmp.ne.s32.totalorder %v274, 0
      %vm651 = vcmp.ne.s32.totalorder %v285, 0
      %vm652 = vcmp.ne.s32.totalorder %v296, 0
      %vm653 = vcmp.ne.s32.totalorder %v307, 0
      %vm654 = vcmp.ne.s32.totalorder %v318, 0
      %vm655 = vcmp.ne.s32.totalorder %v329, 0
      %vm656 = vcmp.ne.s32.totalorder %v340, 0
      %vm657 = vcmp.ne.s32.totalorder %v351, 0
      %vm658 = vcmp.ne.s32.totalorder %v362, 0
      %vm659 = vcmp.ne.s32.totalorder %v373, 0
      %vm660 = vcmp.ne.s32.totalorder %v384, 0
      %vm661 = vcmp.ne.s32.totalorder %v395, 0
      %vm662 = vcmp.ne.s32.totalorder %v406, 0
      %vm663 = vcmp.ne.s32.totalorder %v417, 0
      %vm664 = vcmp.ne.s32.totalorder %v428, 0
      %vm665 = vcmp.ne.s32.totalorder %v439, 0
      %vm666 = vcmp.ne.s32.totalorder %v450, 0
      %vm667 = vcmp.ne.s32.totalorder %v461, 0
      %vm668 = vcmp.ne.s32.totalorder %v472, 0
      %vm669 = vcmp.ne.s32.totalorder %v483, 0
      %vm670 = vcmp.ne.s32.totalorder %v494, 0
      %vm671 = vcmp.ne.s32.totalorder %v505, 0
      %vm672 = vcmp.ne.s32.totalorder %v516, 0
      %vm673 = vcmp.ne.s32.totalorder %v527, 0
      %vm674 = vcmp.ne.s32.totalorder %v538, 0
      %vm675 = vcmp.ne.s32.totalorder %v549, 0
      %vm676 = vcmp.ne.s32.totalorder %v560, 0
      %vm677 = vcmp.ne.s32.totalorder %v571, 0
      %vm678 = vcmp.ne.s32.totalorder %v582, 0
      %vm679 = vcmp.ne.s32.totalorder %v593, 0
      %vm680 = vcmp.ne.s32.totalorder %v604, 0
      %vm681 = vcmp.ne.s32.totalorder %v615, 0
      %vm682 = vcmp.ne.s32.totalorder %v626, 0
      %vm683 = vcmp.ne.s32.totalorder %v637, 0
      %vm684 = vcmp.ne.s32.totalorder %v648, 0
      %vm685 = vcmp.lt.s32.totalorder %v263, 0
      %vm686 = vcmp.lt.s32.totalorder %v274, 0
      %vm687 = vcmp.lt.s32.totalorder %v285, 0
      %vm688 = vcmp.lt.s32.totalorder %v296, 0
      %vm689 = vcmp.lt.s32.totalorder %v307, 0
      %vm690 = vcmp.lt.s32.totalorder %v318, 0
      %vm691 = vcmp.lt.s32.totalorder %v329, 0
      %vm692 = vcmp.lt.s32.totalorder %v340, 0
      %vm693 = vcmp.lt.s32.totalorder %v351, 0
      %vm694 = vcmp.lt.s32.totalorder %v362, 0
      %vm695 = vcmp.lt.s32.totalorder %v373, 0
      %vm696 = vcmp.lt.s32.totalorder %v384, 0
      %vm697 = vcmp.lt.s32.totalorder %v395, 0
      %vm698 = vcmp.lt.s32.totalorder %v406, 0
      %vm699 = vcmp.lt.s32.totalorder %v417, 0
      %vm700 = vcmp.lt.s32.totalorder %v428, 0
      %vm701 = vcmp.lt.s32.totalorder %v439, 0
      %vm702 = vcmp.lt.s32.totalorder %v450, 0
      %vm703 = vcmp.lt.s32.totalorder %v461, 0
      %vm704 = vcmp.lt.s32.totalorder %v472, 0
      %vm705 = vcmp.lt.s32.totalorder %v483, 0
      %vm706 = vcmp.lt.s32.totalorder %v494, 0
      %vm707 = vcmp.lt.s32.totalorder %v505, 0
      %vm708 = vcmp.lt.s32.totalorder %v516, 0
      %vm709 = vcmp.lt.s32.totalorder %v527, 0
      %vm710 = vcmp.lt.s32.totalorder %v538, 0
      %vm711 = vcmp.lt.s32.totalorder %v549, 0
      %vm712 = vcmp.lt.s32.totalorder %v560, 0
      %vm713 = vcmp.lt.s32.totalorder %v571, 0
      %vm714 = vcmp.lt.s32.totalorder %v582, 0
      %vm715 = vcmp.lt.s32.totalorder %v593, 0
      %vm716 = vcmp.lt.s32.totalorder %v604, 0
      %vm717 = vcmp.lt.s32.totalorder %v615, 0
      %vm718 = vcmp.lt.s32.totalorder %v626, 0
      %vm719 = vcmp.lt.s32.totalorder %v637, 0
      %vm720 = vcmp.lt.s32.totalorder %v648, 0
      %vm721 = vmand %vm685, %vm649
      %vm722 = vmand %vm686, %vm650
      %vm723 = vmand %vm687, %vm651
      %vm724 = vmand %vm688, %vm652
      %vm725 = vmand %vm689, %vm653
      %vm726 = vmand %vm690, %vm654
      %vm727 = vmand %vm691, %vm655
      %vm728 = vmand %vm692, %vm656
      %vm729 = vmand %vm693, %vm657
      %vm730 = vmand %vm694, %vm658
      %vm731 = vmand %vm695, %vm659
      %vm732 = vmand %vm696, %vm660
      %vm733 = vmand %vm697, %vm661
      %vm734 = vmand %vm698, %vm662
      %vm735 = vmand %vm699, %vm663
      %vm736 = vmand %vm700, %vm664
      %vm737 = vmand %vm701, %vm665
      %vm738 = vmand %vm702, %vm666
      %vm739 = vmand %vm703, %vm667
      %vm740 = vmand %vm704, %vm668
      %vm741 = vmand %vm705, %vm669
      %vm742 = vmand %vm706, %vm670
      %vm743 = vmand %vm707, %vm671
      %vm744 = vmand %vm708, %vm672
      %vm745 = vmand %vm709, %vm673
      %vm746 = vmand %vm710, %vm674
      %vm747 = vmand %vm711, %vm675
      %vm748 = vmand %vm712, %vm676
      %vm749 = vmand %vm713, %vm677
      %vm750 = vmand %vm714, %vm678
      %vm751 = vmand %vm715, %vm679
      %vm752 = vmand %vm716, %vm680
      %vm753 = vmand %vm717, %vm681
      %vm754 = vmand %vm718, %vm682
      %vm755 = vmand %vm719, %vm683
      %vm756 = vmand %vm720, %vm684
      %v757 = vadd.s32 %v263, 18
      %v758 = vadd.s32 %v274, 18
      %v759 = vadd.s32 %v285, 18
      %v760 = vadd.s32 %v296, 18
      %v761 = vadd.s32 %v307, 18
      %v762 = vadd.s32 %v318, 18
      %v763 = vadd.s32 %v329, 18
      %v764 = vadd.s32 %v340, 18
      %v765 = vadd.s32 %v351, 18
      %v766 = vadd.s32 %v362, 18
      %v767 = vadd.s32 %v373, 18
      %v768 = vadd.s32 %v384, 18
      %v769 = vadd.s32 %v395, 18
      %v770 = vadd.s32 %v406, 18
      %v771 = vadd.s32 %v417, 18
      %v772 = vadd.s32 %v428, 18
      %v773 = vadd.s32 %v439, 18
      %v774 = vadd.s32 %v450, 18
      %v775 = vadd.s32 %v461, 18
      %v776 = vadd.s32 %v472, 18
      %v777 = vadd.s32 %v483, 18
      %v778 = vadd.s32 %v494, 18
      %v779 = vadd.s32 %v505, 18
      %v780 = vadd.s32 %v516, 18
      %v781 = vadd.s32 %v527, 18
      %v782 = vadd.s32 %v538, 18
      %v783 = vadd.s32 %v549, 18
      %v784 = vadd.s32 %v560, 18
      %v785 = vadd.s32 %v571, 18
      %v786 = vadd.s32 %v582, 18
      %v787 = vadd.s32 %v593, 18
      %v788 = vadd.s32 %v604, 18
      %v789 = vadd.s32 %v615, 18
      %v790 = vadd.s32 %v626, 18
      %v791 = vadd.s32 %v637, 18
      %v792 = vadd.s32 %v648, 18
      %v793 = vsel %vm721, %v757, %v263
      %v794 = vsel %vm722, %v758, %v274
      %v795 = vsel %vm723, %v759, %v285
      %v796 = vsel %vm724, %v760, %v296
      %v797 = vsel %vm725, %v761, %v307
      %v798 = vsel %vm726, %v762, %v318
      %v799 = vsel %vm727, %v763, %v329
      %v800 = vsel %vm728, %v764, %v340
      %v801 = vsel %vm729, %v765, %v351
      %v802 = vsel %vm730, %v766, %v362
      %v803 = vsel %vm731, %v767, %v373
      %v804 = vsel %vm732, %v768, %v384
      %v805 = vsel %vm733, %v769, %v395
      %v806 = vsel %vm734, %v770, %v406
      %v807 = vsel %vm735, %v771, %v417
      %v808 = vsel %vm736, %v772, %v428
      %v809 = vsel %vm737, %v773, %v439
      %v810 = vsel %vm738, %v774, %v450
      %v811 = vsel %vm739, %v775, %v461
      %v812 = vsel %vm740, %v776, %v472
      %v813 = vsel %vm741, %v777, %v483
      %v814 = vsel %vm742, %v778, %v494
      %v815 = vsel %vm743, %v779, %v505
      %v816 = vsel %vm744, %v780, %v516
      %v817 = vsel %vm745, %v781, %v527
      %v818 = vsel %vm746, %v782, %v538
      %v819 = vsel %vm747, %v783, %v549
      %v820 = vsel %vm748, %v784, %v560
      %v821 = vsel %vm749, %v785, %v571
      %v822 = vsel %vm750, %v786, %v582
      %v823 = vsel %vm751, %v787, %v593
      %v824 = vsel %vm752, %v788, %v604
      %v825 = vsel %vm753, %v789, %v615
      %v826 = vsel %vm754, %v790, %v626
      %v827 = vsel %vm755, %v791, %v637
      %v828 = vsel %vm756, %v792, %v648
      %vm829 = vcmp.lt.s32.totalorder %v793, 16
      %vm830 = vcmp.lt.s32.totalorder %v794, 16
      %vm831 = vcmp.lt.s32.totalorder %v795, 16
      %vm832 = vcmp.lt.s32.totalorder %v796, 16
      %vm833 = vcmp.lt.s32.totalorder %v797, 16
      %vm834 = vcmp.lt.s32.totalorder %v798, 16
      %vm835 = vcmp.lt.s32.totalorder %v799, 16
      %vm836 = vcmp.lt.s32.totalorder %v800, 16
      %vm837 = vcmp.lt.s32.totalorder %v801, 16
      %vm838 = vcmp.lt.s32.totalorder %v802, 16
      %vm839 = vcmp.lt.s32.totalorder %v803, 16
      %vm840 = vcmp.lt.s32.totalorder %v804, 16
      %vm841 = vcmp.lt.s32.totalorder %v805, 16
      %vm842 = vcmp.lt.s32.totalorder %v806, 16
      %vm843 = vcmp.lt.s32.totalorder %v807, 16
      %vm844 = vcmp.lt.s32.totalorder %v808, 16
      %vm845 = vcmp.lt.s32.totalorder %v809, 16
      %vm846 = vcmp.lt.s32.totalorder %v810, 16
      %vm847 = vcmp.lt.s32.totalorder %v811, 16
      %vm848 = vcmp.lt.s32.totalorder %v812, 16
      %vm849 = vcmp.lt.s32.totalorder %v813, 16
      %vm850 = vcmp.lt.s32.totalorder %v814, 16
      %vm851 = vcmp.lt.s32.totalorder %v815, 16
      %vm852 = vcmp.lt.s32.totalorder %v816, 16
      %vm853 = vcmp.lt.s32.totalorder %v817, 16
      %vm854 = vcmp.lt.s32.totalorder %v818, 16
      %vm855 = vcmp.lt.s32.totalorder %v819, 16
      %vm856 = vcmp.lt.s32.totalorder %v820, 16
      %vm857 = vcmp.lt.s32.totalorder %v821, 16
      %vm858 = vcmp.lt.s32.totalorder %v822, 16
      %vm859 = vcmp.lt.s32.totalorder %v823, 16
      %vm860 = vcmp.lt.s32.totalorder %v824, 16
      %vm861 = vcmp.lt.s32.totalorder %v825, 16
      %vm862 = vcmp.lt.s32.totalorder %v826, 16
      %vm863 = vcmp.lt.s32.totalorder %v827, 16
      %vm864 = vcmp.lt.s32.totalorder %v828, 16
      %v865 = vld [vmem:[%s203] sm:$0xf]
      %v866 = vld [vmem:[%s203 + $0x4] sm:$0xf]
      %v867 = vld [vmem:[%s203 + $0x8] sm:$0xf]
      %v868 = vld [vmem:[%s203 + $0xc] sm:$0xf]
      %v869 = vld [vmem:[%s203 + $0x10] sm:$0xf]
      %v870 = vld [vmem:[%s203 + $0x14] sm:$0xf]
      %v871 = vld [vmem:[%s203 + $0x18] sm:$0xf]
      %v872 = vld [vmem:[%s203 + $0x1c] sm:$0xf]
      %v873 = vld [vmem:[%s203 + $0x20] sm:$0xf]
      %v874 = vld [vmem:[%s203 + $0x24] sm:$0xf]
      %v875 = vld [vmem:[%s203 + $0x28] sm:$0xf]
      %v876 = vld [vmem:[%s203 + $0x2c] sm:$0xf]
      %v877 = vld [vmem:[%s203 + $0x30] sm:$0xf]
      %v878 = vld [vmem:[%s203 + $0x34] sm:$0xf]
      %v879 = vld [vmem:[%s203 + $0x38] sm:$0xf]
      %v880 = vld [vmem:[%s203 + $0x3c] sm:$0xf]
      %v881 = vld [vmem:[%s203 + $0x40] sm:$0xf]
      %v882 = vld [vmem:[%s203 + $0x44] sm:$0xf]
      %v883 = vld [vmem:[%s203 + $0x48] sm:$0xf]
      %v884 = vld [vmem:[%s203 + $0x4c] sm:$0xf]
      %v885 = vld [vmem:[%s203 + $0x50] sm:$0xf]
      %v886 = vld [vmem:[%s203 + $0x54] sm:$0xf]
      %v887 = vld [vmem:[%s203 + $0x58] sm:$0xf]
      %v888 = vld [vmem:[%s203 + $0x5c] sm:$0xf]
      %v889 = vld [vmem:[%s203 + $0x60] sm:$0xf]
      %v890 = vld [vmem:[%s203 + $0x64] sm:$0xf]
      %v891 = vld [vmem:[%s203 + $0x68] sm:$0xf]
      %v892 = vld [vmem:[%s203 + $0x6c] sm:$0xf]
      %v893 = vld [vmem:[%s203 + $0x70] sm:$0xf]
      %v894 = vld [vmem:[%s203 + $0x74] sm:$0xf]
      %v895 = vld [vmem:[%s203 + $0x78] sm:$0xf]
      %v896 = vld [vmem:[%s203 + $0x7c] sm:$0xf]
      %v897 = vld [vmem:[%s203 + $0x80] sm:$0xf]
      %v898 = vld [vmem:[%s203 + $0x84] sm:$0xf]
      %v899 = vld [vmem:[%s203 + $0x88] sm:$0xf]
      %v900 = vld [vmem:[%s203 + $0x8c] sm:$0xf]
      %v901 = vld [vmem:[%s1] sm:$0x3]
      %v902 = vld [vmem:[%s203 + $0x90] sm:$0x1]
      %s903 = scalar_lea.vmem %s1, 2
      %v904 = vld [vmem:[%s903] sm:$0x3]
      %v942 = vunpack.c.l.b16 %v865
      %v943 = vunpack.c.l.b16 %v866
      %v944 = vunpack.c.l.b16 %v867
      %v945 = vunpack.c.l.b16 %v868
      %v946 = vunpack.c.l.b16 %v869
      %v947 = vunpack.c.l.b16 %v870
      %v948 = vunpack.c.l.b16 %v871
      %v949 = vunpack.c.l.b16 %v872
      %v950 = vunpack.c.l.b16 %v873
      %v951 = vunpack.c.l.b16 %v874
      %v952 = vunpack.c.l.b16 %v875
      %v953 = vunpack.c.l.b16 %v876
      %v954 = vunpack.c.l.b16 %v877
      %v955 = vunpack.c.l.b16 %v878
      %v956 = vunpack.c.l.b16 %v879
      %v957 = vunpack.c.l.b16 %v880
      %v958 = vunpack.c.l.b16 %v881
      %v959 = vunpack.c.l.b16 %v882
      %v960 = vunpack.c.l.b16 %v883
      %v961 = vunpack.c.l.b16 %v884
      %v962 = vunpack.c.l.b16 %v885
      %v963 = vunpack.c.l.b16 %v886
      %v964 = vunpack.c.l.b16 %v887
      %v965 = vunpack.c.l.b16 %v888
      %v966 = vunpack.c.l.b16 %v889
      %v967 = vunpack.c.l.b16 %v890
      %v968 = vunpack.c.l.b16 %v891
      %v969 = vunpack.c.l.b16 %v892
      %v970 = vunpack.c.l.b16 %v893
      %v971 = vunpack.c.l.b16 %v894
      %v972 = vunpack.c.l.b16 %v895
      %v973 = vunpack.c.l.b16 %v896
      %v974 = vunpack.c.l.b16 %v897
      %v975 = vunpack.c.l.b16 %v898
      %v976 = vunpack.c.l.b16 %v899
      %v977 = vunpack.c.l.b16 %v900
      %v978 = vunpack.c.l.b16 %v902
      %v979 = vpack.c.b16 %v943, %v942
      %v980 = vpack.c.b16 %v945, %v944
      %v981 = vpack.c.b16 %v947, %v946
      %v982 = vpack.c.b16 %v949, %v948
      %v983 = vpack.c.b16 %v951, %v950
      %v984 = vpack.c.b16 %v953, %v952
      %v985 = vpack.c.b16 %v955, %v954
      %v986 = vpack.c.b16 %v957, %v956
      %v987 = vpack.c.b16 %v959, %v958
      %v988 = vpack.c.b16 %v961, %v960
      %v989 = vpack.c.b16 %v963, %v962
      %v990 = vpack.c.b16 %v965, %v964
      %v991 = vpack.c.b16 %v967, %v966
      %v992 = vpack.c.b16 %v969, %v968
      %v993 = vpack.c.b16 %v971, %v970
      %v994 = vpack.c.b16 %v973, %v972
      %v995 = vpack.c.b16 %v975, %v974
      %v996 = vpack.c.b16 %v977, %v976
      %v997 = vpack.c.b16 %v978, %v978
      %vm998 = vsmask.f32 7424
      %v1000 = vshrl.u32 %v979, 16
      %v1002 = vshll.u32 %v979, 16
      %v1004 = vrot.slane %v1002, 1
      %v1005 = vor.u32 %v1000, %v1004
      %v1007 = vshll.u32 %v980, 16
      %v1009 = vrot.slane %v1007, 1
      %v1010 = vsel %vm998, %v1005, %v1009
      %v1011 = vshrl.u32 %v980, 16
      %v1013 = vor.u32 %v1011, %v1009
      %v1015 = vshll.u32 %v981, 16
      %v1017 = vrot.slane %v1015, 1
      %v1018 = vsel %vm998, %v1013, %v1017
      %v1019 = vshrl.u32 %v981, 16
      %v1021 = vor.u32 %v1019, %v1017
      %v1023 = vshll.u32 %v982, 16
      %v1025 = vrot.slane %v1023, 1
      %v1026 = vsel %vm998, %v1021, %v1025
      %v1027 = vshrl.u32 %v982, 16
      %v1029 = vor.u32 %v1027, %v1025
      %v1031 = vshll.u32 %v983, 16
      %v1033 = vrot.slane %v1031, 1
      %v1034 = vsel %vm998, %v1029, %v1033
      %v1035 = vshrl.u32 %v983, 16
      %v1037 = vor.u32 %v1035, %v1033
      %v1039 = vshll.u32 %v984, 16
      %v1041 = vrot.slane %v1039, 1
      %v1042 = vsel %vm998, %v1037, %v1041
      %v1043 = vshrl.u32 %v984, 16
      %v1045 = vor.u32 %v1043, %v1041
      %v1047 = vshll.u32 %v985, 16
      %v1049 = vrot.slane %v1047, 1
      %v1050 = vsel %vm998, %v1045, %v1049
      %v1051 = vshrl.u32 %v985, 16
      %v1053 = vor.u32 %v1051, %v1049
      %v1055 = vshll.u32 %v986, 16
      %v1057 = vrot.slane %v1055, 1
      %v1058 = vsel %vm998, %v1053, %v1057
      %v1059 = vshrl.u32 %v986, 16
      %v1061 = vor.u32 %v1059, %v1057
      %v1063 = vshll.u32 %v987, 16
      %v1065 = vrot.slane %v1063, 1
      %v1066 = vsel %vm998, %v1061, %v1065
      %v1067 = vshrl.u32 %v987, 16
      %v1069 = vor.u32 %v1067, %v1065
      %v1071 = vshll.u32 %v988, 16
      %v1073 = vrot.slane %v1071, 1
      %v1074 = vsel %vm998, %v1069, %v1073
      %v1075 = vshrl.u32 %v988, 16
      %v1077 = vor.u32 %v1075, %v1073
      %v1079 = vshll.u32 %v989, 16
      %v1081 = vrot.slane %v1079, 1
      %v1082 = vsel %vm998, %v1077, %v1081
      %v1083 = vshrl.u32 %v989, 16
      %v1085 = vor.u32 %v1083, %v1081
      %v1087 = vshll.u32 %v990, 16
      %v1089 = vrot.slane %v1087, 1
      %v1090 = vsel %vm998, %v1085, %v1089
      %v1091 = vshrl.u32 %v990, 16
      %v1093 = vor.u32 %v1091, %v1089
      %v1095 = vshll.u32 %v991, 16
      %v1097 = vrot.slane %v1095, 1
      %v1098 = vsel %vm998, %v1093, %v1097
      %v1099 = vshrl.u32 %v991, 16
      %v1101 = vor.u32 %v1099, %v1097
      %v1103 = vshll.u32 %v992, 16
      %v1105 = vrot.slane %v1103, 1
      %v1106 = vsel %vm998, %v1101, %v1105
      %v1107 = vshrl.u32 %v992, 16
      %v1109 = vor.u32 %v1107, %v1105
      %v1111 = vshll.u32 %v993, 16
      %v1113 = vrot.slane %v1111, 1
      %v1114 = vsel %vm998, %v1109, %v1113
      %v1115 = vshrl.u32 %v993, 16
      %v1117 = vor.u32 %v1115, %v1113
      %v1119 = vshll.u32 %v994, 16
      %v1121 = vrot.slane %v1119, 1
      %v1122 = vsel %vm998, %v1117, %v1121
      %v1123 = vshrl.u32 %v994, 16
      %v1125 = vor.u32 %v1123, %v1121
      %v1127 = vshll.u32 %v995, 16
      %v1129 = vrot.slane %v1127, 1
      %v1130 = vsel %vm998, %v1125, %v1129
      %v1131 = vshrl.u32 %v995, 16
      %v1133 = vor.u32 %v1131, %v1129
      %v1135 = vshll.u32 %v996, 16
      %v1137 = vrot.slane %v1135, 1
      %v1138 = vsel %vm998, %v1133, %v1137
      %v1139 = vshrl.u32 %v996, 16
      %v1141 = vor.u32 %v1139, %v1137
      %v1143 = vshll.u32 %v997, 16
      %v1145 = vrot.slane %v1143, 1
      %v1146 = vsel %vm998, %v1141, %v1145
      %vm1147 = vcmask 31744
      %v1149 = vsel %vm1147, %v1010, 0
      %v1152 = vsel %vm1147, %v1018, 0
      %v1155 = vsel %vm1147, %v1026, 0
      %v1158 = vsel %vm1147, %v1034, 0
      %v1161 = vsel %vm1147, %v1042, 0
      %v1164 = vsel %vm1147, %v1050, 0
      %v1167 = vsel %vm1147, %v1058, 0
      %v1170 = vsel %vm1147, %v1066, 0
      %v1173 = vsel %vm1147, %v1074, 0
      %v1176 = vsel %vm1147, %v1082, 0
      %v1179 = vsel %vm1147, %v1090, 0
      %v1182 = vsel %vm1147, %v1098, 0
      %v1185 = vsel %vm1147, %v1106, 0
      %v1188 = vsel %vm1147, %v1114, 0
      %v1191 = vsel %vm1147, %v1122, 0
      %v1194 = vsel %vm1147, %v1130, 0
      %v1197 = vsel %vm1147, %v1138, 0
      %v1200 = vsel %vm1147, %v1146, 0
      %vm1202 = vcmask 1041408
      %v1204 = vsel %vm1202, %v904, 0
      %1206 = vmatprep.subr.bf16.mxu0 0
      %1207 = vmatpush1.bf16.msra.mxu0 0
      %1208 = vmatprep.subr.bf16.mxu0 0
      %1209 = vmatpush1.bf16.msra.mxu0 0
      %1210 = vmatprep.subr.bf16.mxu0 0
      %1211 = vmatpush1.bf16.msra.mxu0 0
      %1212 = vmatprep.subr.bf16.mxu0 0
      %1213 = vmatpush1.bf16.msra.mxu0 0
      %1214 = vmatprep.subr.bf16.mxu0 0
      %1215 = vmatpush1.bf16.msra.mxu0 0
      %1216 = vmatprep.subr.bf16.mxu0 0
      %1217 = vmatpush1.bf16.msra.mxu0 0
      %1218 = vmatprep.subr.bf16.mxu0 0
      %1219 = vmatpush1.bf16.msra.mxu0 0
      %1220 = vmatprep.subr.bf16.mxu0 0
      %1221 = vmatpush1.bf16.msra.mxu0 %v1204
      %1222 = vmatprep.subr.bf16.mxu0 0
      %1223 = vmatpush2.bf16.msra.mxu0 0
      %1224 = vmatprep.subr.bf16.mxu0 0
      %1225 = vmatpush2.bf16.msra.mxu0 0
      %1226 = vmatprep.subr.bf16.mxu0 0
      %1227 = vmatpush2.bf16.msra.mxu0 0
      %1228 = vmatprep.subr.bf16.mxu0 0
      %1229 = vmatpush2.bf16.msra.mxu0 0
      %1230 = vmatprep.subr.bf16.mxu0 0
      %1231 = vmatpush2.bf16.msra.mxu0 0
      %1232 = vmatprep.subr.bf16.mxu0 0
      %1233 = vmatpush2.bf16.msra.mxu0 0
      %1234 = vmatprep.subr.bf16.mxu0 0
      %1235 = vmatpush2.bf16.msra.mxu0 0
      %1236 = vmatprep.subr.bf16.mxu0 0
      %1237 = vmatpush2.bf16.msra.mxu0 0
      %1238 = vmatprep.mubr.bf16.mxu0 0
      %1239 = vmatmul.mubr.bf16.gmra.mxu0 %v1149
      %v1240 = vpop.f32.mrf.mxu0
      %v1241 = vadd.f32 0.0, %v1240
      %v1242 = vpop.f32.mrf.mxu0
      %v1243 = vpop.f32.mrf.mxu0
      %v1244 = vadd.f32 0.0, %v1243
      %v1245 = vpop.f32.mrf.mxu0
      %1246 = vmatprep.mubr.bf16.mxu0 0
      %1247 = vmatmul.mubr.bf16.gmra.mxu0 %v1152
      %v1248 = vpop.f32.mrf.mxu0
      %v1249 = vadd.f32 0.0, %v1248
      %v1250 = vpop.f32.mrf.mxu0
      %v1251 = vpop.f32.mrf.mxu0
      %v1252 = vadd.f32 0.0, %v1251
      %v1253 = vpop.f32.mrf.mxu0
      %1254 = vmatprep.mubr.bf16.mxu0 0
      %1255 = vmatmul.mubr.bf16.gmra.mxu0 %v1155
      %v1256 = vpop.f32.mrf.mxu0
      %v1257 = vadd.f32 0.0, %v1256
      %v1258 = vpop.f32.mrf.mxu0
      %v1259 = vpop.f32.mrf.mxu0
      %v1260 = vadd.f32 0.0, %v1259
      %v1261 = vpop.f32.mrf.mxu0
      %1262 = vmatprep.mubr.bf16.mxu0 0
      %1263 = vmatmul.mubr.bf16.gmra.mxu0 %v1158
      %v1264 = vpop.f32.mrf.mxu0
      %v1265 = vadd.f32 0.0, %v1264
      %v1266 = vpop.f32.mrf.mxu0
      %v1267 = vpop.f32.mrf.mxu0
      %v1268 = vadd.f32 0.0, %v1267
      %v1269 = vpop.f32.mrf.mxu0
      %1270 = vmatprep.mubr.bf16.mxu0 0
      %1271 = vmatmul.mubr.bf16.gmra.mxu0 %v1161
      %v1272 = vpop.f32.mrf.mxu0
      %v1273 = vadd.f32 0.0, %v1272
      %v1274 = vpop.f32.mrf.mxu0
      %v1275 = vpop.f32.mrf.mxu0
      %v1276 = vadd.f32 0.0, %v1275
      %v1277 = vpop.f32.mrf.mxu0
      %1278 = vmatprep.mubr.bf16.mxu0 0
      %1279 = vmatmul.mubr.bf16.gmra.mxu0 %v1164
      %v1280 = vpop.f32.mrf.mxu0
      %v1281 = vadd.f32 0.0, %v1280
      %v1282 = vpop.f32.mrf.mxu0
      %v1283 = vpop.f32.mrf.mxu0
      %v1284 = vadd.f32 0.0, %v1283
      %v1285 = vpop.f32.mrf.mxu0
      %1286 = vmatprep.mubr.bf16.mxu0 0
      %1287 = vmatmul.mubr.bf16.gmra.mxu0 %v1167
      %v1288 = vpop.f32.mrf.mxu0
      %v1289 = vadd.f32 0.0, %v1288
      %v1290 = vpop.f32.mrf.mxu0
      %v1291 = vpop.f32.mrf.mxu0
      %v1292 = vadd.f32 0.0, %v1291
      %v1293 = vpop.f32.mrf.mxu0
      %1294 = vmatprep.mubr.bf16.mxu0 0
      %1295 = vmatmul.mubr.bf16.gmra.mxu0 %v1170
      %v1296 = vpop.f32.mrf.mxu0
      %v1297 = vadd.f32 0.0, %v1296
      %v1298 = vpop.f32.mrf.mxu0
      %v1299 = vpop.f32.mrf.mxu0
      %v1300 = vadd.f32 0.0, %v1299
      %v1301 = vpop.f32.mrf.mxu0
      %1302 = vmatprep.mubr.bf16.mxu0 0
      %1303 = vmatmul.mubr.bf16.gmra.mxu0 %v1173
      %v1304 = vpop.f32.mrf.mxu0
      %v1305 = vadd.f32 0.0, %v1304
      %v1306 = vpop.f32.mrf.mxu0
      %v1307 = vpop.f32.mrf.mxu0
      %v1308 = vadd.f32 0.0, %v1307
      %v1309 = vpop.f32.mrf.mxu0
      %1310 = vmatprep.mubr.bf16.mxu0 0
      %1311 = vmatmul.mubr.bf16.gmra.mxu0 %v1176
      %v1312 = vpop.f32.mrf.mxu0
      %v1313 = vadd.f32 0.0, %v1312
      %v1314 = vpop.f32.mrf.mxu0
      %v1315 = vpop.f32.mrf.mxu0
      %v1316 = vadd.f32 0.0, %v1315
      %v1317 = vpop.f32.mrf.mxu0
      %1318 = vmatprep.mubr.bf16.mxu0 0
      %1319 = vmatmul.mubr.bf16.gmra.mxu0 %v1179
      %v1320 = vpop.f32.mrf.mxu0
      %v1321 = vadd.f32 0.0, %v1320
      %v1322 = vpop.f32.mrf.mxu0
      %v1323 = vpop.f32.mrf.mxu0
      %v1324 = vadd.f32 0.0, %v1323
      %v1325 = vpop.f32.mrf.mxu0
      %1326 = vmatprep.mubr.bf16.mxu0 0
      %1327 = vmatmul.mubr.bf16.gmra.mxu0 %v1182
      %v1328 = vpop.f32.mrf.mxu0
      %v1329 = vadd.f32 0.0, %v1328
      %v1330 = vpop.f32.mrf.mxu0
      %v1331 = vpop.f32.mrf.mxu0
      %v1332 = vadd.f32 0.0, %v1331
      %v1333 = vpop.f32.mrf.mxu0
      %1334 = vmatprep.mubr.bf16.mxu0 0
      %1335 = vmatmul.mubr.bf16.gmra.mxu0 %v1185
      %v1336 = vpop.f32.mrf.mxu0
      %v1337 = vadd.f32 0.0, %v1336
      %v1338 = vpop.f32.mrf.mxu0
      %v1339 = vpop.f32.mrf.mxu0
      %v1340 = vadd.f32 0.0, %v1339
      %v1341 = vpop.f32.mrf.mxu0
      %1342 = vmatprep.mubr.bf16.mxu0 0
      %1343 = vmatmul.mubr.bf16.gmra.mxu0 %v1188
      %v1344 = vpop.f32.mrf.mxu0
      %v1345 = vadd.f32 0.0, %v1344
      %v1346 = vpop.f32.mrf.mxu0
      %v1347 = vpop.f32.mrf.mxu0
      %v1348 = vadd.f32 0.0, %v1347
      %v1349 = vpop.f32.mrf.mxu0
      %1350 = vmatprep.mubr.bf16.mxu0 0
      %1351 = vmatmul.mubr.bf16.gmra.mxu0 %v1191
      %v1352 = vpop.f32.mrf.mxu0
      %v1353 = vadd.f32 0.0, %v1352
      %v1354 = vpop.f32.mrf.mxu0
      %v1355 = vpop.f32.mrf.mxu0
      %v1356 = vadd.f32 0.0, %v1355
      %v1357 = vpop.f32.mrf.mxu0
      %1358 = vmatprep.mubr.bf16.mxu0 0
      %1359 = vmatmul.mubr.bf16.gmra.mxu0 %v1194
      %v1360 = vpop.f32.mrf.mxu0
      %v1361 = vadd.f32 0.0, %v1360
      %v1362 = vpop.f32.mrf.mxu0
      %v1363 = vpop.f32.mrf.mxu0
      %v1364 = vadd.f32 0.0, %v1363
      %v1365 = vpop.f32.mrf.mxu0
      %1366 = vmatprep.mubr.bf16.mxu0 0
      %1367 = vmatmul.mubr.bf16.gmra.mxu0 %v1197
      %v1368 = vpop.f32.mrf.mxu0
      %v1369 = vadd.f32 0.0, %v1368
      %v1370 = vpop.f32.mrf.mxu0
      %v1371 = vpop.f32.mrf.mxu0
      %v1372 = vadd.f32 0.0, %v1371
      %v1373 = vpop.f32.mrf.mxu0
      %1374 = vmatprep.mubr.bf16.mxu0 0
      %1375 = vmatmul.mubr.bf16.gmra.mxu0 %v1200
      %v1376 = vpop.f32.mrf.mxu0
      %v1377 = vadd.f32 0.0, %v1376
      %v1378 = vpop.f32.mrf.mxu0
      %v1379 = vpop.f32.mrf.mxu0
      %v1380 = vadd.f32 0.0, %v1379
      %v1381 = vpop.f32.mrf.mxu0
      %1382 = vdwg.mxu0
      %v1383 = vsel %vm1147, %v979, 0
      %v1385 = vsel %vm1147, %v980, 0
      %v1387 = vsel %vm1147, %v981, 0
      %v1389 = vsel %vm1147, %v982, 0
      %v1391 = vsel %vm1147, %v983, 0
      %v1393 = vsel %vm1147, %v984, 0
      %v1395 = vsel %vm1147, %v985, 0
      %v1397 = vsel %vm1147, %v986, 0
      %v1399 = vsel %vm1147, %v987, 0
      %v1401 = vsel %vm1147, %v988, 0
      %v1403 = vsel %vm1147, %v989, 0
      %v1405 = vsel %vm1147, %v990, 0
      %v1407 = vsel %vm1147, %v991, 0
      %v1409 = vsel %vm1147, %v992, 0
      %v1411 = vsel %vm1147, %v993, 0
      %v1413 = vsel %vm1147, %v994, 0
      %v1415 = vsel %vm1147, %v995, 0
      %v1417 = vsel %vm1147, %v996, 0
      %v1420 = vsel %vm1202, %v901, 0
      %1422 = vmatprep.subr.bf16.mxu0 0
      %1423 = vmatpush1.bf16.msra.mxu0 0
      %1424 = vmatprep.subr.bf16.mxu0 0
      %1425 = vmatpush1.bf16.msra.mxu0 0
      %1426 = vmatprep.subr.bf16.mxu0 0
      %1427 = vmatpush1.bf16.msra.mxu0 0
      %1428 = vmatprep.subr.bf16.mxu0 0
      %1429 = vmatpush1.bf16.msra.mxu0 0
      %1430 = vmatprep.subr.bf16.mxu0 0
      %1431 = vmatpush1.bf16.msra.mxu0 0
      %1432 = vmatprep.subr.bf16.mxu0 0
      %1433 = vmatpush1.bf16.msra.mxu0 0
      %1434 = vmatprep.subr.bf16.mxu0 0
      %1435 = vmatpush1.bf16.msra.mxu0 0
      %1436 = vmatprep.subr.bf16.mxu0 0
      %1437 = vmatpush1.bf16.msra.mxu0 %v1420
      %1438 = vmatprep.subr.bf16.mxu0 0
      %1439 = vmatpush2.bf16.msra.mxu0 0
      %1440 = vmatprep.subr.bf16.mxu0 0
      %1441 = vmatpush2.bf16.msra.mxu0 0
      %1442 = vmatprep.subr.bf16.mxu0 0
      %1443 = vmatpush2.bf16.msra.mxu0 0
      %1444 = vmatprep.subr.bf16.mxu0 0
      %1445 = vmatpush2.bf16.msra.mxu0 0
      %1446 = vmatprep.subr.bf16.mxu0 0
      %1447 = vmatpush2.bf16.msra.mxu0 0
      %1448 = vmatprep.subr.bf16.mxu0 0
      %1449 = vmatpush2.bf16.msra.mxu0 0
      %1450 = vmatprep.subr.bf16.mxu0 0
      %1451 = vmatpush2.bf16.msra.mxu0 0
      %1452 = vmatprep.subr.bf16.mxu0 0
      %1453 = vmatpush2.bf16.msra.mxu0 0
      %1454 = vmatprep.mubr.bf16.mxu0 0
      %1455 = vmatmul.mubr.bf16.gmra.mxu0 %v1383
      %v1456 = vpop.f32.mrf.mxu0
      %v1457 = vadd.f32 %v1241, %v1456
      %v1458 = vpop.f32.mrf.mxu0
      %v1459 = vpop.f32.mrf.mxu0
      %v1460 = vadd.f32 %v1244, %v1459
      %v1461 = vpop.f32.mrf.mxu0
      %1462 = vmatprep.mubr.bf16.mxu0 0
      %1463 = vmatmul.mubr.bf16.gmra.mxu0 %v1385
      %v1464 = vpop.f32.mrf.mxu0
      %v1465 = vadd.f32 %v1249, %v1464
      %v1466 = vpop.f32.mrf.mxu0
      %v1467 = vpop.f32.mrf.mxu0
      %v1468 = vadd.f32 %v1252, %v1467
      %v1469 = vpop.f32.mrf.mxu0
      %1470 = vmatprep.mubr.bf16.mxu0 0
      %1471 = vmatmul.mubr.bf16.gmra.mxu0 %v1387
      %v1472 = vpop.f32.mrf.mxu0
      %v1473 = vadd.f32 %v1257, %v1472
      %v1474 = vpop.f32.mrf.mxu0
      %v1475 = vpop.f32.mrf.mxu0
      %v1476 = vadd.f32 %v1260, %v1475
      %v1477 = vpop.f32.mrf.mxu0
      %1478 = vmatprep.mubr.bf16.mxu0 0
      %1479 = vmatmul.mubr.bf16.gmra.mxu0 %v1389
      %v1480 = vpop.f32.mrf.mxu0
      %v1481 = vadd.f32 %v1265, %v1480
      %v1482 = vpop.f32.mrf.mxu0
      %v1483 = vpop.f32.mrf.mxu0
      %v1484 = vadd.f32 %v1268, %v1483
      %v1485 = vpop.f32.mrf.mxu0
      %1486 = vmatprep.mubr.bf16.mxu0 0
      %1487 = vmatmul.mubr.bf16.gmra.mxu0 %v1391
      %v1488 = vpop.f32.mrf.mxu0
      %v1489 = vadd.f32 %v1273, %v1488
      %v1490 = vpop.f32.mrf.mxu0
      %v1491 = vpop.f32.mrf.mxu0
      %v1492 = vadd.f32 %v1276, %v1491
      %v1493 = vpop.f32.mrf.mxu0
      %1494 = vmatprep.mubr.bf16.mxu0 0
      %1495 = vmatmul.mubr.bf16.gmra.mxu0 %v1393
      %v1496 = vpop.f32.mrf.mxu0
      %v1497 = vadd.f32 %v1281, %v1496
      %v1498 = vpop.f32.mrf.mxu0
      %v1499 = vpop.f32.mrf.mxu0
      %v1500 = vadd.f32 %v1284, %v1499
      %v1501 = vpop.f32.mrf.mxu0
      %1502 = vmatprep.mubr.bf16.mxu0 0
      %1503 = vmatmul.mubr.bf16.gmra.mxu0 %v1395
      %v1504 = vpop.f32.mrf.mxu0
      %v1505 = vadd.f32 %v1289, %v1504
      %v1506 = vpop.f32.mrf.mxu0
      %v1507 = vpop.f32.mrf.mxu0
      %v1508 = vadd.f32 %v1292, %v1507
      %v1509 = vpop.f32.mrf.mxu0
      %1510 = vmatprep.mubr.bf16.mxu0 0
      %1511 = vmatmul.mubr.bf16.gmra.mxu0 %v1397
      %v1512 = vpop.f32.mrf.mxu0
      %v1513 = vadd.f32 %v1297, %v1512
      %v1514 = vpop.f32.mrf.mxu0
      %v1515 = vpop.f32.mrf.mxu0
      %v1516 = vadd.f32 %v1300, %v1515
      %v1517 = vpop.f32.mrf.mxu0
      %1518 = vmatprep.mubr.bf16.mxu0 0
      %1519 = vmatmul.mubr.bf16.gmra.mxu0 %v1399
      %v1520 = vpop.f32.mrf.mxu0
      %v1521 = vadd.f32 %v1305, %v1520
      %v1522 = vpop.f32.mrf.mxu0
      %v1523 = vpop.f32.mrf.mxu0
      %v1524 = vadd.f32 %v1308, %v1523
      %v1525 = vpop.f32.mrf.mxu0
      %1526 = vmatprep.mubr.bf16.mxu0 0
      %1527 = vmatmul.mubr.bf16.gmra.mxu0 %v1401
      %v1528 = vpop.f32.mrf.mxu0
      %v1529 = vadd.f32 %v1313, %v1528
      %v1530 = vpop.f32.mrf.mxu0
      %v1531 = vpop.f32.mrf.mxu0
      %v1532 = vadd.f32 %v1316, %v1531
      %v1533 = vpop.f32.mrf.mxu0
      %1534 = vmatprep.mubr.bf16.mxu0 0
      %1535 = vmatmul.mubr.bf16.gmra.mxu0 %v1403
      %v1536 = vpop.f32.mrf.mxu0
      %v1537 = vadd.f32 %v1321, %v1536
      %v1538 = vpop.f32.mrf.mxu0
      %v1539 = vpop.f32.mrf.mxu0
      %v1540 = vadd.f32 %v1324, %v1539
      %v1541 = vpop.f32.mrf.mxu0
      %1542 = vmatprep.mubr.bf16.mxu0 0
      %1543 = vmatmul.mubr.bf16.gmra.mxu0 %v1405
      %v1544 = vpop.f32.mrf.mxu0
      %v1545 = vadd.f32 %v1329, %v1544
      %v1546 = vpop.f32.mrf.mxu0
      %v1547 = vpop.f32.mrf.mxu0
      %v1548 = vadd.f32 %v1332, %v1547
      %v1549 = vpop.f32.mrf.mxu0
      %1550 = vmatprep.mubr.bf16.mxu0 0
      %1551 = vmatmul.mubr.bf16.gmra.mxu0 %v1407
      %v1552 = vpop.f32.mrf.mxu0
      %v1553 = vadd.f32 %v1337, %v1552
      %v1554 = vpop.f32.mrf.mxu0
      %v1555 = vpop.f32.mrf.mxu0
      %v1556 = vadd.f32 %v1340, %v1555
      %v1557 = vpop.f32.mrf.mxu0
      %1558 = vmatprep.mubr.bf16.mxu0 0
      %1559 = vmatmul.mubr.bf16.gmra.mxu0 %v1409
      %v1560 = vpop.f32.mrf.mxu0
      %v1561 = vadd.f32 %v1345, %v1560
      %v1562 = vpop.f32.mrf.mxu0
      %v1563 = vpop.f32.mrf.mxu0
      %v1564 = vadd.f32 %v1348, %v1563
      %v1565 = vpop.f32.mrf.mxu0
      %1566 = vmatprep.mubr.bf16.mxu0 0
      %1567 = vmatmul.mubr.bf16.gmra.mxu0 %v1411
      %v1568 = vpop.f32.mrf.mxu0
      %v1569 = vadd.f32 %v1353, %v1568
      %v1570 = vpop.f32.mrf.mxu0
      %v1571 = vpop.f32.mrf.mxu0
      %v1572 = vadd.f32 %v1356, %v1571
      %v1573 = vpop.f32.mrf.mxu0
      %1574 = vmatprep.mubr.bf16.mxu0 0
      %1575 = vmatmul.mubr.bf16.gmra.mxu0 %v1413
      %v1576 = vpop.f32.mrf.mxu0
      %v1577 = vadd.f32 %v1361, %v1576
      %v1578 = vpop.f32.mrf.mxu0
      %v1579 = vpop.f32.mrf.mxu0
      %v1580 = vadd.f32 %v1364, %v1579
      %v1581 = vpop.f32.mrf.mxu0
      %1582 = vmatprep.mubr.bf16.mxu0 0
      %1583 = vmatmul.mubr.bf16.gmra.mxu0 %v1415
      %v1584 = vpop.f32.mrf.mxu0
      %v1585 = vadd.f32 %v1369, %v1584
      %v1586 = vpop.f32.mrf.mxu0
      %v1587 = vpop.f32.mrf.mxu0
      %v1588 = vadd.f32 %v1372, %v1587
      %v1589 = vpop.f32.mrf.mxu0
      %1590 = vmatprep.mubr.bf16.mxu0 0
      %1591 = vmatmul.mubr.bf16.gmra.mxu0 %v1417
      %v1592 = vpop.f32.mrf.mxu0
      %v1593 = vadd.f32 %v1377, %v1592
      %v1594 = vpop.f32.mrf.mxu0
      %v1595 = vpop.f32.mrf.mxu0
      %v1596 = vadd.f32 %v1380, %v1595
      %v1597 = vpop.f32.mrf.mxu0
      %1598 = vdwg.mxu0
      %v1599 = vld [vmem:[%s203] sm:$0xe]
      %s1600 = scalar_lea.vmem %s1, 4
      %v1601 = vld [vmem:[%s1600] sm:$0x3]
      %v1603 = vunpack.c.l.b16 %v1599
      %v1604 = vpack.c.b16 %v943, %v1603
      %vm1605 = vcmask 1046528
      %v1606 = vrot.slane %v1604, 1
      %v1607 = vrot.slane %v980, 1
      %v1608 = vsel %vm1605, %v1606, %v1607
      %v1609 = vrot.slane %v981, 1
      %v1610 = vsel %vm1605, %v1607, %v1609
      %v1611 = vrot.slane %v982, 1
      %v1612 = vsel %vm1605, %v1609, %v1611
      %v1613 = vrot.slane %v983, 1
      %v1614 = vsel %vm1605, %v1611, %v1613
      %v1615 = vrot.slane %v984, 1
      %v1616 = vsel %vm1605, %v1613, %v1615
      %v1617 = vrot.slane %v985, 1
      %v1618 = vsel %vm1605, %v1615, %v1617
      %v1619 = vrot.slane %v986, 1
      %v1620 = vsel %vm1605, %v1617, %v1619
      %v1621 = vrot.slane %v987, 1
      %v1622 = vsel %vm1605, %v1619, %v1621
      %v1623 = vrot.slane %v988, 1
      %v1624 = vsel %vm1605, %v1621, %v1623
      %v1625 = vrot.slane %v989, 1
      %v1626 = vsel %vm1605, %v1623, %v1625
      %v1627 = vrot.slane %v990, 1
      %v1628 = vsel %vm1605, %v1625, %v1627
      %v1629 = vrot.slane %v991, 1
      %v1630 = vsel %vm1605, %v1627, %v1629
      %v1631 = vrot.slane %v992, 1
      %v1632 = vsel %vm1605, %v1629, %v1631
      %v1633 = vrot.slane %v993, 1
      %v1634 = vsel %vm1605, %v1631, %v1633
      %v1635 = vrot.slane %v994, 1
      %v1636 = vsel %vm1605, %v1633, %v1635
      %v1637 = vrot.slane %v995, 1
      %v1638 = vsel %vm1605, %v1635, %v1637
      %v1639 = vrot.slane %v996, 1
      %v1640 = vsel %vm1605, %v1637, %v1639
      %v1641 = vrot.slane %v997, 1
      %v1642 = vsel %vm1605, %v1639, %v1641
      %v1644 = vsel %vm1147, %v1608, 0
      %v1647 = vsel %vm1147, %v1610, 0
      %v1650 = vsel %vm1147, %v1612, 0
      %v1653 = vsel %vm1147, %v1614, 0
      %v1656 = vsel %vm1147, %v1616, 0
      %v1659 = vsel %vm1147, %v1618, 0
      %v1662 = vsel %vm1147, %v1620, 0
      %v1665 = vsel %vm1147, %v1622, 0
      %v1668 = vsel %vm1147, %v1624, 0
      %v1671 = vsel %vm1147, %v1626, 0
      %v1674 = vsel %vm1147, %v1628, 0
      %v1677 = vsel %vm1147, %v1630, 0
      %v1680 = vsel %vm1147, %v1632, 0
      %v1683 = vsel %vm1147, %v1634, 0
      %v1686 = vsel %vm1147, %v1636, 0
      %v1689 = vsel %vm1147, %v1638, 0
      %v1692 = vsel %vm1147, %v1640, 0
      %v1695 = vsel %vm1147, %v1642, 0
      %v1698 = vsel %vm1202, %v1601, 0
      %1700 = vmatprep.subr.bf16.mxu0 0
      %1701 = vmatpush1.bf16.msra.mxu0 0
      %1702 = vmatprep.subr.bf16.mxu0 0
      %1703 = vmatpush1.bf16.msra.mxu0 0
      %1704 = vmatprep.subr.bf16.mxu0 0
      %1705 = vmatpush1.bf16.msra.mxu0 0
      %1706 = vmatprep.subr.bf16.mxu0 0
      %1707 = vmatpush1.bf16.msra.mxu0 0
      %1708 = vmatprep.subr.bf16.mxu0 0
      %1709 = vmatpush1.bf16.msra.mxu0 0
      %1710 = vmatprep.subr.bf16.mxu0 0
      %1711 = vmatpush1.bf16.msra.mxu0 0
      %1712 = vmatprep.subr.bf16.mxu0 0
      %1713 = vmatpush1.bf16.msra.mxu0 0
      %1714 = vmatprep.subr.bf16.mxu0 0
      %1715 = vmatpush1.bf16.msra.mxu0 %v1698
      %1716 = vmatprep.subr.bf16.mxu0 0
      %1717 = vmatpush2.bf16.msra.mxu0 0
      %1718 = vmatprep.subr.bf16.mxu0 0
      %1719 = vmatpush2.bf16.msra.mxu0 0
      %1720 = vmatprep.subr.bf16.mxu0 0
      %1721 = vmatpush2.bf16.msra.mxu0 0
      %1722 = vmatprep.subr.bf16.mxu0 0
      %1723 = vmatpush2.bf16.msra.mxu0 0
      %1724 = vmatprep.subr.bf16.mxu0 0
      %1725 = vmatpush2.bf16.msra.mxu0 0
      %1726 = vmatprep.subr.bf16.mxu0 0
      %1727 = vmatpush2.bf16.msra.mxu0 0
      %1728 = vmatprep.subr.bf16.mxu0 0
      %1729 = vmatpush2.bf16.msra.mxu0 0
      %1730 = vmatprep.subr.bf16.mxu0 0
      %1731 = vmatpush2.bf16.msra.mxu0 0
      %1732 = vmatprep.mubr.bf16.mxu0 0
      %1733 = vmatmul.mubr.bf16.gmra.mxu0 %v1644
      %v1734 = vpop.f32.mrf.mxu0
      %v1735 = vadd.f32 0.0, %v1734
      %v1736 = vpop.f32.mrf.mxu0
      %v1737 = vpop.f32.mrf.mxu0
      %v1738 = vadd.f32 0.0, %v1737
      %v1739 = vpop.f32.mrf.mxu0
      %1740 = vmatprep.mubr.bf16.mxu0 0
      %1741 = vmatmul.mubr.bf16.gmra.mxu0 %v1647
      %v1742 = vpop.f32.mrf.mxu0
      %v1743 = vadd.f32 0.0, %v1742
      %v1744 = vpop.f32.mrf.mxu0
      %v1745 = vpop.f32.mrf.mxu0
      %v1746 = vadd.f32 0.0, %v1745
      %v1747 = vpop.f32.mrf.mxu0
      %1748 = vmatprep.mubr.bf16.mxu0 0
      %1749 = vmatmul.mubr.bf16.gmra.mxu0 %v1650
      %v1750 = vpop.f32.mrf.mxu0
      %v1751 = vadd.f32 0.0, %v1750
      %v1752 = vpop.f32.mrf.mxu0
      %v1753 = vpop.f32.mrf.mxu0
      %v1754 = vadd.f32 0.0, %v1753
      %v1755 = vpop.f32.mrf.mxu0
      %1756 = vmatprep.mubr.bf16.mxu0 0
      %1757 = vmatmul.mubr.bf16.gmra.mxu0 %v1653
      %v1758 = vpop.f32.mrf.mxu0
      %v1759 = vadd.f32 0.0, %v1758
      %v1760 = vpop.f32.mrf.mxu0
      %v1761 = vpop.f32.mrf.mxu0
      %v1762 = vadd.f32 0.0, %v1761
      %v1763 = vpop.f32.mrf.mxu0
      %1764 = vmatprep.mubr.bf16.mxu0 0
      %1765 = vmatmul.mubr.bf16.gmra.mxu0 %v1656
      %v1766 = vpop.f32.mrf.mxu0
      %v1767 = vadd.f32 0.0, %v1766
      %v1768 = vpop.f32.mrf.mxu0
      %v1769 = vpop.f32.mrf.mxu0
      %v1770 = vadd.f32 0.0, %v1769
      %v1771 = vpop.f32.mrf.mxu0
      %1772 = vmatprep.mubr.bf16.mxu0 0
      %1773 = vmatmul.mubr.bf16.gmra.mxu0 %v1659
      %v1774 = vpop.f32.mrf.mxu0
      %v1775 = vadd.f32 0.0, %v1774
      %v1776 = vpop.f32.mrf.mxu0
      %v1777 = vpop.f32.mrf.mxu0
      %v1778 = vadd.f32 0.0, %v1777
      %v1779 = vpop.f32.mrf.mxu0
      %1780 = vmatprep.mubr.bf16.mxu0 0
      %1781 = vmatmul.mubr.bf16.gmra.mxu0 %v1662
      %v1782 = vpop.f32.mrf.mxu0
      %v1783 = vadd.f32 0.0, %v1782
      %v1784 = vpop.f32.mrf.mxu0
      %v1785 = vpop.f32.mrf.mxu0
      %v1786 = vadd.f32 0.0, %v1785
      %v1787 = vpop.f32.mrf.mxu0
      %1788 = vmatprep.mubr.bf16.mxu0 0
      %1789 = vmatmul.mubr.bf16.gmra.mxu0 %v1665
      %v1790 = vpop.f32.mrf.mxu0
      %v1791 = vadd.f32 0.0, %v1790
      %v1792 = vpop.f32.mrf.mxu0
      %v1793 = vpop.f32.mrf.mxu0
      %v1794 = vadd.f32 0.0, %v1793
      %v1795 = vpop.f32.mrf.mxu0
      %1796 = vmatprep.mubr.bf16.mxu0 0
      %1797 = vmatmul.mubr.bf16.gmra.mxu0 %v1668
      %v1798 = vpop.f32.mrf.mxu0
      %v1799 = vadd.f32 0.0, %v1798
      %v1800 = vpop.f32.mrf.mxu0
      %v1801 = vpop.f32.mrf.mxu0
      %v1802 = vadd.f32 0.0, %v1801
      %v1803 = vpop.f32.mrf.mxu0
      %1804 = vmatprep.mubr.bf16.mxu0 0
      %1805 = vmatmul.mubr.bf16.gmra.mxu0 %v1671
      %v1806 = vpop.f32.mrf.mxu0
      %v1807 = vadd.f32 0.0, %v1806
      %v1808 = vpop.f32.mrf.mxu0
      %v1809 = vpop.f32.mrf.mxu0
      %v1810 = vadd.f32 0.0, %v1809
      %v1811 = vpop.f32.mrf.mxu0
      %1812 = vmatprep.mubr.bf16.mxu0 0
      %1813 = vmatmul.mubr.bf16.gmra.mxu0 %v1674
      %v1814 = vpop.f32.mrf.mxu0
      %v1815 = vadd.f32 0.0, %v1814
      %v1816 = vpop.f32.mrf.mxu0
      %v1817 = vpop.f32.mrf.mxu0
      %v1818 = vadd.f32 0.0, %v1817
      %v1819 = vpop.f32.mrf.mxu0
      %1820 = vmatprep.mubr.bf16.mxu0 0
      %1821 = vmatmul.mubr.bf16.gmra.mxu0 %v1677
      %v1822 = vpop.f32.mrf.mxu0
      %v1823 = vadd.f32 0.0, %v1822
      %v1824 = vpop.f32.mrf.mxu0
      %v1825 = vpop.f32.mrf.mxu0
      %v1826 = vadd.f32 0.0, %v1825
      %v1827 = vpop.f32.mrf.mxu0
      %1828 = vmatprep.mubr.bf16.mxu0 0
      %1829 = vmatmul.mubr.bf16.gmra.mxu0 %v1680
      %v1830 = vpop.f32.mrf.mxu0
      %v1831 = vadd.f32 0.0, %v1830
      %v1832 = vpop.f32.mrf.mxu0
      %v1833 = vpop.f32.mrf.mxu0
      %v1834 = vadd.f32 0.0, %v1833
      %v1835 = vpop.f32.mrf.mxu0
      %1836 = vmatprep.mubr.bf16.mxu0 0
      %1837 = vmatmul.mubr.bf16.gmra.mxu0 %v1683
      %v1838 = vpop.f32.mrf.mxu0
      %v1839 = vadd.f32 0.0, %v1838
      %v1840 = vpop.f32.mrf.mxu0
      %v1841 = vpop.f32.mrf.mxu0
      %v1842 = vadd.f32 0.0, %v1841
      %v1843 = vpop.f32.mrf.mxu0
      %1844 = vmatprep.mubr.bf16.mxu0 0
      %1845 = vmatmul.mubr.bf16.gmra.mxu0 %v1686
      %v1846 = vpop.f32.mrf.mxu0
      %v1847 = vadd.f32 0.0, %v1846
      %v1848 = vpop.f32.mrf.mxu0
      %v1849 = vpop.f32.mrf.mxu0
      %v1850 = vadd.f32 0.0, %v1849
      %v1851 = vpop.f32.mrf.mxu0
      %1852 = vmatprep.mubr.bf16.mxu0 0
      %1853 = vmatmul.mubr.bf16.gmra.mxu0 %v1689
      %v1854 = vpop.f32.mrf.mxu0
      %v1855 = vadd.f32 0.0, %v1854
      %v1856 = vpop.f32.mrf.mxu0
      %v1857 = vpop.f32.mrf.mxu0
      %v1858 = vadd.f32 0.0, %v1857
      %v1859 = vpop.f32.mrf.mxu0
      %1860 = vmatprep.mubr.bf16.mxu0 0
      %1861 = vmatmul.mubr.bf16.gmra.mxu0 %v1692
      %v1862 = vpop.f32.mrf.mxu0
      %v1863 = vadd.f32 0.0, %v1862
      %v1864 = vpop.f32.mrf.mxu0
      %v1865 = vpop.f32.mrf.mxu0
      %v1866 = vadd.f32 0.0, %v1865
      %v1867 = vpop.f32.mrf.mxu0
      %1868 = vmatprep.mubr.bf16.mxu0 0
      %1869 = vmatmul.mubr.bf16.gmra.mxu0 %v1695
      %v1870 = vpop.f32.mrf.mxu0
      %v1871 = vadd.f32 0.0, %v1870
      %v1872 = vpop.f32.mrf.mxu0
      %v1873 = vpop.f32.mrf.mxu0
      %v1874 = vadd.f32 0.0, %v1873
      %v1875 = vpop.f32.mrf.mxu0
      %1876 = vdwg.mxu0
      %v1877 = vadd.f32 %v1457, %v1735
      %v1878 = vadd.f32 %v1460, %v1738
      %v1879 = vadd.f32 %v1465, %v1743
      %v1880 = vadd.f32 %v1468, %v1746
      %v1881 = vadd.f32 %v1473, %v1751
      %v1882 = vadd.f32 %v1476, %v1754
      %v1883 = vadd.f32 %v1481, %v1759
      %v1884 = vadd.f32 %v1484, %v1762
      %v1885 = vadd.f32 %v1489, %v1767
      %v1886 = vadd.f32 %v1492, %v1770
      %v1887 = vadd.f32 %v1497, %v1775
      %v1888 = vadd.f32 %v1500, %v1778
      %v1889 = vadd.f32 %v1505, %v1783
      %v1890 = vadd.f32 %v1508, %v1786
      %v1891 = vadd.f32 %v1513, %v1791
      %v1892 = vadd.f32 %v1516, %v1794
      %v1893 = vadd.f32 %v1521, %v1799
      %v1894 = vadd.f32 %v1524, %v1802
      %v1895 = vadd.f32 %v1529, %v1807
      %v1896 = vadd.f32 %v1532, %v1810
      %v1897 = vadd.f32 %v1537, %v1815
      %v1898 = vadd.f32 %v1540, %v1818
      %v1899 = vadd.f32 %v1545, %v1823
      %v1900 = vadd.f32 %v1548, %v1826
      %v1901 = vadd.f32 %v1553, %v1831
      %v1902 = vadd.f32 %v1556, %v1834
      %v1903 = vadd.f32 %v1561, %v1839
      %v1904 = vadd.f32 %v1564, %v1842
      %v1905 = vadd.f32 %v1569, %v1847
      %v1906 = vadd.f32 %v1572, %v1850
      %v1907 = vadd.f32 %v1577, %v1855
      %v1908 = vadd.f32 %v1580, %v1858
      %v1909 = vadd.f32 %v1585, %v1863
      %v1910 = vadd.f32 %v1588, %v1866
      %v1911 = vadd.f32 %v1593, %v1871
      %v1912 = vadd.f32 %v1596, %v1874
      %v1913 = vld [vmem:[%s203 + $0x8] sm:$0xe]
      %v1914 = vld [vmem:[%s203 + $0xc] sm:$0xf]
      %v1915 = vld [vmem:[%s203 + $0x10] sm:$0xf]
      %v1916 = vld [vmem:[%s203 + $0x14] sm:$0xf]
      %v1917 = vld [vmem:[%s203 + $0x18] sm:$0xf]
      %v1918 = vld [vmem:[%s203 + $0x1c] sm:$0xf]
      %v1919 = vld [vmem:[%s203 + $0x20] sm:$0xf]
      %v1920 = vld [vmem:[%s203 + $0x24] sm:$0xf]
      %v1921 = vld [vmem:[%s203 + $0x28] sm:$0xf]
      %v1922 = vld [vmem:[%s203 + $0x2c] sm:$0xf]
      %v1923 = vld [vmem:[%s203 + $0x30] sm:$0xf]
      %v1924 = vld [vmem:[%s203 + $0x34] sm:$0xf]
      %v1925 = vld [vmem:[%s203 + $0x38] sm:$0xf]
      %v1926 = vld [vmem:[%s203 + $0x3c] sm:$0xf]
      %v1927 = vld [vmem:[%s203 + $0x40] sm:$0xf]
      %v1928 = vld [vmem:[%s203 + $0x44] sm:$0xf]
      %v1929 = vld [vmem:[%s203 + $0x48] sm:$0xf]
      %v1930 = vld [vmem:[%s203 + $0x4c] sm:$0xf]
      %v1931 = vld [vmem:[%s203 + $0x50] sm:$0xf]
      %v1932 = vld [vmem:[%s203 + $0x54] sm:$0xf]
      %v1933 = vld [vmem:[%s203 + $0x58] sm:$0xf]
      %v1934 = vld [vmem:[%s203 + $0x5c] sm:$0xf]
      %v1935 = vld [vmem:[%s203 + $0x60] sm:$0xf]
      %v1936 = vld [vmem:[%s203 + $0x64] sm:$0xf]
      %v1937 = vld [vmem:[%s203 + $0x68] sm:$0xf]
      %v1938 = vld [vmem:[%s203 + $0x6c] sm:$0xf]
      %v1939 = vld [vmem:[%s203 + $0x70] sm:$0xf]
      %v1940 = vld [vmem:[%s203 + $0x74] sm:$0xf]
      %v1941 = vld [vmem:[%s203 + $0x78] sm:$0xf]
      %v1942 = vld [vmem:[%s203 + $0x7c] sm:$0xf]
      %v1943 = vld [vmem:[%s203 + $0x80] sm:$0xf]
      %v1944 = vld [vmem:[%s203 + $0x84] sm:$0xf]
      %v1945 = vld [vmem:[%s203 + $0x88] sm:$0xf]
      %v1946 = vld [vmem:[%s203 + $0x8c] sm:$0xf]
      %v1947 = vld [vmem:[%s203 + $0x90] sm:$0xf]
      %v1948 = vld [vmem:[%s203 + $0x94] sm:$0xf]
      %v1949 = vld [vmem:[%s203 + $0x98] sm:$0x1]
      %s1950 = scalar_lea.vmem %s1, 6
      %v1951 = vld [vmem:[%s1950] sm:$0x3]
      %v1989 = vunpack.c.l.b16 %v1913
      %v1990 = vunpack.c.l.b16 %v1914
      %v1991 = vunpack.c.l.b16 %v1915
      %v1992 = vunpack.c.l.b16 %v1916
      %v1993 = vunpack.c.l.b16 %v1917
      %v1994 = vunpack.c.l.b16 %v1918
      %v1995 = vunpack.c.l.b16 %v1919
      %v1996 = vunpack.c.l.b16 %v1920
      %v1997 = vunpack.c.l.b16 %v1921
      %v1998 = vunpack.c.l.b16 %v1922
      %v1999 = vunpack.c.l.b16 %v1923
      %v2000 = vunpack.c.l.b16 %v1924
      %v2001 = vunpack.c.l.b16 %v1925
      %v2002 = vunpack.c.l.b16 %v1926
      %v2003 = vunpack.c.l.b16 %v1927
      %v2004 = vunpack.c.l.b16 %v1928
      %v2005 = vunpack.c.l.b16 %v1929
      %v2006 = vunpack.c.l.b16 %v1930
      %v2007 = vunpack.c.l.b16 %v1931
      %v2008 = vunpack.c.l.b16 %v1932
      %v2009 = vunpack.c.l.b16 %v1933
      %v2010 = vunpack.c.l.b16 %v1934
      %v2011 = vunpack.c.l.b16 %v1935
      %v2012 = vunpack.c.l.b16 %v1936
      %v2013 = vunpack.c.l.b16 %v1937
      %v2014 = vunpack.c.l.b16 %v1938
      %v2015 = vunpack.c.l.b16 %v1939
      %v2016 = vunpack.c.l.b16 %v1940
      %v2017 = vunpack.c.l.b16 %v1941
      %v2018 = vunpack.c.l.b16 %v1942
      %v2019 = vunpack.c.l.b16 %v1943
      %v2020 = vunpack.c.l.b16 %v1944
      %v2021 = vunpack.c.l.b16 %v1945
      %v2022 = vunpack.c.l.b16 %v1946
      %v2023 = vunpack.c.l.b16 %v1947
      %v2024 = vunpack.c.l.b16 %v1948
      %v2025 = vunpack.c.l.b16 %v1949
      %v2026 = vpack.c.b16 %v1990, %v1989
      %v2027 = vpack.c.b16 %v1992, %v1991
      %v2028 = vpack.c.b16 %v1994, %v1993
      %v2029 = vpack.c.b16 %v1996, %v1995
      %v2030 = vpack.c.b16 %v1998, %v1997
      %v2031 = vpack.c.b16 %v2000, %v1999
      %v2032 = vpack.c.b16 %v2002, %v2001
      %v2033 = vpack.c.b16 %v2004, %v2003
      %v2034 = vpack.c.b16 %v2006, %v2005
      %v2035 = vpack.c.b16 %v2008, %v2007
      %v2036 = vpack.c.b16 %v2010, %v2009
      %v2037 = vpack.c.b16 %v2012, %v2011
      %v2038 = vpack.c.b16 %v2014, %v2013
      %v2039 = vpack.c.b16 %v2016, %v2015
      %v2040 = vpack.c.b16 %v2018, %v2017
      %v2041 = vpack.c.b16 %v2020, %v2019
      %v2042 = vpack.c.b16 %v2022, %v2021
      %v2043 = vpack.c.b16 %v2024, %v2023
      %v2044 = vpack.c.b16 %v2025, %v2025
      %v2045 = vrot.slane %v2026, 1
      %v2046 = vrot.slane %v2027, 1
      %v2047 = vsel %vm1605, %v2045, %v2046
      %v2048 = vrot.slane %v2028, 1
      %v2049 = vsel %vm1605, %v2046, %v2048
      %v2050 = vrot.slane %v2029, 1
      %v2051 = vsel %vm1605, %v2048, %v2050
      %v2052 = vrot.slane %v2030, 1
      %v2053 = vsel %vm1605, %v2050, %v2052
      %v2054 = vrot.slane %v2031, 1
      %v2055 = vsel %vm1605, %v2052, %v2054
      %v2056 = vrot.slane %v2032, 1
      %v2057 = vsel %vm1605, %v2054, %v2056
      %v2058 = vrot.slane %v2033, 1
      %v2059 = vsel %vm1605, %v2056, %v2058
      %v2060 = vrot.slane %v2034, 1
      %v2061 = vsel %vm1605, %v2058, %v2060
      %v2062 = vrot.slane %v2035, 1
      %v2063 = vsel %vm1605, %v2060, %v2062
      %v2064 = vrot.slane %v2036, 1
      %v2065 = vsel %vm1605, %v2062, %v2064
      %v2066 = vrot.slane %v2037, 1
      %v2067 = vsel %vm1605, %v2064, %v2066
      %v2068 = vrot.slane %v2038, 1
      %v2069 = vsel %vm1605, %v2066, %v2068
      %v2070 = vrot.slane %v2039, 1
      %v2071 = vsel %vm1605, %v2068, %v2070
      %v2072 = vrot.slane %v2040, 1
      %v2073 = vsel %vm1605, %v2070, %v2072
      %v2074 = vrot.slane %v2041, 1
      %v2075 = vsel %vm1605, %v2072, %v2074
      %v2076 = vrot.slane %v2042, 1
      %v2077 = vsel %vm1605, %v2074, %v2076
      %v2078 = vrot.slane %v2043, 1
      %v2079 = vsel %vm1605, %v2076, %v2078
      %v2080 = vrot.slane %v2044, 1
      %v2081 = vsel %vm1605, %v2078, %v2080
      %v2083 = vsel %vm1147, %v2047, 0
      %v2086 = vsel %vm1147, %v2049, 0
      %v2089 = vsel %vm1147, %v2051, 0
      %v2092 = vsel %vm1147, %v2053, 0
      %v2095 = vsel %vm1147, %v2055, 0
      %v2098 = vsel %vm1147, %v2057, 0
      %v2101 = vsel %vm1147, %v2059, 0
      %v2104 = vsel %vm1147, %v2061, 0
      %v2107 = vsel %vm1147, %v2063, 0
      %v2110 = vsel %vm1147, %v2065, 0
      %v2113 = vsel %vm1147, %v2067, 0
      %v2116 = vsel %vm1147, %v2069, 0
      %v2119 = vsel %vm1147, %v2071, 0
      %v2122 = vsel %vm1147, %v2073, 0
      %v2125 = vsel %vm1147, %v2075, 0
      %v2128 = vsel %vm1147, %v2077, 0
      %v2131 = vsel %vm1147, %v2079, 0
      %v2134 = vsel %vm1147, %v2081, 0
      %v2137 = vsel %vm1202, %v1951, 0
      %2139 = vmatprep.subr.bf16.mxu0 0
      %2140 = vmatpush1.bf16.msra.mxu0 0
      %2141 = vmatprep.subr.bf16.mxu0 0
      %2142 = vmatpush1.bf16.msra.mxu0 0
      %2143 = vmatprep.subr.bf16.mxu0 0
      %2144 = vmatpush1.bf16.msra.mxu0 0
      %2145 = vmatprep.subr.bf16.mxu0 0
      %2146 = vmatpush1.bf16.msra.mxu0 0
      %2147 = vmatprep.subr.bf16.mxu0 0
      %2148 = vmatpush1.bf16.msra.mxu0 0
      %2149 = vmatprep.subr.bf16.mxu0 0
      %2150 = vmatpush1.bf16.msra.mxu0 0
      %2151 = vmatprep.subr.bf16.mxu0 0
      %2152 = vmatpush1.bf16.msra.mxu0 0
      %2153 = vmatprep.subr.bf16.mxu0 0
      %2154 = vmatpush1.bf16.msra.mxu0 %v2137
      %2155 = vmatprep.subr.bf16.mxu0 0
      %2156 = vmatpush2.bf16.msra.mxu0 0
      %2157 = vmatprep.subr.bf16.mxu0 0
      %2158 = vmatpush2.bf16.msra.mxu0 0
      %2159 = vmatprep.subr.bf16.mxu0 0
      %2160 = vmatpush2.bf16.msra.mxu0 0
      %2161 = vmatprep.subr.bf16.mxu0 0
      %2162 = vmatpush2.bf16.msra.mxu0 0
      %2163 = vmatprep.subr.bf16.mxu0 0
      %2164 = vmatpush2.bf16.msra.mxu0 0
      %2165 = vmatprep.subr.bf16.mxu0 0
      %2166 = vmatpush2.bf16.msra.mxu0 0
      %2167 = vmatprep.subr.bf16.mxu0 0
      %2168 = vmatpush2.bf16.msra.mxu0 0
      %2169 = vmatprep.subr.bf16.mxu0 0
      %2170 = vmatpush2.bf16.msra.mxu0 0
      %2171 = vmatprep.mubr.bf16.mxu0 0
      %2172 = vmatmul.mubr.bf16.gmra.mxu0 %v2083
      %v2173 = vpop.f32.mrf.mxu0
      %v2174 = vadd.f32 0.0, %v2173
      %v2175 = vpop.f32.mrf.mxu0
      %v2176 = vpop.f32.mrf.mxu0
      %v2177 = vadd.f32 0.0, %v2176
      %v2178 = vpop.f32.mrf.mxu0
      %2179 = vmatprep.mubr.bf16.mxu0 0
      %2180 = vmatmul.mubr.bf16.gmra.mxu0 %v2086
      %v2181 = vpop.f32.mrf.mxu0
      %v2182 = vadd.f32 0.0, %v2181
      %v2183 = vpop.f32.mrf.mxu0
      %v2184 = vpop.f32.mrf.mxu0
      %v2185 = vadd.f32 0.0, %v2184
      %v2186 = vpop.f32.mrf.mxu0
      %2187 = vmatprep.mubr.bf16.mxu0 0
      %2188 = vmatmul.mubr.bf16.gmra.mxu0 %v2089
      %v2189 = vpop.f32.mrf.mxu0
      %v2190 = vadd.f32 0.0, %v2189
      %v2191 = vpop.f32.mrf.mxu0
      %v2192 = vpop.f32.mrf.mxu0
      %v2193 = vadd.f32 0.0, %v2192
      %v2194 = vpop.f32.mrf.mxu0
      %2195 = vmatprep.mubr.bf16.mxu0 0
      %2196 = vmatmul.mubr.bf16.gmra.mxu0 %v2092
      %v2197 = vpop.f32.mrf.mxu0
      %v2198 = vadd.f32 0.0, %v2197
      %v2199 = vpop.f32.mrf.mxu0
      %v2200 = vpop.f32.mrf.mxu0
      %v2201 = vadd.f32 0.0, %v2200
      %v2202 = vpop.f32.mrf.mxu0
      %2203 = vmatprep.mubr.bf16.mxu0 0
      %2204 = vmatmul.mubr.bf16.gmra.mxu0 %v2095
      %v2205 = vpop.f32.mrf.mxu0
      %v2206 = vadd.f32 0.0, %v2205
      %v2207 = vpop.f32.mrf.mxu0
      %v2208 = vpop.f32.mrf.mxu0
      %v2209 = vadd.f32 0.0, %v2208
      %v2210 = vpop.f32.mrf.mxu0
      %2211 = vmatprep.mubr.bf16.mxu0 0
      %2212 = vmatmul.mubr.bf16.gmra.mxu0 %v2098
      %v2213 = vpop.f32.mrf.mxu0
      %v2214 = vadd.f32 0.0, %v2213
      %v2215 = vpop.f32.mrf.mxu0
      %v2216 = vpop.f32.mrf.mxu0
      %v2217 = vadd.f32 0.0, %v2216
      %v2218 = vpop.f32.mrf.mxu0
      %2219 = vmatprep.mubr.bf16.mxu0 0
      %2220 = vmatmul.mubr.bf16.gmra.mxu0 %v2101
      %v2221 = vpop.f32.mrf.mxu0
      %v2222 = vadd.f32 0.0, %v2221
      %v2223 = vpop.f32.mrf.mxu0
      %v2224 = vpop.f32.mrf.mxu0
      %v2225 = vadd.f32 0.0, %v2224
      %v2226 = vpop.f32.mrf.mxu0
      %2227 = vmatprep.mubr.bf16.mxu0 0
      %2228 = vmatmul.mubr.bf16.gmra.mxu0 %v2104
      %v2229 = vpop.f32.mrf.mxu0
      %v2230 = vadd.f32 0.0, %v2229
      %v2231 = vpop.f32.mrf.mxu0
      %v2232 = vpop.f32.mrf.mxu0
      %v2233 = vadd.f32 0.0, %v2232
      %v2234 = vpop.f32.mrf.mxu0
      %2235 = vmatprep.mubr.bf16.mxu0 0
      %2236 = vmatmul.mubr.bf16.gmra.mxu0 %v2107
      %v2237 = vpop.f32.mrf.mxu0
      %v2238 = vadd.f32 0.0, %v2237
      %v2239 = vpop.f32.mrf.mxu0
      %v2240 = vpop.f32.mrf.mxu0
      %v2241 = vadd.f32 0.0, %v2240
      %v2242 = vpop.f32.mrf.mxu0
      %2243 = vmatprep.mubr.bf16.mxu0 0
      %2244 = vmatmul.mubr.bf16.gmra.mxu0 %v2110
      %v2245 = vpop.f32.mrf.mxu0
      %v2246 = vadd.f32 0.0, %v2245
      %v2247 = vpop.f32.mrf.mxu0
      %v2248 = vpop.f32.mrf.mxu0
      %v2249 = vadd.f32 0.0, %v2248
      %v2250 = vpop.f32.mrf.mxu0
      %2251 = vmatprep.mubr.bf16.mxu0 0
      %2252 = vmatmul.mubr.bf16.gmra.mxu0 %v2113
      %v2253 = vpop.f32.mrf.mxu0
      %v2254 = vadd.f32 0.0, %v2253
      %v2255 = vpop.f32.mrf.mxu0
      %v2256 = vpop.f32.mrf.mxu0
      %v2257 = vadd.f32 0.0, %v2256
      %v2258 = vpop.f32.mrf.mxu0
      %2259 = vmatprep.mubr.bf16.mxu0 0
      %2260 = vmatmul.mubr.bf16.gmra.mxu0 %v2116
      %v2261 = vpop.f32.mrf.mxu0
      %v2262 = vadd.f32 0.0, %v2261
      %v2263 = vpop.f32.mrf.mxu0
      %v2264 = vpop.f32.mrf.mxu0
      %v2265 = vadd.f32 0.0, %v2264
      %v2266 = vpop.f32.mrf.mxu0
      %2267 = vmatprep.mubr.bf16.mxu0 0
      %2268 = vmatmul.mubr.bf16.gmra.mxu0 %v2119
      %v2269 = vpop.f32.mrf.mxu0
      %v2270 = vadd.f32 0.0, %v2269
      %v2271 = vpop.f32.mrf.mxu0
      %v2272 = vpop.f32.mrf.mxu0
      %v2273 = vadd.f32 0.0, %v2272
      %v2274 = vpop.f32.mrf.mxu0
      %2275 = vmatprep.mubr.bf16.mxu0 0
      %2276 = vmatmul.mubr.bf16.gmra.mxu0 %v2122
      %v2277 = vpop.f32.mrf.mxu0
      %v2278 = vadd.f32 0.0, %v2277
      %v2279 = vpop.f32.mrf.mxu0
      %v2280 = vpop.f32.mrf.mxu0
      %v2281 = vadd.f32 0.0, %v2280
      %v2282 = vpop.f32.mrf.mxu0
      %2283 = vmatprep.mubr.bf16.mxu0 0
      %2284 = vmatmul.mubr.bf16.gmra.mxu0 %v2125
      %v2285 = vpop.f32.mrf.mxu0
      %v2286 = vadd.f32 0.0, %v2285
      %v2287 = vpop.f32.mrf.mxu0
      %v2288 = vpop.f32.mrf.mxu0
      %v2289 = vadd.f32 0.0, %v2288
      %v2290 = vpop.f32.mrf.mxu0
      %2291 = vmatprep.mubr.bf16.mxu0 0
      %2292 = vmatmul.mubr.bf16.gmra.mxu0 %v2128
      %v2293 = vpop.f32.mrf.mxu0
      %v2294 = vadd.f32 0.0, %v2293
      %v2295 = vpop.f32.mrf.mxu0
      %v2296 = vpop.f32.mrf.mxu0
      %v2297 = vadd.f32 0.0, %v2296
      %v2298 = vpop.f32.mrf.mxu0
      %2299 = vmatprep.mubr.bf16.mxu0 0
      %2300 = vmatmul.mubr.bf16.gmra.mxu0 %v2131
      %v2301 = vpop.f32.mrf.mxu0
      %v2302 = vadd.f32 0.0, %v2301
      %v2303 = vpop.f32.mrf.mxu0
      %v2304 = vpop.f32.mrf.mxu0
      %v2305 = vadd.f32 0.0, %v2304
      %v2306 = vpop.f32.mrf.mxu0
      %2307 = vmatprep.mubr.bf16.mxu0 0
      %2308 = vmatmul.mubr.bf16.gmra.mxu0 %v2134
      %v2309 = vpop.f32.mrf.mxu0
      %v2310 = vadd.f32 0.0, %v2309
      %v2311 = vpop.f32.mrf.mxu0
      %v2312 = vpop.f32.mrf.mxu0
      %v2313 = vadd.f32 0.0, %v2312
      %v2314 = vpop.f32.mrf.mxu0
      %2315 = vdwg.mxu0
      %v2316 = vadd.f32 %v1877, %v2174
      %v2317 = vadd.f32 %v1878, %v2177
      %v2318 = vadd.f32 %v1879, %v2182
      %v2319 = vadd.f32 %v1880, %v2185
      %v2320 = vadd.f32 %v1881, %v2190
      %v2321 = vadd.f32 %v1882, %v2193
      %v2322 = vadd.f32 %v1883, %v2198
      %v2323 = vadd.f32 %v1884, %v2201
      %v2324 = vadd.f32 %v1885, %v2206
      %v2325 = vadd.f32 %v1886, %v2209
      %v2326 = vadd.f32 %v1887, %v2214
      %v2327 = vadd.f32 %v1888, %v2217
      %v2328 = vadd.f32 %v1889, %v2222
      %v2329 = vadd.f32 %v1890, %v2225
      %v2330 = vadd.f32 %v1891, %v2230
      %v2331 = vadd.f32 %v1892, %v2233
      %v2332 = vadd.f32 %v1893, %v2238
      %v2333 = vadd.f32 %v1894, %v2241
      %v2334 = vadd.f32 %v1895, %v2246
      %v2335 = vadd.f32 %v1896, %v2249
      %v2336 = vadd.f32 %v1897, %v2254
      %v2337 = vadd.f32 %v1898, %v2257
      %v2338 = vadd.f32 %v1899, %v2262
      %v2339 = vadd.f32 %v1900, %v2265
      %v2340 = vadd.f32 %v1901, %v2270
      %v2341 = vadd.f32 %v1902, %v2273
      %v2342 = vadd.f32 %v1903, %v2278
      %v2343 = vadd.f32 %v1904, %v2281
      %v2344 = vadd.f32 %v1905, %v2286
      %v2345 = vadd.f32 %v1906, %v2289
      %v2346 = vadd.f32 %v1907, %v2294
      %v2347 = vadd.f32 %v1908, %v2297
      %v2348 = vadd.f32 %v1909, %v2302
      %v2349 = vadd.f32 %v1910, %v2305
      %v2350 = vadd.f32 %v1911, %v2310
      %v2351 = vadd.f32 %v1912, %v2313
      %v2352 = vld [vmem:[%s203 + $0x98] sm:$0x3]
      %s2353 = scalar_lea.vmem %s1, 8
      %v2354 = vld [vmem:[%s2353] sm:$0x3]
      %v2356 = vunpack.c.l.b16 %v2352
      %v2357 = vpack.c.b16 %v2356, %v2356
      %vm2358 = vsmask.f32 6400
      %v2360 = vshrl.u32 %v2026, 16
      %v2362 = vrot.slane %v2360, 1
      %v2363 = vshll.u32 %v2026, 16
      %v2365 = vrot.slane %v2363, 2
      %v2366 = vor.u32 %v2362, %v2365
      %v2368 = vshrl.u32 %v2027, 16
      %v2370 = vrot.slane %v2368, 1
      %v2371 = vshll.u32 %v2027, 16
      %v2373 = vrot.slane %v2371, 2
      %v2374 = vor.u32 %v2370, %v2373
      %v2375 = vsel %vm2358, %v2366, %v2374
      %v2377 = vshrl.u32 %v2028, 16
      %v2379 = vrot.slane %v2377, 1
      %v2380 = vshll.u32 %v2028, 16
      %v2382 = vrot.slane %v2380, 2
      %v2383 = vor.u32 %v2379, %v2382
      %v2384 = vsel %vm2358, %v2374, %v2383
      %v2386 = vshrl.u32 %v2029, 16
      %v2388 = vrot.slane %v2386, 1
      %v2389 = vshll.u32 %v2029, 16
      %v2391 = vrot.slane %v2389, 2
      %v2392 = vor.u32 %v2388, %v2391
      %v2393 = vsel %vm2358, %v2383, %v2392
      %v2395 = vshrl.u32 %v2030, 16
      %v2397 = vrot.slane %v2395, 1
      %v2398 = vshll.u32 %v2030, 16
      %v2400 = vrot.slane %v2398, 2
      %v2401 = vor.u32 %v2397, %v2400
      %v2402 = vsel %vm2358, %v2392, %v2401
      %v2404 = vshrl.u32 %v2031, 16
      %v2406 = vrot.slane %v2404, 1
      %v2407 = vshll.u32 %v2031, 16
      %v2409 = vrot.slane %v2407, 2
      %v2410 = vor.u32 %v2406, %v2409
      %v2411 = vsel %vm2358, %v2401, %v2410
      %v2413 = vshrl.u32 %v2032, 16
      %v2415 = vrot.slane %v2413, 1
      %v2416 = vshll.u32 %v2032, 16
      %v2418 = vrot.slane %v2416, 2
      %v2419 = vor.u32 %v2415, %v2418
      %v2420 = vsel %vm2358, %v2410, %v2419
      %v2422 = vshrl.u32 %v2033, 16
      %v2424 = vrot.slane %v2422, 1
      %v2425 = vshll.u32 %v2033, 16
      %v2427 = vrot.slane %v2425, 2
      %v2428 = vor.u32 %v2424, %v2427
      %v2429 = vsel %vm2358, %v2419, %v2428
      %v2431 = vshrl.u32 %v2034, 16
      %v2433 = vrot.slane %v2431, 1
      %v2434 = vshll.u32 %v2034, 16
      %v2436 = vrot.slane %v2434, 2
      %v2437 = vor.u32 %v2433, %v2436
      %v2438 = vsel %vm2358, %v2428, %v2437
      %v2440 = vshrl.u32 %v2035, 16
      %v2442 = vrot.slane %v2440, 1
      %v2443 = vshll.u32 %v2035, 16
      %v2445 = vrot.slane %v2443, 2
      %v2446 = vor.u32 %v2442, %v2445
      %v2447 = vsel %vm2358, %v2437, %v2446
      %v2449 = vshrl.u32 %v2036, 16
      %v2451 = vrot.slane %v2449, 1
      %v2452 = vshll.u32 %v2036, 16
      %v2454 = vrot.slane %v2452, 2
      %v2455 = vor.u32 %v2451, %v2454
      %v2456 = vsel %vm2358, %v2446, %v2455
      %v2458 = vshrl.u32 %v2037, 16
      %v2460 = vrot.slane %v2458, 1
      %v2461 = vshll.u32 %v2037, 16
      %v2463 = vrot.slane %v2461, 2
      %v2464 = vor.u32 %v2460, %v2463
      %v2465 = vsel %vm2358, %v2455, %v2464
      %v2467 = vshrl.u32 %v2038, 16
      %v2469 = vrot.slane %v2467, 1
      %v2470 = vshll.u32 %v2038, 16
      %v2472 = vrot.slane %v2470, 2
      %v2473 = vor.u32 %v2469, %v2472
      %v2474 = vsel %vm2358, %v2464, %v2473
      %v2476 = vshrl.u32 %v2039, 16
      %v2478 = vrot.slane %v2476, 1
      %v2479 = vshll.u32 %v2039, 16
      %v2481 = vrot.slane %v2479, 2
      %v2482 = vor.u32 %v2478, %v2481
      %v2483 = vsel %vm2358, %v2473, %v2482
      %v2485 = vshrl.u32 %v2040, 16
      %v2487 = vrot.slane %v2485, 1
      %v2488 = vshll.u32 %v2040, 16
      %v2490 = vrot.slane %v2488, 2
      %v2491 = vor.u32 %v2487, %v2490
      %v2492 = vsel %vm2358, %v2482, %v2491
      %v2494 = vshrl.u32 %v2041, 16
      %v2496 = vrot.slane %v2494, 1
      %v2497 = vshll.u32 %v2041, 16
      %v2499 = vrot.slane %v2497, 2
      %v2500 = vor.u32 %v2496, %v2499
      %v2501 = vsel %vm2358, %v2491, %v2500
      %v2503 = vshrl.u32 %v2042, 16
      %v2505 = vrot.slane %v2503, 1
      %v2506 = vshll.u32 %v2042, 16
      %v2508 = vrot.slane %v2506, 2
      %v2509 = vor.u32 %v2505, %v2508
      %v2510 = vsel %vm2358, %v2500, %v2509
      %v2512 = vshrl.u32 %v2043, 16
      %v2514 = vrot.slane %v2512, 1
      %v2515 = vshll.u32 %v2043, 16
      %v2517 = vrot.slane %v2515, 2
      %v2518 = vor.u32 %v2514, %v2517
      %v2519 = vsel %vm2358, %v2509, %v2518
      %v2521 = vshrl.u32 %v2357, 16
      %v2523 = vrot.slane %v2521, 1
      %v2524 = vshll.u32 %v2357, 16
      %v2526 = vrot.slane %v2524, 2
      %v2527 = vor.u32 %v2523, %v2526
      %v2528 = vsel %vm2358, %v2518, %v2527
      %v2530 = vsel %vm1147, %v2375, 0
      %v2533 = vsel %vm1147, %v2384, 0
      %v2536 = vsel %vm1147, %v2393, 0
      %v2539 = vsel %vm1147, %v2402, 0
      %v2542 = vsel %vm1147, %v2411, 0
      %v2545 = vsel %vm1147, %v2420, 0
      %v2548 = vsel %vm1147, %v2429, 0
      %v2551 = vsel %vm1147, %v2438, 0
      %v2554 = vsel %vm1147, %v2447, 0
      %v2557 = vsel %vm1147, %v2456, 0
      %v2560 = vsel %vm1147, %v2465, 0
      %v2563 = vsel %vm1147, %v2474, 0
      %v2566 = vsel %vm1147, %v2483, 0
      %v2569 = vsel %vm1147, %v2492, 0
      %v2572 = vsel %vm1147, %v2501, 0
      %v2575 = vsel %vm1147, %v2510, 0
      %v2578 = vsel %vm1147, %v2519, 0
      %v2581 = vsel %vm1147, %v2528, 0
      %v2584 = vsel %vm1202, %v2354, 0
      %2586 = vmatprep.subr.bf16.mxu0 0
      %2587 = vmatpush1.bf16.msra.mxu0 0
      %2588 = vmatprep.subr.bf16.mxu0 0
      %2589 = vmatpush1.bf16.msra.mxu0 0
      %2590 = vmatprep.subr.bf16.mxu0 0
      %2591 = vmatpush1.bf16.msra.mxu0 0
      %2592 = vmatprep.subr.bf16.mxu0 0
      %2593 = vmatpush1.bf16.msra.mxu0 0
      %2594 = vmatprep.subr.bf16.mxu0 0
      %2595 = vmatpush1.bf16.msra.mxu0 0
      %2596 = vmatprep.subr.bf16.mxu0 0
      %2597 = vmatpush1.bf16.msra.mxu0 0
      %2598 = vmatprep.subr.bf16.mxu0 0
      %2599 = vmatpush1.bf16.msra.mxu0 0
      %2600 = vmatprep.subr.bf16.mxu0 0
      %2601 = vmatpush1.bf16.msra.mxu0 %v2584
      %2602 = vmatprep.subr.bf16.mxu0 0
      %2603 = vmatpush2.bf16.msra.mxu0 0
      %2604 = vmatprep.subr.bf16.mxu0 0
      %2605 = vmatpush2.bf16.msra.mxu0 0
      %2606 = vmatprep.subr.bf16.mxu0 0
      %2607 = vmatpush2.bf16.msra.mxu0 0
      %2608 = vmatprep.subr.bf16.mxu0 0
      %2609 = vmatpush2.bf16.msra.mxu0 0
      %2610 = vmatprep.subr.bf16.mxu0 0
      %2611 = vmatpush2.bf16.msra.mxu0 0
      %2612 = vmatprep.subr.bf16.mxu0 0
      %2613 = vmatpush2.bf16.msra.mxu0 0
      %2614 = vmatprep.subr.bf16.mxu0 0
      %2615 = vmatpush2.bf16.msra.mxu0 0
      %2616 = vmatprep.subr.bf16.mxu0 0
      %2617 = vmatpush2.bf16.msra.mxu0 0
      %2618 = vmatprep.mubr.bf16.mxu0 0
      %2619 = vmatmul.mubr.bf16.gmra.mxu0 %v2530
      %v2620 = vpop.f32.mrf.mxu0
      %v2621 = vadd.f32 0.0, %v2620
      %v2622 = vpop.f32.mrf.mxu0
      %v2623 = vpop.f32.mrf.mxu0
      %v2624 = vadd.f32 0.0, %v2623
      %v2625 = vpop.f32.mrf.mxu0
      %2626 = vmatprep.mubr.bf16.mxu0 0
      %2627 = vmatmul.mubr.bf16.gmra.mxu0 %v2533
      %v2628 = vpop.f32.mrf.mxu0
      %v2629 = vadd.f32 0.0, %v2628
      %v2630 = vpop.f32.mrf.mxu0
      %v2631 = vpop.f32.mrf.mxu0
      %v2632 = vadd.f32 0.0, %v2631
      %v2633 = vpop.f32.mrf.mxu0
      %2634 = vmatprep.mubr.bf16.mxu0 0
      %2635 = vmatmul.mubr.bf16.gmra.mxu0 %v2536
      %v2636 = vpop.f32.mrf.mxu0
      %v2637 = vadd.f32 0.0, %v2636
      %v2638 = vpop.f32.mrf.mxu0
      %v2639 = vpop.f32.mrf.mxu0
      %v2640 = vadd.f32 0.0, %v2639
      %v2641 = vpop.f32.mrf.mxu0
      %2642 = vmatprep.mubr.bf16.mxu0 0
      %2643 = vmatmul.mubr.bf16.gmra.mxu0 %v2539
      %v2644 = vpop.f32.mrf.mxu0
      %v2645 = vadd.f32 0.0, %v2644
      %v2646 = vpop.f32.mrf.mxu0
      %v2647 = vpop.f32.mrf.mxu0
      %v2648 = vadd.f32 0.0, %v2647
      %v2649 = vpop.f32.mrf.mxu0
      %2650 = vmatprep.mubr.bf16.mxu0 0
      %2651 = vmatmul.mubr.bf16.gmra.mxu0 %v2542
      %v2652 = vpop.f32.mrf.mxu0
      %v2653 = vadd.f32 0.0, %v2652
      %v2654 = vpop.f32.mrf.mxu0
      %v2655 = vpop.f32.mrf.mxu0
      %v2656 = vadd.f32 0.0, %v2655
      %v2657 = vpop.f32.mrf.mxu0
      %2658 = vmatprep.mubr.bf16.mxu0 0
      %2659 = vmatmul.mubr.bf16.gmra.mxu0 %v2545
      %v2660 = vpop.f32.mrf.mxu0
      %v2661 = vadd.f32 0.0, %v2660
      %v2662 = vpop.f32.mrf.mxu0
      %v2663 = vpop.f32.mrf.mxu0
      %v2664 = vadd.f32 0.0, %v2663
      %v2665 = vpop.f32.mrf.mxu0
      %2666 = vmatprep.mubr.bf16.mxu0 0
      %2667 = vmatmul.mubr.bf16.gmra.mxu0 %v2548
      %v2668 = vpop.f32.mrf.mxu0
      %v2669 = vadd.f32 0.0, %v2668
      %v2670 = vpop.f32.mrf.mxu0
      %v2671 = vpop.f32.mrf.mxu0
      %v2672 = vadd.f32 0.0, %v2671
      %v2673 = vpop.f32.mrf.mxu0
      %2674 = vmatprep.mubr.bf16.mxu0 0
      %2675 = vmatmul.mubr.bf16.gmra.mxu0 %v2551
      %v2676 = vpop.f32.mrf.mxu0
      %v2677 = vadd.f32 0.0, %v2676
      %v2678 = vpop.f32.mrf.mxu0
      %v2679 = vpop.f32.mrf.mxu0
      %v2680 = vadd.f32 0.0, %v2679
      %v2681 = vpop.f32.mrf.mxu0
      %2682 = vmatprep.mubr.bf16.mxu0 0
      %2683 = vmatmul.mubr.bf16.gmra.mxu0 %v2554
      %v2684 = vpop.f32.mrf.mxu0
      %v2685 = vadd.f32 0.0, %v2684
      %v2686 = vpop.f32.mrf.mxu0
      %v2687 = vpop.f32.mrf.mxu0
      %v2688 = vadd.f32 0.0, %v2687
      %v2689 = vpop.f32.mrf.mxu0
      %2690 = vmatprep.mubr.bf16.mxu0 0
      %2691 = vmatmul.mubr.bf16.gmra.mxu0 %v2557
      %v2692 = vpop.f32.mrf.mxu0
      %v2693 = vadd.f32 0.0, %v2692
      %v2694 = vpop.f32.mrf.mxu0
      %v2695 = vpop.f32.mrf.mxu0
      %v2696 = vadd.f32 0.0, %v2695
      %v2697 = vpop.f32.mrf.mxu0
      %2698 = vmatprep.mubr.bf16.mxu0 0
      %2699 = vmatmul.mubr.bf16.gmra.mxu0 %v2560
      %v2700 = vpop.f32.mrf.mxu0
      %v2701 = vadd.f32 0.0, %v2700
      %v2702 = vpop.f32.mrf.mxu0
      %v2703 = vpop.f32.mrf.mxu0
      %v2704 = vadd.f32 0.0, %v2703
      %v2705 = vpop.f32.mrf.mxu0
      %2706 = vmatprep.mubr.bf16.mxu0 0
      %2707 = vmatmul.mubr.bf16.gmra.mxu0 %v2563
      %v2708 = vpop.f32.mrf.mxu0
      %v2709 = vadd.f32 0.0, %v2708
      %v2710 = vpop.f32.mrf.mxu0
      %v2711 = vpop.f32.mrf.mxu0
      %v2712 = vadd.f32 0.0, %v2711
      %v2713 = vpop.f32.mrf.mxu0
      %2714 = vmatprep.mubr.bf16.mxu0 0
      %2715 = vmatmul.mubr.bf16.gmra.mxu0 %v2566
      %v2716 = vpop.f32.mrf.mxu0
      %v2717 = vadd.f32 0.0, %v2716
      %v2718 = vpop.f32.mrf.mxu0
      %v2719 = vpop.f32.mrf.mxu0
      %v2720 = vadd.f32 0.0, %v2719
      %v2721 = vpop.f32.mrf.mxu0
      %2722 = vmatprep.mubr.bf16.mxu0 0
      %2723 = vmatmul.mubr.bf16.gmra.mxu0 %v2569
      %v2724 = vpop.f32.mrf.mxu0
      %v2725 = vadd.f32 0.0, %v2724
      %v2726 = vpop.f32.mrf.mxu0
      %v2727 = vpop.f32.mrf.mxu0
      %v2728 = vadd.f32 0.0, %v2727
      %v2729 = vpop.f32.mrf.mxu0
      %2730 = vmatprep.mubr.bf16.mxu0 0
      %2731 = vmatmul.mubr.bf16.gmra.mxu0 %v2572
      %v2732 = vpop.f32.mrf.mxu0
      %v2733 = vadd.f32 0.0, %v2732
      %v2734 = vpop.f32.mrf.mxu0
      %v2735 = vpop.f32.mrf.mxu0
      %v2736 = vadd.f32 0.0, %v2735
      %v2737 = vpop.f32.mrf.mxu0
      %2738 = vmatprep.mubr.bf16.mxu0 0
      %2739 = vmatmul.mubr.bf16.gmra.mxu0 %v2575
      %v2740 = vpop.f32.mrf.mxu0
      %v2741 = vadd.f32 0.0, %v2740
      %v2742 = vpop.f32.mrf.mxu0
      %v2743 = vpop.f32.mrf.mxu0
      %v2744 = vadd.f32 0.0, %v2743
      %v2745 = vpop.f32.mrf.mxu0
      %2746 = vmatprep.mubr.bf16.mxu0 0
      %2747 = vmatmul.mubr.bf16.gmra.mxu0 %v2578
      %v2748 = vpop.f32.mrf.mxu0
      %v2749 = vadd.f32 0.0, %v2748
      %v2750 = vpop.f32.mrf.mxu0
      %v2751 = vpop.f32.mrf.mxu0
      %v2752 = vadd.f32 0.0, %v2751
      %v2753 = vpop.f32.mrf.mxu0
      %2754 = vmatprep.mubr.bf16.mxu0 0
      %2755 = vmatmul.mubr.bf16.gmra.mxu0 %v2581
      %v2756 = vpop.f32.mrf.mxu0
      %v2757 = vadd.f32 0.0, %v2756
      %v2758 = vpop.f32.mrf.mxu0
      %v2759 = vpop.f32.mrf.mxu0
      %v2760 = vadd.f32 0.0, %v2759
      %v2761 = vpop.f32.mrf.mxu0
      %2762 = vdwg.mxu0
      %v2763 = vadd.f32 %v2316, %v2621
      %v2764 = vadd.f32 %v2317, %v2624
      %v2765 = vadd.f32 %v2318, %v2629
      %v2766 = vadd.f32 %v2319, %v2632
      %v2767 = vadd.f32 %v2320, %v2637
      %v2768 = vadd.f32 %v2321, %v2640
      %v2769 = vadd.f32 %v2322, %v2645
      %v2770 = vadd.f32 %v2323, %v2648
      %v2771 = vadd.f32 %v2324, %v2653
      %v2772 = vadd.f32 %v2325, %v2656
      %v2773 = vadd.f32 %v2326, %v2661
      %v2774 = vadd.f32 %v2327, %v2664
      %v2775 = vadd.f32 %v2328, %v2669
      %v2776 = vadd.f32 %v2329, %v2672
      %v2777 = vadd.f32 %v2330, %v2677
      %v2778 = vadd.f32 %v2331, %v2680
      %v2779 = vadd.f32 %v2332, %v2685
      %v2780 = vadd.f32 %v2333, %v2688
      %v2781 = vadd.f32 %v2334, %v2693
      %v2782 = vadd.f32 %v2335, %v2696
      %v2783 = vadd.f32 %v2336, %v2701
      %v2784 = vadd.f32 %v2337, %v2704
      %v2785 = vadd.f32 %v2338, %v2709
      %v2786 = vadd.f32 %v2339, %v2712
      %v2787 = vadd.f32 %v2340, %v2717
      %v2788 = vadd.f32 %v2341, %v2720
      %v2789 = vadd.f32 %v2342, %v2725
      %v2790 = vadd.f32 %v2343, %v2728
      %v2791 = vadd.f32 %v2344, %v2733
      %v2792 = vadd.f32 %v2345, %v2736
      %v2793 = vadd.f32 %v2346, %v2741
      %v2794 = vadd.f32 %v2347, %v2744
      %v2795 = vadd.f32 %v2348, %v2749
      %v2796 = vadd.f32 %v2349, %v2752
      %v2797 = vadd.f32 %v2350, %v2757
      %v2798 = vadd.f32 %v2351, %v2760
      %v2799 = vld [vmem:[%s203 + $0x8] sm:$0xc]
      %s2800 = scalar_lea.vmem %s1, 10
      %v2801 = vld [vmem:[%s2800] sm:$0x3]
      %v2803 = vunpack.c.l.b16 %v2799
      %v2804 = vpack.c.b16 %v1990, %v2803
      %vm2805 = vcmask 1045504
      %v2806 = vrot.slane %v2804, 2
      %v2807 = vrot.slane %v2027, 2
      %v2808 = vsel %vm2805, %v2806, %v2807
      %v2809 = vrot.slane %v2028, 2
      %v2810 = vsel %vm2805, %v2807, %v2809
      %v2811 = vrot.slane %v2029, 2
      %v2812 = vsel %vm2805, %v2809, %v2811
      %v2813 = vrot.slane %v2030, 2
      %v2814 = vsel %vm2805, %v2811, %v2813
      %v2815 = vrot.slane %v2031, 2
      %v2816 = vsel %vm2805, %v2813, %v2815
      %v2817 = vrot.slane %v2032, 2
      %v2818 = vsel %vm2805, %v2815, %v2817
      %v2819 = vrot.slane %v2033, 2
      %v2820 = vsel %vm2805, %v2817, %v2819
      %v2821 = vrot.slane %v2034, 2
      %v2822 = vsel %vm2805, %v2819, %v2821
      %v2823 = vrot.slane %v2035, 2
      %v2824 = vsel %vm2805, %v2821, %v2823
      %v2825 = vrot.slane %v2036, 2
      %v2826 = vsel %vm2805, %v2823, %v2825
      %v2827 = vrot.slane %v2037, 2
      %v2828 = vsel %vm2805, %v2825, %v2827
      %v2829 = vrot.slane %v2038, 2
      %v2830 = vsel %vm2805, %v2827, %v2829
      %v2831 = vrot.slane %v2039, 2
      %v2832 = vsel %vm2805, %v2829, %v2831
      %v2833 = vrot.slane %v2040, 2
      %v2834 = vsel %vm2805, %v2831, %v2833
      %v2835 = vrot.slane %v2041, 2
      %v2836 = vsel %vm2805, %v2833, %v2835
      %v2837 = vrot.slane %v2042, 2
      %v2838 = vsel %vm2805, %v2835, %v2837
      %v2839 = vrot.slane %v2043, 2
      %v2840 = vsel %vm2805, %v2837, %v2839
      %v2841 = vrot.slane %v2357, 2
      %v2842 = vsel %vm2805, %v2839, %v2841
      %v2844 = vsel %vm1147, %v2808, 0
      %v2847 = vsel %vm1147, %v2810, 0
      %v2850 = vsel %vm1147, %v2812, 0
      %v2853 = vsel %vm1147, %v2814, 0
      %v2856 = vsel %vm1147, %v2816, 0
      %v2859 = vsel %vm1147, %v2818, 0
      %v2862 = vsel %vm1147, %v2820, 0
      %v2865 = vsel %vm1147, %v2822, 0
      %v2868 = vsel %vm1147, %v2824, 0
      %v2871 = vsel %vm1147, %v2826, 0
      %v2874 = vsel %vm1147, %v2828, 0
      %v2877 = vsel %vm1147, %v2830, 0
      %v2880 = vsel %vm1147, %v2832, 0
      %v2883 = vsel %vm1147, %v2834, 0
      %v2886 = vsel %vm1147, %v2836, 0
      %v2889 = vsel %vm1147, %v2838, 0
      %v2892 = vsel %vm1147, %v2840, 0
      %v2895 = vsel %vm1147, %v2842, 0
      %v2898 = vsel %vm1202, %v2801, 0
      %2900 = vmatprep.subr.bf16.mxu0 0
      %2901 = vmatpush1.bf16.msra.mxu0 0
      %2902 = vmatprep.subr.bf16.mxu0 0
      %2903 = vmatpush1.bf16.msra.mxu0 0
      %2904 = vmatprep.subr.bf16.mxu0 0
      %2905 = vmatpush1.bf16.msra.mxu0 0
      %2906 = vmatprep.subr.bf16.mxu0 0
      %2907 = vmatpush1.bf16.msra.mxu0 0
      %2908 = vmatprep.subr.bf16.mxu0 0
      %2909 = vmatpush1.bf16.msra.mxu0 0
      %2910 = vmatprep.subr.bf16.mxu0 0
      %2911 = vmatpush1.bf16.msra.mxu0 0
      %2912 = vmatprep.subr.bf16.mxu0 0
      %2913 = vmatpush1.bf16.msra.mxu0 0
      %2914 = vmatprep.subr.bf16.mxu0 0
      %2915 = vmatpush1.bf16.msra.mxu0 %v2898
      %2916 = vmatprep.subr.bf16.mxu0 0
      %2917 = vmatpush2.bf16.msra.mxu0 0
      %2918 = vmatprep.subr.bf16.mxu0 0
      %2919 = vmatpush2.bf16.msra.mxu0 0
      %2920 = vmatprep.subr.bf16.mxu0 0
      %2921 = vmatpush2.bf16.msra.mxu0 0
      %2922 = vmatprep.subr.bf16.mxu0 0
      %2923 = vmatpush2.bf16.msra.mxu0 0
      %2924 = vmatprep.subr.bf16.mxu0 0
      %2925 = vmatpush2.bf16.msra.mxu0 0
      %2926 = vmatprep.subr.bf16.mxu0 0
      %2927 = vmatpush2.bf16.msra.mxu0 0
      %2928 = vmatprep.subr.bf16.mxu0 0
      %2929 = vmatpush2.bf16.msra.mxu0 0
      %2930 = vmatprep.subr.bf16.mxu0 0
      %2931 = vmatpush2.bf16.msra.mxu0 0
      %2932 = vmatprep.mubr.bf16.mxu0 0
      %2933 = vmatmul.mubr.bf16.gmra.mxu0 %v2844
      %v2934 = vpop.f32.mrf.mxu0
      %v2935 = vadd.f32 0.0, %v2934
      %v2936 = vpop.f32.mrf.mxu0
      %v2937 = vpop.f32.mrf.mxu0
      %v2938 = vadd.f32 0.0, %v2937
      %v2939 = vpop.f32.mrf.mxu0
      %2940 = vmatprep.mubr.bf16.mxu0 0
      %2941 = vmatmul.mubr.bf16.gmra.mxu0 %v2847
      %v2942 = vpop.f32.mrf.mxu0
      %v2943 = vadd.f32 0.0, %v2942
      %v2944 = vpop.f32.mrf.mxu0
      %v2945 = vpop.f32.mrf.mxu0
      %v2946 = vadd.f32 0.0, %v2945
      %v2947 = vpop.f32.mrf.mxu0
      %2948 = vmatprep.mubr.bf16.mxu0 0
      %2949 = vmatmul.mubr.bf16.gmra.mxu0 %v2850
      %v2950 = vpop.f32.mrf.mxu0
      %v2951 = vadd.f32 0.0, %v2950
      %v2952 = vpop.f32.mrf.mxu0
      %v2953 = vpop.f32.mrf.mxu0
      %v2954 = vadd.f32 0.0, %v2953
      %v2955 = vpop.f32.mrf.mxu0
      %2956 = vmatprep.mubr.bf16.mxu0 0
      %2957 = vmatmul.mubr.bf16.gmra.mxu0 %v2853
      %v2958 = vpop.f32.mrf.mxu0
      %v2959 = vadd.f32 0.0, %v2958
      %v2960 = vpop.f32.mrf.mxu0
      %v2961 = vpop.f32.mrf.mxu0
      %v2962 = vadd.f32 0.0, %v2961
      %v2963 = vpop.f32.mrf.mxu0
      %2964 = vmatprep.mubr.bf16.mxu0 0
      %2965 = vmatmul.mubr.bf16.gmra.mxu0 %v2856
      %v2966 = vpop.f32.mrf.mxu0
      %v2967 = vadd.f32 0.0, %v2966
      %v2968 = vpop.f32.mrf.mxu0
      %v2969 = vpop.f32.mrf.mxu0
      %v2970 = vadd.f32 0.0, %v2969
      %v2971 = vpop.f32.mrf.mxu0
      %2972 = vmatprep.mubr.bf16.mxu0 0
      %2973 = vmatmul.mubr.bf16.gmra.mxu0 %v2859
      %v2974 = vpop.f32.mrf.mxu0
      %v2975 = vadd.f32 0.0, %v2974
      %v2976 = vpop.f32.mrf.mxu0
      %v2977 = vpop.f32.mrf.mxu0
      %v2978 = vadd.f32 0.0, %v2977
      %v2979 = vpop.f32.mrf.mxu0
      %2980 = vmatprep.mubr.bf16.mxu0 0
      %2981 = vmatmul.mubr.bf16.gmra.mxu0 %v2862
      %v2982 = vpop.f32.mrf.mxu0
      %v2983 = vadd.f32 0.0, %v2982
      %v2984 = vpop.f32.mrf.mxu0
      %v2985 = vpop.f32.mrf.mxu0
      %v2986 = vadd.f32 0.0, %v2985
      %v2987 = vpop.f32.mrf.mxu0
      %2988 = vmatprep.mubr.bf16.mxu0 0
      %2989 = vmatmul.mubr.bf16.gmra.mxu0 %v2865
      %v2990 = vpop.f32.mrf.mxu0
      %v2991 = vadd.f32 0.0, %v2990
      %v2992 = vpop.f32.mrf.mxu0
      %v2993 = vpop.f32.mrf.mxu0
      %v2994 = vadd.f32 0.0, %v2993
      %v2995 = vpop.f32.mrf.mxu0
      %2996 = vmatprep.mubr.bf16.mxu0 0
      %2997 = vmatmul.mubr.bf16.gmra.mxu0 %v2868
      %v2998 = vpop.f32.mrf.mxu0
      %v2999 = vadd.f32 0.0, %v2998
      %v3000 = vpop.f32.mrf.mxu0
      %v3001 = vpop.f32.mrf.mxu0
      %v3002 = vadd.f32 0.0, %v3001
      %v3003 = vpop.f32.mrf.mxu0
      %3004 = vmatprep.mubr.bf16.mxu0 0
      %3005 = vmatmul.mubr.bf16.gmra.mxu0 %v2871
      %v3006 = vpop.f32.mrf.mxu0
      %v3007 = vadd.f32 0.0, %v3006
      %v3008 = vpop.f32.mrf.mxu0
      %v3009 = vpop.f32.mrf.mxu0
      %v3010 = vadd.f32 0.0, %v3009
      %v3011 = vpop.f32.mrf.mxu0
      %3012 = vmatprep.mubr.bf16.mxu0 0
      %3013 = vmatmul.mubr.bf16.gmra.mxu0 %v2874
      %v3014 = vpop.f32.mrf.mxu0
      %v3015 = vadd.f32 0.0, %v3014
      %v3016 = vpop.f32.mrf.mxu0
      %v3017 = vpop.f32.mrf.mxu0
      %v3018 = vadd.f32 0.0, %v3017
      %v3019 = vpop.f32.mrf.mxu0
      %3020 = vmatprep.mubr.bf16.mxu0 0
      %3021 = vmatmul.mubr.bf16.gmra.mxu0 %v2877
      %v3022 = vpop.f32.mrf.mxu0
      %v3023 = vadd.f32 0.0, %v3022
      %v3024 = vpop.f32.mrf.mxu0
      %v3025 = vpop.f32.mrf.mxu0
      %v3026 = vadd.f32 0.0, %v3025
      %v3027 = vpop.f32.mrf.mxu0
      %3028 = vmatprep.mubr.bf16.mxu0 0
      %3029 = vmatmul.mubr.bf16.gmra.mxu0 %v2880
      %v3030 = vpop.f32.mrf.mxu0
      %v3031 = vadd.f32 0.0, %v3030
      %v3032 = vpop.f32.mrf.mxu0
      %v3033 = vpop.f32.mrf.mxu0
      %v3034 = vadd.f32 0.0, %v3033
      %v3035 = vpop.f32.mrf.mxu0
      %3036 = vmatprep.mubr.bf16.mxu0 0
      %3037 = vmatmul.mubr.bf16.gmra.mxu0 %v2883
      %v3038 = vpop.f32.mrf.mxu0
      %v3039 = vadd.f32 0.0, %v3038
      %v3040 = vpop.f32.mrf.mxu0
      %v3041 = vpop.f32.mrf.mxu0
      %v3042 = vadd.f32 0.0, %v3041
      %v3043 = vpop.f32.mrf.mxu0
      %3044 = vmatprep.mubr.bf16.mxu0 0
      %3045 = vmatmul.mubr.bf16.gmra.mxu0 %v2886
      %v3046 = vpop.f32.mrf.mxu0
      %v3047 = vadd.f32 0.0, %v3046
      %v3048 = vpop.f32.mrf.mxu0
      %v3049 = vpop.f32.mrf.mxu0
      %v3050 = vadd.f32 0.0, %v3049
      %v3051 = vpop.f32.mrf.mxu0
      %3052 = vmatprep.mubr.bf16.mxu0 0
      %3053 = vmatmul.mubr.bf16.gmra.mxu0 %v2889
      %v3054 = vpop.f32.mrf.mxu0
      %v3055 = vadd.f32 0.0, %v3054
      %v3056 = vpop.f32.mrf.mxu0
      %v3057 = vpop.f32.mrf.mxu0
      %v3058 = vadd.f32 0.0, %v3057
      %v3059 = vpop.f32.mrf.mxu0
      %3060 = vmatprep.mubr.bf16.mxu0 0
      %3061 = vmatmul.mubr.bf16.gmra.mxu0 %v2892
      %v3062 = vpop.f32.mrf.mxu0
      %v3063 = vadd.f32 0.0, %v3062
      %v3064 = vpop.f32.mrf.mxu0
      %v3065 = vpop.f32.mrf.mxu0
      %v3066 = vadd.f32 0.0, %v3065
      %v3067 = vpop.f32.mrf.mxu0
      %3068 = vmatprep.mubr.bf16.mxu0 0
      %3069 = vmatmul.mubr.bf16.gmra.mxu0 %v2895
      %v3070 = vpop.f32.mrf.mxu0
      %v3071 = vadd.f32 0.0, %v3070
      %v3072 = vpop.f32.mrf.mxu0
      %v3073 = vpop.f32.mrf.mxu0
      %v3074 = vadd.f32 0.0, %v3073
      %v3075 = vpop.f32.mrf.mxu0
      %3076 = vdwg.mxu0
      %v3077 = vadd.f32 %v2763, %v2935
      %v3078 = vadd.f32 %v2764, %v2938
      %v3079 = vadd.f32 %v2765, %v2943
      %v3080 = vadd.f32 %v2766, %v2946
      %v3081 = vadd.f32 %v2767, %v2951
      %v3082 = vadd.f32 %v2768, %v2954
      %v3083 = vadd.f32 %v2769, %v2959
      %v3084 = vadd.f32 %v2770, %v2962
      %v3085 = vadd.f32 %v2771, %v2967
      %v3086 = vadd.f32 %v2772, %v2970
      %v3087 = vadd.f32 %v2773, %v2975
      %v3088 = vadd.f32 %v2774, %v2978
      %v3089 = vadd.f32 %v2775, %v2983
      %v3090 = vadd.f32 %v2776, %v2986
      %v3091 = vadd.f32 %v2777, %v2991
      %v3092 = vadd.f32 %v2778, %v2994
      %v3093 = vadd.f32 %v2779, %v2999
      %v3094 = vadd.f32 %v2780, %v3002
      %v3095 = vadd.f32 %v2781, %v3007
      %v3096 = vadd.f32 %v2782, %v3010
      %v3097 = vadd.f32 %v2783, %v3015
      %v3098 = vadd.f32 %v2784, %v3018
      %v3099 = vadd.f32 %v2785, %v3023
      %v3100 = vadd.f32 %v2786, %v3026
      %v3101 = vadd.f32 %v2787, %v3031
      %v3102 = vadd.f32 %v2788, %v3034
      %v3103 = vadd.f32 %v2789, %v3039
      %v3104 = vadd.f32 %v2790, %v3042
      %v3105 = vadd.f32 %v2791, %v3047
      %v3106 = vadd.f32 %v2792, %v3050
      %v3107 = vadd.f32 %v2793, %v3055
      %v3108 = vadd.f32 %v2794, %v3058
      %v3109 = vadd.f32 %v2795, %v3063
      %v3110 = vadd.f32 %v2796, %v3066
      %v3111 = vadd.f32 %v2797, %v3071
      %v3112 = vadd.f32 %v2798, %v3074
      %v3113 = vld [vmem:[%s203 + $0x10] sm:$0xc]
      %v3114 = vld [vmem:[%s203 + $0x14] sm:$0xf]
      %v3115 = vld [vmem:[%s203 + $0x18] sm:$0xf]
      %v3116 = vld [vmem:[%s203 + $0x1c] sm:$0xf]
      %v3117 = vld [vmem:[%s203 + $0x20] sm:$0xf]
      %v3118 = vld [vmem:[%s203 + $0x24] sm:$0xf]
      %v3119 = vld [vmem:[%s203 + $0x28] sm:$0xf]
      %v3120 = vld [vmem:[%s203 + $0x2c] sm:$0xf]
      %v3121 = vld [vmem:[%s203 + $0x30] sm:$0xf]
      %v3122 = vld [vmem:[%s203 + $0x34] sm:$0xf]
      %v3123 = vld [vmem:[%s203 + $0x38] sm:$0xf]
      %v3124 = vld [vmem:[%s203 + $0x3c] sm:$0xf]
      %v3125 = vld [vmem:[%s203 + $0x40] sm:$0xf]
      %v3126 = vld [vmem:[%s203 + $0x44] sm:$0xf]
      %v3127 = vld [vmem:[%s203 + $0x48] sm:$0xf]
      %v3128 = vld [vmem:[%s203 + $0x4c] sm:$0xf]
      %v3129 = vld [vmem:[%s203 + $0x50] sm:$0xf]
      %v3130 = vld [vmem:[%s203 + $0x54] sm:$0xf]
      %v3131 = vld [vmem:[%s203 + $0x58] sm:$0xf]
      %v3132 = vld [vmem:[%s203 + $0x5c] sm:$0xf]
      %v3133 = vld [vmem:[%s203 + $0x60] sm:$0xf]
      %v3134 = vld [vmem:[%s203 + $0x64] sm:$0xf]
      %v3135 = vld [vmem:[%s203 + $0x68] sm:$0xf]
      %v3136 = vld [vmem:[%s203 + $0x6c] sm:$0xf]
      %v3137 = vld [vmem:[%s203 + $0x70] sm:$0xf]
      %v3138 = vld [vmem:[%s203 + $0x74] sm:$0xf]
      %v3139 = vld [vmem:[%s203 + $0x78] sm:$0xf]
      %v3140 = vld [vmem:[%s203 + $0x7c] sm:$0xf]
      %v3141 = vld [vmem:[%s203 + $0x80] sm:$0xf]
      %v3142 = vld [vmem:[%s203 + $0x84] sm:$0xf]
      %v3143 = vld [vmem:[%s203 + $0x88] sm:$0xf]
      %v3144 = vld [vmem:[%s203 + $0x8c] sm:$0xf]
      %v3145 = vld [vmem:[%s203 + $0x90] sm:$0xf]
      %v3146 = vld [vmem:[%s203 + $0x94] sm:$0xf]
      %v3147 = vld [vmem:[%s203 + $0x98] sm:$0xf]
      %v3148 = vld [vmem:[%s203 + $0x9c] sm:$0xf]
      %v3149 = vld [vmem:[%s203 + $0xa0] sm:$0x3]
      %s3150 = scalar_lea.vmem %s1, 12
      %v3151 = vld [vmem:[%s3150] sm:$0x3]
      %v3189 = vunpack.c.l.b16 %v3113
      %v3190 = vunpack.c.l.b16 %v3114
      %v3191 = vunpack.c.l.b16 %v3115
      %v3192 = vunpack.c.l.b16 %v3116
      %v3193 = vunpack.c.l.b16 %v3117
      %v3194 = vunpack.c.l.b16 %v3118
      %v3195 = vunpack.c.l.b16 %v3119
      %v3196 = vunpack.c.l.b16 %v3120
      %v3197 = vunpack.c.l.b16 %v3121
      %v3198 = vunpack.c.l.b16 %v3122
      %v3199 = vunpack.c.l.b16 %v3123
      %v3200 = vunpack.c.l.b16 %v3124
      %v3201 = vunpack.c.l.b16 %v3125
      %v3202 = vunpack.c.l.b16 %v3126
      %v3203 = vunpack.c.l.b16 %v3127
      %v3204 = vunpack.c.l.b16 %v3128
      %v3205 = vunpack.c.l.b16 %v3129
      %v3206 = vunpack.c.l.b16 %v3130
      %v3207 = vunpack.c.l.b16 %v3131
      %v3208 = vunpack.c.l.b16 %v3132
      %v3209 = vunpack.c.l.b16 %v3133
      %v3210 = vunpack.c.l.b16 %v3134
      %v3211 = vunpack.c.l.b16 %v3135
      %v3212 = vunpack.c.l.b16 %v3136
      %v3213 = vunpack.c.l.b16 %v3137
      %v3214 = vunpack.c.l.b16 %v3138
      %v3215 = vunpack.c.l.b16 %v3139
      %v3216 = vunpack.c.l.b16 %v3140
      %v3217 = vunpack.c.l.b16 %v3141
      %v3218 = vunpack.c.l.b16 %v3142
      %v3219 = vunpack.c.l.b16 %v3143
      %v3220 = vunpack.c.l.b16 %v3144
      %v3221 = vunpack.c.l.b16 %v3145
      %v3222 = vunpack.c.l.b16 %v3146
      %v3223 = vunpack.c.l.b16 %v3147
      %v3224 = vunpack.c.l.b16 %v3148
      %v3225 = vunpack.c.l.b16 %v3149
      %v3226 = vpack.c.b16 %v3190, %v3189
      %v3227 = vpack.c.b16 %v3192, %v3191
      %v3228 = vpack.c.b16 %v3194, %v3193
      %v3229 = vpack.c.b16 %v3196, %v3195
      %v3230 = vpack.c.b16 %v3198, %v3197
      %v3231 = vpack.c.b16 %v3200, %v3199
      %v3232 = vpack.c.b16 %v3202, %v3201
      %v3233 = vpack.c.b16 %v3204, %v3203
      %v3234 = vpack.c.b16 %v3206, %v3205
      %v3235 = vpack.c.b16 %v3208, %v3207
      %v3236 = vpack.c.b16 %v3210, %v3209
      %v3237 = vpack.c.b16 %v3212, %v3211
      %v3238 = vpack.c.b16 %v3214, %v3213
      %v3239 = vpack.c.b16 %v3216, %v3215
      %v3240 = vpack.c.b16 %v3218, %v3217
      %v3241 = vpack.c.b16 %v3220, %v3219
      %v3242 = vpack.c.b16 %v3222, %v3221
      %v3243 = vpack.c.b16 %v3224, %v3223
      %v3244 = vpack.c.b16 %v3225, %v3225
      %v3245 = vrot.slane %v3226, 2
      %v3246 = vrot.slane %v3227, 2
      %v3247 = vsel %vm2805, %v3245, %v3246
      %v3248 = vrot.slane %v3228, 2
      %v3249 = vsel %vm2805, %v3246, %v3248
      %v3250 = vrot.slane %v3229, 2
      %v3251 = vsel %vm2805, %v3248, %v3250
      %v3252 = vrot.slane %v3230, 2
      %v3253 = vsel %vm2805, %v3250, %v3252
      %v3254 = vrot.slane %v3231, 2
      %v3255 = vsel %vm2805, %v3252, %v3254
      %v3256 = vrot.slane %v3232, 2
      %v3257 = vsel %vm2805, %v3254, %v3256
      %v3258 = vrot.slane %v3233, 2
      %v3259 = vsel %vm2805, %v3256, %v3258
      %v3260 = vrot.slane %v3234, 2
      %v3261 = vsel %vm2805, %v3258, %v3260
      %v3262 = vrot.slane %v3235, 2
      %v3263 = vsel %vm2805, %v3260, %v3262
      %v3264 = vrot.slane %v3236, 2
      %v3265 = vsel %vm2805, %v3262, %v3264
      %v3266 = vrot.slane %v3237, 2
      %v3267 = vsel %vm2805, %v3264, %v3266
      %v3268 = vrot.slane %v3238, 2
      %v3269 = vsel %vm2805, %v3266, %v3268
      %v3270 = vrot.slane %v3239, 2
      %v3271 = vsel %vm2805, %v3268, %v3270
      %v3272 = vrot.slane %v3240, 2
      %v3273 = vsel %vm2805, %v3270, %v3272
      %v3274 = vrot.slane %v3241, 2
      %v3275 = vsel %vm2805, %v3272, %v3274
      %v3276 = vrot.slane %v3242, 2
      %v3277 = vsel %vm2805, %v3274, %v3276
      %v3278 = vrot.slane %v3243, 2
      %v3279 = vsel %vm2805, %v3276, %v3278
      %v3280 = vrot.slane %v3244, 2
      %v3281 = vsel %vm2805, %v3278, %v3280
      %v3283 = vsel %vm1147, %v3247, 0
      %v3286 = vsel %vm1147, %v3249, 0
      %v3289 = vsel %vm1147, %v3251, 0
      %v3292 = vsel %vm1147, %v3253, 0
      %v3295 = vsel %vm1147, %v3255, 0
      %v3298 = vsel %vm1147, %v3257, 0
      %v3301 = vsel %vm1147, %v3259, 0
      %v3304 = vsel %vm1147, %v3261, 0
      %v3307 = vsel %vm1147, %v3263, 0
      %v3310 = vsel %vm1147, %v3265, 0
      %v3313 = vsel %vm1147, %v3267, 0
      %v3316 = vsel %vm1147, %v3269, 0
      %v3319 = vsel %vm1147, %v3271, 0
      %v3322 = vsel %vm1147, %v3273, 0
      %v3325 = vsel %vm1147, %v3275, 0
      %v3328 = vsel %vm1147, %v3277, 0
      %v3331 = vsel %vm1147, %v3279, 0
      %v3334 = vsel %vm1147, %v3281, 0
      %v3337 = vsel %vm1202, %v3151, 0
      %3339 = vmatprep.subr.bf16.mxu0 0
      %3340 = vmatpush1.bf16.msra.mxu0 0
      %3341 = vmatprep.subr.bf16.mxu0 0
      %3342 = vmatpush1.bf16.msra.mxu0 0
      %3343 = vmatprep.subr.bf16.mxu0 0
      %3344 = vmatpush1.bf16.msra.mxu0 0
      %3345 = vmatprep.subr.bf16.mxu0 0
      %3346 = vmatpush1.bf16.msra.mxu0 0
      %3347 = vmatprep.subr.bf16.mxu0 0
      %3348 = vmatpush1.bf16.msra.mxu0 0
      %3349 = vmatprep.subr.bf16.mxu0 0
      %3350 = vmatpush1.bf16.msra.mxu0 0
      %3351 = vmatprep.subr.bf16.mxu0 0
      %3352 = vmatpush1.bf16.msra.mxu0 0
      %3353 = vmatprep.subr.bf16.mxu0 0
      %3354 = vmatpush1.bf16.msra.mxu0 %v3337
      %3355 = vmatprep.subr.bf16.mxu0 0
      %3356 = vmatpush2.bf16.msra.mxu0 0
      %3357 = vmatprep.subr.bf16.mxu0 0
      %3358 = vmatpush2.bf16.msra.mxu0 0
      %3359 = vmatprep.subr.bf16.mxu0 0
      %3360 = vmatpush2.bf16.msra.mxu0 0
      %3361 = vmatprep.subr.bf16.mxu0 0
      %3362 = vmatpush2.bf16.msra.mxu0 0
      %3363 = vmatprep.subr.bf16.mxu0 0
      %3364 = vmatpush2.bf16.msra.mxu0 0
      %3365 = vmatprep.subr.bf16.mxu0 0
      %3366 = vmatpush2.bf16.msra.mxu0 0
      %3367 = vmatprep.subr.bf16.mxu0 0
      %3368 = vmatpush2.bf16.msra.mxu0 0
      %3369 = vmatprep.subr.bf16.mxu0 0
      %3370 = vmatpush2.bf16.msra.mxu0 0
      %3371 = vmatprep.mubr.bf16.mxu0 0
      %3372 = vmatmul.mubr.bf16.gmra.mxu0 %v3283
      %v3373 = vpop.f32.mrf.mxu0
      %v3374 = vadd.f32 0.0, %v3373
      %v3375 = vpop.f32.mrf.mxu0
      %v3376 = vpop.f32.mrf.mxu0
      %v3377 = vadd.f32 0.0, %v3376
      %v3378 = vpop.f32.mrf.mxu0
      %3379 = vmatprep.mubr.bf16.mxu0 0
      %3380 = vmatmul.mubr.bf16.gmra.mxu0 %v3286
      %v3381 = vpop.f32.mrf.mxu0
      %v3382 = vadd.f32 0.0, %v3381
      %v3383 = vpop.f32.mrf.mxu0
      %v3384 = vpop.f32.mrf.mxu0
      %v3385 = vadd.f32 0.0, %v3384
      %v3386 = vpop.f32.mrf.mxu0
      %3387 = vmatprep.mubr.bf16.mxu0 0
      %3388 = vmatmul.mubr.bf16.gmra.mxu0 %v3289
      %v3389 = vpop.f32.mrf.mxu0
      %v3390 = vadd.f32 0.0, %v3389
      %v3391 = vpop.f32.mrf.mxu0
      %v3392 = vpop.f32.mrf.mxu0
      %v3393 = vadd.f32 0.0, %v3392
      %v3394 = vpop.f32.mrf.mxu0
      %3395 = vmatprep.mubr.bf16.mxu0 0
      %3396 = vmatmul.mubr.bf16.gmra.mxu0 %v3292
      %v3397 = vpop.f32.mrf.mxu0
      %v3398 = vadd.f32 0.0, %v3397
      %v3399 = vpop.f32.mrf.mxu0
      %v3400 = vpop.f32.mrf.mxu0
      %v3401 = vadd.f32 0.0, %v3400
      %v3402 = vpop.f32.mrf.mxu0
      %3403 = vmatprep.mubr.bf16.mxu0 0
      %3404 = vmatmul.mubr.bf16.gmra.mxu0 %v3295
      %v3405 = vpop.f32.mrf.mxu0
      %v3406 = vadd.f32 0.0, %v3405
      %v3407 = vpop.f32.mrf.mxu0
      %v3408 = vpop.f32.mrf.mxu0
      %v3409 = vadd.f32 0.0, %v3408
      %v3410 = vpop.f32.mrf.mxu0
      %3411 = vmatprep.mubr.bf16.mxu0 0
      %3412 = vmatmul.mubr.bf16.gmra.mxu0 %v3298
      %v3413 = vpop.f32.mrf.mxu0
      %v3414 = vadd.f32 0.0, %v3413
      %v3415 = vpop.f32.mrf.mxu0
      %v3416 = vpop.f32.mrf.mxu0
      %v3417 = vadd.f32 0.0, %v3416
      %v3418 = vpop.f32.mrf.mxu0
      %3419 = vmatprep.mubr.bf16.mxu0 0
      %3420 = vmatmul.mubr.bf16.gmra.mxu0 %v3301
      %v3421 = vpop.f32.mrf.mxu0
      %v3422 = vadd.f32 0.0, %v3421
      %v3423 = vpop.f32.mrf.mxu0
      %v3424 = vpop.f32.mrf.mxu0
      %v3425 = vadd.f32 0.0, %v3424
      %v3426 = vpop.f32.mrf.mxu0
      %3427 = vmatprep.mubr.bf16.mxu0 0
      %3428 = vmatmul.mubr.bf16.gmra.mxu0 %v3304
      %v3429 = vpop.f32.mrf.mxu0
      %v3430 = vadd.f32 0.0, %v3429
      %v3431 = vpop.f32.mrf.mxu0
      %v3432 = vpop.f32.mrf.mxu0
      %v3433 = vadd.f32 0.0, %v3432
      %v3434 = vpop.f32.mrf.mxu0
      %3435 = vmatprep.mubr.bf16.mxu0 0
      %3436 = vmatmul.mubr.bf16.gmra.mxu0 %v3307
      %v3437 = vpop.f32.mrf.mxu0
      %v3438 = vadd.f32 0.0, %v3437
      %v3439 = vpop.f32.mrf.mxu0
      %v3440 = vpop.f32.mrf.mxu0
      %v3441 = vadd.f32 0.0, %v3440
      %v3442 = vpop.f32.mrf.mxu0
      %3443 = vmatprep.mubr.bf16.mxu0 0
      %3444 = vmatmul.mubr.bf16.gmra.mxu0 %v3310
      %v3445 = vpop.f32.mrf.mxu0
      %v3446 = vadd.f32 0.0, %v3445
      %v3447 = vpop.f32.mrf.mxu0
      %v3448 = vpop.f32.mrf.mxu0
      %v3449 = vadd.f32 0.0, %v3448
      %v3450 = vpop.f32.mrf.mxu0
      %3451 = vmatprep.mubr.bf16.mxu0 0
      %3452 = vmatmul.mubr.bf16.gmra.mxu0 %v3313
      %v3453 = vpop.f32.mrf.mxu0
      %v3454 = vadd.f32 0.0, %v3453
      %v3455 = vpop.f32.mrf.mxu0
      %v3456 = vpop.f32.mrf.mxu0
      %v3457 = vadd.f32 0.0, %v3456
      %v3458 = vpop.f32.mrf.mxu0
      %3459 = vmatprep.mubr.bf16.mxu0 0
      %3460 = vmatmul.mubr.bf16.gmra.mxu0 %v3316
      %v3461 = vpop.f32.mrf.mxu0
      %v3462 = vadd.f32 0.0, %v3461
      %v3463 = vpop.f32.mrf.mxu0
      %v3464 = vpop.f32.mrf.mxu0
      %v3465 = vadd.f32 0.0, %v3464
      %v3466 = vpop.f32.mrf.mxu0
      %3467 = vmatprep.mubr.bf16.mxu0 0
      %3468 = vmatmul.mubr.bf16.gmra.mxu0 %v3319
      %v3469 = vpop.f32.mrf.mxu0
      %v3470 = vadd.f32 0.0, %v3469
      %v3471 = vpop.f32.mrf.mxu0
      %v3472 = vpop.f32.mrf.mxu0
      %v3473 = vadd.f32 0.0, %v3472
      %v3474 = vpop.f32.mrf.mxu0
      %3475 = vmatprep.mubr.bf16.mxu0 0
      %3476 = vmatmul.mubr.bf16.gmra.mxu0 %v3322
      %v3477 = vpop.f32.mrf.mxu0
      %v3478 = vadd.f32 0.0, %v3477
      %v3479 = vpop.f32.mrf.mxu0
      %v3480 = vpop.f32.mrf.mxu0
      %v3481 = vadd.f32 0.0, %v3480
      %v3482 = vpop.f32.mrf.mxu0
      %3483 = vmatprep.mubr.bf16.mxu0 0
      %3484 = vmatmul.mubr.bf16.gmra.mxu0 %v3325
      %v3485 = vpop.f32.mrf.mxu0
      %v3486 = vadd.f32 0.0, %v3485
      %v3487 = vpop.f32.mrf.mxu0
      %v3488 = vpop.f32.mrf.mxu0
      %v3489 = vadd.f32 0.0, %v3488
      %v3490 = vpop.f32.mrf.mxu0
      %3491 = vmatprep.mubr.bf16.mxu0 0
      %3492 = vmatmul.mubr.bf16.gmra.mxu0 %v3328
      %v3493 = vpop.f32.mrf.mxu0
      %v3494 = vadd.f32 0.0, %v3493
      %v3495 = vpop.f32.mrf.mxu0
      %v3496 = vpop.f32.mrf.mxu0
      %v3497 = vadd.f32 0.0, %v3496
      %v3498 = vpop.f32.mrf.mxu0
      %3499 = vmatprep.mubr.bf16.mxu0 0
      %3500 = vmatmul.mubr.bf16.gmra.mxu0 %v3331
      %v3501 = vpop.f32.mrf.mxu0
      %v3502 = vadd.f32 0.0, %v3501
      %v3503 = vpop.f32.mrf.mxu0
      %v3504 = vpop.f32.mrf.mxu0
      %v3505 = vadd.f32 0.0, %v3504
      %v3506 = vpop.f32.mrf.mxu0
      %3507 = vmatprep.mubr.bf16.mxu0 0
      %3508 = vmatmul.mubr.bf16.gmra.mxu0 %v3334
      %v3509 = vpop.f32.mrf.mxu0
      %v3510 = vadd.f32 0.0, %v3509
      %v3511 = vpop.f32.mrf.mxu0
      %v3512 = vpop.f32.mrf.mxu0
      %v3513 = vadd.f32 0.0, %v3512
      %v3514 = vpop.f32.mrf.mxu0
      %3515 = vdwg.mxu0
      %v3516 = vadd.f32 %v3077, %v3374
      %v3517 = vadd.f32 %v3078, %v3377
      %v3518 = vadd.f32 %v3079, %v3382
      %v3519 = vadd.f32 %v3080, %v3385
      %v3520 = vadd.f32 %v3081, %v3390
      %v3521 = vadd.f32 %v3082, %v3393
      %v3522 = vadd.f32 %v3083, %v3398
      %v3523 = vadd.f32 %v3084, %v3401
      %v3524 = vadd.f32 %v3085, %v3406
      %v3525 = vadd.f32 %v3086, %v3409
      %v3526 = vadd.f32 %v3087, %v3414
      %v3527 = vadd.f32 %v3088, %v3417
      %v3528 = vadd.f32 %v3089, %v3422
      %v3529 = vadd.f32 %v3090, %v3425
      %v3530 = vadd.f32 %v3091, %v3430
      %v3531 = vadd.f32 %v3092, %v3433
      %v3532 = vadd.f32 %v3093, %v3438
      %v3533 = vadd.f32 %v3094, %v3441
      %v3534 = vadd.f32 %v3095, %v3446
      %v3535 = vadd.f32 %v3096, %v3449
      %v3536 = vadd.f32 %v3097, %v3454
      %v3537 = vadd.f32 %v3098, %v3457
      %v3538 = vadd.f32 %v3099, %v3462
      %v3539 = vadd.f32 %v3100, %v3465
      %v3540 = vadd.f32 %v3101, %v3470
      %v3541 = vadd.f32 %v3102, %v3473
      %v3542 = vadd.f32 %v3103, %v3478
      %v3543 = vadd.f32 %v3104, %v3481
      %v3544 = vadd.f32 %v3105, %v3486
      %v3545 = vadd.f32 %v3106, %v3489
      %v3546 = vadd.f32 %v3107, %v3494
      %v3547 = vadd.f32 %v3108, %v3497
      %v3548 = vadd.f32 %v3109, %v3502
      %v3549 = vadd.f32 %v3110, %v3505
      %v3550 = vadd.f32 %v3111, %v3510
      %v3551 = vadd.f32 %v3112, %v3513
      %v3552 = vld [vmem:[%s203 + $0xa0] sm:$0x7]
      %s3553 = scalar_lea.vmem %s1, 14
      %v3554 = vld [vmem:[%s3553] sm:$0x3]
      %v3556 = vunpack.c.l.b16 %v3552
      %v3557 = vpack.c.b16 %v3556, %v3556
      %vm3558 = vsmask.f32 5376
      %v3560 = vshrl.u32 %v3226, 16
      %v3562 = vrot.slane %v3560, 2
      %v3563 = vshll.u32 %v3226, 16
      %v3565 = vrot.slane %v3563, 3
      %v3566 = vor.u32 %v3562, %v3565
      %v3568 = vshrl.u32 %v3227, 16
      %v3570 = vrot.slane %v3568, 2
      %v3571 = vshll.u32 %v3227, 16
      %v3573 = vrot.slane %v3571, 3
      %v3574 = vor.u32 %v3570, %v3573
      %v3575 = vsel %vm3558, %v3566, %v3574
      %v3577 = vshrl.u32 %v3228, 16
      %v3579 = vrot.slane %v3577, 2
      %v3580 = vshll.u32 %v3228, 16
      %v3582 = vrot.slane %v3580, 3
      %v3583 = vor.u32 %v3579, %v3582
      %v3584 = vsel %vm3558, %v3574, %v3583
      %v3586 = vshrl.u32 %v3229, 16
      %v3588 = vrot.slane %v3586, 2
      %v3589 = vshll.u32 %v3229, 16
      %v3591 = vrot.slane %v3589, 3
      %v3592 = vor.u32 %v3588, %v3591
      %v3593 = vsel %vm3558, %v3583, %v3592
      %v3595 = vshrl.u32 %v3230, 16
      %v3597 = vrot.slane %v3595, 2
      %v3598 = vshll.u32 %v3230, 16
      %v3600 = vrot.slane %v3598, 3
      %v3601 = vor.u32 %v3597, %v3600
      %v3602 = vsel %vm3558, %v3592, %v3601
      %v3604 = vshrl.u32 %v3231, 16
      %v3606 = vrot.slane %v3604, 2
      %v3607 = vshll.u32 %v3231, 16
      %v3609 = vrot.slane %v3607, 3
      %v3610 = vor.u32 %v3606, %v3609
      %v3611 = vsel %vm3558, %v3601, %v3610
      %v3613 = vshrl.u32 %v3232, 16
      %v3615 = vrot.slane %v3613, 2
      %v3616 = vshll.u32 %v3232, 16
      %v3618 = vrot.slane %v3616, 3
      %v3619 = vor.u32 %v3615, %v3618
      %v3620 = vsel %vm3558, %v3610, %v3619
      %v3622 = vshrl.u32 %v3233, 16
      %v3624 = vrot.slane %v3622, 2
      %v3625 = vshll.u32 %v3233, 16
      %v3627 = vrot.slane %v3625, 3
      %v3628 = vor.u32 %v3624, %v3627
      %v3629 = vsel %vm3558, %v3619, %v3628
      %v3631 = vshrl.u32 %v3234, 16
      %v3633 = vrot.slane %v3631, 2
      %v3634 = vshll.u32 %v3234, 16
      %v3636 = vrot.slane %v3634, 3
      %v3637 = vor.u32 %v3633, %v3636
      %v3638 = vsel %vm3558, %v3628, %v3637
      %v3640 = vshrl.u32 %v3235, 16
      %v3642 = vrot.slane %v3640, 2
      %v3643 = vshll.u32 %v3235, 16
      %v3645 = vrot.slane %v3643, 3
      %v3646 = vor.u32 %v3642, %v3645
      %v3647 = vsel %vm3558, %v3637, %v3646
      %v3649 = vshrl.u32 %v3236, 16
      %v3651 = vrot.slane %v3649, 2
      %v3652 = vshll.u32 %v3236, 16
      %v3654 = vrot.slane %v3652, 3
      %v3655 = vor.u32 %v3651, %v3654
      %v3656 = vsel %vm3558, %v3646, %v3655
      %v3658 = vshrl.u32 %v3237, 16
      %v3660 = vrot.slane %v3658, 2
      %v3661 = vshll.u32 %v3237, 16
      %v3663 = vrot.slane %v3661, 3
      %v3664 = vor.u32 %v3660, %v3663
      %v3665 = vsel %vm3558, %v3655, %v3664
      %v3667 = vshrl.u32 %v3238, 16
      %v3669 = vrot.slane %v3667, 2
      %v3670 = vshll.u32 %v3238, 16
      %v3672 = vrot.slane %v3670, 3
      %v3673 = vor.u32 %v3669, %v3672
      %v3674 = vsel %vm3558, %v3664, %v3673
      %v3676 = vshrl.u32 %v3239, 16
      %v3678 = vrot.slane %v3676, 2
      %v3679 = vshll.u32 %v3239, 16
      %v3681 = vrot.slane %v3679, 3
      %v3682 = vor.u32 %v3678, %v3681
      %v3683 = vsel %vm3558, %v3673, %v3682
      %v3685 = vshrl.u32 %v3240, 16
      %v3687 = vrot.slane %v3685, 2
      %v3688 = vshll.u32 %v3240, 16
      %v3690 = vrot.slane %v3688, 3
      %v3691 = vor.u32 %v3687, %v3690
      %v3692 = vsel %vm3558, %v3682, %v3691
      %v3694 = vshrl.u32 %v3241, 16
      %v3696 = vrot.slane %v3694, 2
      %v3697 = vshll.u32 %v3241, 16
      %v3699 = vrot.slane %v3697, 3
      %v3700 = vor.u32 %v3696, %v3699
      %v3701 = vsel %vm3558, %v3691, %v3700
      %v3703 = vshrl.u32 %v3242, 16
      %v3705 = vrot.slane %v3703, 2
      %v3706 = vshll.u32 %v3242, 16
      %v3708 = vrot.slane %v3706, 3
      %v3709 = vor.u32 %v3705, %v3708
      %v3710 = vsel %vm3558, %v3700, %v3709
      %v3712 = vshrl.u32 %v3243, 16
      %v3714 = vrot.slane %v3712, 2
      %v3715 = vshll.u32 %v3243, 16
      %v3717 = vrot.slane %v3715, 3
      %v3718 = vor.u32 %v3714, %v3717
      %v3719 = vsel %vm3558, %v3709, %v3718
      %v3721 = vshrl.u32 %v3557, 16
      %v3723 = vrot.slane %v3721, 2
      %v3724 = vshll.u32 %v3557, 16
      %v3726 = vrot.slane %v3724, 3
      %v3727 = vor.u32 %v3723, %v3726
      %v3728 = vsel %vm3558, %v3718, %v3727
      %v3730 = vsel %vm1147, %v3575, 0
      %v3733 = vsel %vm1147, %v3584, 0
      %v3736 = vsel %vm1147, %v3593, 0
      %v3739 = vsel %vm1147, %v3602, 0
      %v3742 = vsel %vm1147, %v3611, 0
      %v3745 = vsel %vm1147, %v3620, 0
      %v3748 = vsel %vm1147, %v3629, 0
      %v3751 = vsel %vm1147, %v3638, 0
      %v3754 = vsel %vm1147, %v3647, 0
      %v3757 = vsel %vm1147, %v3656, 0
      %v3760 = vsel %vm1147, %v3665, 0
      %v3763 = vsel %vm1147, %v3674, 0
      %v3766 = vsel %vm1147, %v3683, 0
      %v3769 = vsel %vm1147, %v3692, 0
      %v3772 = vsel %vm1147, %v3701, 0
      %v3775 = vsel %vm1147, %v3710, 0
      %v3778 = vsel %vm1147, %v3719, 0
      %v3781 = vsel %vm1147, %v3728, 0
      %v3784 = vsel %vm1202, %v3554, 0
      %3786 = vmatprep.subr.bf16.mxu0 0
      %3787 = vmatpush1.bf16.msra.mxu0 0
      %3788 = vmatprep.subr.bf16.mxu0 0
      %3789 = vmatpush1.bf16.msra.mxu0 0
      %3790 = vmatprep.subr.bf16.mxu0 0
      %3791 = vmatpush1.bf16.msra.mxu0 0
      %3792 = vmatprep.subr.bf16.mxu0 0
      %3793 = vmatpush1.bf16.msra.mxu0 0
      %3794 = vmatprep.subr.bf16.mxu0 0
      %3795 = vmatpush1.bf16.msra.mxu0 0
      %3796 = vmatprep.subr.bf16.mxu0 0
      %3797 = vmatpush1.bf16.msra.mxu0 0
      %3798 = vmatprep.subr.bf16.mxu0 0
      %3799 = vmatpush1.bf16.msra.mxu0 0
      %3800 = vmatprep.subr.bf16.mxu0 0
      %3801 = vmatpush1.bf16.msra.mxu0 %v3784
      %3802 = vmatprep.subr.bf16.mxu0 0
      %3803 = vmatpush2.bf16.msra.mxu0 0
      %3804 = vmatprep.subr.bf16.mxu0 0
      %3805 = vmatpush2.bf16.msra.mxu0 0
      %3806 = vmatprep.subr.bf16.mxu0 0
      %3807 = vmatpush2.bf16.msra.mxu0 0
      %3808 = vmatprep.subr.bf16.mxu0 0
      %3809 = vmatpush2.bf16.msra.mxu0 0
      %3810 = vmatprep.subr.bf16.mxu0 0
      %3811 = vmatpush2.bf16.msra.mxu0 0
      %3812 = vmatprep.subr.bf16.mxu0 0
      %3813 = vmatpush2.bf16.msra.mxu0 0
      %3814 = vmatprep.subr.bf16.mxu0 0
      %3815 = vmatpush2.bf16.msra.mxu0 0
      %3816 = vmatprep.subr.bf16.mxu0 0
      %3817 = vmatpush2.bf16.msra.mxu0 0
      %3818 = vmatprep.mubr.bf16.mxu0 0
      %3819 = vmatmul.mubr.bf16.gmra.mxu0 %v3730
      %v3820 = vpop.f32.mrf.mxu0
      %v3821 = vadd.f32 0.0, %v3820
      %v3822 = vpop.f32.mrf.mxu0
      %v3823 = vpop.f32.mrf.mxu0
      %v3824 = vadd.f32 0.0, %v3823
      %v3825 = vpop.f32.mrf.mxu0
      %3826 = vmatprep.mubr.bf16.mxu0 0
      %3827 = vmatmul.mubr.bf16.gmra.mxu0 %v3733
      %v3828 = vpop.f32.mrf.mxu0
      %v3829 = vadd.f32 0.0, %v3828
      %v3830 = vpop.f32.mrf.mxu0
      %v3831 = vpop.f32.mrf.mxu0
      %v3832 = vadd.f32 0.0, %v3831
      %v3833 = vpop.f32.mrf.mxu0
      %3834 = vmatprep.mubr.bf16.mxu0 0
      %3835 = vmatmul.mubr.bf16.gmra.mxu0 %v3736
      %v3836 = vpop.f32.mrf.mxu0
      %v3837 = vadd.f32 0.0, %v3836
      %v3838 = vpop.f32.mrf.mxu0
      %v3839 = vpop.f32.mrf.mxu0
      %v3840 = vadd.f32 0.0, %v3839
      %v3841 = vpop.f32.mrf.mxu0
      %3842 = vmatprep.mubr.bf16.mxu0 0
      %3843 = vmatmul.mubr.bf16.gmra.mxu0 %v3739
      %v3844 = vpop.f32.mrf.mxu0
      %v3845 = vadd.f32 0.0, %v3844
      %v3846 = vpop.f32.mrf.mxu0
      %v3847 = vpop.f32.mrf.mxu0
      %v3848 = vadd.f32 0.0, %v3847
      %v3849 = vpop.f32.mrf.mxu0
      %3850 = vmatprep.mubr.bf16.mxu0 0
      %3851 = vmatmul.mubr.bf16.gmra.mxu0 %v3742
      %v3852 = vpop.f32.mrf.mxu0
      %v3853 = vadd.f32 0.0, %v3852
      %v3854 = vpop.f32.mrf.mxu0
      %v3855 = vpop.f32.mrf.mxu0
      %v3856 = vadd.f32 0.0, %v3855
      %v3857 = vpop.f32.mrf.mxu0
      %3858 = vmatprep.mubr.bf16.mxu0 0
      %3859 = vmatmul.mubr.bf16.gmra.mxu0 %v3745
      %v3860 = vpop.f32.mrf.mxu0
      %v3861 = vadd.f32 0.0, %v3860
      %v3862 = vpop.f32.mrf.mxu0
      %v3863 = vpop.f32.mrf.mxu0
      %v3864 = vadd.f32 0.0, %v3863
      %v3865 = vpop.f32.mrf.mxu0
      %3866 = vmatprep.mubr.bf16.mxu0 0
      %3867 = vmatmul.mubr.bf16.gmra.mxu0 %v3748
      %v3868 = vpop.f32.mrf.mxu0
      %v3869 = vadd.f32 0.0, %v3868
      %v3870 = vpop.f32.mrf.mxu0
      %v3871 = vpop.f32.mrf.mxu0
      %v3872 = vadd.f32 0.0, %v3871
      %v3873 = vpop.f32.mrf.mxu0
      %3874 = vmatprep.mubr.bf16.mxu0 0
      %3875 = vmatmul.mubr.bf16.gmra.mxu0 %v3751
      %v3876 = vpop.f32.mrf.mxu0
      %v3877 = vadd.f32 0.0, %v3876
      %v3878 = vpop.f32.mrf.mxu0
      %v3879 = vpop.f32.mrf.mxu0
      %v3880 = vadd.f32 0.0, %v3879
      %v3881 = vpop.f32.mrf.mxu0
      %3882 = vmatprep.mubr.bf16.mxu0 0
      %3883 = vmatmul.mubr.bf16.gmra.mxu0 %v3754
      %v3884 = vpop.f32.mrf.mxu0
      %v3885 = vadd.f32 0.0, %v3884
      %v3886 = vpop.f32.mrf.mxu0
      %v3887 = vpop.f32.mrf.mxu0
      %v3888 = vadd.f32 0.0, %v3887
      %v3889 = vpop.f32.mrf.mxu0
      %3890 = vmatprep.mubr.bf16.mxu0 0
      %3891 = vmatmul.mubr.bf16.gmra.mxu0 %v3757
      %v3892 = vpop.f32.mrf.mxu0
      %v3893 = vadd.f32 0.0, %v3892
      %v3894 = vpop.f32.mrf.mxu0
      %v3895 = vpop.f32.mrf.mxu0
      %v3896 = vadd.f32 0.0, %v3895
      %v3897 = vpop.f32.mrf.mxu0
      %3898 = vmatprep.mubr.bf16.mxu0 0
      %3899 = vmatmul.mubr.bf16.gmra.mxu0 %v3760
      %v3900 = vpop.f32.mrf.mxu0
      %v3901 = vadd.f32 0.0, %v3900
      %v3902 = vpop.f32.mrf.mxu0
      %v3903 = vpop.f32.mrf.mxu0
      %v3904 = vadd.f32 0.0, %v3903
      %v3905 = vpop.f32.mrf.mxu0
      %3906 = vmatprep.mubr.bf16.mxu0 0
      %3907 = vmatmul.mubr.bf16.gmra.mxu0 %v3763
      %v3908 = vpop.f32.mrf.mxu0
      %v3909 = vadd.f32 0.0, %v3908
      %v3910 = vpop.f32.mrf.mxu0
      %v3911 = vpop.f32.mrf.mxu0
      %v3912 = vadd.f32 0.0, %v3911
      %v3913 = vpop.f32.mrf.mxu0
      %3914 = vmatprep.mubr.bf16.mxu0 0
      %3915 = vmatmul.mubr.bf16.gmra.mxu0 %v3766
      %v3916 = vpop.f32.mrf.mxu0
      %v3917 = vadd.f32 0.0, %v3916
      %v3918 = vpop.f32.mrf.mxu0
      %v3919 = vpop.f32.mrf.mxu0
      %v3920 = vadd.f32 0.0, %v3919
      %v3921 = vpop.f32.mrf.mxu0
      %3922 = vmatprep.mubr.bf16.mxu0 0
      %3923 = vmatmul.mubr.bf16.gmra.mxu0 %v3769
      %v3924 = vpop.f32.mrf.mxu0
      %v3925 = vadd.f32 0.0, %v3924
      %v3926 = vpop.f32.mrf.mxu0
      %v3927 = vpop.f32.mrf.mxu0
      %v3928 = vadd.f32 0.0, %v3927
      %v3929 = vpop.f32.mrf.mxu0
      %3930 = vmatprep.mubr.bf16.mxu0 0
      %3931 = vmatmul.mubr.bf16.gmra.mxu0 %v3772
      %v3932 = vpop.f32.mrf.mxu0
      %v3933 = vadd.f32 0.0, %v3932
      %v3934 = vpop.f32.mrf.mxu0
      %v3935 = vpop.f32.mrf.mxu0
      %v3936 = vadd.f32 0.0, %v3935
      %v3937 = vpop.f32.mrf.mxu0
      %3938 = vmatprep.mubr.bf16.mxu0 0
      %3939 = vmatmul.mubr.bf16.gmra.mxu0 %v3775
      %v3940 = vpop.f32.mrf.mxu0
      %v3941 = vadd.f32 0.0, %v3940
      %v3942 = vpop.f32.mrf.mxu0
      %v3943 = vpop.f32.mrf.mxu0
      %v3944 = vadd.f32 0.0, %v3943
      %v3945 = vpop.f32.mrf.mxu0
      %3946 = vmatprep.mubr.bf16.mxu0 0
      %3947 = vmatmul.mubr.bf16.gmra.mxu0 %v3778
      %v3948 = vpop.f32.mrf.mxu0
      %v3949 = vadd.f32 0.0, %v3948
      %v3950 = vpop.f32.mrf.mxu0
      %v3951 = vpop.f32.mrf.mxu0
      %v3952 = vadd.f32 0.0, %v3951
      %v3953 = vpop.f32.mrf.mxu0
      %3954 = vmatprep.mubr.bf16.mxu0 0
      %3955 = vmatmul.mubr.bf16.gmra.mxu0 %v3781
      %v3956 = vpop.f32.mrf.mxu0
      %v3957 = vadd.f32 0.0, %v3956
      %v3958 = vpop.f32.mrf.mxu0
      %v3959 = vpop.f32.mrf.mxu0
      %v3960 = vadd.f32 0.0, %v3959
      %v3961 = vpop.f32.mrf.mxu0
      %3962 = vdwg.mxu0
      %v3963 = vadd.f32 %v3516, %v3821
      %v3964 = vadd.f32 %v3517, %v3824
      %v3965 = vadd.f32 %v3518, %v3829
      %v3966 = vadd.f32 %v3519, %v3832
      %v3967 = vadd.f32 %v3520, %v3837
      %v3968 = vadd.f32 %v3521, %v3840
      %v3969 = vadd.f32 %v3522, %v3845
      %v3970 = vadd.f32 %v3523, %v3848
      %v3971 = vadd.f32 %v3524, %v3853
      %v3972 = vadd.f32 %v3525, %v3856
      %v3973 = vadd.f32 %v3526, %v3861
      %v3974 = vadd.f32 %v3527, %v3864
      %v3975 = vadd.f32 %v3528, %v3869
      %v3976 = vadd.f32 %v3529, %v3872
      %v3977 = vadd.f32 %v3530, %v3877
      %v3978 = vadd.f32 %v3531, %v3880
      %v3979 = vadd.f32 %v3532, %v3885
      %v3980 = vadd.f32 %v3533, %v3888
      %v3981 = vadd.f32 %v3534, %v3893
      %v3982 = vadd.f32 %v3535, %v3896
      %v3983 = vadd.f32 %v3536, %v3901
      %v3984 = vadd.f32 %v3537, %v3904
      %v3985 = vadd.f32 %v3538, %v3909
      %v3986 = vadd.f32 %v3539, %v3912
      %v3987 = vadd.f32 %v3540, %v3917
      %v3988 = vadd.f32 %v3541, %v3920
      %v3989 = vadd.f32 %v3542, %v3925
      %v3990 = vadd.f32 %v3543, %v3928
      %v3991 = vadd.f32 %v3544, %v3933
      %v3992 = vadd.f32 %v3545, %v3936
      %v3993 = vadd.f32 %v3546, %v3941
      %v3994 = vadd.f32 %v3547, %v3944
      %v3995 = vadd.f32 %v3548, %v3949
      %v3996 = vadd.f32 %v3549, %v3952
      %v3997 = vadd.f32 %v3550, %v3957
      %v3998 = vadd.f32 %v3551, %v3960
      %v3999 = vld [vmem:[%s203 + $0x10] sm:$0x8]
      %s4000 = scalar_lea.vmem %s1, 16
      %v4001 = vld [vmem:[%s4000] sm:$0x3]
      %v4003 = vunpack.c.l.b16 %v3999
      %v4004 = vpack.c.b16 %v3190, %v4003
      %vm4005 = vcmask 1044480
      %v4006 = vrot.slane %v4004, 3
      %v4007 = vrot.slane %v3227, 3
      %v4008 = vsel %vm4005, %v4006, %v4007
      %v4009 = vrot.slane %v3228, 3
      %v4010 = vsel %vm4005, %v4007, %v4009
      %v4011 = vrot.slane %v3229, 3
      %v4012 = vsel %vm4005, %v4009, %v4011
      %v4013 = vrot.slane %v3230, 3
      %v4014 = vsel %vm4005, %v4011, %v4013
      %v4015 = vrot.slane %v3231, 3
      %v4016 = vsel %vm4005, %v4013, %v4015
      %v4017 = vrot.slane %v3232, 3
      %v4018 = vsel %vm4005, %v4015, %v4017
      %v4019 = vrot.slane %v3233, 3
      %v4020 = vsel %vm4005, %v4017, %v4019
      %v4021 = vrot.slane %v3234, 3
      %v4022 = vsel %vm4005, %v4019, %v4021
      %v4023 = vrot.slane %v3235, 3
      %v4024 = vsel %vm4005, %v4021, %v4023
      %v4025 = vrot.slane %v3236, 3
      %v4026 = vsel %vm4005, %v4023, %v4025
      %v4027 = vrot.slane %v3237, 3
      %v4028 = vsel %vm4005, %v4025, %v4027
      %v4029 = vrot.slane %v3238, 3
      %v4030 = vsel %vm4005, %v4027, %v4029
      %v4031 = vrot.slane %v3239, 3
      %v4032 = vsel %vm4005, %v4029, %v4031
      %v4033 = vrot.slane %v3240, 3
      %v4034 = vsel %vm4005, %v4031, %v4033
      %v4035 = vrot.slane %v3241, 3
      %v4036 = vsel %vm4005, %v4033, %v4035
      %v4037 = vrot.slane %v3242, 3
      %v4038 = vsel %vm4005, %v4035, %v4037
      %v4039 = vrot.slane %v3243, 3
      %v4040 = vsel %vm4005, %v4037, %v4039
      %v4041 = vrot.slane %v3557, 3
      %v4042 = vsel %vm4005, %v4039, %v4041
      %v4044 = vsel %vm1147, %v4008, 0
      %v4047 = vsel %vm1147, %v4010, 0
      %v4050 = vsel %vm1147, %v4012, 0
      %v4053 = vsel %vm1147, %v4014, 0
      %v4056 = vsel %vm1147, %v4016, 0
      %v4059 = vsel %vm1147, %v4018, 0
      %v4062 = vsel %vm1147, %v4020, 0
      %v4065 = vsel %vm1147, %v4022, 0
      %v4068 = vsel %vm1147, %v4024, 0
      %v4071 = vsel %vm1147, %v4026, 0
      %v4074 = vsel %vm1147, %v4028, 0
      %v4077 = vsel %vm1147, %v4030, 0
      %v4080 = vsel %vm1147, %v4032, 0
      %v4083 = vsel %vm1147, %v4034, 0
      %v4086 = vsel %vm1147, %v4036, 0
      %v4089 = vsel %vm1147, %v4038, 0
      %v4092 = vsel %vm1147, %v4040, 0
      %v4095 = vsel %vm1147, %v4042, 0
      %v4098 = vsel %vm1202, %v4001, 0
      %4100 = vmatprep.subr.bf16.mxu0 0
      %4101 = vmatpush1.bf16.msra.mxu0 0
      %4102 = vmatprep.subr.bf16.mxu0 0
      %4103 = vmatpush1.bf16.msra.mxu0 0
      %4104 = vmatprep.subr.bf16.mxu0 0
      %4105 = vmatpush1.bf16.msra.mxu0 0
      %4106 = vmatprep.subr.bf16.mxu0 0
      %4107 = vmatpush1.bf16.msra.mxu0 0
      %4108 = vmatprep.subr.bf16.mxu0 0
      %4109 = vmatpush1.bf16.msra.mxu0 0
      %4110 = vmatprep.subr.bf16.mxu0 0
      %4111 = vmatpush1.bf16.msra.mxu0 0
      %4112 = vmatprep.subr.bf16.mxu0 0
      %4113 = vmatpush1.bf16.msra.mxu0 0
      %4114 = vmatprep.subr.bf16.mxu0 0
      %4115 = vmatpush1.bf16.msra.mxu0 %v4098
      %4116 = vmatprep.subr.bf16.mxu0 0
      %4117 = vmatpush2.bf16.msra.mxu0 0
      %4118 = vmatprep.subr.bf16.mxu0 0
      %4119 = vmatpush2.bf16.msra.mxu0 0
      %4120 = vmatprep.subr.bf16.mxu0 0
      %4121 = vmatpush2.bf16.msra.mxu0 0
      %4122 = vmatprep.subr.bf16.mxu0 0
      %4123 = vmatpush2.bf16.msra.mxu0 0
      %4124 = vmatprep.subr.bf16.mxu0 0
      %4125 = vmatpush2.bf16.msra.mxu0 0
      %4126 = vmatprep.subr.bf16.mxu0 0
      %4127 = vmatpush2.bf16.msra.mxu0 0
      %4128 = vmatprep.subr.bf16.mxu0 0
      %4129 = vmatpush2.bf16.msra.mxu0 0
      %4130 = vmatprep.subr.bf16.mxu0 0
      %4131 = vmatpush2.bf16.msra.mxu0 0
      %4132 = vmatprep.mubr.bf16.mxu0 0
      %4133 = vmatmul.mubr.bf16.gmra.mxu0 %v4044
      %v4134 = vpop.f32.mrf.mxu0
      %v4135 = vadd.f32 0.0, %v4134
      %v4136 = vpop.f32.mrf.mxu0
      %v4137 = vpop.f32.mrf.mxu0
      %v4138 = vadd.f32 0.0, %v4137
      %v4139 = vpop.f32.mrf.mxu0
      %4140 = vmatprep.mubr.bf16.mxu0 0
      %4141 = vmatmul.mubr.bf16.gmra.mxu0 %v4047
      %v4142 = vpop.f32.mrf.mxu0
      %v4143 = vadd.f32 0.0, %v4142
      %v4144 = vpop.f32.mrf.mxu0
      %v4145 = vpop.f32.mrf.mxu0
      %v4146 = vadd.f32 0.0, %v4145
      %v4147 = vpop.f32.mrf.mxu0
      %4148 = vmatprep.mubr.bf16.mxu0 0
      %4149 = vmatmul.mubr.bf16.gmra.mxu0 %v4050
      %v4150 = vpop.f32.mrf.mxu0
      %v4151 = vadd.f32 0.0, %v4150
      %v4152 = vpop.f32.mrf.mxu0
      %v4153 = vpop.f32.mrf.mxu0
      %v4154 = vadd.f32 0.0, %v4153
      %v4155 = vpop.f32.mrf.mxu0
      %4156 = vmatprep.mubr.bf16.mxu0 0
      %4157 = vmatmul.mubr.bf16.gmra.mxu0 %v4053
      %v4158 = vpop.f32.mrf.mxu0
      %v4159 = vadd.f32 0.0, %v4158
      %v4160 = vpop.f32.mrf.mxu0
      %v4161 = vpop.f32.mrf.mxu0
      %v4162 = vadd.f32 0.0, %v4161
      %v4163 = vpop.f32.mrf.mxu0
      %4164 = vmatprep.mubr.bf16.mxu0 0
      %4165 = vmatmul.mubr.bf16.gmra.mxu0 %v4056
      %v4166 = vpop.f32.mrf.mxu0
      %v4167 = vadd.f32 0.0, %v4166
      %v4168 = vpop.f32.mrf.mxu0
      %v4169 = vpop.f32.mrf.mxu0
      %v4170 = vadd.f32 0.0, %v4169
      %v4171 = vpop.f32.mrf.mxu0
      %4172 = vmatprep.mubr.bf16.mxu0 0
      %4173 = vmatmul.mubr.bf16.gmra.mxu0 %v4059
      %v4174 = vpop.f32.mrf.mxu0
      %v4175 = vadd.f32 0.0, %v4174
      %v4176 = vpop.f32.mrf.mxu0
      %v4177 = vpop.f32.mrf.mxu0
      %v4178 = vadd.f32 0.0, %v4177
      %v4179 = vpop.f32.mrf.mxu0
      %4180 = vmatprep.mubr.bf16.mxu0 0
      %4181 = vmatmul.mubr.bf16.gmra.mxu0 %v4062
      %v4182 = vpop.f32.mrf.mxu0
      %v4183 = vadd.f32 0.0, %v4182
      %v4184 = vpop.f32.mrf.mxu0
      %v4185 = vpop.f32.mrf.mxu0
      %v4186 = vadd.f32 0.0, %v4185
      %v4187 = vpop.f32.mrf.mxu0
      %4188 = vmatprep.mubr.bf16.mxu0 0
      %4189 = vmatmul.mubr.bf16.gmra.mxu0 %v4065
      %v4190 = vpop.f32.mrf.mxu0
      %v4191 = vadd.f32 0.0, %v4190
      %v4192 = vpop.f32.mrf.mxu0
      %v4193 = vpop.f32.mrf.mxu0
      %v4194 = vadd.f32 0.0, %v4193
      %v4195 = vpop.f32.mrf.mxu0
      %4196 = vmatprep.mubr.bf16.mxu0 0
      %4197 = vmatmul.mubr.bf16.gmra.mxu0 %v4068
      %v4198 = vpop.f32.mrf.mxu0
      %v4199 = vadd.f32 0.0, %v4198
      %v4200 = vpop.f32.mrf.mxu0
      %v4201 = vpop.f32.mrf.mxu0
      %v4202 = vadd.f32 0.0, %v4201
      %v4203 = vpop.f32.mrf.mxu0
      %4204 = vmatprep.mubr.bf16.mxu0 0
      %4205 = vmatmul.mubr.bf16.gmra.mxu0 %v4071
      %v4206 = vpop.f32.mrf.mxu0
      %v4207 = vadd.f32 0.0, %v4206
      %v4208 = vpop.f32.mrf.mxu0
      %v4209 = vpop.f32.mrf.mxu0
      %v4210 = vadd.f32 0.0, %v4209
      %v4211 = vpop.f32.mrf.mxu0
      %4212 = vmatprep.mubr.bf16.mxu0 0
      %4213 = vmatmul.mubr.bf16.gmra.mxu0 %v4074
      %v4214 = vpop.f32.mrf.mxu0
      %v4215 = vadd.f32 0.0, %v4214
      %v4216 = vpop.f32.mrf.mxu0
      %v4217 = vpop.f32.mrf.mxu0
      %v4218 = vadd.f32 0.0, %v4217
      %v4219 = vpop.f32.mrf.mxu0
      %4220 = vmatprep.mubr.bf16.mxu0 0
      %4221 = vmatmul.mubr.bf16.gmra.mxu0 %v4077
      %v4222 = vpop.f32.mrf.mxu0
      %v4223 = vadd.f32 0.0, %v4222
      %v4224 = vpop.f32.mrf.mxu0
      %v4225 = vpop.f32.mrf.mxu0
      %v4226 = vadd.f32 0.0, %v4225
      %v4227 = vpop.f32.mrf.mxu0
      %4228 = vmatprep.mubr.bf16.mxu0 0
      %4229 = vmatmul.mubr.bf16.gmra.mxu0 %v4080
      %v4230 = vpop.f32.mrf.mxu0
      %v4231 = vadd.f32 0.0, %v4230
      %v4232 = vpop.f32.mrf.mxu0
      %v4233 = vpop.f32.mrf.mxu0
      %v4234 = vadd.f32 0.0, %v4233
      %v4235 = vpop.f32.mrf.mxu0
      %4236 = vmatprep.mubr.bf16.mxu0 0
      %4237 = vmatmul.mubr.bf16.gmra.mxu0 %v4083
      %v4238 = vpop.f32.mrf.mxu0
      %v4239 = vadd.f32 0.0, %v4238
      %v4240 = vpop.f32.mrf.mxu0
      %v4241 = vpop.f32.mrf.mxu0
      %v4242 = vadd.f32 0.0, %v4241
      %v4243 = vpop.f32.mrf.mxu0
      %4244 = vmatprep.mubr.bf16.mxu0 0
      %4245 = vmatmul.mubr.bf16.gmra.mxu0 %v4086
      %v4246 = vpop.f32.mrf.mxu0
      %v4247 = vadd.f32 0.0, %v4246
      %v4248 = vpop.f32.mrf.mxu0
      %v4249 = vpop.f32.mrf.mxu0
      %v4250 = vadd.f32 0.0, %v4249
      %v4251 = vpop.f32.mrf.mxu0
      %4252 = vmatprep.mubr.bf16.mxu0 0
      %4253 = vmatmul.mubr.bf16.gmra.mxu0 %v4089
      %v4254 = vpop.f32.mrf.mxu0
      %v4255 = vadd.f32 0.0, %v4254
      %v4256 = vpop.f32.mrf.mxu0
      %v4257 = vpop.f32.mrf.mxu0
      %v4258 = vadd.f32 0.0, %v4257
      %v4259 = vpop.f32.mrf.mxu0
      %4260 = vmatprep.mubr.bf16.mxu0 0
      %4261 = vmatmul.mubr.bf16.gmra.mxu0 %v4092
      %v4262 = vpop.f32.mrf.mxu0
      %v4263 = vadd.f32 0.0, %v4262
      %v4264 = vpop.f32.mrf.mxu0
      %v4265 = vpop.f32.mrf.mxu0
      %v4266 = vadd.f32 0.0, %v4265
      %v4267 = vpop.f32.mrf.mxu0
      %4268 = vmatprep.mubr.bf16.mxu0 0
      %4269 = vmatmul.mubr.bf16.gmra.mxu0 %v4095
      %v4270 = vpop.f32.mrf.mxu0
      %v4271 = vadd.f32 0.0, %v4270
      %v4272 = vpop.f32.mrf.mxu0
      %v4273 = vpop.f32.mrf.mxu0
      %v4274 = vadd.f32 0.0, %v4273
      %v4275 = vpop.f32.mrf.mxu0
      %4276 = vdwg.mxu0
      %v4277 = vadd.f32 %v3963, %v4135
      %v4278 = vadd.f32 %v3964, %v4138
      %v4279 = vadd.f32 %v3965, %v4143
      %v4280 = vadd.f32 %v3966, %v4146
      %v4281 = vadd.f32 %v3967, %v4151
      %v4282 = vadd.f32 %v3968, %v4154
      %v4283 = vadd.f32 %v3969, %v4159
      %v4284 = vadd.f32 %v3970, %v4162
      %v4285 = vadd.f32 %v3971, %v4167
      %v4286 = vadd.f32 %v3972, %v4170
      %v4287 = vadd.f32 %v3973, %v4175
      %v4288 = vadd.f32 %v3974, %v4178
      %v4289 = vadd.f32 %v3975, %v4183
      %v4290 = vadd.f32 %v3976, %v4186
      %v4291 = vadd.f32 %v3977, %v4191
      %v4292 = vadd.f32 %v3978, %v4194
      %v4293 = vadd.f32 %v3979, %v4199
      %v4294 = vadd.f32 %v3980, %v4202
      %v4295 = vadd.f32 %v3981, %v4207
      %v4296 = vadd.f32 %v3982, %v4210
      %v4297 = vadd.f32 %v3983, %v4215
      %v4298 = vadd.f32 %v3984, %v4218
      %v4299 = vadd.f32 %v3985, %v4223
      %v4300 = vadd.f32 %v3986, %v4226
      %v4301 = vadd.f32 %v3987, %v4231
      %v4302 = vadd.f32 %v3988, %v4234
      %v4303 = vadd.f32 %v3989, %v4239
      %v4304 = vadd.f32 %v3990, %v4242
      %v4305 = vadd.f32 %v3991, %v4247
      %v4306 = vadd.f32 %v3992, %v4250
      %v4307 = vadd.f32 %v3993, %v4255
      %v4308 = vadd.f32 %v3994, %v4258
      %v4309 = vadd.f32 %v3995, %v4263
      %v4310 = vadd.f32 %v3996, %v4266
      %v4311 = vadd.f32 %v3997, %v4271
      %v4312 = vadd.f32 %v3998, %v4274
      %v4313 = vsel %vm829, 1, 0
      %v4314 = vsel %vm830, 1, 0
      %v4315 = vsel %vm831, 1, 0
      %v4316 = vsel %vm832, 1, 0
      %v4317 = vsel %vm833, 1, 0
      %v4318 = vsel %vm834, 1, 0
      %v4319 = vsel %vm835, 1, 0
      %v4320 = vsel %vm836, 1, 0
      %v4321 = vsel %vm837, 1, 0
      %v4322 = vsel %vm838, 1, 0
      %v4323 = vsel %vm839, 1, 0
      %v4324 = vsel %vm840, 1, 0
      %v4325 = vsel %vm841, 1, 0
      %v4326 = vsel %vm842, 1, 0
      %v4327 = vsel %vm843, 1, 0
      %v4328 = vsel %vm844, 1, 0
      %v4329 = vsel %vm845, 1, 0
      %v4330 = vsel %vm846, 1, 0
      %v4331 = vsel %vm847, 1, 0
      %v4332 = vsel %vm848, 1, 0
      %v4333 = vsel %vm849, 1, 0
      %v4334 = vsel %vm850, 1, 0
      %v4335 = vsel %vm851, 1, 0
      %v4336 = vsel %vm852, 1, 0
      %v4337 = vsel %vm853, 1, 0
      %v4338 = vsel %vm854, 1, 0
      %v4339 = vsel %vm855, 1, 0
      %v4340 = vsel %vm856, 1, 0
      %v4341 = vsel %vm857, 1, 0
      %v4342 = vsel %vm858, 1, 0
      %v4343 = vsel %vm859, 1, 0
      %v4344 = vsel %vm860, 1, 0
      %v4345 = vsel %vm861, 1, 0
      %v4346 = vsel %vm862, 1, 0
      %v4347 = vsel %vm863, 1, 0
      %v4348 = vsel %vm864, 1, 0
      %vm4349 = vcmp.eq.s32.totalorder %v4313, 1
      %vm4350 = vcmp.eq.s32.totalorder %v4314, 1
      %vm4351 = vcmp.eq.s32.totalorder %v4315, 1
      %vm4352 = vcmp.eq.s32.totalorder %v4316, 1
      %vm4353 = vcmp.eq.s32.totalorder %v4317, 1
      %vm4354 = vcmp.eq.s32.totalorder %v4318, 1
      %vm4355 = vcmp.eq.s32.totalorder %v4319, 1
      %vm4356 = vcmp.eq.s32.totalorder %v4320, 1
      %vm4357 = vcmp.eq.s32.totalorder %v4321, 1
      %vm4358 = vcmp.eq.s32.totalorder %v4322, 1
      %vm4359 = vcmp.eq.s32.totalorder %v4323, 1
      %vm4360 = vcmp.eq.s32.totalorder %v4324, 1
      %vm4361 = vcmp.eq.s32.totalorder %v4325, 1
      %vm4362 = vcmp.eq.s32.totalorder %v4326, 1
      %vm4363 = vcmp.eq.s32.totalorder %v4327, 1
      %vm4364 = vcmp.eq.s32.totalorder %v4328, 1
      %vm4365 = vcmp.eq.s32.totalorder %v4329, 1
      %vm4366 = vcmp.eq.s32.totalorder %v4330, 1
      %vm4367 = vcmp.eq.s32.totalorder %v4331, 1
      %vm4368 = vcmp.eq.s32.totalorder %v4332, 1
      %vm4369 = vcmp.eq.s32.totalorder %v4333, 1
      %vm4370 = vcmp.eq.s32.totalorder %v4334, 1
      %vm4371 = vcmp.eq.s32.totalorder %v4335, 1
      %vm4372 = vcmp.eq.s32.totalorder %v4336, 1
      %vm4373 = vcmp.eq.s32.totalorder %v4337, 1
      %vm4374 = vcmp.eq.s32.totalorder %v4338, 1
      %vm4375 = vcmp.eq.s32.totalorder %v4339, 1
      %vm4376 = vcmp.eq.s32.totalorder %v4340, 1
      %vm4377 = vcmp.eq.s32.totalorder %v4341, 1
      %vm4378 = vcmp.eq.s32.totalorder %v4342, 1
      %vm4379 = vcmp.eq.s32.totalorder %v4343, 1
      %vm4380 = vcmp.eq.s32.totalorder %v4344, 1
      %vm4381 = vcmp.eq.s32.totalorder %v4345, 1
      %vm4382 = vcmp.eq.s32.totalorder %v4346, 1
      %vm4383 = vcmp.eq.s32.totalorder %v4347, 1
      %vm4384 = vcmp.eq.s32.totalorder %v4348, 1
      %v4385 = vsel %vm4349, %v4277, 0.0
      %v4386 = vsel %vm4350, %v4278, 0.0
      %v4387 = vsel %vm4351, %v4279, 0.0
      %v4388 = vsel %vm4352, %v4280, 0.0
      %v4389 = vsel %vm4353, %v4281, 0.0
      %v4390 = vsel %vm4354, %v4282, 0.0
      %v4391 = vsel %vm4355, %v4283, 0.0
      %v4392 = vsel %vm4356, %v4284, 0.0
      %v4393 = vsel %vm4357, %v4285, 0.0
      %v4394 = vsel %vm4358, %v4286, 0.0
      %v4395 = vsel %vm4359, %v4287, 0.0
      %v4396 = vsel %vm4360, %v4288, 0.0
      %v4397 = vsel %vm4361, %v4289, 0.0
      %v4398 = vsel %vm4362, %v4290, 0.0
      %v4399 = vsel %vm4363, %v4291, 0.0
      %v4400 = vsel %vm4364, %v4292, 0.0
      %v4401 = vsel %vm4365, %v4293, 0.0
      %v4402 = vsel %vm4366, %v4294, 0.0
      %v4403 = vsel %vm4367, %v4295, 0.0
      %v4404 = vsel %vm4368, %v4296, 0.0
      %v4405 = vsel %vm4369, %v4297, 0.0
      %v4406 = vsel %vm4370, %v4298, 0.0
      %v4407 = vsel %vm4371, %v4299, 0.0
      %v4408 = vsel %vm4372, %v4300, 0.0
      %v4409 = vsel %vm4373, %v4301, 0.0
      %v4410 = vsel %vm4374, %v4302, 0.0
      %v4411 = vsel %vm4375, %v4303, 0.0
      %v4412 = vsel %vm4376, %v4304, 0.0
      %v4413 = vsel %vm4377, %v4305, 0.0
      %v4414 = vsel %vm4378, %v4306, 0.0
      %v4415 = vsel %vm4379, %v4307, 0.0
      %v4416 = vsel %vm4380, %v4308, 0.0
      %v4417 = vsel %vm4381, %v4309, 0.0
      %v4418 = vsel %vm4382, %v4310, 0.0
      %v4419 = vsel %vm4383, %v4311, 0.0
      %v4420 = vsel %vm4384, %v4312, 0.0
      %vm4421 = vcmask 60416
      %4422 = vst.msk [vmem:[%s208] sm:$0xf] %vm4421, 0
      %4423 = vst.msk [vmem:[%s208 + $0x4] sm:$0xf] %vm4421, 0
      %vm4424 = vcmask 58368
      %vm4425 = vsmask.f32 1280
      %vm4426 = vmand %vm4424, %vm4425
      %v4427 = vld [vmem:[%s208 + $0x8] sm:$0x3]
      %v4428 = vsel %vm4426, 0, %v4427
      %4429 = vst [vmem:[%s208 + $0x8] sm:$0x3] %v4428
      %v4430 = vpack.c.bf16 %v4386, %v4385
      %v4431 = vpack.c.bf16 %v4388, %v4387
      %v4432 = vpack.c.bf16 %v4390, %v4389
      %v4433 = vpack.c.bf16 %v4392, %v4391
      %v4434 = vpack.c.bf16 %v4394, %v4393
      %v4435 = vpack.c.bf16 %v4396, %v4395
      %v4436 = vpack.c.bf16 %v4398, %v4397
      %v4437 = vpack.c.bf16 %v4400, %v4399
      %v4438 = vpack.c.bf16 %v4402, %v4401
      %v4439 = vpack.c.bf16 %v4404, %v4403
      %v4440 = vpack.c.bf16 %v4406, %v4405
      %v4441 = vpack.c.bf16 %v4408, %v4407
      %v4442 = vpack.c.bf16 %v4410, %v4409
      %v4443 = vpack.c.bf16 %v4412, %v4411
      %v4444 = vpack.c.bf16 %v4414, %v4413
      %v4445 = vpack.c.bf16 %v4416, %v4415
      %v4446 = vpack.c.bf16 %v4418, %v4417
      %v4447 = vpack.c.bf16 %v4420, %v4419
      %v4466 = vunpack.c.l.b16 %v4430
      %v4467 = vunpack.c.h.b16 %v4430
      %v4468 = vunpack.c.l.b16 %v4431
      %v4469 = vunpack.c.h.b16 %v4431
      %v4470 = vunpack.c.l.b16 %v4432
      %v4471 = vunpack.c.h.b16 %v4432
      %v4472 = vunpack.c.l.b16 %v4433
      %v4473 = vunpack.c.h.b16 %v4433
      %v4474 = vunpack.c.l.b16 %v4434
      %v4475 = vunpack.c.h.b16 %v4434
      %v4476 = vunpack.c.l.b16 %v4435
      %v4477 = vunpack.c.h.b16 %v4435
      %v4478 = vunpack.c.l.b16 %v4436
      %v4479 = vunpack.c.h.b16 %v4436
      %v4480 = vunpack.c.l.b16 %v4437
      %v4481 = vunpack.c.h.b16 %v4437
      %v4482 = vunpack.c.l.b16 %v4438
      %v4483 = vunpack.c.h.b16 %v4438
      %v4484 = vunpack.c.l.b16 %v4439
      %v4485 = vunpack.c.h.b16 %v4439
      %v4486 = vunpack.c.l.b16 %v4440
      %v4487 = vunpack.c.h.b16 %v4440
      %v4488 = vunpack.c.l.b16 %v4441
      %v4489 = vunpack.c.h.b16 %v4441
      %v4490 = vunpack.c.l.b16 %v4442
      %v4491 = vunpack.c.h.b16 %v4442
      %v4492 = vunpack.c.l.b16 %v4443
      %v4493 = vunpack.c.h.b16 %v4443
      %v4494 = vunpack.c.l.b16 %v4444
      %v4495 = vunpack.c.h.b16 %v4444
      %v4496 = vunpack.c.l.b16 %v4445
      %v4497 = vunpack.c.h.b16 %v4445
      %v4498 = vunpack.c.l.b16 %v4446
      %v4499 = vunpack.c.h.b16 %v4446
      %v4500 = vunpack.c.l.b16 %v4447
      %v4501 = vunpack.c.h.b16 %v4447
      %v4502 = vpack.c.b16 %v4466, %v4466
      %v4503 = vpack.c.b16 %v4467, %v4467
      %v4504 = vpack.c.b16 %v4468, %v4468
      %v4505 = vpack.c.b16 %v4469, %v4469
      %v4506 = vpack.c.b16 %v4470, %v4470
      %v4507 = vpack.c.b16 %v4471, %v4471
      %v4508 = vpack.c.b16 %v4472, %v4472
      %v4509 = vpack.c.b16 %v4473, %v4473
      %v4510 = vpack.c.b16 %v4474, %v4474
      %v4511 = vpack.c.b16 %v4475, %v4475
      %v4512 = vpack.c.b16 %v4476, %v4476
      %v4513 = vpack.c.b16 %v4477, %v4477
      %v4514 = vpack.c.b16 %v4478, %v4478
      %v4515 = vpack.c.b16 %v4479, %v4479
      %v4516 = vpack.c.b16 %v4480, %v4480
      %v4517 = vpack.c.b16 %v4481, %v4481
      %v4518 = vpack.c.b16 %v4482, %v4482
      %v4519 = vpack.c.b16 %v4483, %v4483
      %v4520 = vpack.c.b16 %v4484, %v4484
      %v4521 = vpack.c.b16 %v4485, %v4485
      %v4522 = vpack.c.b16 %v4486, %v4486
      %v4523 = vpack.c.b16 %v4487, %v4487
      %v4524 = vpack.c.b16 %v4488, %v4488
      %v4525 = vpack.c.b16 %v4489, %v4489
      %v4526 = vpack.c.b16 %v4490, %v4490
      %v4527 = vpack.c.b16 %v4491, %v4491
      %v4528 = vpack.c.b16 %v4492, %v4492
      %v4529 = vpack.c.b16 %v4493, %v4493
      %v4530 = vpack.c.b16 %v4494, %v4494
      %v4531 = vpack.c.b16 %v4495, %v4495
      %v4532 = vpack.c.b16 %v4496, %v4496
      %v4533 = vpack.c.b16 %v4497, %v4497
      %v4534 = vpack.c.b16 %v4498, %v4498
      %v4535 = vpack.c.b16 %v4499, %v4499
      %v4536 = vpack.c.b16 %v4500, %v4500
      %v4537 = vpack.c.b16 %v4501, %v4501
      %vm4538 = vsmask.f32 5392
      %vm4539 = vmor %vm4425, %vm4538
      %v4541 = vshrl.u32 %v4502, 16
      %v4543 = vrot.slane %v4541, 6
      %v4544 = vshll.u32 %v4502, 16
      %v4546 = vrot.slane %v4544, 7
      %v4547 = vor.u32 %v4543, %v4546
      %v4548 = vrot.slane %v4547, 4
      %v4550 = vshrl.u32 %v4503, 16
      %v4552 = vrot.slane %v4550, 6
      %v4553 = vshll.u32 %v4503, 16
      %v4555 = vrot.slane %v4553, 7
      %v4556 = vor.u32 %v4552, %v4555
      %v4557 = vsel %vm4539, %v4548, %v4556
      %v4558 = vrot.slane %v4556, 4
      %v4560 = vshrl.u32 %v4504, 16
      %v4562 = vrot.slane %v4560, 6
      %v4563 = vshll.u32 %v4504, 16
      %v4565 = vrot.slane %v4563, 7
      %v4566 = vor.u32 %v4562, %v4565
      %v4567 = vsel %vm4539, %v4558, %v4566
      %v4568 = vrot.slane %v4566, 4
      %v4570 = vshrl.u32 %v4505, 16
      %v4572 = vrot.slane %v4570, 6
      %v4573 = vshll.u32 %v4505, 16
      %v4575 = vrot.slane %v4573, 7
      %v4576 = vor.u32 %v4572, %v4575
      %v4577 = vsel %vm4539, %v4568, %v4576
      %v4578 = vrot.slane %v4576, 4
      %v4580 = vshrl.u32 %v4506, 16
      %v4582 = vrot.slane %v4580, 6
      %v4583 = vshll.u32 %v4506, 16
      %v4585 = vrot.slane %v4583, 7
      %v4586 = vor.u32 %v4582, %v4585
      %v4587 = vsel %vm4539, %v4578, %v4586
      %v4588 = vrot.slane %v4586, 4
      %v4590 = vshrl.u32 %v4507, 16
      %v4592 = vrot.slane %v4590, 6
      %v4593 = vshll.u32 %v4507, 16
      %v4595 = vrot.slane %v4593, 7
      %v4596 = vor.u32 %v4592, %v4595
      %v4597 = vsel %vm4539, %v4588, %v4596
      %v4598 = vrot.slane %v4596, 4
      %v4600 = vshrl.u32 %v4508, 16
      %v4602 = vrot.slane %v4600, 6
      %v4603 = vshll.u32 %v4508, 16
      %v4605 = vrot.slane %v4603, 7
      %v4606 = vor.u32 %v4602, %v4605
      %v4607 = vsel %vm4539, %v4598, %v4606
      %v4608 = vrot.slane %v4606, 4
      %v4610 = vshrl.u32 %v4509, 16
      %v4612 = vrot.slane %v4610, 6
      %v4613 = vshll.u32 %v4509, 16
      %v4615 = vrot.slane %v4613, 7
      %v4616 = vor.u32 %v4612, %v4615
      %v4617 = vsel %vm4539, %v4608, %v4616
      %v4618 = vrot.slane %v4616, 4
      %v4620 = vshrl.u32 %v4510, 16
      %v4622 = vrot.slane %v4620, 6
      %v4623 = vshll.u32 %v4510, 16
      %v4625 = vrot.slane %v4623, 7
      %v4626 = vor.u32 %v4622, %v4625
      %v4627 = vsel %vm4539, %v4618, %v4626
      %v4628 = vrot.slane %v4626, 4
      %v4630 = vshrl.u32 %v4511, 16
      %v4632 = vrot.slane %v4630, 6
      %v4633 = vshll.u32 %v4511, 16
      %v4635 = vrot.slane %v4633, 7
      %v4636 = vor.u32 %v4632, %v4635
      %v4637 = vsel %vm4539, %v4628, %v4636
      %v4638 = vrot.slane %v4636, 4
      %v4640 = vshrl.u32 %v4512, 16
      %v4642 = vrot.slane %v4640, 6
      %v4643 = vshll.u32 %v4512, 16
      %v4645 = vrot.slane %v4643, 7
      %v4646 = vor.u32 %v4642, %v4645
      %v4647 = vsel %vm4539, %v4638, %v4646
      %v4648 = vrot.slane %v4646, 4
      %v4650 = vshrl.u32 %v4513, 16
      %v4652 = vrot.slane %v4650, 6
      %v4653 = vshll.u32 %v4513, 16
      %v4655 = vrot.slane %v4653, 7
      %v4656 = vor.u32 %v4652, %v4655
      %v4657 = vsel %vm4539, %v4648, %v4656
      %v4658 = vrot.slane %v4656, 4
      %v4660 = vshrl.u32 %v4514, 16
      %v4662 = vrot.slane %v4660, 6
      %v4663 = vshll.u32 %v4514, 16
      %v4665 = vrot.slane %v4663, 7
      %v4666 = vor.u32 %v4662, %v4665
      %v4667 = vsel %vm4539, %v4658, %v4666
      %v4668 = vrot.slane %v4666, 4
      %v4670 = vshrl.u32 %v4515, 16
      %v4672 = vrot.slane %v4670, 6
      %v4673 = vshll.u32 %v4515, 16
      %v4675 = vrot.slane %v4673, 7
      %v4676 = vor.u32 %v4672, %v4675
      %v4677 = vsel %vm4539, %v4668, %v4676
      %v4678 = vrot.slane %v4676, 4
      %v4680 = vshrl.u32 %v4516, 16
      %v4682 = vrot.slane %v4680, 6
      %v4683 = vshll.u32 %v4516, 16
      %v4685 = vrot.slane %v4683, 7
      %v4686 = vor.u32 %v4682, %v4685
      %v4687 = vsel %vm4539, %v4678, %v4686
      %v4688 = vrot.slane %v4686, 4
      %v4690 = vshrl.u32 %v4517, 16
      %v4692 = vrot.slane %v4690, 6
      %v4693 = vshll.u32 %v4517, 16
      %v4695 = vrot.slane %v4693, 7
      %v4696 = vor.u32 %v4692, %v4695
      %v4697 = vsel %vm4539, %v4688, %v4696
      %v4698 = vrot.slane %v4696, 4
      %v4700 = vshrl.u32 %v4518, 16
      %v4702 = vrot.slane %v4700, 6
      %v4703 = vshll.u32 %v4518, 16
      %v4705 = vrot.slane %v4703, 7
      %v4706 = vor.u32 %v4702, %v4705
      %v4707 = vsel %vm4539, %v4698, %v4706
      %v4708 = vrot.slane %v4706, 4
      %v4710 = vshrl.u32 %v4519, 16
      %v4712 = vrot.slane %v4710, 6
      %v4713 = vshll.u32 %v4519, 16
      %v4715 = vrot.slane %v4713, 7
      %v4716 = vor.u32 %v4712, %v4715
      %v4717 = vsel %vm4539, %v4708, %v4716
      %v4718 = vrot.slane %v4716, 4
      %v4720 = vshrl.u32 %v4520, 16
      %v4722 = vrot.slane %v4720, 6
      %v4723 = vshll.u32 %v4520, 16
      %v4725 = vrot.slane %v4723, 7
      %v4726 = vor.u32 %v4722, %v4725
      %v4727 = vsel %vm4539, %v4718, %v4726
      %v4728 = vrot.slane %v4726, 4
      %v4730 = vshrl.u32 %v4521, 16
      %v4732 = vrot.slane %v4730, 6
      %v4733 = vshll.u32 %v4521, 16
      %v4735 = vrot.slane %v4733, 7
      %v4736 = vor.u32 %v4732, %v4735
      %v4737 = vsel %vm4539, %v4728, %v4736
      %v4738 = vrot.slane %v4736, 4
      %v4740 = vshrl.u32 %v4522, 16
      %v4742 = vrot.slane %v4740, 6
      %v4743 = vshll.u32 %v4522, 16
      %v4745 = vrot.slane %v4743, 7
      %v4746 = vor.u32 %v4742, %v4745
      %v4747 = vsel %vm4539, %v4738, %v4746
      %v4748 = vrot.slane %v4746, 4
      %v4750 = vshrl.u32 %v4523, 16
      %v4752 = vrot.slane %v4750, 6
      %v4753 = vshll.u32 %v4523, 16
      %v4755 = vrot.slane %v4753, 7
      %v4756 = vor.u32 %v4752, %v4755
      %v4757 = vsel %vm4539, %v4748, %v4756
      %v4758 = vrot.slane %v4756, 4
      %v4760 = vshrl.u32 %v4524, 16
      %v4762 = vrot.slane %v4760, 6
      %v4763 = vshll.u32 %v4524, 16
      %v4765 = vrot.slane %v4763, 7
      %v4766 = vor.u32 %v4762, %v4765
      %v4767 = vsel %vm4539, %v4758, %v4766
      %v4768 = vrot.slane %v4766, 4
      %v4770 = vshrl.u32 %v4525, 16
      %v4772 = vrot.slane %v4770, 6
      %v4773 = vshll.u32 %v4525, 16
      %v4775 = vrot.slane %v4773, 7
      %v4776 = vor.u32 %v4772, %v4775
      %v4777 = vsel %vm4539, %v4768, %v4776
      %v4778 = vrot.slane %v4776, 4
      %v4780 = vshrl.u32 %v4526, 16
      %v4782 = vrot.slane %v4780, 6
      %v4783 = vshll.u32 %v4526, 16
      %v4785 = vrot.slane %v4783, 7
      %v4786 = vor.u32 %v4782, %v4785
      %v4787 = vsel %vm4539, %v4778, %v4786
      %v4788 = vrot.slane %v4786, 4
      %v4790 = vshrl.u32 %v4527, 16
      %v4792 = vrot.slane %v4790, 6
      %v4793 = vshll.u32 %v4527, 16
      %v4795 = vrot.slane %v4793, 7
      %v4796 = vor.u32 %v4792, %v4795
      %v4797 = vsel %vm4539, %v4788, %v4796
      %v4798 = vrot.slane %v4796, 4
      %v4800 = vshrl.u32 %v4528, 16
      %v4802 = vrot.slane %v4800, 6
      %v4803 = vshll.u32 %v4528, 16
      %v4805 = vrot.slane %v4803, 7
      %v4806 = vor.u32 %v4802, %v4805
      %v4807 = vsel %vm4539, %v4798, %v4806
      %v4808 = vrot.slane %v4806, 4
      %v4810 = vshrl.u32 %v4529, 16
      %v4812 = vrot.slane %v4810, 6
      %v4813 = vshll.u32 %v4529, 16
      %v4815 = vrot.slane %v4813, 7
      %v4816 = vor.u32 %v4812, %v4815
      %v4817 = vsel %vm4539, %v4808, %v4816
      %v4818 = vrot.slane %v4816, 4
      %v4820 = vshrl.u32 %v4530, 16
      %v4822 = vrot.slane %v4820, 6
      %v4823 = vshll.u32 %v4530, 16
      %v4825 = vrot.slane %v4823, 7
      %v4826 = vor.u32 %v4822, %v4825
      %v4827 = vsel %vm4539, %v4818, %v4826
      %v4828 = vrot.slane %v4826, 4
      %v4830 = vshrl.u32 %v4531, 16
      %v4832 = vrot.slane %v4830, 6
      %v4833 = vshll.u32 %v4531, 16
      %v4835 = vrot.slane %v4833, 7
      %v4836 = vor.u32 %v4832, %v4835
      %v4837 = vsel %vm4539, %v4828, %v4836
      %v4838 = vrot.slane %v4836, 4
      %v4840 = vshrl.u32 %v4532, 16
      %v4842 = vrot.slane %v4840, 6
      %v4843 = vshll.u32 %v4532, 16
      %v4845 = vrot.slane %v4843, 7
      %v4846 = vor.u32 %v4842, %v4845
      %v4847 = vsel %vm4539, %v4838, %v4846
      %v4848 = vrot.slane %v4846, 4
      %v4850 = vshrl.u32 %v4533, 16
      %v4852 = vrot.slane %v4850, 6
      %v4853 = vshll.u32 %v4533, 16
      %v4855 = vrot.slane %v4853, 7
      %v4856 = vor.u32 %v4852, %v4855
      %v4857 = vsel %vm4539, %v4848, %v4856
      %v4858 = vrot.slane %v4856, 4
      %v4860 = vshrl.u32 %v4534, 16
      %v4862 = vrot.slane %v4860, 6
      %v4863 = vshll.u32 %v4534, 16
      %v4865 = vrot.slane %v4863, 7
      %v4866 = vor.u32 %v4862, %v4865
      %v4867 = vsel %vm4539, %v4858, %v4866
      %v4868 = vrot.slane %v4866, 4
      %v4870 = vshrl.u32 %v4535, 16
      %v4872 = vrot.slane %v4870, 6
      %v4873 = vshll.u32 %v4535, 16
      %v4875 = vrot.slane %v4873, 7
      %v4876 = vor.u32 %v4872, %v4875
      %v4877 = vsel %vm4539, %v4868, %v4876
      %v4878 = vrot.slane %v4876, 4
      %v4880 = vshrl.u32 %v4536, 16
      %v4882 = vrot.slane %v4880, 6
      %v4883 = vshll.u32 %v4536, 16
      %v4885 = vrot.slane %v4883, 7
      %v4886 = vor.u32 %v4882, %v4885
      %v4887 = vsel %vm4539, %v4878, %v4886
      %v4888 = vrot.slane %v4886, 4
      %v4890 = vshrl.u32 %v4537, 16
      %v4892 = vrot.slane %v4890, 6
      %v4893 = vshll.u32 %v4537, 16
      %v4895 = vrot.slane %v4893, 7
      %v4896 = vor.u32 %v4892, %v4895
      %v4897 = vsel %vm4539, %v4888, %v4896
      %v4898 = vrot.slane %v4896, 4
      %vm4936 = vcmask 60417
      %vm4937 = vsmask.f32 7942
      %vm4938 = vmand %vm4936, %vm4937
      %v4939 = vld [vmem:[%s208 + $0x8] sm:$0xe]
      %v4940 = vsel %vm4938, %v4547, %v4939
      %4941 = vst [vmem:[%s208 + $0x8] sm:$0xe] %v4940
      %4942 = vst.msk [vmem:[%s208 + $0xc] sm:$0xf] %vm4421, %v4557
      %4943 = vst.msk [vmem:[%s208 + $0x10] sm:$0xf] %vm4421, %v4567
      %4944 = vst.msk [vmem:[%s208 + $0x14] sm:$0xf] %vm4421, %v4577
      %4945 = vst.msk [vmem:[%s208 + $0x18] sm:$0xf] %vm4421, %v4587
      %4946 = vst.msk [vmem:[%s208 + $0x1c] sm:$0xf] %vm4421, %v4597
      %4947 = vst.msk [vmem:[%s208 + $0x20] sm:$0xf] %vm4421, %v4607
      %4948 = vst.msk [vmem:[%s208 + $0x24] sm:$0xf] %vm4421, %v4617
      %4949 = vst.msk [vmem:[%s208 + $0x28] sm:$0xf] %vm4421, %v4627
      %4950 = vst.msk [vmem:[%s208 + $0x2c] sm:$0xf] %vm4421, %v4637
      %4951 = vst.msk [vmem:[%s208 + $0x30] sm:$0xf] %vm4421, %v4647
      %4952 = vst.msk [vmem:[%s208 + $0x34] sm:$0xf] %vm4421, %v4657
      %4953 = vst.msk [vmem:[%s208 + $0x38] sm:$0xf] %vm4421, %v4667
      %4954 = vst.msk [vmem:[%s208 + $0x3c] sm:$0xf] %vm4421, %v4677
      %4955 = vst.msk [vmem:[%s208 + $0x40] sm:$0xf] %vm4421, %v4687
      %4956 = vst.msk [vmem:[%s208 + $0x44] sm:$0xf] %vm4421, %v4697
      %4957 = vst.msk [vmem:[%s208 + $0x48] sm:$0xf] %vm4421, %v4707
      %4958 = vst.msk [vmem:[%s208 + $0x4c] sm:$0xf] %vm4421, %v4717
      %4959 = vst.msk [vmem:[%s208 + $0x50] sm:$0xf] %vm4421, %v4727
      %4960 = vst.msk [vmem:[%s208 + $0x54] sm:$0xf] %vm4421, %v4737
      %4961 = vst.msk [vmem:[%s208 + $0x58] sm:$0xf] %vm4421, %v4747
      %4962 = vst.msk [vmem:[%s208 + $0x5c] sm:$0xf] %vm4421, %v4757
      %4963 = vst.msk [vmem:[%s208 + $0x60] sm:$0xf] %vm4421, %v4767
      %4964 = vst.msk [vmem:[%s208 + $0x64] sm:$0xf] %vm4421, %v4777
      %4965 = vst.msk [vmem:[%s208 + $0x68] sm:$0xf] %vm4421, %v4787
      %4966 = vst.msk [vmem:[%s208 + $0x6c] sm:$0xf] %vm4421, %v4797
      %4967 = vst.msk [vmem:[%s208 + $0x70] sm:$0xf] %vm4421, %v4807
      %4968 = vst.msk [vmem:[%s208 + $0x74] sm:$0xf] %vm4421, %v4817
      %4969 = vst.msk [vmem:[%s208 + $0x78] sm:$0xf] %vm4421, %v4827
      %4970 = vst.msk [vmem:[%s208 + $0x7c] sm:$0xf] %vm4421, %v4837
      %4971 = vst.msk [vmem:[%s208 + $0x80] sm:$0xf] %vm4421, %v4847
      %4972 = vst.msk [vmem:[%s208 + $0x84] sm:$0xf] %vm4421, %v4857
      %4973 = vst.msk [vmem:[%s208 + $0x88] sm:$0xf] %vm4421, %v4867
      %4974 = vst.msk [vmem:[%s208 + $0x8c] sm:$0xf] %vm4421, %v4877
      %4975 = vst.msk [vmem:[%s208 + $0x90] sm:$0xf] %vm4421, %v4887
      %4976 = vst.msk [vmem:[%s208 + $0x94] sm:$0xf] %vm4421, %v4897
      %v4977 = vld [vmem:[%s208 + $0x98] sm:$0x3]
      %v4978 = vsel %vm4426, %v4898, %v4977
      %4979 = vst [vmem:[%s208 + $0x98] sm:$0x3] %v4978
      %v4980 = vld [vmem:[%s208 + $0x98] sm:$0xe]
      %v4981 = vsel %vm4938, 0, %v4980
      %4982 = vst [vmem:[%s208 + $0x98] sm:$0xe] %v4981
      %4983 = vst.msk [vmem:[%s208 + $0x9c] sm:$0xf] %vm4421, 0
      %vm4984 = vcmask 59392
      %4985 = vst.msk [vmem:[%s208 + $0xa0] sm:$0x7] %vm4984, 0
      %vm4986 = vcmask 64512
      %v4987 = vsel %vm4986, %v4385, 0.0
      %v4988 = vsel %vm4986, %v4386, 0.0
      %v4989 = vadd.f32 %v4987, %v4988
      %v4990 = vsel %vm4986, %v4387, 0.0
      %v4991 = vadd.f32 %v4989, %v4990
      %v4992 = vsel %vm4986, %v4388, 0.0
      %v4993 = vadd.f32 %v4991, %v4992
      %v4994 = vsel %vm4986, %v4389, 0.0
      %v4995 = vadd.f32 %v4993, %v4994
      %v4996 = vsel %vm4986, %v4390, 0.0
      %v4997 = vadd.f32 %v4995, %v4996
      %v4998 = vsel %vm4986, %v4391, 0.0
      %v4999 = vadd.f32 %v4997, %v4998
      %v5000 = vsel %vm4986, %v4392, 0.0
      %v5001 = vadd.f32 %v4999, %v5000
      %v5002 = vsel %vm4986, %v4393, 0.0
      %v5003 = vadd.f32 %v5001, %v5002
      %v5004 = vsel %vm4986, %v4394, 0.0
      %v5005 = vadd.f32 %v5003, %v5004
      %v5006 = vsel %vm4986, %v4395, 0.0
      %v5007 = vadd.f32 %v5005, %v5006
      %v5008 = vsel %vm4986, %v4396, 0.0
      %v5009 = vadd.f32 %v5007, %v5008
      %v5010 = vsel %vm4986, %v4397, 0.0
      %v5011 = vadd.f32 %v5009, %v5010
      %v5012 = vsel %vm4986, %v4398, 0.0
      %v5013 = vadd.f32 %v5011, %v5012
      %v5014 = vsel %vm4986, %v4399, 0.0
      %v5015 = vadd.f32 %v5013, %v5014
      %v5016 = vsel %vm4986, %v4400, 0.0
      %v5017 = vadd.f32 %v5015, %v5016
      %v5018 = vsel %vm4986, %v4401, 0.0
      %v5019 = vadd.f32 %v5017, %v5018
      %v5020 = vsel %vm4986, %v4402, 0.0
      %v5021 = vadd.f32 %v5019, %v5020
      %v5022 = vsel %vm4986, %v4403, 0.0
      %v5023 = vadd.f32 %v5021, %v5022
      %v5024 = vsel %vm4986, %v4404, 0.0
      %v5025 = vadd.f32 %v5023, %v5024
      %v5026 = vsel %vm4986, %v4405, 0.0
      %v5027 = vadd.f32 %v5025, %v5026
      %v5028 = vsel %vm4986, %v4406, 0.0
      %v5029 = vadd.f32 %v5027, %v5028
      %v5030 = vsel %vm4986, %v4407, 0.0
      %v5031 = vadd.f32 %v5029, %v5030
      %v5032 = vsel %vm4986, %v4408, 0.0
      %v5033 = vadd.f32 %v5031, %v5032
      %v5034 = vsel %vm4986, %v4409, 0.0
      %v5035 = vadd.f32 %v5033, %v5034
      %v5036 = vsel %vm4986, %v4410, 0.0
      %v5037 = vadd.f32 %v5035, %v5036
      %v5038 = vsel %vm4986, %v4411, 0.0
      %v5039 = vadd.f32 %v5037, %v5038
      %v5040 = vsel %vm4986, %v4412, 0.0
      %v5041 = vadd.f32 %v5039, %v5040
      %v5042 = vsel %vm4986, %v4413, 0.0
      %v5043 = vadd.f32 %v5041, %v5042
      %v5044 = vsel %vm4986, %v4414, 0.0
      %v5045 = vadd.f32 %v5043, %v5044
      %v5046 = vsel %vm4986, %v4415, 0.0
      %v5047 = vadd.f32 %v5045, %v5046
      %v5048 = vsel %vm4986, %v4416, 0.0
      %v5049 = vadd.f32 %v5047, %v5048
      %v5050 = vsel %vm4986, %v4417, 0.0
      %v5051 = vadd.f32 %v5049, %v5050
      %v5052 = vsel %vm4986, %v4418, 0.0
      %v5053 = vadd.f32 %v5051, %v5052
      %v5054 = vsel %vm4986, %v4419, 0.0
      %v5055 = vadd.f32 %v5053, %v5054
      %v5056 = vsel %vm4986, %v4420, 0.0
      %v5057 = vadd.f32 %v5055, %v5056
      %v5058 = vrot.slane %v5057, 4
      %v5059 = vadd.f32 %v5057, %v5058
      %v5060 = vrot.slane %v5059, 2
      %v5061 = vadd.f32 %v5059, %v5060
      %v5062 = vrot.slane %v5061, 1
      %v5063 = vadd.f32 %v5061, %v5062
      %v5064 = vadd.f32 %v5063, 0.0
      %v5065 = vmul.f32 %v4385, %v4385
      %v5066 = vmul.f32 %v4386, %v4386
      %v5067 = vmul.f32 %v4387, %v4387
      %v5068 = vmul.f32 %v4388, %v4388
      %v5069 = vmul.f32 %v4389, %v4389
      %v5070 = vmul.f32 %v4390, %v4390
      %v5071 = vmul.f32 %v4391, %v4391
      %v5072 = vmul.f32 %v4392, %v4392
      %v5073 = vmul.f32 %v4393, %v4393
      %v5074 = vmul.f32 %v4394, %v4394
      %v5075 = vmul.f32 %v4395, %v4395
      %v5076 = vmul.f32 %v4396, %v4396
      %v5077 = vmul.f32 %v4397, %v4397
      %v5078 = vmul.f32 %v4398, %v4398
      %v5079 = vmul.f32 %v4399, %v4399
      %v5080 = vmul.f32 %v4400, %v4400
      %v5081 = vmul.f32 %v4401, %v4401
      %v5082 = vmul.f32 %v4402, %v4402
      %v5083 = vmul.f32 %v4403, %v4403
      %v5084 = vmul.f32 %v4404, %v4404
      %v5085 = vmul.f32 %v4405, %v4405
      %v5086 = vmul.f32 %v4406, %v4406
      %v5087 = vmul.f32 %v4407, %v4407
      %v5088 = vmul.f32 %v4408, %v4408
      %v5089 = vmul.f32 %v4409, %v4409
      %v5090 = vmul.f32 %v4410, %v4410
      %v5091 = vmul.f32 %v4411, %v4411
      %v5092 = vmul.f32 %v4412, %v4412
      %v5093 = vmul.f32 %v4413, %v4413
      %v5094 = vmul.f32 %v4414, %v4414
      %v5095 = vmul.f32 %v4415, %v4415
      %v5096 = vmul.f32 %v4416, %v4416
      %v5097 = vmul.f32 %v4417, %v4417
      %v5098 = vmul.f32 %v4418, %v4418
      %v5099 = vmul.f32 %v4419, %v4419
      %v5100 = vmul.f32 %v4420, %v4420
      %v5101 = vsel %vm4986, %v5065, 0.0
      %v5102 = vsel %vm4986, %v5066, 0.0
      %v5103 = vadd.f32 %v5101, %v5102
      %v5104 = vsel %vm4986, %v5067, 0.0
      %v5105 = vadd.f32 %v5103, %v5104
      %v5106 = vsel %vm4986, %v5068, 0.0
      %v5107 = vadd.f32 %v5105, %v5106
      %v5108 = vsel %vm4986, %v5069, 0.0
      %v5109 = vadd.f32 %v5107, %v5108
      %v5110 = vsel %vm4986, %v5070, 0.0
      %v5111 = vadd.f32 %v5109, %v5110
      %v5112 = vsel %vm4986, %v5071, 0.0
      %v5113 = vadd.f32 %v5111, %v5112
      %v5114 = vsel %vm4986, %v5072, 0.0
      %v5115 = vadd.f32 %v5113, %v5114
      %v5116 = vsel %vm4986, %v5073, 0.0
      %v5117 = vadd.f32 %v5115, %v5116
      %v5118 = vsel %vm4986, %v5074, 0.0
      %v5119 = vadd.f32 %v5117, %v5118
      %v5120 = vsel %vm4986, %v5075, 0.0
      %v5121 = vadd.f32 %v5119, %v5120
      %v5122 = vsel %vm4986, %v5076, 0.0
      %v5123 = vadd.f32 %v5121, %v5122
      %v5124 = vsel %vm4986, %v5077, 0.0
      %v5125 = vadd.f32 %v5123, %v5124
      %v5126 = vsel %vm4986, %v5078, 0.0
      %v5127 = vadd.f32 %v5125, %v5126
      %v5128 = vsel %vm4986, %v5079, 0.0
      %v5129 = vadd.f32 %v5127, %v5128
      %v5130 = vsel %vm4986, %v5080, 0.0
      %v5131 = vadd.f32 %v5129, %v5130
      %v5132 = vsel %vm4986, %v5081, 0.0
      %v5133 = vadd.f32 %v5131, %v5132
      %v5134 = vsel %vm4986, %v5082, 0.0
      %v5135 = vadd.f32 %v5133, %v5134
      %v5136 = vsel %vm4986, %v5083, 0.0
      %v5137 = vadd.f32 %v5135, %v5136
      %v5138 = vsel %vm4986, %v5084, 0.0
      %v5139 = vadd.f32 %v5137, %v5138
      %v5140 = vsel %vm4986, %v5085, 0.0
      %v5141 = vadd.f32 %v5139, %v5140
      %v5142 = vsel %vm4986, %v5086, 0.0
      %v5143 = vadd.f32 %v5141, %v5142
      %v5144 = vsel %vm4986, %v5087, 0.0
      %v5145 = vadd.f32 %v5143, %v5144
      %v5146 = vsel %vm4986, %v5088, 0.0
      %v5147 = vadd.f32 %v5145, %v5146
      %v5148 = vsel %vm4986, %v5089, 0.0
      %v5149 = vadd.f32 %v5147, %v5148
      %v5150 = vsel %vm4986, %v5090, 0.0
      %v5151 = vadd.f32 %v5149, %v5150
      %v5152 = vsel %vm4986, %v5091, 0.0
      %v5153 = vadd.f32 %v5151, %v5152
      %v5154 = vsel %vm4986, %v5092, 0.0
      %v5155 = vadd.f32 %v5153, %v5154
      %v5156 = vsel %vm4986, %v5093, 0.0
      %v5157 = vadd.f32 %v5155, %v5156
      %v5158 = vsel %vm4986, %v5094, 0.0
      %v5159 = vadd.f32 %v5157, %v5158
      %v5160 = vsel %vm4986, %v5095, 0.0
      %v5161 = vadd.f32 %v5159, %v5160
      %v5162 = vsel %vm4986, %v5096, 0.0
      %v5163 = vadd.f32 %v5161, %v5162
      %v5164 = vsel %vm4986, %v5097, 0.0
      %v5165 = vadd.f32 %v5163, %v5164
      %v5166 = vsel %vm4986, %v5098, 0.0
      %v5167 = vadd.f32 %v5165, %v5166
      %v5168 = vsel %vm4986, %v5099, 0.0
      %v5169 = vadd.f32 %v5167, %v5168
      %v5170 = vsel %vm4986, %v5100, 0.0
      %v5171 = vadd.f32 %v5169, %v5170
      %v5172 = vrot.slane %v5171, 4
      %v5173 = vadd.f32 %v5171, %v5172
      %v5174 = vrot.slane %v5173, 2
      %v5175 = vadd.f32 %v5173, %v5174
      %v5176 = vrot.slane %v5175, 1
      %v5177 = vadd.f32 %v5175, %v5176
      %v5178 = vadd.f32 %v5177, 0.0
      %vm5179 = vcmask 57344
      %5180 = vst.msk [vmem:[%s211] sm:$0x1] %vm5179, %v5064
      %5181 = vst.msk [vmem:[%s214] sm:$0x1] %vm5179, %v5178
      %p5182 = scmp.lt.s32.totalorder %s16, 1
      %s5183 = scalar_select %p5182, %s16, 1
      %s5184 = smul.addr %s5183, 41
      %s5185 = smul.addr %s5184, 4
      %s5186 = scalar_lea.vmem %s2, %s5185
      %p5187 = scmp.lt.s32.totalorder %s16, 1
      %s5188 = scalar_select %p5187, %s16, 1
      %s5189 = scalar_lea.vmem %s3, %s5188
      %p5190 = scmp.lt.s32.totalorder %s16, 1
      %s5191 = scalar_select %p5190, %s16, 1
      %s5192 = scalar_lea.vmem %s4, %s5191
      // Predicated region
      $region29: #{conv3x3_forward.3} parent=27 // pred_check
        %p5193 = pneg %p81
      $region30: #{conv3x3_forward.3} parent=27 // pred_check_branch
        %5195 = sbr.rel (%p5193) target = $region32
      $region31: #{conv3x3_forward.3} parent=27 // pred_region
        _
      $region32: #{conv3x3_forward.3} parent=27 // pred_fallthru
        _
      // Predicated region
      $region33: #{conv3x3_forward.3} parent=27 // pred_check
        %p5196 = pneg %p107
      $region34: #{conv3x3_forward.3} parent=27 // pred_check_branch
        %5198 = sbr.rel (%p5196) target = $region36
      $region35: #{conv3x3_forward.3} parent=27 // pred_region
        _
      $region36: #{conv3x3_forward.3} parent=27 // pred_fallthru
        _
      // Predicated region
      $region37: #{conv3x3_forward.3} parent=27 // pred_check
        %p5199 = pneg %p133
      $region38: #{conv3x3_forward.3} parent=27 // pred_check_branch
        %5201 = sbr.rel (%p5199) target = $region40
      $region39: #{conv3x3_forward.3} parent=27 // pred_region
        _
      $region40: #{conv3x3_forward.3} parent=27 // pred_fallthru
        _
    $region28: #{conv3x3_forward.3} parent=5 // pred_fallthru
      _
    %p5202 = scmp.le.s32.totalorder 2, %s11
    // Predicated region
    $region41: #{conv3x3_forward.3} parent=5 // pred_check
      %p5203 = pneg %p5202
    $region42: #{conv3x3_forward.3} parent=5 // pred_check_branch
      %5205 = sbr.rel (%p5203) target = $region44
    $region43: #{conv3x3_forward.3} parent=5 // pred_region
      %s5206 = ssub.s32 %s11, 2
      // Predicated region
      $region45: #{conv3x3_forward.3} parent=43 // pred_check
        %p5207 = pneg %p87
      $region46: #{conv3x3_forward.3} parent=43 // pred_check_branch
        %5209 = sbr.rel (%p5207) target = $region48
      $region47: #{conv3x3_forward.3} parent=43 // pred_region
        %p5210 = scmp.lt.s32.totalorder %s17, 1
        %s5211 = scalar_select %p5210, %s17, 1
        %s5212 = smul.addr %s5211, 41
        %s5213 = smul.addr %s5212, 4
        %s5214 = scalar_lea.vmem %s2, %s5213
      $region48: #{conv3x3_forward.3} parent=43 // pred_fallthru
        _
      // Predicated region
      $region49: #{conv3x3_forward.3} parent=43 // pred_check
        %p5215 = pneg %p113
      $region50: #{conv3x3_forward.3} parent=43 // pred_check_branch
        %5217 = sbr.rel (%p5215) target = $region52
      $region51: #{conv3x3_forward.3} parent=43 // pred_region
        %p5218 = scmp.lt.s32.totalorder %s17, 1
        %s5219 = scalar_select %p5218, %s17, 1
        %s5220 = scalar_lea.vmem %s3, %s5219
      $region52: #{conv3x3_forward.3} parent=43 // pred_fallthru
        _
      // Predicated region
      $region53: #{conv3x3_forward.3} parent=43 // pred_check
        %p5221 = pneg %p139
      $region54: #{conv3x3_forward.3} parent=43 // pred_check_branch
        %5223 = sbr.rel (%p5221) target = $region56
      $region55: #{conv3x3_forward.3} parent=43 // pred_region
        %p5224 = scmp.lt.s32.totalorder %s17, 1
        %s5225 = scalar_select %p5224, %s17, 1
        %s5226 = scalar_lea.vmem %s4, %s5225
      $region56: #{conv3x3_forward.3} parent=43 // pred_fallthru
        _
    $region44: #{conv3x3_forward.3} parent=5 // pred_fallthru
      _
  $region6: #{conv3x3_forward.3} parent=0 // loop_footer
    %s15 = sadd.s32 1, %s11
  $region7: #{conv3x3_forward.3} parent=0 // loop_footer_branch
    %10 = sbr.rel target = $region3
  $region8: #{conv3x3_forward.3} parent=0 // loop_exit
    _

// kernel: conv3x3_forward.4
$region0: #{conv3x3_forward.4}
  #allocation0 [shape = 'u32[]', space=smem, size = 0x4, offset = 0x4, fixed_abs, tag = 'smem constant byte address 0x4 - core index']
  #allocation1 [shape = 'u32[144,128]{1,0:T(1,128)}', space=vmem, size = 0x12000, scoped, tag = 'internal scratch']
  #allocation2 [shape = 'bf16[326,8]{1,0:T(8,128)(2,1)}', space=vmem, size = 0x14800, scoped, tag = 'scratch operand']
  %s0 = inlined_call_operand.vmem [shape: bf16[2,326,8], index: 0, kind: input, shape index: {}]
  %s1 = inlined_call_operand.vmem [shape: f32[1,8], index: 1, kind: input, shape index: {}]
  %s2 = inlined_call_operand.vmem [shape: f32[1,8], index: 2, kind: input, shape index: {}]
  %s3 = inlined_call_operand.vmem [shape: bf16[9,8,8], index: 3, kind: input, shape index: {}]
  %s4 = inlined_call_operand.vmem [shape: bf16[2,326,8], index: 4, kind: output, shape index: {0}]
  %s5 = inlined_call_operand.vmem [shape: f32[2,1,8], index: 5, kind: output, shape index: {1}]
  %s6 = inlined_call_operand.vmem [shape: f32[2,1,8], index: 6, kind: output, shape index: {2}]
  %7 = xla_tuple %s4, %s5, %s6
  %s8 = sld [smem:[#allocation0]]
  $region65: #{conv3x3_forward.4} parent=0
    _
  %s10 = ssub.s32 1, %s8
  %s11 = scalar_select 0, %s10, %s8
  loop: start=0, step=1, limit=4
  $region2: #{conv3x3_forward.4} parent=0 // loop_pre_header
    _
  $region3: #{conv3x3_forward.4} parent=0 // loop_header
    %s13 = sphi 0, %s17
    %p14 = scmp.ge.s32.totalorder %s13, 4
    %s23 = sphi 0, %s25
    %s26 = sphi 0, %s23
    %s27 = sphi 0, %s26
    %s43 = sphi 0, %s27
    %s47 = sphi 0, %s47
    %s49 = sphi 0, %s47
    %s50 = sphi 0, %s49
    %s64 = sphi 0, %s50
    %s68 = sphi 0, %s68
    %s70 = sphi 0, %s68
    %s71 = sphi 0, %s70
    %s85 = sphi 0, %s71
    %s89 = sphi 0, %s89
    %s91 = sphi 0, %s89
    %s92 = sphi 0, %s91
    %s106 = sphi 0, %s92
    %s112 = sphi 0, %s114
    %s115 = sphi 0, %s112
    %s116 = sphi 0, %s115
    %s132 = sphi 0, %s116
    %s138 = sphi 0, %s140
    %s141 = sphi 0, %s138
    %s142 = sphi 0, %s141
    %s158 = sphi 0, %s142
    %s164 = sphi 0, %s166
    %s167 = sphi 0, %s164
    %s168 = sphi 0, %s167
    %s184 = sphi 0, %s168
  $region4: #{conv3x3_forward.4} parent=0 // loop_header_branch
    %16 = sbr.rel (%p14) target = $region8
  $region5: #{conv3x3_forward.4} parent=0 // loop_body
    %s18 = ssub.s32 %s13, 1
    %s19 = ssub.s32 %s13, 2
    %s20 = sadd.s32 %s13, 1
    %s21 = ssub.s32 %s13, %s20
    %p22 = scmp.eq.s32.totalorder %s21, 0
    %s24 = sadd.s32 %s23, 1
    %s25 = scalar_select %p22, %s23, %s24
    %p28 = pneg %p22
    %p29 = scmp.eq.s32.totalorder %s13, 1
    %p30 = por %p28, %p29
    %p31 = scmp.ne.s32.totalorder %s23, %s26
    %p32 = scmp.eq.s32.totalorder %s13, 0
    %p33 = por %p31, %p32
    %p34 = scmp.ne.s32.totalorder %s23, %s26
    %p35 = scmp.eq.s32.totalorder %s18, 1
    %p36 = por %p34, %p35
    %p37 = scmp.ne.s32.totalorder %s26, %s27
    %p38 = scmp.eq.s32.totalorder %s18, 0
    %p39 = por %p37, %p38
    %p40 = scmp.ne.s32.totalorder %s26, %s27
    %p41 = scmp.eq.s32.totalorder %s19, 1
    %p42 = por %p40, %p41
    %p44 = scmp.ne.s32.totalorder %s27, %s43
    %p45 = scmp.eq.s32.totalorder %s19, 0
    %p46 = por %p44, %p45
    %s48 = sadd.s32 %s47, 1
    %p51 = scmp.eq.s32.totalorder %s13, 1
    %p52 = scmp.ne.s32.totalorder %s47, %s49
    %p53 = scmp.eq.s32.totalorder %s13, 0
    %p54 = por %p52, %p53
    %p55 = scmp.ne.s32.totalorder %s47, %s49
    %p56 = scmp.eq.s32.totalorder %s18, 1
    %p57 = por %p55, %p56
    %p58 = scmp.ne.s32.totalorder %s49, %s50
    %p59 = scmp.eq.s32.totalorder %s18, 0
    %p60 = por %p58, %p59
    %p61 = scmp.ne.s32.totalorder %s49, %s50
    %p62 = scmp.eq.s32.totalorder %s19, 1
    %p63 = por %p61, %p62
    %p65 = scmp.ne.s32.totalorder %s50, %s64
    %p66 = scmp.eq.s32.totalorder %s19, 0
    %p67 = por %p65, %p66
    %s69 = sadd.s32 %s68, 1
    %p72 = scmp.eq.s32.totalorder %s13, 1
    %p73 = scmp.ne.s32.totalorder %s68, %s70
    %p74 = scmp.eq.s32.totalorder %s13, 0
    %p75 = por %p73, %p74
    %p76 = scmp.ne.s32.totalorder %s68, %s70
    %p77 = scmp.eq.s32.totalorder %s18, 1
    %p78 = por %p76, %p77
    %p79 = scmp.ne.s32.totalorder %s70, %s71
    %p80 = scmp.eq.s32.totalorder %s18, 0
    %p81 = por %p79, %p80
    %p82 = scmp.ne.s32.totalorder %s70, %s71
    %p83 = scmp.eq.s32.totalorder %s19, 1
    %p84 = por %p82, %p83
    %p86 = scmp.ne.s32.totalorder %s71, %s85
    %p87 = scmp.eq.s32.totalorder %s19, 0
    %p88 = por %p86, %p87
    %s90 = sadd.s32 %s89, 1
    %p93 = scmp.eq.s32.totalorder %s13, 1
    %p94 = scmp.ne.s32.totalorder %s89, %s91
    %p95 = scmp.eq.s32.totalorder %s13, 0
    %p96 = por %p94, %p95
    %p97 = scmp.ne.s32.totalorder %s89, %s91
    %p98 = scmp.eq.s32.totalorder %s18, 1
    %p99 = por %p97, %p98
    %p100 = scmp.ne.s32.totalorder %s91, %s92
    %p101 = scmp.eq.s32.totalorder %s18, 0
    %p102 = por %p100, %p101
    %p103 = scmp.ne.s32.totalorder %s91, %s92
    %p104 = scmp.eq.s32.totalorder %s19, 1
    %p105 = por %p103, %p104
    %p107 = scmp.ne.s32.totalorder %s92, %s106
    %p108 = scmp.eq.s32.totalorder %s19, 0
    %p109 = por %p107, %p108
    %s110 = ssub.s32 %s13, %s20
    %p111 = scmp.eq.s32.totalorder %s110, 0
    %s113 = sadd.s32 %s112, 1
    %s114 = scalar_select %p111, %s112, %s113
    %p117 = pneg %p111
    %p118 = scmp.eq.s32.totalorder %s13, 1
    %p119 = por %p117, %p118
    %p120 = scmp.ne.s32.totalorder %s112, %s115
    %p121 = scmp.eq.s32.totalorder %s13, 0
    %p122 = por %p120, %p121
    %p123 = scmp.ne.s32.totalorder %s112, %s115
    %p124 = scmp.eq.s32.totalorder %s18, 1
    %p125 = por %p123, %p124
    %p126 = scmp.ne.s32.totalorder %s115, %s116
    %p127 = scmp.eq.s32.totalorder %s18, 0
    %p128 = por %p126, %p127
    %p129 = scmp.ne.s32.totalorder %s115, %s116
    %p130 = scmp.eq.s32.totalorder %s19, 1
    %p131 = por %p129, %p130
    %p133 = scmp.ne.s32.totalorder %s116, %s132
    %p134 = scmp.eq.s32.totalorder %s19, 0
    %p135 = por %p133, %p134
    %s136 = ssub.s32 %s13, %s20
    %p137 = scmp.eq.s32.totalorder %s136, 0
    %s139 = sadd.s32 %s138, 1
    %s140 = scalar_select %p137, %s138, %s139
    %p143 = pneg %p137
    %p144 = scmp.eq.s32.totalorder %s13, 1
    %p145 = por %p143, %p144
    %p146 = scmp.ne.s32.totalorder %s138, %s141
    %p147 = scmp.eq.s32.totalorder %s13, 0
    %p148 = por %p146, %p147
    %p149 = scmp.ne.s32.totalorder %s138, %s141
    %p150 = scmp.eq.s32.totalorder %s18, 1
    %p151 = por %p149, %p150
    %p152 = scmp.ne.s32.totalorder %s141, %s142
    %p153 = scmp.eq.s32.totalorder %s18, 0
    %p154 = por %p152, %p153
    %p155 = scmp.ne.s32.totalorder %s141, %s142
    %p156 = scmp.eq.s32.totalorder %s19, 1
    %p157 = por %p155, %p156
    %p159 = scmp.ne.s32.totalorder %s142, %s158
    %p160 = scmp.eq.s32.totalorder %s19, 0
    %p161 = por %p159, %p160
    %s162 = ssub.s32 %s13, %s20
    %p163 = scmp.eq.s32.totalorder %s162, 0
    %s165 = sadd.s32 %s164, 1
    %s166 = scalar_select %p163, %s164, %s165
    %p169 = pneg %p163
    %p170 = scmp.eq.s32.totalorder %s13, 1
    %p171 = por %p169, %p170
    %p172 = scmp.ne.s32.totalorder %s164, %s167
    %p173 = scmp.eq.s32.totalorder %s13, 0
    %p174 = por %p172, %p173
    %p175 = scmp.ne.s32.totalorder %s164, %s167
    %p176 = scmp.eq.s32.totalorder %s18, 1
    %p177 = por %p175, %p176
    %p178 = scmp.ne.s32.totalorder %s167, %s168
    %p179 = scmp.eq.s32.totalorder %s18, 0
    %p180 = por %p178, %p179
    %p181 = scmp.ne.s32.totalorder %s167, %s168
    %p182 = scmp.eq.s32.totalorder %s19, 1
    %p183 = por %p181, %p182
    %p185 = scmp.ne.s32.totalorder %s168, %s184
    %p186 = scmp.eq.s32.totalorder %s19, 0
    %p187 = por %p185, %p186
    %p188 = scmp.le.s32.totalorder 1, %s13
    %p189 = scmp.lt.s32.totalorder %s13, 3
    %p190 = pnand %p188, %p189
    %p191 = pneg %p190
    // Predicated region
    $region9: #{conv3x3_forward.4} parent=5 // pred_check
      _
    $region10: #{conv3x3_forward.4} parent=5 // pred_check_branch
      %193 = sbr.rel (%p190) target = $region12
    $region11: #{conv3x3_forward.4} parent=5 // pred_region
      %s194 = ssub.s32 %s13, 1
      // Predicated region
      $region13: #{conv3x3_forward.4} parent=11 // pred_check
        %p195 = pneg %p60
      $region14: #{conv3x3_forward.4} parent=11 // pred_check_branch
        %197 = sbr.rel (%p195) target = $region16
      $region15: #{conv3x3_forward.4} parent=11 // pred_region
        _
      $region16: #{conv3x3_forward.4} parent=11 // pred_fallthru
        _
      // Predicated region
      $region17: #{conv3x3_forward.4} parent=11 // pred_check
        %p198 = pneg %p81
      $region18: #{conv3x3_forward.4} parent=11 // pred_check_branch
        %200 = sbr.rel (%p198) target = $region20
      $region19: #{conv3x3_forward.4} parent=11 // pred_region
        _
      $region20: #{conv3x3_forward.4} parent=11 // pred_fallthru
        _
      // Predicated region
      $region21: #{conv3x3_forward.4} parent=11 // pred_check
        %p201 = pneg %p102
      $region22: #{conv3x3_forward.4} parent=11 // pred_check_branch
        %203 = sbr.rel (%p201) target = $region24
      $region23: #{conv3x3_forward.4} parent=11 // pred_region
        _
      $region24: #{conv3x3_forward.4} parent=11 // pred_fallthru
        _
    $region12: #{conv3x3_forward.4} parent=5 // pred_fallthru
      _
    %p204 = scmp.lt.s32.totalorder %s13, 2
    // Predicated region
    $region25: #{conv3x3_forward.4} parent=5 // pred_check
      %p205 = pneg %p204
    $region26: #{conv3x3_forward.4} parent=5 // pred_check_branch
      %207 = sbr.rel (%p205) target = $region28
    $region27: #{conv3x3_forward.4} parent=5 // pred_region
      // Predicated region
      $region29: #{conv3x3_forward.4} parent=27 // pred_check
        %p208 = pneg %p33
      $region30: #{conv3x3_forward.4} parent=27 // pred_check_branch
        %210 = sbr.rel (%p208) target = $region32
      $region31: #{conv3x3_forward.4} parent=27 // pred_region
        %p211 = scmp.lt.s32.totalorder %s13, 1
        %s212 = scalar_select %p211, %s13, 1
        %s213 = smul.addr %s212, 41
        %s214 = smul.addr %s213, 4
        %s215 = scalar_lea.vmem %s0, %s214
      $region32: #{conv3x3_forward.4} parent=27 // pred_fallthru
        _
    $region28: #{conv3x3_forward.4} parent=5 // pred_fallthru
      _
    %p216 = scmp.le.s32.totalorder 1, %s13
    %p217 = scmp.lt.s32.totalorder %s13, 3
    %p218 = pnand %p216, %p217
    %p219 = pneg %p218
    // Predicated region
    $region33: #{conv3x3_forward.4} parent=5 // pred_check
      _
    $region34: #{conv3x3_forward.4} parent=5 // pred_check_branch
      %221 = sbr.rel (%p218) target = $region36
    $region35: #{conv3x3_forward.4} parent=5 // pred_region
      %s222 = ssub.s32 %s13, 1
      %p223 = scmp.lt.s32.totalorder %s18, 1
      %s224 = scalar_select %p223, %s18, 1
      %s225 = smul.addr %s224, 41
      %s226 = smul.addr %s225, 4
      %s227 = scalar_lea.vmem %s0, %s226
      %p228 = pneg %p39
      %p229 = pneg %p36
      %p230 = pneg %p60
      %p231 = pneg %p57
      %p232 = pneg %p81
      %p233 = pneg %p78
      %p234 = pneg %p102
      %p235 = pneg %p99
      %p236 = pneg %p128
      %p237 = pneg %p125
      %p238 = scmp.lt.s32.totalorder %s18, 1
      %s239 = scalar_select %p238, %s18, 1
      %s240 = smul.addr %s239, 41
      %s241 = smul.addr %s240, 4
      %s242 = scalar_lea.vmem %s4, %s241
      %p243 = pneg %p154
      %p244 = pneg %p151
      %p245 = scmp.lt.s32.totalorder %s18, 1
      %s246 = scalar_select %p245, %s18, 1
      %s247 = scalar_lea.vmem %s5, %s246
      %p248 = pneg %p180
      %p249 = pneg %p177
      %p250 = scmp.lt.s32.totalorder %s18, 1
      %s251 = scalar_select %p250, %s18, 1
      %s252 = scalar_lea.vmem %s6, %s251
      %p253 = scmp.lt.s32.totalorder %s18, 1
      %s254 = scalar_select %p253, %s18, 1
      %s255 = smul.addr %s254, 41
      %s256 = smul.addr %s255, 4
      %s257 = scalar_lea.vmem %s0, %s256
      %p258 = scmp.lt.s32.totalorder %s18, 1
      %s259 = scalar_select %p258, %s18, 1
      %s260 = smul.addr %s259, 41
      %s261 = smul.addr %s260, 4
      %s262 = scalar_lea.vmem %s4, %s261
      %p263 = scmp.lt.s32.totalorder %s18, 1
      %s264 = scalar_select %p263, %s18, 1
      %s265 = scalar_lea.vmem %s5, %s264
      %p266 = scmp.lt.s32.totalorder %s18, 1
      %s267 = scalar_select %p266, %s18, 1
      %s268 = scalar_lea.vmem %s6, %s267
      %v270 = vlaneseq
      %v271 = vshrl.u32 %v270, 7
      %v272 = vadd.s32 %v271, 8
      %v273 = vadd.s32 %v271, 16
      %v274 = vadd.s32 %v271, 24
      %v275 = vadd.s32 %v271, 32
      %v276 = vadd.s32 %v271, 40
      %v277 = vadd.s32 %v271, 48
      %v278 = vadd.s32 %v271, 56
      %v279 = vadd.s32 %v271, 64
      %v280 = vadd.s32 %v271, 72
      %v281 = vadd.s32 %v271, 80
      %v282 = vadd.s32 %v271, 88
      %v283 = vadd.s32 %v271, 96
      %v284 = vadd.s32 %v271, 104
      %v285 = vadd.s32 %v271, 112
      %v286 = vadd.s32 %v271, 120
      %v287 = vadd.s32 %v271, 128
      %v288 = vadd.s32 %v271, 136
      %v289 = vadd.s32 %v271, 144
      %v290 = vadd.s32 %v271, 152
      %v291 = vadd.s32 %v271, 160
      %v292 = vadd.s32 %v271, 168
      %v293 = vadd.s32 %v271, 176
      %v294 = vadd.s32 %v271, 184
      %v295 = vadd.s32 %v271, 192
      %v296 = vadd.s32 %v271, 200
      %v297 = vadd.s32 %v271, 208
      %v298 = vadd.s32 %v271, 216
      %v299 = vadd.s32 %v271, 224
      %v300 = vadd.s32 %v271, 232
      %v301 = vadd.s32 %v271, 240
      %v302 = vadd.s32 %v271, 248
      %v303 = vadd.s32 %v271, 256
      %v304 = vadd.s32 %v271, 264
      %v305 = vadd.s32 %v271, 272
      %v306 = vadd.s32 %v271, 280
      %vm307 = vcmp.lt.s32.totalorder %v271, 0
      %v308 = vsub.s32 0, %v271
      %v309 = vsel %vm307, %v308, %v271
      %v310 = vmul.u32.u64.compose %v309, 3817748708
      %v311 = vextract.low.u32 %v310
      %v312 = vextract.high.u32 %v310
      %v313 = vshrl.u32 %v312, 4
      %v314 = vmul.u32 %v313, 18
      %v315 = vsub.s32 %v309, %v314
      %v316 = vsub.s32 0, %v315
      %v317 = vsel %vm307, %v316, %v315
      %vm318 = vcmp.lt.s32.totalorder %v272, 0
      %v319 = vsub.s32 0, %v272
      %v320 = vsel %vm318, %v319, %v272
      %v321 = vmul.u32.u64.compose %v320, 3817748708
      %v322 = vextract.low.u32 %v321
      %v323 = vextract.high.u32 %v321
      %v324 = vshrl.u32 %v323, 4
      %v325 = vmul.u32 %v324, 18
      %v326 = vsub.s32 %v320, %v325
      %v327 = vsub.s32 0, %v326
      %v328 = vsel %vm318, %v327, %v326
      %vm329 = vcmp.lt.s32.totalorder %v273, 0
      %v330 = vsub.s32 0, %v273
      %v331 = vsel %vm329, %v330, %v273
      %v332 = vmul.u32.u64.compose %v331, 3817748708
      %v333 = vextract.low.u32 %v332
      %v334 = vextract.high.u32 %v332
      %v335 = vshrl.u32 %v334, 4
      %v336 = vmul.u32 %v335, 18
      %v337 = vsub.s32 %v331, %v336
      %v338 = vsub.s32 0, %v337
      %v339 = vsel %vm329, %v338, %v337
      %vm340 = vcmp.lt.s32.totalorder %v274, 0
      %v341 = vsub.s32 0, %v274
      %v342 = vsel %vm340, %v341, %v274
      %v343 = vmul.u32.u64.compose %v342, 3817748708
      %v344 = vextract.low.u32 %v343
      %v345 = vextract.high.u32 %v343
      %v346 = vshrl.u32 %v345, 4
      %v347 = vmul.u32 %v346, 18
      %v348 = vsub.s32 %v342, %v347
      %v349 = vsub.s32 0, %v348
      %v350 = vsel %vm340, %v349, %v348
      %vm351 = vcmp.lt.s32.totalorder %v275, 0
      %v352 = vsub.s32 0, %v275
      %v353 = vsel %vm351, %v352, %v275
      %v354 = vmul.u32.u64.compose %v353, 3817748708
      %v355 = vextract.low.u32 %v354
      %v356 = vextract.high.u32 %v354
      %v357 = vshrl.u32 %v356, 4
      %v358 = vmul.u32 %v357, 18
      %v359 = vsub.s32 %v353, %v358
      %v360 = vsub.s32 0, %v359
      %v361 = vsel %vm351, %v360, %v359
      %vm362 = vcmp.lt.s32.totalorder %v276, 0
      %v363 = vsub.s32 0, %v276
      %v364 = vsel %vm362, %v363, %v276
      %v365 = vmul.u32.u64.compose %v364, 3817748708
      %v366 = vextract.low.u32 %v365
      %v367 = vextract.high.u32 %v365
      %v368 = vshrl.u32 %v367, 4
      %v369 = vmul.u32 %v368, 18
      %v370 = vsub.s32 %v364, %v369
      %v371 = vsub.s32 0, %v370
      %v372 = vsel %vm362, %v371, %v370
      %vm373 = vcmp.lt.s32.totalorder %v277, 0
      %v374 = vsub.s32 0, %v277
      %v375 = vsel %vm373, %v374, %v277
      %v376 = vmul.u32.u64.compose %v375, 3817748708
      %v377 = vextract.low.u32 %v376
      %v378 = vextract.high.u32 %v376
      %v379 = vshrl.u32 %v378, 4
      %v380 = vmul.u32 %v379, 18
      %v381 = vsub.s32 %v375, %v380
      %v382 = vsub.s32 0, %v381
      %v383 = vsel %vm373, %v382, %v381
      %vm384 = vcmp.lt.s32.totalorder %v278, 0
      %v385 = vsub.s32 0, %v278
      %v386 = vsel %vm384, %v385, %v278
      %v387 = vmul.u32.u64.compose %v386, 3817748708
      %v388 = vextract.low.u32 %v387
      %v389 = vextract.high.u32 %v387
      %v390 = vshrl.u32 %v389, 4
      %v391 = vmul.u32 %v390, 18
      %v392 = vsub.s32 %v386, %v391
      %v393 = vsub.s32 0, %v392
      %v394 = vsel %vm384, %v393, %v392
      %vm395 = vcmp.lt.s32.totalorder %v279, 0
      %v396 = vsub.s32 0, %v279
      %v397 = vsel %vm395, %v396, %v279
      %v398 = vmul.u32.u64.compose %v397, 3817748708
      %v399 = vextract.low.u32 %v398
      %v400 = vextract.high.u32 %v398
      %v401 = vshrl.u32 %v400, 4
      %v402 = vmul.u32 %v401, 18
      %v403 = vsub.s32 %v397, %v402
      %v404 = vsub.s32 0, %v403
      %v405 = vsel %vm395, %v404, %v403
      %vm406 = vcmp.lt.s32.totalorder %v280, 0
      %v407 = vsub.s32 0, %v280
      %v408 = vsel %vm406, %v407, %v280
      %v409 = vmul.u32.u64.compose %v408, 3817748708
      %v410 = vextract.low.u32 %v409
      %v411 = vextract.high.u32 %v409
      %v412 = vshrl.u32 %v411, 4
      %v413 = vmul.u32 %v412, 18
      %v414 = vsub.s32 %v408, %v413
      %v415 = vsub.s32 0, %v414
      %v416 = vsel %vm406, %v415, %v414
      %vm417 = vcmp.lt.s32.totalorder %v281, 0
      %v418 = vsub.s32 0, %v281
      %v419 = vsel %vm417, %v418, %v281
      %v420 = vmul.u32.u64.compose %v419, 3817748708
      %v421 = vextract.low.u32 %v420
      %v422 = vextract.high.u32 %v420
      %v423 = vshrl.u32 %v422, 4
      %v424 = vmul.u32 %v423, 18
      %v425 = vsub.s32 %v419, %v424
      %v426 = vsub.s32 0, %v425
      %v427 = vsel %vm417, %v426, %v425
      %vm428 = vcmp.lt.s32.totalorder %v282, 0
      %v429 = vsub.s32 0, %v282
      %v430 = vsel %vm428, %v429, %v282
      %v431 = vmul.u32.u64.compose %v430, 3817748708
      %v432 = vextract.low.u32 %v431
      %v433 = vextract.high.u32 %v431
      %v434 = vshrl.u32 %v433, 4
      %v435 = vmul.u32 %v434, 18
      %v436 = vsub.s32 %v430, %v435
      %v437 = vsub.s32 0, %v436
      %v438 = vsel %vm428, %v437, %v436
      %vm439 = vcmp.lt.s32.totalorder %v283, 0
      %v440 = vsub.s32 0, %v283
      %v441 = vsel %vm439, %v440, %v283
      %v442 = vmul.u32.u64.compose %v441, 3817748708
      %v443 = vextract.low.u32 %v442
      %v444 = vextract.high.u32 %v442
      %v445 = vshrl.u32 %v444, 4
      %v446 = vmul.u32 %v445, 18
      %v447 = vsub.s32 %v441, %v446
      %v448 = vsub.s32 0, %v447
      %v449 = vsel %vm439, %v448, %v447
      %vm450 = vcmp.lt.s32.totalorder %v284, 0
      %v451 = vsub.s32 0, %v284
      %v452 = vsel %vm450, %v451, %v284
      %v453 = vmul.u32.u64.compose %v452, 3817748708
      %v454 = vextract.low.u32 %v453
      %v455 = vextract.high.u32 %v453
      %v456 = vshrl.u32 %v455, 4
      %v457 = vmul.u32 %v456, 18
      %v458 = vsub.s32 %v452, %v457
      %v459 = vsub.s32 0, %v458
      %v460 = vsel %vm450, %v459, %v458
      %vm461 = vcmp.lt.s32.totalorder %v285, 0
      %v462 = vsub.s32 0, %v285
      %v463 = vsel %vm461, %v462, %v285
      %v464 = vmul.u32.u64.compose %v463, 3817748708
      %v465 = vextract.low.u32 %v464
      %v466 = vextract.high.u32 %v464
      %v467 = vshrl.u32 %v466, 4
      %v468 = vmul.u32 %v467, 18
      %v469 = vsub.s32 %v463, %v468
      %v470 = vsub.s32 0, %v469
      %v471 = vsel %vm461, %v470, %v469
      %vm472 = vcmp.lt.s32.totalorder %v286, 0
      %v473 = vsub.s32 0, %v286
      %v474 = vsel %vm472, %v473, %v286
      %v475 = vmul.u32.u64.compose %v474, 3817748708
      %v476 = vextract.low.u32 %v475
      %v477 = vextract.high.u32 %v475
      %v478 = vshrl.u32 %v477, 4
      %v479 = vmul.u32 %v478, 18
      %v480 = vsub.s32 %v474, %v479
      %v481 = vsub.s32 0, %v480
      %v482 = vsel %vm472, %v481, %v480
      %vm483 = vcmp.lt.s32.totalorder %v287, 0
      %v484 = vsub.s32 0, %v287
      %v485 = vsel %vm483, %v484, %v287
      %v486 = vmul.u32.u64.compose %v485, 3817748708
      %v487 = vextract.low.u32 %v486
      %v488 = vextract.high.u32 %v486
      %v489 = vshrl.u32 %v488, 4
      %v490 = vmul.u32 %v489, 18
      %v491 = vsub.s32 %v485, %v490
      %v492 = vsub.s32 0, %v491
      %v493 = vsel %vm483, %v492, %v491
      %vm494 = vcmp.lt.s32.totalorder %v288, 0
      %v495 = vsub.s32 0, %v288
      %v496 = vsel %vm494, %v495, %v288
      %v497 = vmul.u32.u64.compose %v496, 3817748708
      %v498 = vextract.low.u32 %v497
      %v499 = vextract.high.u32 %v497
      %v500 = vshrl.u32 %v499, 4
      %v501 = vmul.u32 %v500, 18
      %v502 = vsub.s32 %v496, %v501
      %v503 = vsub.s32 0, %v502
      %v504 = vsel %vm494, %v503, %v502
      %vm505 = vcmp.lt.s32.totalorder %v289, 0
      %v506 = vsub.s32 0, %v289
      %v507 = vsel %vm505, %v506, %v289
      %v508 = vmul.u32.u64.compose %v507, 3817748708
      %v509 = vextract.low.u32 %v508
      %v510 = vextract.high.u32 %v508
      %v511 = vshrl.u32 %v510, 4
      %v512 = vmul.u32 %v511, 18
      %v513 = vsub.s32 %v507, %v512
      %v514 = vsub.s32 0, %v513
      %v515 = vsel %vm505, %v514, %v513
      %vm516 = vcmp.lt.s32.totalorder %v290, 0
      %v517 = vsub.s32 0, %v290
      %v518 = vsel %vm516, %v517, %v290
      %v519 = vmul.u32.u64.compose %v518, 3817748708
      %v520 = vextract.low.u32 %v519
      %v521 = vextract.high.u32 %v519
      %v522 = vshrl.u32 %v521, 4
      %v523 = vmul.u32 %v522, 18
      %v524 = vsub.s32 %v518, %v523
      %v525 = vsub.s32 0, %v524
      %v526 = vsel %vm516, %v525, %v524
      %vm527 = vcmp.lt.s32.totalorder %v291, 0
      %v528 = vsub.s32 0, %v291
      %v529 = vsel %vm527, %v528, %v291
      %v530 = vmul.u32.u64.compose %v529, 3817748708
      %v531 = vextract.low.u32 %v530
      %v532 = vextract.high.u32 %v530
      %v533 = vshrl.u32 %v532, 4
      %v534 = vmul.u32 %v533, 18
      %v535 = vsub.s32 %v529, %v534
      %v536 = vsub.s32 0, %v535
      %v537 = vsel %vm527, %v536, %v535
      %vm538 = vcmp.lt.s32.totalorder %v292, 0
      %v539 = vsub.s32 0, %v292
      %v540 = vsel %vm538, %v539, %v292
      %v541 = vmul.u32.u64.compose %v540, 3817748708
      %v542 = vextract.low.u32 %v541
      %v543 = vextract.high.u32 %v541
      %v544 = vshrl.u32 %v543, 4
      %v545 = vmul.u32 %v544, 18
      %v546 = vsub.s32 %v540, %v545
      %v547 = vsub.s32 0, %v546
      %v548 = vsel %vm538, %v547, %v546
      %vm549 = vcmp.lt.s32.totalorder %v293, 0
      %v550 = vsub.s32 0, %v293
      %v551 = vsel %vm549, %v550, %v293
      %v552 = vmul.u32.u64.compose %v551, 3817748708
      %v553 = vextract.low.u32 %v552
      %v554 = vextract.high.u32 %v552
      %v555 = vshrl.u32 %v554, 4
      %v556 = vmul.u32 %v555, 18
      %v557 = vsub.s32 %v551, %v556
      %v558 = vsub.s32 0, %v557
      %v559 = vsel %vm549, %v558, %v557
      %vm560 = vcmp.lt.s32.totalorder %v294, 0
      %v561 = vsub.s32 0, %v294
      %v562 = vsel %vm560, %v561, %v294
      %v563 = vmul.u32.u64.compose %v562, 3817748708
      %v564 = vextract.low.u32 %v563
      %v565 = vextract.high.u32 %v563
      %v566 = vshrl.u32 %v565, 4
      %v567 = vmul.u32 %v566, 18
      %v568 = vsub.s32 %v562, %v567
      %v569 = vsub.s32 0, %v568
      %v570 = vsel %vm560, %v569, %v568
      %vm571 = vcmp.lt.s32.totalorder %v295, 0
      %v572 = vsub.s32 0, %v295
      %v573 = vsel %vm571, %v572, %v295
      %v574 = vmul.u32.u64.compose %v573, 3817748708
      %v575 = vextract.low.u32 %v574
      %v576 = vextract.high.u32 %v574
      %v577 = vshrl.u32 %v576, 4
      %v578 = vmul.u32 %v577, 18
      %v579 = vsub.s32 %v573, %v578
      %v580 = vsub.s32 0, %v579
      %v581 = vsel %vm571, %v580, %v579
      %vm582 = vcmp.lt.s32.totalorder %v296, 0
      %v583 = vsub.s32 0, %v296
      %v584 = vsel %vm582, %v583, %v296
      %v585 = vmul.u32.u64.compose %v584, 3817748708
      %v586 = vextract.low.u32 %v585
      %v587 = vextract.high.u32 %v585
      %v588 = vshrl.u32 %v587, 4
      %v589 = vmul.u32 %v588, 18
      %v590 = vsub.s32 %v584, %v589
      %v591 = vsub.s32 0, %v590
      %v592 = vsel %vm582, %v591, %v590
      %vm593 = vcmp.lt.s32.totalorder %v297, 0
      %v594 = vsub.s32 0, %v297
      %v595 = vsel %vm593, %v594, %v297
      %v596 = vmul.u32.u64.compose %v595, 3817748708
      %v597 = vextract.low.u32 %v596
      %v598 = vextract.high.u32 %v596
      %v599 = vshrl.u32 %v598, 4
      %v600 = vmul.u32 %v599, 18
      %v601 = vsub.s32 %v595, %v600
      %v602 = vsub.s32 0, %v601
      %v603 = vsel %vm593, %v602, %v601
      %vm604 = vcmp.lt.s32.totalorder %v298, 0
      %v605 = vsub.s32 0, %v298
      %v606 = vsel %vm604, %v605, %v298
      %v607 = vmul.u32.u64.compose %v606, 3817748708
      %v608 = vextract.low.u32 %v607
      %v609 = vextract.high.u32 %v607
      %v610 = vshrl.u32 %v609, 4
      %v611 = vmul.u32 %v610, 18
      %v612 = vsub.s32 %v606, %v611
      %v613 = vsub.s32 0, %v612
      %v614 = vsel %vm604, %v613, %v612
      %vm615 = vcmp.lt.s32.totalorder %v299, 0
      %v616 = vsub.s32 0, %v299
      %v617 = vsel %vm615, %v616, %v299
      %v618 = vmul.u32.u64.compose %v617, 3817748708
      %v619 = vextract.low.u32 %v618
      %v620 = vextract.high.u32 %v618
      %v621 = vshrl.u32 %v620, 4
      %v622 = vmul.u32 %v621, 18
      %v623 = vsub.s32 %v617, %v622
      %v624 = vsub.s32 0, %v623
      %v625 = vsel %vm615, %v624, %v623
      %vm626 = vcmp.lt.s32.totalorder %v300, 0
      %v627 = vsub.s32 0, %v300
      %v628 = vsel %vm626, %v627, %v300
      %v629 = vmul.u32.u64.compose %v628, 3817748708
      %v630 = vextract.low.u32 %v629
      %v631 = vextract.high.u32 %v629
      %v632 = vshrl.u32 %v631, 4
      %v633 = vmul.u32 %v632, 18
      %v634 = vsub.s32 %v628, %v633
      %v635 = vsub.s32 0, %v634
      %v636 = vsel %vm626, %v635, %v634
      %vm637 = vcmp.lt.s32.totalorder %v301, 0
      %v638 = vsub.s32 0, %v301
      %v639 = vsel %vm637, %v638, %v301
      %v640 = vmul.u32.u64.compose %v639, 3817748708
      %v641 = vextract.low.u32 %v640
      %v642 = vextract.high.u32 %v640
      %v643 = vshrl.u32 %v642, 4
      %v644 = vmul.u32 %v643, 18
      %v645 = vsub.s32 %v639, %v644
      %v646 = vsub.s32 0, %v645
      %v647 = vsel %vm637, %v646, %v645
      %vm648 = vcmp.lt.s32.totalorder %v302, 0
      %v649 = vsub.s32 0, %v302
      %v650 = vsel %vm648, %v649, %v302
      %v651 = vmul.u32.u64.compose %v650, 3817748708
      %v652 = vextract.low.u32 %v651
      %v653 = vextract.high.u32 %v651
      %v654 = vshrl.u32 %v653, 4
      %v655 = vmul.u32 %v654, 18
      %v656 = vsub.s32 %v650, %v655
      %v657 = vsub.s32 0, %v656
      %v658 = vsel %vm648, %v657, %v656
      %vm659 = vcmp.lt.s32.totalorder %v303, 0
      %v660 = vsub.s32 0, %v303
      %v661 = vsel %vm659, %v660, %v303
      %v662 = vmul.u32.u64.compose %v661, 3817748708
      %v663 = vextract.low.u32 %v662
      %v664 = vextract.high.u32 %v662
      %v665 = vshrl.u32 %v664, 4
      %v666 = vmul.u32 %v665, 18
      %v667 = vsub.s32 %v661, %v666
      %v668 = vsub.s32 0, %v667
      %v669 = vsel %vm659, %v668, %v667
      %vm670 = vcmp.lt.s32.totalorder %v304, 0
      %v671 = vsub.s32 0, %v304
      %v672 = vsel %vm670, %v671, %v304
      %v673 = vmul.u32.u64.compose %v672, 3817748708
      %v674 = vextract.low.u32 %v673
      %v675 = vextract.high.u32 %v673
      %v676 = vshrl.u32 %v675, 4
      %v677 = vmul.u32 %v676, 18
      %v678 = vsub.s32 %v672, %v677
      %v679 = vsub.s32 0, %v678
      %v680 = vsel %vm670, %v679, %v678
      %vm681 = vcmp.lt.s32.totalorder %v305, 0
      %v682 = vsub.s32 0, %v305
      %v683 = vsel %vm681, %v682, %v305
      %v684 = vmul.u32.u64.compose %v683, 3817748708
      %v685 = vextract.low.u32 %v684
      %v686 = vextract.high.u32 %v684
      %v687 = vshrl.u32 %v686, 4
      %v688 = vmul.u32 %v687, 18
      %v689 = vsub.s32 %v683, %v688
      %v690 = vsub.s32 0, %v689
      %v691 = vsel %vm681, %v690, %v689
      %vm692 = vcmp.lt.s32.totalorder %v306, 0
      %v693 = vsub.s32 0, %v306
      %v694 = vsel %vm692, %v693, %v306
      %v695 = vmul.u32.u64.compose %v694, 3817748708
      %v696 = vextract.low.u32 %v695
      %v697 = vextract.high.u32 %v695
      %v698 = vshrl.u32 %v697, 4
      %v699 = vmul.u32 %v698, 18
      %v700 = vsub.s32 %v694, %v699
      %v701 = vsub.s32 0, %v700
      %v702 = vsel %vm692, %v701, %v700
      %vm703 = vcmp.ne.s32.totalorder %v317, 0
      %vm704 = vcmp.ne.s32.totalorder %v328, 0
      %vm705 = vcmp.ne.s32.totalorder %v339, 0
      %vm706 = vcmp.ne.s32.totalorder %v350, 0
      %vm707 = vcmp.ne.s32.totalorder %v361, 0
      %vm708 = vcmp.ne.s32.totalorder %v372, 0
      %vm709 = vcmp.ne.s32.totalorder %v383, 0
      %vm710 = vcmp.ne.s32.totalorder %v394, 0
      %vm711 = vcmp.ne.s32.totalorder %v405, 0
      %vm712 = vcmp.ne.s32.totalorder %v416, 0
      %vm713 = vcmp.ne.s32.totalorder %v427, 0
      %vm714 = vcmp.ne.s32.totalorder %v438, 0
      %vm715 = vcmp.ne.s32.totalorder %v449, 0
      %vm716 = vcmp.ne.s32.totalorder %v460, 0
      %vm717 = vcmp.ne.s32.totalorder %v471, 0
      %vm718 = vcmp.ne.s32.totalorder %v482, 0
      %vm719 = vcmp.ne.s32.totalorder %v493, 0
      %vm720 = vcmp.ne.s32.totalorder %v504, 0
      %vm721 = vcmp.ne.s32.totalorder %v515, 0
      %vm722 = vcmp.ne.s32.totalorder %v526, 0
      %vm723 = vcmp.ne.s32.totalorder %v537, 0
      %vm724 = vcmp.ne.s32.totalorder %v548, 0
      %vm725 = vcmp.ne.s32.totalorder %v559, 0
      %vm726 = vcmp.ne.s32.totalorder %v570, 0
      %vm727 = vcmp.ne.s32.totalorder %v581, 0
      %vm728 = vcmp.ne.s32.totalorder %v592, 0
      %vm729 = vcmp.ne.s32.totalorder %v603, 0
      %vm730 = vcmp.ne.s32.totalorder %v614, 0
      %vm731 = vcmp.ne.s32.totalorder %v625, 0
      %vm732 = vcmp.ne.s32.totalorder %v636, 0
      %vm733 = vcmp.ne.s32.totalorder %v647, 0
      %vm734 = vcmp.ne.s32.totalorder %v658, 0
      %vm735 = vcmp.ne.s32.totalorder %v669, 0
      %vm736 = vcmp.ne.s32.totalorder %v680, 0
      %vm737 = vcmp.ne.s32.totalorder %v691, 0
      %vm738 = vcmp.ne.s32.totalorder %v702, 0
      %vm739 = vcmp.lt.s32.totalorder %v317, 0
      %vm740 = vcmp.lt.s32.totalorder %v328, 0
      %vm741 = vcmp.lt.s32.totalorder %v339, 0
      %vm742 = vcmp.lt.s32.totalorder %v350, 0
      %vm743 = vcmp.lt.s32.totalorder %v361, 0
      %vm744 = vcmp.lt.s32.totalorder %v372, 0
      %vm745 = vcmp.lt.s32.totalorder %v383, 0
      %vm746 = vcmp.lt.s32.totalorder %v394, 0
      %vm747 = vcmp.lt.s32.totalorder %v405, 0
      %vm748 = vcmp.lt.s32.totalorder %v416, 0
      %vm749 = vcmp.lt.s32.totalorder %v427, 0
      %vm750 = vcmp.lt.s32.totalorder %v438, 0
      %vm751 = vcmp.lt.s32.totalorder %v449, 0
      %vm752 = vcmp.lt.s32.totalorder %v460, 0
      %vm753 = vcmp.lt.s32.totalorder %v471, 0
      %vm754 = vcmp.lt.s32.totalorder %v482, 0
      %vm755 = vcmp.lt.s32.totalorder %v493, 0
      %vm756 = vcmp.lt.s32.totalorder %v504, 0
      %vm757 = vcmp.lt.s32.totalorder %v515, 0
      %vm758 = vcmp.lt.s32.totalorder %v526, 0
      %vm759 = vcmp.lt.s32.totalorder %v537, 0
      %vm760 = vcmp.lt.s32.totalorder %v548, 0
      %vm761 = vcmp.lt.s32.totalorder %v559, 0
      %vm762 = vcmp.lt.s32.totalorder %v570, 0
      %vm763 = vcmp.lt.s32.totalorder %v581, 0
      %vm764 = vcmp.lt.s32.totalorder %v592, 0
      %vm765 = vcmp.lt.s32.totalorder %v603, 0
      %vm766 = vcmp.lt.s32.totalorder %v614, 0
      %vm767 = vcmp.lt.s32.totalorder %v625, 0
      %vm768 = vcmp.lt.s32.totalorder %v636, 0
      %vm769 = vcmp.lt.s32.totalorder %v647, 0
      %vm770 = vcmp.lt.s32.totalorder %v658, 0
      %vm771 = vcmp.lt.s32.totalorder %v669, 0
      %vm772 = vcmp.lt.s32.totalorder %v680, 0
      %vm773 = vcmp.lt.s32.totalorder %v691, 0
      %vm774 = vcmp.lt.s32.totalorder %v702, 0
      %vm775 = vmand %vm739, %vm703
      %vm776 = vmand %vm740, %vm704
      %vm777 = vmand %vm741, %vm705
      %vm778 = vmand %vm742, %vm706
      %vm779 = vmand %vm743, %vm707
      %vm780 = vmand %vm744, %vm708
      %vm781 = vmand %vm745, %vm709
      %vm782 = vmand %vm746, %vm710
      %vm783 = vmand %vm747, %vm711
      %vm784 = vmand %vm748, %vm712
      %vm785 = vmand %vm749, %vm713
      %vm786 = vmand %vm750, %vm714
      %vm787 = vmand %vm751, %vm715
      %vm788 = vmand %vm752, %vm716
      %vm789 = vmand %vm753, %vm717
      %vm790 = vmand %vm754, %vm718
      %vm791 = vmand %vm755, %vm719
      %vm792 = vmand %vm756, %vm720
      %vm793 = vmand %vm757, %vm721
      %vm794 = vmand %vm758, %vm722
      %vm795 = vmand %vm759, %vm723
      %vm796 = vmand %vm760, %vm724
      %vm797 = vmand %vm761, %vm725
      %vm798 = vmand %vm762, %vm726
      %vm799 = vmand %vm763, %vm727
      %vm800 = vmand %vm764, %vm728
      %vm801 = vmand %vm765, %vm729
      %vm802 = vmand %vm766, %vm730
      %vm803 = vmand %vm767, %vm731
      %vm804 = vmand %vm768, %vm732
      %vm805 = vmand %vm769, %vm733
      %vm806 = vmand %vm770, %vm734
      %vm807 = vmand %vm771, %vm735
      %vm808 = vmand %vm772, %vm736
      %vm809 = vmand %vm773, %vm737
      %vm810 = vmand %vm774, %vm738
      %v811 = vadd.s32 %v317, 18
      %v812 = vadd.s32 %v328, 18
      %v813 = vadd.s32 %v339, 18
      %v814 = vadd.s32 %v350, 18
      %v815 = vadd.s32 %v361, 18
      %v816 = vadd.s32 %v372, 18
      %v817 = vadd.s32 %v383, 18
      %v818 = vadd.s32 %v394, 18
      %v819 = vadd.s32 %v405, 18
      %v820 = vadd.s32 %v416, 18
      %v821 = vadd.s32 %v427, 18
      %v822 = vadd.s32 %v438, 18
      %v823 = vadd.s32 %v449, 18
      %v824 = vadd.s32 %v460, 18
      %v825 = vadd.s32 %v471, 18
      %v826 = vadd.s32 %v482, 18
      %v827 = vadd.s32 %v493, 18
      %v828 = vadd.s32 %v504, 18
      %v829 = vadd.s32 %v515, 18
      %v830 = vadd.s32 %v526, 18
      %v831 = vadd.s32 %v537, 18
      %v832 = vadd.s32 %v548, 18
      %v833 = vadd.s32 %v559, 18
      %v834 = vadd.s32 %v570, 18
      %v835 = vadd.s32 %v581, 18
      %v836 = vadd.s32 %v592, 18
      %v837 = vadd.s32 %v603, 18
      %v838 = vadd.s32 %v614, 18
      %v839 = vadd.s32 %v625, 18
      %v840 = vadd.s32 %v636, 18
      %v841 = vadd.s32 %v647, 18
      %v842 = vadd.s32 %v658, 18
      %v843 = vadd.s32 %v669, 18
      %v844 = vadd.s32 %v680, 18
      %v845 = vadd.s32 %v691, 18
      %v846 = vadd.s32 %v702, 18
      %v847 = vsel %vm775, %v811, %v317
      %v848 = vsel %vm776, %v812, %v328
      %v849 = vsel %vm777, %v813, %v339
      %v850 = vsel %vm778, %v814, %v350
      %v851 = vsel %vm779, %v815, %v361
      %v852 = vsel %vm780, %v816, %v372
      %v853 = vsel %vm781, %v817, %v383
      %v854 = vsel %vm782, %v818, %v394
      %v855 = vsel %vm783, %v819, %v405
      %v856 = vsel %vm784, %v820, %v416
      %v857 = vsel %vm785, %v821, %v427
      %v858 = vsel %vm786, %v822, %v438
      %v859 = vsel %vm787, %v823, %v449
      %v860 = vsel %vm788, %v824, %v460
      %v861 = vsel %vm789, %v825, %v471
      %v862 = vsel %vm790, %v826, %v482
      %v863 = vsel %vm791, %v827, %v493
      %v864 = vsel %vm792, %v828, %v504
      %v865 = vsel %vm793, %v829, %v515
      %v866 = vsel %vm794, %v830, %v526
      %v867 = vsel %vm795, %v831, %v537
      %v868 = vsel %vm796, %v832, %v548
      %v869 = vsel %vm797, %v833, %v559
      %v870 = vsel %vm798, %v834, %v570
      %v871 = vsel %vm799, %v835, %v581
      %v872 = vsel %vm800, %v836, %v592
      %v873 = vsel %vm801, %v837, %v603
      %v874 = vsel %vm802, %v838, %v614
      %v875 = vsel %vm803, %v839, %v625
      %v876 = vsel %vm804, %v840, %v636
      %v877 = vsel %vm805, %v841, %v647
      %v878 = vsel %vm806, %v842, %v658
      %v879 = vsel %vm807, %v843, %v669
      %v880 = vsel %vm808, %v844, %v680
      %v881 = vsel %vm809, %v845, %v691
      %v882 = vsel %vm810, %v846, %v702
      %vm883 = vcmp.lt.s32.totalorder %v847, 16
      %vm884 = vcmp.lt.s32.totalorder %v848, 16
      %vm885 = vcmp.lt.s32.totalorder %v849, 16
      %vm886 = vcmp.lt.s32.totalorder %v850, 16
      %vm887 = vcmp.lt.s32.totalorder %v851, 16
      %vm888 = vcmp.lt.s32.totalorder %v852, 16
      %vm889 = vcmp.lt.s32.totalorder %v853, 16
      %vm890 = vcmp.lt.s32.totalorder %v854, 16
      %vm891 = vcmp.lt.s32.totalorder %v855, 16
      %vm892 = vcmp.lt.s32.totalorder %v856, 16
      %vm893 = vcmp.lt.s32.totalorder %v857, 16
      %vm894 = vcmp.lt.s32.totalorder %v858, 16
      %vm895 = vcmp.lt.s32.totalorder %v859, 16
      %vm896 = vcmp.lt.s32.totalorder %v860, 16
      %vm897 = vcmp.lt.s32.totalorder %v861, 16
      %vm898 = vcmp.lt.s32.totalorder %v862, 16
      %vm899 = vcmp.lt.s32.totalorder %v863, 16
      %vm900 = vcmp.lt.s32.totalorder %v864, 16
      %vm901 = vcmp.lt.s32.totalorder %v865, 16
      %vm902 = vcmp.lt.s32.totalorder %v866, 16
      %vm903 = vcmp.lt.s32.totalorder %v867, 16
      %vm904 = vcmp.lt.s32.totalorder %v868, 16
      %vm905 = vcmp.lt.s32.totalorder %v869, 16
      %vm906 = vcmp.lt.s32.totalorder %v870, 16
      %vm907 = vcmp.lt.s32.totalorder %v871, 16
      %vm908 = vcmp.lt.s32.totalorder %v872, 16
      %vm909 = vcmp.lt.s32.totalorder %v873, 16
      %vm910 = vcmp.lt.s32.totalorder %v874, 16
      %vm911 = vcmp.lt.s32.totalorder %v875, 16
      %vm912 = vcmp.lt.s32.totalorder %v876, 16
      %vm913 = vcmp.lt.s32.totalorder %v877, 16
      %vm914 = vcmp.lt.s32.totalorder %v878, 16
      %vm915 = vcmp.lt.s32.totalorder %v879, 16
      %vm916 = vcmp.lt.s32.totalorder %v880, 16
      %vm917 = vcmp.lt.s32.totalorder %v881, 16
      %vm918 = vcmp.lt.s32.totalorder %v882, 16
      %v919 = vadd.s32 %v271, 288
      %v920 = vadd.s32 %v271, 296
      %v921 = vadd.s32 %v271, 304
      %v922 = vadd.s32 %v271, 312
      %v923 = vadd.s32 %v271, 320
      %vm924 = vcmp.lt.s32.totalorder %v919, 0
      %v925 = vsub.s32 0, %v919
      %v926 = vsel %vm924, %v925, %v919
      %v927 = vmul.u32.u64.compose %v926, 3817748708
      %v928 = vextract.low.u32 %v927
      %v929 = vextract.high.u32 %v927
      %v930 = vshrl.u32 %v929, 4
      %v931 = vmul.u32 %v930, 18
      %v932 = vsub.s32 %v926, %v931
      %v933 = vsub.s32 0, %v932
      %v934 = vsel %vm924, %v933, %v932
      %vm935 = vcmp.lt.s32.totalorder %v920, 0
      %v936 = vsub.s32 0, %v920
      %v937 = vsel %vm935, %v936, %v920
      %v938 = vmul.u32.u64.compose %v937, 3817748708
      %v939 = vextract.low.u32 %v938
      %v940 = vextract.high.u32 %v938
      %v941 = vshrl.u32 %v940, 4
      %v942 = vmul.u32 %v941, 18
      %v943 = vsub.s32 %v937, %v942
      %v944 = vsub.s32 0, %v943
      %v945 = vsel %vm935, %v944, %v943
      %vm946 = vcmp.lt.s32.totalorder %v921, 0
      %v947 = vsub.s32 0, %v921
      %v948 = vsel %vm946, %v947, %v921
      %v949 = vmul.u32.u64.compose %v948, 3817748708
      %v950 = vextract.low.u32 %v949
      %v951 = vextract.high.u32 %v949
      %v952 = vshrl.u32 %v951, 4
      %v953 = vmul.u32 %v952, 18
      %v954 = vsub.s32 %v948, %v953
      %v955 = vsub.s32 0, %v954
      %v956 = vsel %vm946, %v955, %v954
      %vm957 = vcmp.lt.s32.totalorder %v922, 0
      %v958 = vsub.s32 0, %v922
      %v959 = vsel %vm957, %v958, %v922
      %v960 = vmul.u32.u64.compose %v959, 3817748708
      %v961 = vextract.low.u32 %v960
      %v962 = vextract.high.u32 %v960
      %v963 = vshrl.u32 %v962, 4
      %v964 = vmul.u32 %v963, 18
      %v965 = vsub.s32 %v959, %v964
      %v966 = vsub.s32 0, %v965
      %v967 = vsel %vm957, %v966, %v965
      %vm968 = vcmp.lt.s32.totalorder %v923, 0
      %v969 = vsub.s32 0, %v923
      %v970 = vsel %vm968, %v969, %v923
      %v971 = vmul.u32.u64.compose %v970, 3817748708
      %v972 = vextract.low.u32 %v971
      %v973 = vextract.high.u32 %v971
      %v974 = vshrl.u32 %v973, 4
      %v975 = vmul.u32 %v974, 18
      %v976 = vsub.s32 %v970, %v975
      %v977 = vsub.s32 0, %v976
      %v978 = vsel %vm968, %v977, %v976
      %vm979 = vcmp.ne.s32.totalorder %v934, 0
      %vm980 = vcmp.ne.s32.totalorder %v945, 0
      %vm981 = vcmp.ne.s32.totalorder %v956, 0
      %vm982 = vcmp.ne.s32.totalorder %v967, 0
      %vm983 = vcmp.ne.s32.totalorder %v978, 0
      %vm984 = vcmp.lt.s32.totalorder %v934, 0
      %vm985 = vcmp.lt.s32.totalorder %v945, 0
      %vm986 = vcmp.lt.s32.totalorder %v956, 0
      %vm987 = vcmp.lt.s32.totalorder %v967, 0
      %vm988 = vcmp.lt.s32.totalorder %v978, 0
      %vm989 = vmand %vm984, %vm979
      %vm990 = vmand %vm985, %vm980
      %vm991 = vmand %vm986, %vm981
      %vm992 = vmand %vm987, %vm982
      %vm993 = vmand %vm988, %vm983
      %v994 = vadd.s32 %v934, 18
      %v995 = vadd.s32 %v945, 18
      %v996 = vadd.s32 %v956, 18
      %v997 = vadd.s32 %v967, 18
      %v998 = vadd.s32 %v978, 18
      %v999 = vsel %vm989, %v994, %v934
      %v1000 = vsel %vm990, %v995, %v945
      %v1001 = vsel %vm991, %v996, %v956
      %v1002 = vsel %vm992, %v997, %v967
      %v1003 = vsel %vm993, %v998, %v978
      %vm1004 = vcmp.ge.s32.totalorder %v271, 18
      %vm1005 = vcmp.ge.s32.totalorder %v272, 18
      %vm1006 = vcmp.ge.s32.totalorder %v273, 18
      %vm1007 = vcmp.ge.s32.totalorder %v274, 18
      %vm1008 = vcmp.ge.s32.totalorder %v275, 18
      %vm1009 = vcmp.ge.s32.totalorder %v276, 18
      %vm1010 = vcmp.ge.s32.totalorder %v277, 18
      %vm1011 = vcmp.ge.s32.totalorder %v278, 18
      %vm1012 = vcmp.ge.s32.totalorder %v279, 18
      %vm1013 = vcmp.ge.s32.totalorder %v280, 18
      %vm1014 = vcmp.ge.s32.totalorder %v281, 18
      %vm1015 = vcmp.ge.s32.totalorder %v282, 18
      %vm1016 = vcmp.ge.s32.totalorder %v283, 18
      %vm1017 = vcmp.ge.s32.totalorder %v284, 18
      %vm1018 = vcmp.ge.s32.totalorder %v285, 18
      %vm1019 = vcmp.ge.s32.totalorder %v286, 18
      %vm1020 = vcmp.ge.s32.totalorder %v287, 18
      %vm1021 = vcmp.ge.s32.totalorder %v288, 18
      %vm1022 = vcmp.ge.s32.totalorder %v289, 18
      %vm1023 = vcmp.ge.s32.totalorder %v290, 18
      %vm1024 = vcmp.ge.s32.totalorder %v291, 18
      %vm1025 = vcmp.ge.s32.totalorder %v292, 18
      %vm1026 = vcmp.ge.s32.totalorder %v293, 18
      %vm1027 = vcmp.ge.s32.totalorder %v294, 18
      %vm1028 = vcmp.ge.s32.totalorder %v295, 18
      %vm1029 = vcmp.ge.s32.totalorder %v296, 18
      %vm1030 = vcmp.ge.s32.totalorder %v297, 18
      %vm1031 = vcmp.ge.s32.totalorder %v298, 18
      %vm1032 = vcmp.ge.s32.totalorder %v299, 18
      %vm1033 = vcmp.ge.s32.totalorder %v300, 18
      %vm1034 = vcmp.ge.s32.totalorder %v301, 18
      %vm1035 = vcmp.ge.s32.totalorder %v302, 18
      %vm1036 = vcmp.ge.s32.totalorder %v303, 18
      %vm1037 = vcmp.ge.s32.totalorder %v304, 18
      %vm1038 = vcmp.ge.s32.totalorder %v305, 18
      %vm1039 = vcmp.ge.s32.totalorder %v306, 18
      %vm1040 = vcmp.ge.s32.totalorder %v919, 18
      %vm1041 = vcmp.ge.s32.totalorder %v920, 18
      %vm1042 = vcmp.ge.s32.totalorder %v921, 18
      %vm1043 = vcmp.ge.s32.totalorder %v922, 18
      %vm1044 = vcmp.ge.s32.totalorder %v923, 18
      %vm1045 = vcmp.lt.s32.totalorder %v271, 306
      %vm1046 = vcmp.lt.s32.totalorder %v272, 306
      %vm1047 = vcmp.lt.s32.totalorder %v273, 306
      %vm1048 = vcmp.lt.s32.totalorder %v274, 306
      %vm1049 = vcmp.lt.s32.totalorder %v275, 306
      %vm1050 = vcmp.lt.s32.totalorder %v276, 306
      %vm1051 = vcmp.lt.s32.totalorder %v277, 306
      %vm1052 = vcmp.lt.s32.totalorder %v278, 306
      %vm1053 = vcmp.lt.s32.totalorder %v279, 306
      %vm1054 = vcmp.lt.s32.totalorder %v280, 306
      %vm1055 = vcmp.lt.s32.totalorder %v281, 306
      %vm1056 = vcmp.lt.s32.totalorder %v282, 306
      %vm1057 = vcmp.lt.s32.totalorder %v283, 306
      %vm1058 = vcmp.lt.s32.totalorder %v284, 306
      %vm1059 = vcmp.lt.s32.totalorder %v285, 306
      %vm1060 = vcmp.lt.s32.totalorder %v286, 306
      %vm1061 = vcmp.lt.s32.totalorder %v287, 306
      %vm1062 = vcmp.lt.s32.totalorder %v288, 306
      %vm1063 = vcmp.lt.s32.totalorder %v289, 306
      %vm1064 = vcmp.lt.s32.totalorder %v290, 306
      %vm1065 = vcmp.lt.s32.totalorder %v291, 306
      %vm1066 = vcmp.lt.s32.totalorder %v292, 306
      %vm1067 = vcmp.lt.s32.totalorder %v293, 306
      %vm1068 = vcmp.lt.s32.totalorder %v294, 306
      %vm1069 = vcmp.lt.s32.totalorder %v295, 306
      %vm1070 = vcmp.lt.s32.totalorder %v296, 306
      %vm1071 = vcmp.lt.s32.totalorder %v297, 306
      %vm1072 = vcmp.lt.s32.totalorder %v298, 306
      %vm1073 = vcmp.lt.s32.totalorder %v299, 306
      %vm1074 = vcmp.lt.s32.totalorder %v300, 306
      %vm1075 = vcmp.lt.s32.totalorder %v301, 306
      %vm1076 = vcmp.lt.s32.totalorder %v302, 306
      %vm1077 = vcmp.lt.s32.totalorder %v303, 306
      %vm1078 = vcmp.lt.s32.totalorder %v304, 306
      %vm1079 = vcmp.lt.s32.totalorder %v305, 306
      %vm1080 = vcmp.lt.s32.totalorder %v306, 306
      %vm1081 = vcmp.lt.s32.totalorder %v919, 306
      %vm1082 = vcmp.lt.s32.totalorder %v920, 306
      %vm1083 = vcmp.lt.s32.totalorder %v921, 306
      %vm1084 = vcmp.lt.s32.totalorder %v922, 306
      %vm1085 = vcmp.lt.s32.totalorder %v923, 306
      %vm1086 = vmand %vm1004, %vm1045
      %vm1087 = vmand %vm1005, %vm1046
      %vm1088 = vmand %vm1006, %vm1047
      %vm1089 = vmand %vm1007, %vm1048
      %vm1090 = vmand %vm1008, %vm1049
      %vm1091 = vmand %vm1009, %vm1050
      %vm1092 = vmand %vm1010, %vm1051
      %vm1093 = vmand %vm1011, %vm1052
      %vm1094 = vmand %vm1012, %vm1053
      %vm1095 = vmand %vm1013, %vm1054
      %vm1096 = vmand %vm1014, %vm1055
      %vm1097 = vmand %vm1015, %vm1056
      %vm1098 = vmand %vm1016, %vm1057
      %vm1099 = vmand %vm1017, %vm1058
      %vm1100 = vmand %vm1018, %vm1059
      %vm1101 = vmand %vm1019, %vm1060
      %vm1102 = vmand %vm1020, %vm1061
      %vm1103 = vmand %vm1021, %vm1062
      %vm1104 = vmand %vm1022, %vm1063
      %vm1105 = vmand %vm1023, %vm1064
      %vm1106 = vmand %vm1024, %vm1065
      %vm1107 = vmand %vm1025, %vm1066
      %vm1108 = vmand %vm1026, %vm1067
      %vm1109 = vmand %vm1027, %vm1068
      %vm1110 = vmand %vm1028, %vm1069
      %vm1111 = vmand %vm1029, %vm1070
      %vm1112 = vmand %vm1030, %vm1071
      %vm1113 = vmand %vm1031, %vm1072
      %vm1114 = vmand %vm1032, %vm1073
      %vm1115 = vmand %vm1033, %vm1074
      %vm1116 = vmand %vm1034, %vm1075
      %vm1117 = vmand %vm1035, %vm1076
      %vm1118 = vmand %vm1036, %vm1077
      %vm1119 = vmand %vm1037, %vm1078
      %vm1120 = vmand %vm1038, %vm1079
      %vm1121 = vmand %vm1039, %vm1080
      %vm1122 = vmand %vm1040, %vm1081
      %vm1123 = vmand %vm1041, %vm1082
      %vm1124 = vmand %vm1042, %vm1083
      %vm1125 = vmand %vm1043, %vm1084
      %vm1126 = vmand %vm1044, %vm1085
      %vm1127 = vcmp.ge.s32.totalorder %v847, 1
      %vm1128 = vcmp.ge.s32.totalorder %v848, 1
      %vm1129 = vcmp.ge.s32.totalorder %v849, 1
      %vm1130 = vcmp.ge.s32.totalorder %v850, 1
      %vm1131 = vcmp.ge.s32.totalorder %v851, 1
      %vm1132 = vcmp.ge.s32.totalorder %v852, 1
      %vm1133 = vcmp.ge.s32.totalorder %v853, 1
      %vm1134 = vcmp.ge.s32.totalorder %v854, 1
      %vm1135 = vcmp.ge.s32.totalorder %v855, 1
      %vm1136 = vcmp.ge.s32.totalorder %v856, 1
      %vm1137 = vcmp.ge.s32.totalorder %v857, 1
      %vm1138 = vcmp.ge.s32.totalorder %v858, 1
      %vm1139 = vcmp.ge.s32.totalorder %v859, 1
      %vm1140 = vcmp.ge.s32.totalorder %v860, 1
      %vm1141 = vcmp.ge.s32.totalorder %v861, 1
      %vm1142 = vcmp.ge.s32.totalorder %v862, 1
      %vm1143 = vcmp.ge.s32.totalorder %v863, 1
      %vm1144 = vcmp.ge.s32.totalorder %v864, 1
      %vm1145 = vcmp.ge.s32.totalorder %v865, 1
      %vm1146 = vcmp.ge.s32.totalorder %v866, 1
      %vm1147 = vcmp.ge.s32.totalorder %v867, 1
      %vm1148 = vcmp.ge.s32.totalorder %v868, 1
      %vm1149 = vcmp.ge.s32.totalorder %v869, 1
      %vm1150 = vcmp.ge.s32.totalorder %v870, 1
      %vm1151 = vcmp.ge.s32.totalorder %v871, 1
      %vm1152 = vcmp.ge.s32.totalorder %v872, 1
      %vm1153 = vcmp.ge.s32.totalorder %v873, 1
      %vm1154 = vcmp.ge.s32.totalorder %v874, 1
      %vm1155 = vcmp.ge.s32.totalorder %v875, 1
      %vm1156 = vcmp.ge.s32.totalorder %v876, 1
      %vm1157 = vcmp.ge.s32.totalorder %v877, 1
      %vm1158 = vcmp.ge.s32.totalorder %v878, 1
      %vm1159 = vcmp.ge.s32.totalorder %v879, 1
      %vm1160 = vcmp.ge.s32.totalorder %v880, 1
      %vm1161 = vcmp.ge.s32.totalorder %v881, 1
      %vm1162 = vcmp.ge.s32.totalorder %v882, 1
      %vm1163 = vcmp.ge.s32.totalorder %v999, 1
      %vm1164 = vcmp.ge.s32.totalorder %v1000, 1
      %vm1165 = vcmp.ge.s32.totalorder %v1001, 1
      %vm1166 = vcmp.ge.s32.totalorder %v1002, 1
      %vm1167 = vcmp.ge.s32.totalorder %v1003, 1
      %vm1168 = vmand %vm1086, %vm1127
      %vm1169 = vmand %vm1087, %vm1128
      %vm1170 = vmand %vm1088, %vm1129
      %vm1171 = vmand %vm1089, %vm1130
      %vm1172 = vmand %vm1090, %vm1131
      %vm1173 = vmand %vm1091, %vm1132
      %vm1174 = vmand %vm1092, %vm1133
      %vm1175 = vmand %vm1093, %vm1134
      %vm1176 = vmand %vm1094, %vm1135
      %vm1177 = vmand %vm1095, %vm1136
      %vm1178 = vmand %vm1096, %vm1137
      %vm1179 = vmand %vm1097, %vm1138
      %vm1180 = vmand %vm1098, %vm1139
      %vm1181 = vmand %vm1099, %vm1140
      %vm1182 = vmand %vm1100, %vm1141
      %vm1183 = vmand %vm1101, %vm1142
      %vm1184 = vmand %vm1102, %vm1143
      %vm1185 = vmand %vm1103, %vm1144
      %vm1186 = vmand %vm1104, %vm1145
      %vm1187 = vmand %vm1105, %vm1146
      %vm1188 = vmand %vm1106, %vm1147
      %vm1189 = vmand %vm1107, %vm1148
      %vm1190 = vmand %vm1108, %vm1149
      %vm1191 = vmand %vm1109, %vm1150
      %vm1192 = vmand %vm1110, %vm1151
      %vm1193 = vmand %vm1111, %vm1152
      %vm1194 = vmand %vm1112, %vm1153
      %vm1195 = vmand %vm1113, %vm1154
      %vm1196 = vmand %vm1114, %vm1155
      %vm1197 = vmand %vm1115, %vm1156
      %vm1198 = vmand %vm1116, %vm1157
      %vm1199 = vmand %vm1117, %vm1158
      %vm1200 = vmand %vm1118, %vm1159
      %vm1201 = vmand %vm1119, %vm1160
      %vm1202 = vmand %vm1120, %vm1161
      %vm1203 = vmand %vm1121, %vm1162
      %vm1204 = vmand %vm1122, %vm1163
      %vm1205 = vmand %vm1123, %vm1164
      %vm1206 = vmand %vm1124, %vm1165
      %vm1207 = vmand %vm1125, %vm1166
      %vm1208 = vmand %vm1126, %vm1167
      %vm1209 = vcmp.le.s32.totalorder %v847, 16
      %vm1210 = vcmp.le.s32.totalorder %v848, 16
      %vm1211 = vcmp.le.s32.totalorder %v849, 16
      %vm1212 = vcmp.le.s32.totalorder %v850, 16
      %vm1213 = vcmp.le.s32.totalorder %v851, 16
      %vm1214 = vcmp.le.s32.totalorder %v852, 16
      %vm1215 = vcmp.le.s32.totalorder %v853, 16
      %vm1216 = vcmp.le.s32.totalorder %v854, 16
      %vm1217 = vcmp.le.s32.totalorder %v855, 16
      %vm1218 = vcmp.le.s32.totalorder %v856, 16
      %vm1219 = vcmp.le.s32.totalorder %v857, 16
      %vm1220 = vcmp.le.s32.totalorder %v858, 16
      %vm1221 = vcmp.le.s32.totalorder %v859, 16
      %vm1222 = vcmp.le.s32.totalorder %v860, 16
      %vm1223 = vcmp.le.s32.totalorder %v861, 16
      %vm1224 = vcmp.le.s32.totalorder %v862, 16
      %vm1225 = vcmp.le.s32.totalorder %v863, 16
      %vm1226 = vcmp.le.s32.totalorder %v864, 16
      %vm1227 = vcmp.le.s32.totalorder %v865, 16
      %vm1228 = vcmp.le.s32.totalorder %v866, 16
      %vm1229 = vcmp.le.s32.totalorder %v867, 16
      %vm1230 = vcmp.le.s32.totalorder %v868, 16
      %vm1231 = vcmp.le.s32.totalorder %v869, 16
      %vm1232 = vcmp.le.s32.totalorder %v870, 16
      %vm1233 = vcmp.le.s32.totalorder %v871, 16
      %vm1234 = vcmp.le.s32.totalorder %v872, 16
      %vm1235 = vcmp.le.s32.totalorder %v873, 16
      %vm1236 = vcmp.le.s32.totalorder %v874, 16
      %vm1237 = vcmp.le.s32.totalorder %v875, 16
      %vm1238 = vcmp.le.s32.totalorder %v876, 16
      %vm1239 = vcmp.le.s32.totalorder %v877, 16
      %vm1240 = vcmp.le.s32.totalorder %v878, 16
      %vm1241 = vcmp.le.s32.totalorder %v879, 16
      %vm1242 = vcmp.le.s32.totalorder %v880, 16
      %vm1243 = vcmp.le.s32.totalorder %v881, 16
      %vm1244 = vcmp.le.s32.totalorder %v882, 16
      %vm1245 = vcmp.le.s32.totalorder %v999, 16
      %vm1246 = vcmp.le.s32.totalorder %v1000, 16
      %vm1247 = vcmp.le.s32.totalorder %v1001, 16
      %vm1248 = vcmp.le.s32.totalorder %v1002, 16
      %vm1249 = vcmp.le.s32.totalorder %v1003, 16
      %vm1250 = vmand %vm1168, %vm1209
      %vm1251 = vmand %vm1169, %vm1210
      %vm1252 = vmand %vm1170, %vm1211
      %vm1253 = vmand %vm1171, %vm1212
      %vm1254 = vmand %vm1172, %vm1213
      %vm1255 = vmand %vm1173, %vm1214
      %vm1256 = vmand %vm1174, %vm1215
      %vm1257 = vmand %vm1175, %vm1216
      %vm1258 = vmand %vm1176, %vm1217
      %vm1259 = vmand %vm1177, %vm1218
      %vm1260 = vmand %vm1178, %vm1219
      %vm1261 = vmand %vm1179, %vm1220
      %vm1262 = vmand %vm1180, %vm1221
      %vm1263 = vmand %vm1181, %vm1222
      %vm1264 = vmand %vm1182, %vm1223
      %vm1265 = vmand %vm1183, %vm1224
      %vm1266 = vmand %vm1184, %vm1225
      %vm1267 = vmand %vm1185, %vm1226
      %vm1268 = vmand %vm1186, %vm1227
      %vm1269 = vmand %vm1187, %vm1228
      %vm1270 = vmand %vm1188, %vm1229
      %vm1271 = vmand %vm1189, %vm1230
      %vm1272 = vmand %vm1190, %vm1231
      %vm1273 = vmand %vm1191, %vm1232
      %vm1274 = vmand %vm1192, %vm1233
      %vm1275 = vmand %vm1193, %vm1234
      %vm1276 = vmand %vm1194, %vm1235
      %vm1277 = vmand %vm1195, %vm1236
      %vm1278 = vmand %vm1196, %vm1237
      %vm1279 = vmand %vm1197, %vm1238
      %vm1280 = vmand %vm1198, %vm1239
      %vm1281 = vmand %vm1199, %vm1240
      %vm1282 = vmand %vm1200, %vm1241
      %vm1283 = vmand %vm1201, %vm1242
      %vm1284 = vmand %vm1202, %vm1243
      %vm1285 = vmand %vm1203, %vm1244
      %vm1286 = vmand %vm1204, %vm1245
      %vm1287 = vmand %vm1205, %vm1246
      %vm1288 = vmand %vm1206, %vm1247
      %vm1289 = vmand %vm1207, %vm1248
      %vm1290 = vmand %vm1208, %vm1249
      %v1291 = vld [vmem:[%s1] sm:$0x1]
      %v1292 = vld [vmem:[%s2] sm:$0x1]
      %v1293 = vld [vmem:[%s257] sm:$0xf]
      %v1294 = vld [vmem:[%s257 + $0x4] sm:$0xf]
      %v1295 = vld [vmem:[%s257 + $0x8] sm:$0xf]
      %v1296 = vld [vmem:[%s257 + $0xc] sm:$0xf]
      %v1297 = vld [vmem:[%s257 + $0x10] sm:$0xf]
      %v1298 = vld [vmem:[%s257 + $0x14] sm:$0xf]
      %v1299 = vld [vmem:[%s257 + $0x18] sm:$0xf]
      %v1300 = vld [vmem:[%s257 + $0x1c] sm:$0xf]
      %v1301 = vld [vmem:[%s257 + $0x20] sm:$0xf]
      %v1302 = vld [vmem:[%s257 + $0x24] sm:$0xf]
      %v1303 = vld [vmem:[%s257 + $0x28] sm:$0xf]
      %v1304 = vld [vmem:[%s257 + $0x2c] sm:$0xf]
      %v1305 = vld [vmem:[%s257 + $0x30] sm:$0xf]
      %v1306 = vld [vmem:[%s257 + $0x34] sm:$0xf]
      %v1307 = vld [vmem:[%s257 + $0x38] sm:$0xf]
      %v1308 = vld [vmem:[%s257 + $0x3c] sm:$0xf]
      %v1309 = vld [vmem:[%s257 + $0x40] sm:$0xf]
      %v1310 = vld [vmem:[%s257 + $0x44] sm:$0xf]
      %v1311 = vld [vmem:[%s257 + $0x48] sm:$0xf]
      %v1312 = vld [vmem:[%s257 + $0x4c] sm:$0xf]
      %v1313 = vld [vmem:[%s257 + $0x50] sm:$0xf]
      %v1314 = vld [vmem:[%s257 + $0x54] sm:$0xf]
      %v1315 = vld [vmem:[%s257 + $0x58] sm:$0xf]
      %v1316 = vld [vmem:[%s257 + $0x5c] sm:$0xf]
      %v1317 = vld [vmem:[%s257 + $0x60] sm:$0xf]
      %v1318 = vld [vmem:[%s257 + $0x64] sm:$0xf]
      %v1319 = vld [vmem:[%s257 + $0x68] sm:$0xf]
      %v1320 = vld [vmem:[%s257 + $0x6c] sm:$0xf]
      %v1321 = vld [vmem:[%s257 + $0x70] sm:$0xf]
      %v1322 = vld [vmem:[%s257 + $0x74] sm:$0xf]
      %v1323 = vld [vmem:[%s257 + $0x78] sm:$0xf]
      %v1324 = vld [vmem:[%s257 + $0x7c] sm:$0xf]
      %v1325 = vld [vmem:[%s257 + $0x80] sm:$0xf]
      %v1326 = vld [vmem:[%s257 + $0x84] sm:$0xf]
      %v1327 = vld [vmem:[%s257 + $0x88] sm:$0xf]
      %v1328 = vld [vmem:[%s257 + $0x8c] sm:$0xf]
      %v1329 = vld [vmem:[%s257 + $0x90] sm:$0xf]
      %v1330 = vld [vmem:[%s257 + $0x94] sm:$0xf]
      %v1331 = vld [vmem:[%s257 + $0x98] sm:$0xf]
      %v1332 = vld [vmem:[%s257 + $0x9c] sm:$0xf]
      %v1333 = vld [vmem:[%s257 + $0xa0] sm:$0x7]
      %v1334 = vunpack.c.l.bf16 %v1293
      %v1335 = vunpack.c.l.bf16 %v1294
      %v1336 = vunpack.c.l.bf16 %v1295
      %v1337 = vunpack.c.l.bf16 %v1296
      %v1338 = vunpack.c.l.bf16 %v1297
      %v1339 = vunpack.c.l.bf16 %v1298
      %v1340 = vunpack.c.l.bf16 %v1299
      %v1341 = vunpack.c.l.bf16 %v1300
      %v1342 = vunpack.c.l.bf16 %v1301
      %v1343 = vunpack.c.l.bf16 %v1302
      %v1344 = vunpack.c.l.bf16 %v1303
      %v1345 = vunpack.c.l.bf16 %v1304
      %v1346 = vunpack.c.l.bf16 %v1305
      %v1347 = vunpack.c.l.bf16 %v1306
      %v1348 = vunpack.c.l.bf16 %v1307
      %v1349 = vunpack.c.l.bf16 %v1308
      %v1350 = vunpack.c.l.bf16 %v1309
      %v1351 = vunpack.c.l.bf16 %v1310
      %v1352 = vunpack.c.l.bf16 %v1311
      %v1353 = vunpack.c.l.bf16 %v1312
      %v1354 = vunpack.c.l.bf16 %v1313
      %v1355 = vunpack.c.l.bf16 %v1314
      %v1356 = vunpack.c.l.bf16 %v1315
      %v1357 = vunpack.c.l.bf16 %v1316
      %v1358 = vunpack.c.l.bf16 %v1317
      %v1359 = vunpack.c.l.bf16 %v1318
      %v1360 = vunpack.c.l.bf16 %v1319
      %v1361 = vunpack.c.l.bf16 %v1320
      %v1362 = vunpack.c.l.bf16 %v1321
      %v1363 = vunpack.c.l.bf16 %v1322
      %v1364 = vunpack.c.l.bf16 %v1323
      %v1365 = vunpack.c.l.bf16 %v1324
      %v1366 = vunpack.c.l.bf16 %v1325
      %v1367 = vunpack.c.l.bf16 %v1326
      %v1368 = vunpack.c.l.bf16 %v1327
      %v1369 = vunpack.c.l.bf16 %v1328
      %v1370 = vunpack.c.l.bf16 %v1329
      %v1371 = vunpack.c.l.bf16 %v1330
      %v1372 = vunpack.c.l.bf16 %v1331
      %v1373 = vunpack.c.l.bf16 %v1332
      %v1374 = vunpack.c.l.bf16 %v1333
      %v1376 = vlaneseq
      %v1377 = vshrl.u32 %v1376, 7
      %v1378 = vsub.s32 0, %v1377
      %v1379 = vrot.slane %v1291, %v1378
      %v1381 = vmul.f32 %v1334, %v1379
      %v1382 = vmul.f32 %v1335, %v1379
      %v1383 = vmul.f32 %v1336, %v1379
      %v1384 = vmul.f32 %v1337, %v1379
      %v1385 = vmul.f32 %v1338, %v1379
      %v1386 = vmul.f32 %v1339, %v1379
      %v1387 = vmul.f32 %v1340, %v1379
      %v1388 = vmul.f32 %v1341, %v1379
      %v1389 = vmul.f32 %v1342, %v1379
      %v1390 = vmul.f32 %v1343, %v1379
      %v1391 = vmul.f32 %v1344, %v1379
      %v1392 = vmul.f32 %v1345, %v1379
      %v1393 = vmul.f32 %v1346, %v1379
      %v1394 = vmul.f32 %v1347, %v1379
      %v1395 = vmul.f32 %v1348, %v1379
      %v1396 = vmul.f32 %v1349, %v1379
      %v1397 = vmul.f32 %v1350, %v1379
      %v1398 = vmul.f32 %v1351, %v1379
      %v1399 = vmul.f32 %v1352, %v1379
      %v1400 = vmul.f32 %v1353, %v1379
      %v1401 = vmul.f32 %v1354, %v1379
      %v1402 = vmul.f32 %v1355, %v1379
      %v1403 = vmul.f32 %v1356, %v1379
      %v1404 = vmul.f32 %v1357, %v1379
      %v1405 = vmul.f32 %v1358, %v1379
      %v1406 = vmul.f32 %v1359, %v1379
      %v1407 = vmul.f32 %v1360, %v1379
      %v1408 = vmul.f32 %v1361, %v1379
      %v1409 = vmul.f32 %v1362, %v1379
      %v1410 = vmul.f32 %v1363, %v1379
      %v1411 = vmul.f32 %v1364, %v1379
      %v1412 = vmul.f32 %v1365, %v1379
      %v1413 = vmul.f32 %v1366, %v1379
      %v1414 = vmul.f32 %v1367, %v1379
      %v1415 = vmul.f32 %v1368, %v1379
      %v1416 = vmul.f32 %v1369, %v1379
      %v1417 = vmul.f32 %v1370, %v1379
      %v1418 = vmul.f32 %v1371, %v1379
      %v1419 = vmul.f32 %v1372, %v1379
      %v1420 = vmul.f32 %v1373, %v1379
      %v1421 = vmul.f32 %v1374, %v1379
      %v1423 = vlaneseq
      %v1424 = vshrl.u32 %v1423, 7
      %v1425 = vsub.s32 0, %v1424
      %v1426 = vrot.slane %v1292, %v1425
      %v1428 = vadd.f32 %v1381, %v1426
      %v1429 = vadd.f32 %v1382, %v1426
      %v1430 = vadd.f32 %v1383, %v1426
      %v1431 = vadd.f32 %v1384, %v1426
      %v1432 = vadd.f32 %v1385, %v1426
      %v1433 = vadd.f32 %v1386, %v1426
      %v1434 = vadd.f32 %v1387, %v1426
      %v1435 = vadd.f32 %v1388, %v1426
      %v1436 = vadd.f32 %v1389, %v1426
      %v1437 = vadd.f32 %v1390, %v1426
      %v1438 = vadd.f32 %v1391, %v1426
      %v1439 = vadd.f32 %v1392, %v1426
      %v1440 = vadd.f32 %v1393, %v1426
      %v1441 = vadd.f32 %v1394, %v1426
      %v1442 = vadd.f32 %v1395, %v1426
      %v1443 = vadd.f32 %v1396, %v1426
      %v1444 = vadd.f32 %v1397, %v1426
      %v1445 = vadd.f32 %v1398, %v1426
      %v1446 = vadd.f32 %v1399, %v1426
      %v1447 = vadd.f32 %v1400, %v1426
      %v1448 = vadd.f32 %v1401, %v1426
      %v1449 = vadd.f32 %v1402, %v1426
      %v1450 = vadd.f32 %v1403, %v1426
      %v1451 = vadd.f32 %v1404, %v1426
      %v1452 = vadd.f32 %v1405, %v1426
      %v1453 = vadd.f32 %v1406, %v1426
      %v1454 = vadd.f32 %v1407, %v1426
      %v1455 = vadd.f32 %v1408, %v1426
      %v1456 = vadd.f32 %v1409, %v1426
      %v1457 = vadd.f32 %v1410, %v1426
      %v1458 = vadd.f32 %v1411, %v1426
      %v1459 = vadd.f32 %v1412, %v1426
      %v1460 = vadd.f32 %v1413, %v1426
      %v1461 = vadd.f32 %v1414, %v1426
      %v1462 = vadd.f32 %v1415, %v1426
      %v1463 = vadd.f32 %v1416, %v1426
      %v1464 = vadd.f32 %v1417, %v1426
      %v1465 = vadd.f32 %v1418, %v1426
      %v1466 = vadd.f32 %v1419, %v1426
      %v1467 = vadd.f32 %v1420, %v1426
      %v1468 = vadd.f32 %v1421, %v1426
      %v1469 = vmax.f32 %v1428, 0.0
      %v1470 = vmax.f32 %v1429, 0.0
      %v1471 = vmax.f32 %v1430, 0.0
      %v1472 = vmax.f32 %v1431, 0.0
      %v1473 = vmax.f32 %v1432, 0.0
      %v1474 = vmax.f32 %v1433, 0.0
      %v1475 = vmax.f32 %v1434, 0.0
      %v1476 = vmax.f32 %v1435, 0.0
      %v1477 = vmax.f32 %v1436, 0.0
      %v1478 = vmax.f32 %v1437, 0.0
      %v1479 = vmax.f32 %v1438, 0.0
      %v1480 = vmax.f32 %v1439, 0.0
      %v1481 = vmax.f32 %v1440, 0.0
      %v1482 = vmax.f32 %v1441, 0.0
      %v1483 = vmax.f32 %v1442, 0.0
      %v1484 = vmax.f32 %v1443, 0.0
      %v1485 = vmax.f32 %v1444, 0.0
      %v1486 = vmax.f32 %v1445, 0.0
      %v1487 = vmax.f32 %v1446, 0.0
      %v1488 = vmax.f32 %v1447, 0.0
      %v1489 = vmax.f32 %v1448, 0.0
      %v1490 = vmax.f32 %v1449, 0.0
      %v1491 = vmax.f32 %v1450, 0.0
      %v1492 = vmax.f32 %v1451, 0.0
      %v1493 = vmax.f32 %v1452, 0.0
      %v1494 = vmax.f32 %v1453, 0.0
      %v1495 = vmax.f32 %v1454, 0.0
      %v1496 = vmax.f32 %v1455, 0.0
      %v1497 = vmax.f32 %v1456, 0.0
      %v1498 = vmax.f32 %v1457, 0.0
      %v1499 = vmax.f32 %v1458, 0.0
      %v1500 = vmax.f32 %v1459, 0.0
      %v1501 = vmax.f32 %v1460, 0.0
      %v1502 = vmax.f32 %v1461, 0.0
      %v1503 = vmax.f32 %v1462, 0.0
      %v1504 = vmax.f32 %v1463, 0.0
      %v1505 = vmax.f32 %v1464, 0.0
      %v1506 = vmax.f32 %v1465, 0.0
      %v1507 = vmax.f32 %v1466, 0.0
      %v1508 = vmax.f32 %v1467, 0.0
      %v1509 = vmax.f32 %v1468, 0.0
      %v1510 = vsel %vm1250, 1, 0
      %v1511 = vsel %vm1251, 1, 0
      %v1512 = vsel %vm1252, 1, 0
      %v1513 = vsel %vm1253, 1, 0
      %v1514 = vsel %vm1254, 1, 0
      %v1515 = vsel %vm1255, 1, 0
      %v1516 = vsel %vm1256, 1, 0
      %v1517 = vsel %vm1257, 1, 0
      %v1518 = vsel %vm1258, 1, 0
      %v1519 = vsel %vm1259, 1, 0
      %v1520 = vsel %vm1260, 1, 0
      %v1521 = vsel %vm1261, 1, 0
      %v1522 = vsel %vm1262, 1, 0
      %v1523 = vsel %vm1263, 1, 0
      %v1524 = vsel %vm1264, 1, 0
      %v1525 = vsel %vm1265, 1, 0
      %v1526 = vsel %vm1266, 1, 0
      %v1527 = vsel %vm1267, 1, 0
      %v1528 = vsel %vm1268, 1, 0
      %v1529 = vsel %vm1269, 1, 0
      %v1530 = vsel %vm1270, 1, 0
      %v1531 = vsel %vm1271, 1, 0
      %v1532 = vsel %vm1272, 1, 0
      %v1533 = vsel %vm1273, 1, 0
      %v1534 = vsel %vm1274, 1, 0
      %v1535 = vsel %vm1275, 1, 0
      %v1536 = vsel %vm1276, 1, 0
      %v1537 = vsel %vm1277, 1, 0
      %v1538 = vsel %vm1278, 1, 0
      %v1539 = vsel %vm1279, 1, 0
      %v1540 = vsel %vm1280, 1, 0
      %v1541 = vsel %vm1281, 1, 0
      %v1542 = vsel %vm1282, 1, 0
      %v1543 = vsel %vm1283, 1, 0
      %v1544 = vsel %vm1284, 1, 0
      %v1545 = vsel %vm1285, 1, 0
      %v1546 = vsel %vm1286, 1, 0
      %v1547 = vsel %vm1287, 1, 0
      %v1548 = vsel %vm1288, 1, 0
      %v1549 = vsel %vm1289, 1, 0
      %v1550 = vsel %vm1290, 1, 0
      %vm1551 = vcmp.eq.s32.totalorder %v1510, 1
      %vm1552 = vcmp.eq.s32.totalorder %v1511, 1
      %vm1553 = vcmp.eq.s32.totalorder %v1512, 1
      %vm1554 = vcmp.eq.s32.totalorder %v1513, 1
      %vm1555 = vcmp.eq.s32.totalorder %v1514, 1
      %vm1556 = vcmp.eq.s32.totalorder %v1515, 1
      %vm1557 = vcmp.eq.s32.totalorder %v1516, 1
      %vm1558 = vcmp.eq.s32.totalorder %v1517, 1
      %vm1559 = vcmp.eq.s32.totalorder %v1518, 1
      %vm1560 = vcmp.eq.s32.totalorder %v1519, 1
      %vm1561 = vcmp.eq.s32.totalorder %v1520, 1
      %vm1562 = vcmp.eq.s32.totalorder %v1521, 1
      %vm1563 = vcmp.eq.s32.totalorder %v1522, 1
      %vm1564 = vcmp.eq.s32.totalorder %v1523, 1
      %vm1565 = vcmp.eq.s32.totalorder %v1524, 1
      %vm1566 = vcmp.eq.s32.totalorder %v1525, 1
      %vm1567 = vcmp.eq.s32.totalorder %v1526, 1
      %vm1568 = vcmp.eq.s32.totalorder %v1527, 1
      %vm1569 = vcmp.eq.s32.totalorder %v1528, 1
      %vm1570 = vcmp.eq.s32.totalorder %v1529, 1
      %vm1571 = vcmp.eq.s32.totalorder %v1530, 1
      %vm1572 = vcmp.eq.s32.totalorder %v1531, 1
      %vm1573 = vcmp.eq.s32.totalorder %v1532, 1
      %vm1574 = vcmp.eq.s32.totalorder %v1533, 1
      %vm1575 = vcmp.eq.s32.totalorder %v1534, 1
      %vm1576 = vcmp.eq.s32.totalorder %v1535, 1
      %vm1577 = vcmp.eq.s32.totalorder %v1536, 1
      %vm1578 = vcmp.eq.s32.totalorder %v1537, 1
      %vm1579 = vcmp.eq.s32.totalorder %v1538, 1
      %vm1580 = vcmp.eq.s32.totalorder %v1539, 1
      %vm1581 = vcmp.eq.s32.totalorder %v1540, 1
      %vm1582 = vcmp.eq.s32.totalorder %v1541, 1
      %vm1583 = vcmp.eq.s32.totalorder %v1542, 1
      %vm1584 = vcmp.eq.s32.totalorder %v1543, 1
      %vm1585 = vcmp.eq.s32.totalorder %v1544, 1
      %vm1586 = vcmp.eq.s32.totalorder %v1545, 1
      %vm1587 = vcmp.eq.s32.totalorder %v1546, 1
      %vm1588 = vcmp.eq.s32.totalorder %v1547, 1
      %vm1589 = vcmp.eq.s32.totalorder %v1548, 1
      %vm1590 = vcmp.eq.s32.totalorder %v1549, 1
      %vm1591 = vcmp.eq.s32.totalorder %v1550, 1
      %v1592 = vsel %vm1551, %v1469, 0.0
      %v1593 = vsel %vm1552, %v1470, 0.0
      %v1594 = vsel %vm1553, %v1471, 0.0
      %v1595 = vsel %vm1554, %v1472, 0.0
      %v1596 = vsel %vm1555, %v1473, 0.0
      %v1597 = vsel %vm1556, %v1474, 0.0
      %v1598 = vsel %vm1557, %v1475, 0.0
      %v1599 = vsel %vm1558, %v1476, 0.0
      %v1600 = vsel %vm1559, %v1477, 0.0
      %v1601 = vsel %vm1560, %v1478, 0.0
      %v1602 = vsel %vm1561, %v1479, 0.0
      %v1603 = vsel %vm1562, %v1480, 0.0
      %v1604 = vsel %vm1563, %v1481, 0.0
      %v1605 = vsel %vm1564, %v1482, 0.0
      %v1606 = vsel %vm1565, %v1483, 0.0
      %v1607 = vsel %vm1566, %v1484, 0.0
      %v1608 = vsel %vm1567, %v1485, 0.0
      %v1609 = vsel %vm1568, %v1486, 0.0
      %v1610 = vsel %vm1569, %v1487, 0.0
      %v1611 = vsel %vm1570, %v1488, 0.0
      %v1612 = vsel %vm1571, %v1489, 0.0
      %v1613 = vsel %vm1572, %v1490, 0.0
      %v1614 = vsel %vm1573, %v1491, 0.0
      %v1615 = vsel %vm1574, %v1492, 0.0
      %v1616 = vsel %vm1575, %v1493, 0.0
      %v1617 = vsel %vm1576, %v1494, 0.0
      %v1618 = vsel %vm1577, %v1495, 0.0
      %v1619 = vsel %vm1578, %v1496, 0.0
      %v1620 = vsel %vm1579, %v1497, 0.0
      %v1621 = vsel %vm1580, %v1498, 0.0
      %v1622 = vsel %vm1581, %v1499, 0.0
      %v1623 = vsel %vm1582, %v1500, 0.0
      %v1624 = vsel %vm1583, %v1501, 0.0
      %v1625 = vsel %vm1584, %v1502, 0.0
      %v1626 = vsel %vm1585, %v1503, 0.0
      %v1627 = vsel %vm1586, %v1504, 0.0
      %v1628 = vsel %vm1587, %v1505, 0.0
      %v1629 = vsel %vm1588, %v1506, 0.0
      %v1630 = vsel %vm1589, %v1507, 0.0
      %v1631 = vsel %vm1590, %v1508, 0.0
      %v1632 = vsel %vm1591, %v1509, 0.0
      %v1633 = vpack.c.bf16 %v1593, %v1592
      %v1634 = vpack.c.bf16 %v1595, %v1594
      %v1635 = vpack.c.bf16 %v1597, %v1596
      %v1636 = vpack.c.bf16 %v1599, %v1598
      %v1637 = vpack.c.bf16 %v1601, %v1600
      %v1638 = vpack.c.bf16 %v1603, %v1602
      %v1639 = vpack.c.bf16 %v1605, %v1604
      %v1640 = vpack.c.bf16 %v1607, %v1606
      %v1641 = vpack.c.bf16 %v1609, %v1608
      %v1642 = vpack.c.bf16 %v1611, %v1610
      %v1643 = vpack.c.bf16 %v1613, %v1612
      %v1644 = vpack.c.bf16 %v1615, %v1614
      %v1645 = vpack.c.bf16 %v1617, %v1616
      %v1646 = vpack.c.bf16 %v1619, %v1618
      %v1647 = vpack.c.bf16 %v1621, %v1620
      %v1648 = vpack.c.bf16 %v1623, %v1622
      %v1649 = vpack.c.bf16 %v1625, %v1624
      %v1650 = vpack.c.bf16 %v1627, %v1626
      %v1651 = vpack.c.bf16 %v1629, %v1628
      %v1652 = vpack.c.bf16 %v1631, %v1630
      %v1653 = vpack.c.bf16 %v1632, %v1632
      %v1675 = vunpack.c.l.b16 %v1633
      %v1676 = vunpack.c.h.b16 %v1633
      %v1677 = vunpack.c.l.b16 %v1634
      %v1678 = vunpack.c.h.b16 %v1634
      %v1679 = vunpack.c.l.b16 %v1635
      %v1680 = vunpack.c.h.b16 %v1635
      %v1681 = vunpack.c.l.b16 %v1636
      %v1682 = vunpack.c.h.b16 %v1636
      %v1683 = vunpack.c.l.b16 %v1637
      %v1684 = vunpack.c.h.b16 %v1637
      %v1685 = vunpack.c.l.b16 %v1638
      %v1686 = vunpack.c.h.b16 %v1638
      %v1687 = vunpack.c.l.b16 %v1639
      %v1688 = vunpack.c.h.b16 %v1639
      %v1689 = vunpack.c.l.b16 %v1640
      %v1690 = vunpack.c.h.b16 %v1640
      %v1691 = vunpack.c.l.b16 %v1641
      %v1692 = vunpack.c.h.b16 %v1641
      %v1693 = vunpack.c.l.b16 %v1642
      %v1694 = vunpack.c.h.b16 %v1642
      %v1695 = vunpack.c.l.b16 %v1643
      %v1696 = vunpack.c.h.b16 %v1643
      %v1697 = vunpack.c.l.b16 %v1644
      %v1698 = vunpack.c.h.b16 %v1644
      %v1699 = vunpack.c.l.b16 %v1645
      %v1700 = vunpack.c.h.b16 %v1645
      %v1701 = vunpack.c.l.b16 %v1646
      %v1702 = vunpack.c.h.b16 %v1646
      %v1703 = vunpack.c.l.b16 %v1647
      %v1704 = vunpack.c.h.b16 %v1647
      %v1705 = vunpack.c.l.b16 %v1648
      %v1706 = vunpack.c.h.b16 %v1648
      %v1707 = vunpack.c.l.b16 %v1649
      %v1708 = vunpack.c.h.b16 %v1649
      %v1709 = vunpack.c.l.b16 %v1650
      %v1710 = vunpack.c.h.b16 %v1650
      %v1711 = vunpack.c.l.b16 %v1651
      %v1712 = vunpack.c.h.b16 %v1651
      %v1713 = vunpack.c.l.b16 %v1652
      %v1714 = vunpack.c.h.b16 %v1652
      %v1715 = vunpack.c.l.b16 %v1653
      %v1716 = vpack.c.b16 %v1675, %v1675
      %v1717 = vpack.c.b16 %v1676, %v1676
      %v1718 = vpack.c.b16 %v1677, %v1677
      %v1719 = vpack.c.b16 %v1678, %v1678
      %v1720 = vpack.c.b16 %v1679, %v1679
      %v1721 = vpack.c.b16 %v1680, %v1680
      %v1722 = vpack.c.b16 %v1681, %v1681
      %v1723 = vpack.c.b16 %v1682, %v1682
      %v1724 = vpack.c.b16 %v1683, %v1683
      %v1725 = vpack.c.b16 %v1684, %v1684
      %v1726 = vpack.c.b16 %v1685, %v1685
      %v1727 = vpack.c.b16 %v1686, %v1686
      %v1728 = vpack.c.b16 %v1687, %v1687
      %v1729 = vpack.c.b16 %v1688, %v1688
      %v1730 = vpack.c.b16 %v1689, %v1689
      %v1731 = vpack.c.b16 %v1690, %v1690
      %v1732 = vpack.c.b16 %v1691, %v1691
      %v1733 = vpack.c.b16 %v1692, %v1692
      %v1734 = vpack.c.b16 %v1693, %v1693
      %v1735 = vpack.c.b16 %v1694, %v1694
      %v1736 = vpack.c.b16 %v1695, %v1695
      %v1737 = vpack.c.b16 %v1696, %v1696
      %v1738 = vpack.c.b16 %v1697, %v1697
      %v1739 = vpack.c.b16 %v1698, %v1698
      %v1740 = vpack.c.b16 %v1699, %v1699
      %v1741 = vpack.c.b16 %v1700, %v1700
      %v1742 = vpack.c.b16 %v1701, %v1701
      %v1743 = vpack.c.b16 %v1702, %v1702
      %v1744 = vpack.c.b16 %v1703, %v1703
      %v1745 = vpack.c.b16 %v1704, %v1704
      %v1746 = vpack.c.b16 %v1705, %v1705
      %v1747 = vpack.c.b16 %v1706, %v1706
      %v1748 = vpack.c.b16 %v1707, %v1707
      %v1749 = vpack.c.b16 %v1708, %v1708
      %v1750 = vpack.c.b16 %v1709, %v1709
      %v1751 = vpack.c.b16 %v1710, %v1710
      %v1752 = vpack.c.b16 %v1711, %v1711
      %v1753 = vpack.c.b16 %v1712, %v1712
      %v1754 = vpack.c.b16 %v1713, %v1713
      %v1755 = vpack.c.b16 %v1714, %v1714
      %v1756 = vpack.c.b16 %v1715, %v1715
      %vm1798 = vcmask 60416
      %1799 = vst.msk [vmem:[#allocation2] sm:$0xf] %vm1798, %v1716
      %1800 = vst.msk [vmem:[#allocation2 + $0x4] sm:$0xf] %vm1798, %v1717
      %1801 = vst.msk [vmem:[#allocation2 + $0x8] sm:$0xf] %vm1798, %v1718
      %1802 = vst.msk [vmem:[#allocation2 + $0xc] sm:$0xf] %vm1798, %v1719
      %1803 = vst.msk [vmem:[#allocation2 + $0x10] sm:$0xf] %vm1798, %v1720
      %1804 = vst.msk [vmem:[#allocation2 + $0x14] sm:$0xf] %vm1798, %v1721
      %1805 = vst.msk [vmem:[#allocation2 + $0x18] sm:$0xf] %vm1798, %v1722
      %1806 = vst.msk [vmem:[#allocation2 + $0x1c] sm:$0xf] %vm1798, %v1723
      %1807 = vst.msk [vmem:[#allocation2 + $0x20] sm:$0xf] %vm1798, %v1724
      %1808 = vst.msk [vmem:[#allocation2 + $0x24] sm:$0xf] %vm1798, %v1725
      %1809 = vst.msk [vmem:[#allocation2 + $0x28] sm:$0xf] %vm1798, %v1726
      %1810 = vst.msk [vmem:[#allocation2 + $0x2c] sm:$0xf] %vm1798, %v1727
      %1811 = vst.msk [vmem:[#allocation2 + $0x30] sm:$0xf] %vm1798, %v1728
      %1812 = vst.msk [vmem:[#allocation2 + $0x34] sm:$0xf] %vm1798, %v1729
      %1813 = vst.msk [vmem:[#allocation2 + $0x38] sm:$0xf] %vm1798, %v1730
      %1814 = vst.msk [vmem:[#allocation2 + $0x3c] sm:$0xf] %vm1798, %v1731
      %1815 = vst.msk [vmem:[#allocation2 + $0x40] sm:$0xf] %vm1798, %v1732
      %1816 = vst.msk [vmem:[#allocation2 + $0x44] sm:$0xf] %vm1798, %v1733
      %1817 = vst.msk [vmem:[#allocation2 + $0x48] sm:$0xf] %vm1798, %v1734
      %1818 = vst.msk [vmem:[#allocation2 + $0x4c] sm:$0xf] %vm1798, %v1735
      %1819 = vst.msk [vmem:[#allocation2 + $0x50] sm:$0xf] %vm1798, %v1736
      %1820 = vst.msk [vmem:[#allocation2 + $0x54] sm:$0xf] %vm1798, %v1737
      %1821 = vst.msk [vmem:[#allocation2 + $0x58] sm:$0xf] %vm1798, %v1738
      %1822 = vst.msk [vmem:[#allocation2 + $0x5c] sm:$0xf] %vm1798, %v1739
      %1823 = vst.msk [vmem:[#allocation2 + $0x60] sm:$0xf] %vm1798, %v1740
      %1824 = vst.msk [vmem:[#allocation2 + $0x64] sm:$0xf] %vm1798, %v1741
      %1825 = vst.msk [vmem:[#allocation2 + $0x68] sm:$0xf] %vm1798, %v1742
      %1826 = vst.msk [vmem:[#allocation2 + $0x6c] sm:$0xf] %vm1798, %v1743
      %1827 = vst.msk [vmem:[#allocation2 + $0x70] sm:$0xf] %vm1798, %v1744
      %1828 = vst.msk [vmem:[#allocation2 + $0x74] sm:$0xf] %vm1798, %v1745
      %1829 = vst.msk [vmem:[#allocation2 + $0x78] sm:$0xf] %vm1798, %v1746
      %1830 = vst.msk [vmem:[#allocation2 + $0x7c] sm:$0xf] %vm1798, %v1747
      %1831 = vst.msk [vmem:[#allocation2 + $0x80] sm:$0xf] %vm1798, %v1748
      %1832 = vst.msk [vmem:[#allocation2 + $0x84] sm:$0xf] %vm1798, %v1749
      %1833 = vst.msk [vmem:[#allocation2 + $0x88] sm:$0xf] %vm1798, %v1750
      %1834 = vst.msk [vmem:[#allocation2 + $0x8c] sm:$0xf] %vm1798, %v1751
      %1835 = vst.msk [vmem:[#allocation2 + $0x90] sm:$0xf] %vm1798, %v1752
      %1836 = vst.msk [vmem:[#allocation2 + $0x94] sm:$0xf] %vm1798, %v1753
      %1837 = vst.msk [vmem:[#allocation2 + $0x98] sm:$0xf] %vm1798, %v1754
      %1838 = vst.msk [vmem:[#allocation2 + $0x9c] sm:$0xf] %vm1798, %v1755
      %vm1839 = vcmask 59392
      %1840 = vst.msk [vmem:[#allocation2 + $0xa0] sm:$0x7] %vm1839, %v1756
      %v1841 = vld [vmem:[#allocation2] sm:$0xf]
      %v1842 = vld [vmem:[#allocation2 + $0x4] sm:$0xf]
      %v1843 = vld [vmem:[#allocation2 + $0x8] sm:$0xf]
      %v1844 = vld [vmem:[#allocation2 + $0xc] sm:$0xf]
      %v1845 = vld [vmem:[#allocation2 + $0x10] sm:$0xf]
      %v1846 = vld [vmem:[#allocation2 + $0x14] sm:$0xf]
      %v1847 = vld [vmem:[#allocation2 + $0x18] sm:$0xf]
      %v1848 = vld [vmem:[#allocation2 + $0x1c] sm:$0xf]
      %v1849 = vld [vmem:[#allocation2 + $0x20] sm:$0xf]
      %v1850 = vld [vmem:[#allocation2 + $0x24] sm:$0xf]
      %v1851 = vld [vmem:[#allocation2 + $0x28] sm:$0xf]
      %v1852 = vld [vmem:[#allocation2 + $0x2c] sm:$0xf]
      %v1853 = vld [vmem:[#allocation2 + $0x30] sm:$0xf]
      %v1854 = vld [vmem:[#allocation2 + $0x34] sm:$0xf]
      %v1855 = vld [vmem:[#allocation2 + $0x38] sm:$0xf]
      %v1856 = vld [vmem:[#allocation2 + $0x3c] sm:$0xf]
      %v1857 = vld [vmem:[#allocation2 + $0x40] sm:$0xf]
      %v1858 = vld [vmem:[#allocation2 + $0x44] sm:$0xf]
      %v1859 = vld [vmem:[#allocation2 + $0x48] sm:$0xf]
      %v1860 = vld [vmem:[#allocation2 + $0x4c] sm:$0xf]
      %v1861 = vld [vmem:[#allocation2 + $0x50] sm:$0xf]
      %v1862 = vld [vmem:[#allocation2 + $0x54] sm:$0xf]
      %v1863 = vld [vmem:[#allocation2 + $0x58] sm:$0xf]
      %v1864 = vld [vmem:[#allocation2 + $0x5c] sm:$0xf]
      %v1865 = vld [vmem:[#allocation2 + $0x60] sm:$0xf]
      %v1866 = vld [vmem:[#allocation2 + $0x64] sm:$0xf]
      %v1867 = vld [vmem:[#allocation2 + $0x68] sm:$0xf]
      %v1868 = vld [vmem:[#allocation2 + $0x6c] sm:$0xf]
      %v1869 = vld [vmem:[#allocation2 + $0x70] sm:$0xf]
      %v1870 = vld [vmem:[#allocation2 + $0x74] sm:$0xf]
      %v1871 = vld [vmem:[#allocation2 + $0x78] sm:$0xf]
      %v1872 = vld [vmem:[#allocation2 + $0x7c] sm:$0xf]
      %v1873 = vld [vmem:[#allocation2 + $0x80] sm:$0xf]
      %v1874 = vld [vmem:[#allocation2 + $0x84] sm:$0xf]
      %v1875 = vld [vmem:[#allocation2 + $0x88] sm:$0xf]
      %v1876 = vld [vmem:[#allocation2 + $0x8c] sm:$0xf]
      %v1877 = vld [vmem:[%s3] sm:$0xf]
      %v1878 = vld [vmem:[#allocation2 + $0x90] sm:$0x1]
      %s1879 = scalar_lea.vmem %s3, 4
      %v1880 = vld [vmem:[%s1879] sm:$0xf]
      %v1918 = vunpack.c.l.b16 %v1841
      %v1919 = vunpack.c.l.b16 %v1842
      %v1920 = vunpack.c.l.b16 %v1843
      %v1921 = vunpack.c.l.b16 %v1844
      %v1922 = vunpack.c.l.b16 %v1845
      %v1923 = vunpack.c.l.b16 %v1846
      %v1924 = vunpack.c.l.b16 %v1847
      %v1925 = vunpack.c.l.b16 %v1848
      %v1926 = vunpack.c.l.b16 %v1849
      %v1927 = vunpack.c.l.b16 %v1850
      %v1928 = vunpack.c.l.b16 %v1851
      %v1929 = vunpack.c.l.b16 %v1852
      %v1930 = vunpack.c.l.b16 %v1853
      %v1931 = vunpack.c.l.b16 %v1854
      %v1932 = vunpack.c.l.b16 %v1855
      %v1933 = vunpack.c.l.b16 %v1856
      %v1934 = vunpack.c.l.b16 %v1857
      %v1935 = vunpack.c.l.b16 %v1858
      %v1936 = vunpack.c.l.b16 %v1859
      %v1937 = vunpack.c.l.b16 %v1860
      %v1938 = vunpack.c.l.b16 %v1861
      %v1939 = vunpack.c.l.b16 %v1862
      %v1940 = vunpack.c.l.b16 %v1863
      %v1941 = vunpack.c.l.b16 %v1864
      %v1942 = vunpack.c.l.b16 %v1865
      %v1943 = vunpack.c.l.b16 %v1866
      %v1944 = vunpack.c.l.b16 %v1867
      %v1945 = vunpack.c.l.b16 %v1868
      %v1946 = vunpack.c.l.b16 %v1869
      %v1947 = vunpack.c.l.b16 %v1870
      %v1948 = vunpack.c.l.b16 %v1871
      %v1949 = vunpack.c.l.b16 %v1872
      %v1950 = vunpack.c.l.b16 %v1873
      %v1951 = vunpack.c.l.b16 %v1874
      %v1952 = vunpack.c.l.b16 %v1875
      %v1953 = vunpack.c.l.b16 %v1876
      %v1954 = vunpack.c.l.b16 %v1878
      %v1955 = vpack.c.b16 %v1919, %v1918
      %v1956 = vpack.c.b16 %v1921, %v1920
      %v1957 = vpack.c.b16 %v1923, %v1922
      %v1958 = vpack.c.b16 %v1925, %v1924
      %v1959 = vpack.c.b16 %v1927, %v1926
      %v1960 = vpack.c.b16 %v1929, %v1928
      %v1961 = vpack.c.b16 %v1931, %v1930
      %v1962 = vpack.c.b16 %v1933, %v1932
      %v1963 = vpack.c.b16 %v1935, %v1934
      %v1964 = vpack.c.b16 %v1937, %v1936
      %v1965 = vpack.c.b16 %v1939, %v1938
      %v1966 = vpack.c.b16 %v1941, %v1940
      %v1967 = vpack.c.b16 %v1943, %v1942
      %v1968 = vpack.c.b16 %v1945, %v1944
      %v1969 = vpack.c.b16 %v1947, %v1946
      %v1970 = vpack.c.b16 %v1949, %v1948
      %v1971 = vpack.c.b16 %v1951, %v1950
      %v1972 = vpack.c.b16 %v1953, %v1952
      %v1973 = vpack.c.b16 %v1954, %v1954
      %vm1974 = vsmask.f32 7424
      %v1976 = vshrl.u32 %v1955, 16
      %v1978 = vshll.u32 %v1955, 16
      %v1980 = vrot.slane %v1978, 1
      %v1981 = vor.u32 %v1976, %v1980
      %v1983 = vshll.u32 %v1956, 16
      %v1985 = vrot.slane %v1983, 1
      %v1986 = vsel %vm1974, %v1981, %v1985
      %v1987 = vshrl.u32 %v1956, 16
      %v1989 = vor.u32 %v1987, %v1985
      %v1991 = vshll.u32 %v1957, 16
      %v1993 = vrot.slane %v1991, 1
      %v1994 = vsel %vm1974, %v1989, %v1993
      %v1995 = vshrl.u32 %v1957, 16
      %v1997 = vor.u32 %v1995, %v1993
      %v1999 = vshll.u32 %v1958, 16
      %v2001 = vrot.slane %v1999, 1
      %v2002 = vsel %vm1974, %v1997, %v2001
      %v2003 = vshrl.u32 %v1958, 16
      %v2005 = vor.u32 %v2003, %v2001
      %v2007 = vshll.u32 %v1959, 16
      %v2009 = vrot.slane %v2007, 1
      %v2010 = vsel %vm1974, %v2005, %v2009
      %v2011 = vshrl.u32 %v1959, 16
      %v2013 = vor.u32 %v2011, %v2009
      %v2015 = vshll.u32 %v1960, 16
      %v2017 = vrot.slane %v2015, 1
      %v2018 = vsel %vm1974, %v2013, %v2017
      %v2019 = vshrl.u32 %v1960, 16
      %v2021 = vor.u32 %v2019, %v2017
      %v2023 = vshll.u32 %v1961, 16
      %v2025 = vrot.slane %v2023, 1
      %v2026 = vsel %vm1974, %v2021, %v2025
      %v2027 = vshrl.u32 %v1961, 16
      %v2029 = vor.u32 %v2027, %v2025
      %v2031 = vshll.u32 %v1962, 16
      %v2033 = vrot.slane %v2031, 1
      %v2034 = vsel %vm1974, %v2029, %v2033
      %v2035 = vshrl.u32 %v1962, 16
      %v2037 = vor.u32 %v2035, %v2033
      %v2039 = vshll.u32 %v1963, 16
      %v2041 = vrot.slane %v2039, 1
      %v2042 = vsel %vm1974, %v2037, %v2041
      %v2043 = vshrl.u32 %v1963, 16
      %v2045 = vor.u32 %v2043, %v2041
      %v2047 = vshll.u32 %v1964, 16
      %v2049 = vrot.slane %v2047, 1
      %v2050 = vsel %vm1974, %v2045, %v2049
      %v2051 = vshrl.u32 %v1964, 16
      %v2053 = vor.u32 %v2051, %v2049
      %v2055 = vshll.u32 %v1965, 16
      %v2057 = vrot.slane %v2055, 1
      %v2058 = vsel %vm1974, %v2053, %v2057
      %v2059 = vshrl.u32 %v1965, 16
      %v2061 = vor.u32 %v2059, %v2057
      %v2063 = vshll.u32 %v1966, 16
      %v2065 = vrot.slane %v2063, 1
      %v2066 = vsel %vm1974, %v2061, %v2065
      %v2067 = vshrl.u32 %v1966, 16
      %v2069 = vor.u32 %v2067, %v2065
      %v2071 = vshll.u32 %v1967, 16
      %v2073 = vrot.slane %v2071, 1
      %v2074 = vsel %vm1974, %v2069, %v2073
      %v2075 = vshrl.u32 %v1967, 16
      %v2077 = vor.u32 %v2075, %v2073
      %v2079 = vshll.u32 %v1968, 16
      %v2081 = vrot.slane %v2079, 1
      %v2082 = vsel %vm1974, %v2077, %v2081
      %v2083 = vshrl.u32 %v1968, 16
      %v2085 = vor.u32 %v2083, %v2081
      %v2087 = vshll.u32 %v1969, 16
      %v2089 = vrot.slane %v2087, 1
      %v2090 = vsel %vm1974, %v2085, %v2089
      %v2091 = vshrl.u32 %v1969, 16
      %v2093 = vor.u32 %v2091, %v2089
      %v2095 = vshll.u32 %v1970, 16
      %v2097 = vrot.slane %v2095, 1
      %v2098 = vsel %vm1974, %v2093, %v2097
      %v2099 = vshrl.u32 %v1970, 16
      %v2101 = vor.u32 %v2099, %v2097
      %v2103 = vshll.u32 %v1971, 16
      %v2105 = vrot.slane %v2103, 1
      %v2106 = vsel %vm1974, %v2101, %v2105
      %v2107 = vshrl.u32 %v1971, 16
      %v2109 = vor.u32 %v2107, %v2105
      %v2111 = vshll.u32 %v1972, 16
      %v2113 = vrot.slane %v2111, 1
      %v2114 = vsel %vm1974, %v2109, %v2113
      %v2115 = vshrl.u32 %v1972, 16
      %v2117 = vor.u32 %v2115, %v2113
      %v2119 = vshll.u32 %v1973, 16
      %v2121 = vrot.slane %v2119, 1
      %v2122 = vsel %vm1974, %v2117, %v2121
      %vm2123 = vcmask 64512
      %v2125 = vsel %vm2123, %v1986, 0
      %v2128 = vsel %vm2123, %v1994, 0
      %v2131 = vsel %vm2123, %v2002, 0
      %v2134 = vsel %vm2123, %v2010, 0
      %v2137 = vsel %vm2123, %v2018, 0
      %v2140 = vsel %vm2123, %v2026, 0
      %v2143 = vsel %vm2123, %v2034, 0
      %v2146 = vsel %vm2123, %v2042, 0
      %v2149 = vsel %vm2123, %v2050, 0
      %v2152 = vsel %vm2123, %v2058, 0
      %v2155 = vsel %vm2123, %v2066, 0
      %v2158 = vsel %vm2123, %v2074, 0
      %v2161 = vsel %vm2123, %v2082, 0
      %v2164 = vsel %vm2123, %v2090, 0
      %v2167 = vsel %vm2123, %v2098, 0
      %v2170 = vsel %vm2123, %v2106, 0
      %v2173 = vsel %vm2123, %v2114, 0
      %v2176 = vsel %vm2123, %v2122, 0
      %vm2178 = vcmask 1043456
      %v2180 = vsel %vm2178, %v1880, 0
      %2182 = vmatprep.subr.bf16.mxu0 0
      %2183 = vmatpush1.bf16.msra.mxu0 0
      %2184 = vmatprep.subr.bf16.mxu0 0
      %2185 = vmatpush1.bf16.msra.mxu0 0
      %2186 = vmatprep.subr.bf16.mxu0 0
      %2187 = vmatpush1.bf16.msra.mxu0 0
      %2188 = vmatprep.subr.bf16.mxu0 0
      %2189 = vmatpush1.bf16.msra.mxu0 0
      %2190 = vmatprep.subr.bf16.mxu0 0
      %2191 = vmatpush1.bf16.msra.mxu0 0
      %2192 = vmatprep.subr.bf16.mxu0 0
      %2193 = vmatpush1.bf16.msra.mxu0 0
      %2194 = vmatprep.subr.bf16.mxu0 0
      %2195 = vmatpush1.bf16.msra.mxu0 0
      %2196 = vmatprep.subr.bf16.mxu0 0
      %2197 = vmatpush1.bf16.msra.mxu0 %v2180
      %2198 = vmatprep.subr.bf16.mxu0 0
      %2199 = vmatpush2.bf16.msra.mxu0 0
      %2200 = vmatprep.subr.bf16.mxu0 0
      %2201 = vmatpush2.bf16.msra.mxu0 0
      %2202 = vmatprep.subr.bf16.mxu0 0
      %2203 = vmatpush2.bf16.msra.mxu0 0
      %2204 = vmatprep.subr.bf16.mxu0 0
      %2205 = vmatpush2.bf16.msra.mxu0 0
      %2206 = vmatprep.subr.bf16.mxu0 0
      %2207 = vmatpush2.bf16.msra.mxu0 0
      %2208 = vmatprep.subr.bf16.mxu0 0
      %2209 = vmatpush2.bf16.msra.mxu0 0
      %2210 = vmatprep.subr.bf16.mxu0 0
      %2211 = vmatpush2.bf16.msra.mxu0 0
      %2212 = vmatprep.subr.bf16.mxu0 0
      %2213 = vmatpush2.bf16.msra.mxu0 0
      %2214 = vmatprep.mubr.bf16.mxu0 0
      %2215 = vmatmul.mubr.bf16.gmra.mxu0 %v2125
      %v2216 = vpop.f32.mrf.mxu0
      %v2217 = vadd.f32 0.0, %v2216
      %v2218 = vpop.f32.mrf.mxu0
      %v2219 = vpop.f32.mrf.mxu0
      %v2220 = vadd.f32 0.0, %v2219
      %v2221 = vpop.f32.mrf.mxu0
      %2222 = vmatprep.mubr.bf16.mxu0 0
      %2223 = vmatmul.mubr.bf16.gmra.mxu0 %v2128
      %v2224 = vpop.f32.mrf.mxu0
      %v2225 = vadd.f32 0.0, %v2224
      %v2226 = vpop.f32.mrf.mxu0
      %v2227 = vpop.f32.mrf.mxu0
      %v2228 = vadd.f32 0.0, %v2227
      %v2229 = vpop.f32.mrf.mxu0
      %2230 = vmatprep.mubr.bf16.mxu0 0
      %2231 = vmatmul.mubr.bf16.gmra.mxu0 %v2131
      %v2232 = vpop.f32.mrf.mxu0
      %v2233 = vadd.f32 0.0, %v2232
      %v2234 = vpop.f32.mrf.mxu0
      %v2235 = vpop.f32.mrf.mxu0
      %v2236 = vadd.f32 0.0, %v2235
      %v2237 = vpop.f32.mrf.mxu0
      %2238 = vmatprep.mubr.bf16.mxu0 0
      %2239 = vmatmul.mubr.bf16.gmra.mxu0 %v2134
      %v2240 = vpop.f32.mrf.mxu0
      %v2241 = vadd.f32 0.0, %v2240
      %v2242 = vpop.f32.mrf.mxu0
      %v2243 = vpop.f32.mrf.mxu0
      %v2244 = vadd.f32 0.0, %v2243
      %v2245 = vpop.f32.mrf.mxu0
      %2246 = vmatprep.mubr.bf16.mxu0 0
      %2247 = vmatmul.mubr.bf16.gmra.mxu0 %v2137
      %v2248 = vpop.f32.mrf.mxu0
      %v2249 = vadd.f32 0.0, %v2248
      %v2250 = vpop.f32.mrf.mxu0
      %v2251 = vpop.f32.mrf.mxu0
      %v2252 = vadd.f32 0.0, %v2251
      %v2253 = vpop.f32.mrf.mxu0
      %2254 = vmatprep.mubr.bf16.mxu0 0
      %2255 = vmatmul.mubr.bf16.gmra.mxu0 %v2140
      %v2256 = vpop.f32.mrf.mxu0
      %v2257 = vadd.f32 0.0, %v2256
      %v2258 = vpop.f32.mrf.mxu0
      %v2259 = vpop.f32.mrf.mxu0
      %v2260 = vadd.f32 0.0, %v2259
      %v2261 = vpop.f32.mrf.mxu0
      %2262 = vmatprep.mubr.bf16.mxu0 0
      %2263 = vmatmul.mubr.bf16.gmra.mxu0 %v2143
      %v2264 = vpop.f32.mrf.mxu0
      %v2265 = vadd.f32 0.0, %v2264
      %v2266 = vpop.f32.mrf.mxu0
      %v2267 = vpop.f32.mrf.mxu0
      %v2268 = vadd.f32 0.0, %v2267
      %v2269 = vpop.f32.mrf.mxu0
      %2270 = vmatprep.mubr.bf16.mxu0 0
      %2271 = vmatmul.mubr.bf16.gmra.mxu0 %v2146
      %v2272 = vpop.f32.mrf.mxu0
      %v2273 = vadd.f32 0.0, %v2272
      %v2274 = vpop.f32.mrf.mxu0
      %v2275 = vpop.f32.mrf.mxu0
      %v2276 = vadd.f32 0.0, %v2275
      %v2277 = vpop.f32.mrf.mxu0
      %2278 = vmatprep.mubr.bf16.mxu0 0
      %2279 = vmatmul.mubr.bf16.gmra.mxu0 %v2149
      %v2280 = vpop.f32.mrf.mxu0
      %v2281 = vadd.f32 0.0, %v2280
      %v2282 = vpop.f32.mrf.mxu0
      %v2283 = vpop.f32.mrf.mxu0
      %v2284 = vadd.f32 0.0, %v2283
      %v2285 = vpop.f32.mrf.mxu0
      %2286 = vmatprep.mubr.bf16.mxu0 0
      %2287 = vmatmul.mubr.bf16.gmra.mxu0 %v2152
      %v2288 = vpop.f32.mrf.mxu0
      %v2289 = vadd.f32 0.0, %v2288
      %v2290 = vpop.f32.mrf.mxu0
      %v2291 = vpop.f32.mrf.mxu0
      %v2292 = vadd.f32 0.0, %v2291
      %v2293 = vpop.f32.mrf.mxu0
      %2294 = vmatprep.mubr.bf16.mxu0 0
      %2295 = vmatmul.mubr.bf16.gmra.mxu0 %v2155
      %v2296 = vpop.f32.mrf.mxu0
      %v2297 = vadd.f32 0.0, %v2296
      %v2298 = vpop.f32.mrf.mxu0
      %v2299 = vpop.f32.mrf.mxu0
      %v2300 = vadd.f32 0.0, %v2299
      %v2301 = vpop.f32.mrf.mxu0
      %2302 = vmatprep.mubr.bf16.mxu0 0
      %2303 = vmatmul.mubr.bf16.gmra.mxu0 %v2158
      %v2304 = vpop.f32.mrf.mxu0
      %v2305 = vadd.f32 0.0, %v2304
      %v2306 = vpop.f32.mrf.mxu0
      %v2307 = vpop.f32.mrf.mxu0
      %v2308 = vadd.f32 0.0, %v2307
      %v2309 = vpop.f32.mrf.mxu0
      %2310 = vmatprep.mubr.bf16.mxu0 0
      %2311 = vmatmul.mubr.bf16.gmra.mxu0 %v2161
      %v2312 = vpop.f32.mrf.mxu0
      %v2313 = vadd.f32 0.0, %v2312
      %v2314 = vpop.f32.mrf.mxu0
      %v2315 = vpop.f32.mrf.mxu0
      %v2316 = vadd.f32 0.0, %v2315
      %v2317 = vpop.f32.mrf.mxu0
      %2318 = vmatprep.mubr.bf16.mxu0 0
      %2319 = vmatmul.mubr.bf16.gmra.mxu0 %v2164
      %v2320 = vpop.f32.mrf.mxu0
      %v2321 = vadd.f32 0.0, %v2320
      %v2322 = vpop.f32.mrf.mxu0
      %v2323 = vpop.f32.mrf.mxu0
      %v2324 = vadd.f32 0.0, %v2323
      %v2325 = vpop.f32.mrf.mxu0
      %2326 = vmatprep.mubr.bf16.mxu0 0
      %2327 = vmatmul.mubr.bf16.gmra.mxu0 %v2167
      %v2328 = vpop.f32.mrf.mxu0
      %v2329 = vadd.f32 0.0, %v2328
      %v2330 = vpop.f32.mrf.mxu0
      %v2331 = vpop.f32.mrf.mxu0
      %v2332 = vadd.f32 0.0, %v2331
      %v2333 = vpop.f32.mrf.mxu0
      %2334 = vmatprep.mubr.bf16.mxu0 0
      %2335 = vmatmul.mubr.bf16.gmra.mxu0 %v2170
      %v2336 = vpop.f32.mrf.mxu0
      %v2337 = vadd.f32 0.0, %v2336
      %v2338 = vpop.f32.mrf.mxu0
      %v2339 = vpop.f32.mrf.mxu0
      %v2340 = vadd.f32 0.0, %v2339
      %v2341 = vpop.f32.mrf.mxu0
      %2342 = vmatprep.mubr.bf16.mxu0 0
      %2343 = vmatmul.mubr.bf16.gmra.mxu0 %v2173
      %v2344 = vpop.f32.mrf.mxu0
      %v2345 = vadd.f32 0.0, %v2344
      %v2346 = vpop.f32.mrf.mxu0
      %v2347 = vpop.f32.mrf.mxu0
      %v2348 = vadd.f32 0.0, %v2347
      %v2349 = vpop.f32.mrf.mxu0
      %2350 = vmatprep.mubr.bf16.mxu0 0
      %2351 = vmatmul.mubr.bf16.gmra.mxu0 %v2176
      %v2352 = vpop.f32.mrf.mxu0
      %v2353 = vadd.f32 0.0, %v2352
      %v2354 = vpop.f32.mrf.mxu0
      %v2355 = vpop.f32.mrf.mxu0
      %v2356 = vadd.f32 0.0, %v2355
      %v2357 = vpop.f32.mrf.mxu0
      %2358 = vdwg.mxu0
      %v2359 = vsel %vm2123, %v1955, 0
      %v2361 = vsel %vm2123, %v1956, 0
      %v2363 = vsel %vm2123, %v1957, 0
      %v2365 = vsel %vm2123, %v1958, 0
      %v2367 = vsel %vm2123, %v1959, 0
      %v2369 = vsel %vm2123, %v1960, 0
      %v2371 = vsel %vm2123, %v1961, 0
      %v2373 = vsel %vm2123, %v1962, 0
      %v2375 = vsel %vm2123, %v1963, 0
      %v2377 = vsel %vm2123, %v1964, 0
      %v2379 = vsel %vm2123, %v1965, 0
      %v2381 = vsel %vm2123, %v1966, 0
      %v2383 = vsel %vm2123, %v1967, 0
      %v2385 = vsel %vm2123, %v1968, 0
      %v2387 = vsel %vm2123, %v1969, 0
      %v2389 = vsel %vm2123, %v1970, 0
      %v2391 = vsel %vm2123, %v1971, 0
      %v2393 = vsel %vm2123, %v1972, 0
      %v2396 = vsel %vm2178, %v1877, 0
      %2398 = vmatprep.subr.bf16.mxu0 0
      %2399 = vmatpush1.bf16.msra.mxu0 0
      %2400 = vmatprep.subr.bf16.mxu0 0
      %2401 = vmatpush1.bf16.msra.mxu0 0
      %2402 = vmatprep.subr.bf16.mxu0 0
      %2403 = vmatpush1.bf16.msra.mxu0 0
      %2404 = vmatprep.subr.bf16.mxu0 0
      %2405 = vmatpush1.bf16.msra.mxu0 0
      %2406 = vmatprep.subr.bf16.mxu0 0
      %2407 = vmatpush1.bf16.msra.mxu0 0
      %2408 = vmatprep.subr.bf16.mxu0 0
      %2409 = vmatpush1.bf16.msra.mxu0 0
      %2410 = vmatprep.subr.bf16.mxu0 0
      %2411 = vmatpush1.bf16.msra.mxu0 0
      %2412 = vmatprep.subr.bf16.mxu0 0
      %2413 = vmatpush1.bf16.msra.mxu0 %v2396
      %2414 = vmatprep.subr.bf16.mxu0 0
      %2415 = vmatpush2.bf16.msra.mxu0 0
      %2416 = vmatprep.subr.bf16.mxu0 0
      %2417 = vmatpush2.bf16.msra.mxu0 0
      %2418 = vmatprep.subr.bf16.mxu0 0
      %2419 = vmatpush2.bf16.msra.mxu0 0
      %2420 = vmatprep.subr.bf16.mxu0 0
      %2421 = vmatpush2.bf16.msra.mxu0 0
      %2422 = vmatprep.subr.bf16.mxu0 0
      %2423 = vmatpush2.bf16.msra.mxu0 0
      %2424 = vmatprep.subr.bf16.mxu0 0
      %2425 = vmatpush2.bf16.msra.mxu0 0
      %2426 = vmatprep.subr.bf16.mxu0 0
      %2427 = vmatpush2.bf16.msra.mxu0 0
      %2428 = vmatprep.subr.bf16.mxu0 0
      %2429 = vmatpush2.bf16.msra.mxu0 0
      %2430 = vmatprep.mubr.bf16.mxu0 0
      %2431 = vmatmul.mubr.bf16.gmra.mxu0 %v2359
      %v2432 = vpop.f32.mrf.mxu0
      %v2433 = vadd.f32 %v2217, %v2432
      %v2434 = vpop.f32.mrf.mxu0
      %v2435 = vpop.f32.mrf.mxu0
      %v2436 = vadd.f32 %v2220, %v2435
      %v2437 = vpop.f32.mrf.mxu0
      %2438 = vmatprep.mubr.bf16.mxu0 0
      %2439 = vmatmul.mubr.bf16.gmra.mxu0 %v2361
      %v2440 = vpop.f32.mrf.mxu0
      %v2441 = vadd.f32 %v2225, %v2440
      %v2442 = vpop.f32.mrf.mxu0
      %v2443 = vpop.f32.mrf.mxu0
      %v2444 = vadd.f32 %v2228, %v2443
      %v2445 = vpop.f32.mrf.mxu0
      %2446 = vmatprep.mubr.bf16.mxu0 0
      %2447 = vmatmul.mubr.bf16.gmra.mxu0 %v2363
      %v2448 = vpop.f32.mrf.mxu0
      %v2449 = vadd.f32 %v2233, %v2448
      %v2450 = vpop.f32.mrf.mxu0
      %v2451 = vpop.f32.mrf.mxu0
      %v2452 = vadd.f32 %v2236, %v2451
      %v2453 = vpop.f32.mrf.mxu0
      %2454 = vmatprep.mubr.bf16.mxu0 0
      %2455 = vmatmul.mubr.bf16.gmra.mxu0 %v2365
      %v2456 = vpop.f32.mrf.mxu0
      %v2457 = vadd.f32 %v2241, %v2456
      %v2458 = vpop.f32.mrf.mxu0
      %v2459 = vpop.f32.mrf.mxu0
      %v2460 = vadd.f32 %v2244, %v2459
      %v2461 = vpop.f32.mrf.mxu0
      %2462 = vmatprep.mubr.bf16.mxu0 0
      %2463 = vmatmul.mubr.bf16.gmra.mxu0 %v2367
      %v2464 = vpop.f32.mrf.mxu0
      %v2465 = vadd.f32 %v2249, %v2464
      %v2466 = vpop.f32.mrf.mxu0
      %v2467 = vpop.f32.mrf.mxu0
      %v2468 = vadd.f32 %v2252, %v2467
      %v2469 = vpop.f32.mrf.mxu0
      %2470 = vmatprep.mubr.bf16.mxu0 0
      %2471 = vmatmul.mubr.bf16.gmra.mxu0 %v2369
      %v2472 = vpop.f32.mrf.mxu0
      %v2473 = vadd.f32 %v2257, %v2472
      %v2474 = vpop.f32.mrf.mxu0
      %v2475 = vpop.f32.mrf.mxu0
      %v2476 = vadd.f32 %v2260, %v2475
      %v2477 = vpop.f32.mrf.mxu0
      %2478 = vmatprep.mubr.bf16.mxu0 0
      %2479 = vmatmul.mubr.bf16.gmra.mxu0 %v2371
      %v2480 = vpop.f32.mrf.mxu0
      %v2481 = vadd.f32 %v2265, %v2480
      %v2482 = vpop.f32.mrf.mxu0
      %v2483 = vpop.f32.mrf.mxu0
      %v2484 = vadd.f32 %v2268, %v2483
      %v2485 = vpop.f32.mrf.mxu0
      %2486 = vmatprep.mubr.bf16.mxu0 0
      %2487 = vmatmul.mubr.bf16.gmra.mxu0 %v2373
      %v2488 = vpop.f32.mrf.mxu0
      %v2489 = vadd.f32 %v2273, %v2488
      %v2490 = vpop.f32.mrf.mxu0
      %v2491 = vpop.f32.mrf.mxu0
      %v2492 = vadd.f32 %v2276, %v2491
      %v2493 = vpop.f32.mrf.mxu0
      %2494 = vmatprep.mubr.bf16.mxu0 0
      %2495 = vmatmul.mubr.bf16.gmra.mxu0 %v2375
      %v2496 = vpop.f32.mrf.mxu0
      %v2497 = vadd.f32 %v2281, %v2496
      %v2498 = vpop.f32.mrf.mxu0
      %v2499 = vpop.f32.mrf.mxu0
      %v2500 = vadd.f32 %v2284, %v2499
      %v2501 = vpop.f32.mrf.mxu0
      %2502 = vmatprep.mubr.bf16.mxu0 0
      %2503 = vmatmul.mubr.bf16.gmra.mxu0 %v2377
      %v2504 = vpop.f32.mrf.mxu0
      %v2505 = vadd.f32 %v2289, %v2504
      %v2506 = vpop.f32.mrf.mxu0
      %v2507 = vpop.f32.mrf.mxu0
      %v2508 = vadd.f32 %v2292, %v2507
      %v2509 = vpop.f32.mrf.mxu0
      %2510 = vmatprep.mubr.bf16.mxu0 0
      %2511 = vmatmul.mubr.bf16.gmra.mxu0 %v2379
      %v2512 = vpop.f32.mrf.mxu0
      %v2513 = vadd.f32 %v2297, %v2512
      %v2514 = vpop.f32.mrf.mxu0
      %v2515 = vpop.f32.mrf.mxu0
      %v2516 = vadd.f32 %v2300, %v2515
      %v2517 = vpop.f32.mrf.mxu0
      %2518 = vmatprep.mubr.bf16.mxu0 0
      %2519 = vmatmul.mubr.bf16.gmra.mxu0 %v2381
      %v2520 = vpop.f32.mrf.mxu0
      %v2521 = vadd.f32 %v2305, %v2520
      %v2522 = vpop.f32.mrf.mxu0
      %v2523 = vpop.f32.mrf.mxu0
      %v2524 = vadd.f32 %v2308, %v2523
      %v2525 = vpop.f32.mrf.mxu0
      %2526 = vmatprep.mubr.bf16.mxu0 0
      %2527 = vmatmul.mubr.bf16.gmra.mxu0 %v2383
      %v2528 = vpop.f32.mrf.mxu0
      %v2529 = vadd.f32 %v2313, %v2528
      %v2530 = vpop.f32.mrf.mxu0
      %v2531 = vpop.f32.mrf.mxu0
      %v2532 = vadd.f32 %v2316, %v2531
      %v2533 = vpop.f32.mrf.mxu0
      %2534 = vmatprep.mubr.bf16.mxu0 0
      %2535 = vmatmul.mubr.bf16.gmra.mxu0 %v2385
      %v2536 = vpop.f32.mrf.mxu0
      %v2537 = vadd.f32 %v2321, %v2536
      %v2538 = vpop.f32.mrf.mxu0
      %v2539 = vpop.f32.mrf.mxu0
      %v2540 = vadd.f32 %v2324, %v2539
      %v2541 = vpop.f32.mrf.mxu0
      %2542 = vmatprep.mubr.bf16.mxu0 0
      %2543 = vmatmul.mubr.bf16.gmra.mxu0 %v2387
      %v2544 = vpop.f32.mrf.mxu0
      %v2545 = vadd.f32 %v2329, %v2544
      %v2546 = vpop.f32.mrf.mxu0
      %v2547 = vpop.f32.mrf.mxu0
      %v2548 = vadd.f32 %v2332, %v2547
      %v2549 = vpop.f32.mrf.mxu0
      %2550 = vmatprep.mubr.bf16.mxu0 0
      %2551 = vmatmul.mubr.bf16.gmra.mxu0 %v2389
      %v2552 = vpop.f32.mrf.mxu0
      %v2553 = vadd.f32 %v2337, %v2552
      %v2554 = vpop.f32.mrf.mxu0
      %v2555 = vpop.f32.mrf.mxu0
      %v2556 = vadd.f32 %v2340, %v2555
      %v2557 = vpop.f32.mrf.mxu0
      %2558 = vmatprep.mubr.bf16.mxu0 0
      %2559 = vmatmul.mubr.bf16.gmra.mxu0 %v2391
      %v2560 = vpop.f32.mrf.mxu0
      %v2561 = vadd.f32 %v2345, %v2560
      %v2562 = vpop.f32.mrf.mxu0
      %v2563 = vpop.f32.mrf.mxu0
      %v2564 = vadd.f32 %v2348, %v2563
      %v2565 = vpop.f32.mrf.mxu0
      %2566 = vmatprep.mubr.bf16.mxu0 0
      %2567 = vmatmul.mubr.bf16.gmra.mxu0 %v2393
      %v2568 = vpop.f32.mrf.mxu0
      %v2569 = vadd.f32 %v2353, %v2568
      %v2570 = vpop.f32.mrf.mxu0
      %v2571 = vpop.f32.mrf.mxu0
      %v2572 = vadd.f32 %v2356, %v2571
      %v2573 = vpop.f32.mrf.mxu0
      %2574 = vdwg.mxu0
      %v2575 = vld [vmem:[#allocation2] sm:$0xe]
      %s2576 = scalar_lea.vmem %s3, 8
      %v2577 = vld [vmem:[%s2576] sm:$0xf]
      %v2579 = vunpack.c.l.b16 %v2575
      %v2580 = vpack.c.b16 %v1919, %v2579
      %vm2581 = vcmask 1046528
      %v2582 = vrot.slane %v2580, 1
      %v2583 = vrot.slane %v1956, 1
      %v2584 = vsel %vm2581, %v2582, %v2583
      %v2585 = vrot.slane %v1957, 1
      %v2586 = vsel %vm2581, %v2583, %v2585
      %v2587 = vrot.slane %v1958, 1
      %v2588 = vsel %vm2581, %v2585, %v2587
      %v2589 = vrot.slane %v1959, 1
      %v2590 = vsel %vm2581, %v2587, %v2589
      %v2591 = vrot.slane %v1960, 1
      %v2592 = vsel %vm2581, %v2589, %v2591
      %v2593 = vrot.slane %v1961, 1
      %v2594 = vsel %vm2581, %v2591, %v2593
      %v2595 = vrot.slane %v1962, 1
      %v2596 = vsel %vm2581, %v2593, %v2595
      %v2597 = vrot.slane %v1963, 1
      %v2598 = vsel %vm2581, %v2595, %v2597
      %v2599 = vrot.slane %v1964, 1
      %v2600 = vsel %vm2581, %v2597, %v2599
      %v2601 = vrot.slane %v1965, 1
      %v2602 = vsel %vm2581, %v2599, %v2601
      %v2603 = vrot.slane %v1966, 1
      %v2604 = vsel %vm2581, %v2601, %v2603
      %v2605 = vrot.slane %v1967, 1
      %v2606 = vsel %vm2581, %v2603, %v2605
      %v2607 = vrot.slane %v1968, 1
      %v2608 = vsel %vm2581, %v2605, %v2607
      %v2609 = vrot.slane %v1969, 1
      %v2610 = vsel %vm2581, %v2607, %v2609
      %v2611 = vrot.slane %v1970, 1
      %v2612 = vsel %vm2581, %v2609, %v2611
      %v2613 = vrot.slane %v1971, 1
      %v2614 = vsel %vm2581, %v2611, %v2613
      %v2615 = vrot.slane %v1972, 1
      %v2616 = vsel %vm2581, %v2613, %v2615
      %v2617 = vrot.slane %v1973, 1
      %v2618 = vsel %vm2581, %v2615, %v2617
      %v2620 = vsel %vm2123, %v2584, 0
      %v2623 = vsel %vm2123, %v2586, 0
      %v2626 = vsel %vm2123, %v2588, 0
      %v2629 = vsel %vm2123, %v2590, 0
      %v2632 = vsel %vm2123, %v2592, 0
      %v2635 = vsel %vm2123, %v2594, 0
      %v2638 = vsel %vm2123, %v2596, 0
      %v2641 = vsel %vm2123, %v2598, 0
      %v2644 = vsel %vm2123, %v2600, 0
      %v2647 = vsel %vm2123, %v2602, 0
      %v2650 = vsel %vm2123, %v2604, 0
      %v2653 = vsel %vm2123, %v2606, 0
      %v2656 = vsel %vm2123, %v2608, 0
      %v2659 = vsel %vm2123, %v2610, 0
      %v2662 = vsel %vm2123, %v2612, 0
      %v2665 = vsel %vm2123, %v2614, 0
      %v2668 = vsel %vm2123, %v2616, 0
      %v2671 = vsel %vm2123, %v2618, 0
      %v2674 = vsel %vm2178, %v2577, 0
      %2676 = vmatprep.subr.bf16.mxu0 0
      %2677 = vmatpush1.bf16.msra.mxu0 0
      %2678 = vmatprep.subr.bf16.mxu0 0
      %2679 = vmatpush1.bf16.msra.mxu0 0
      %2680 = vmatprep.subr.bf16.mxu0 0
      %2681 = vmatpush1.bf16.msra.mxu0 0
      %2682 = vmatprep.subr.bf16.mxu0 0
      %2683 = vmatpush1.bf16.msra.mxu0 0
      %2684 = vmatprep.subr.bf16.mxu0 0
      %2685 = vmatpush1.bf16.msra.mxu0 0
      %2686 = vmatprep.subr.bf16.mxu0 0
      %2687 = vmatpush1.bf16.msra.mxu0 0
      %2688 = vmatprep.subr.bf16.mxu0 0
      %2689 = vmatpush1.bf16.msra.mxu0 0
      %2690 = vmatprep.subr.bf16.mxu0 0
      %2691 = vmatpush1.bf16.msra.mxu0 %v2674
      %2692 = vmatprep.subr.bf16.mxu0 0
      %2693 = vmatpush2.bf16.msra.mxu0 0
      %2694 = vmatprep.subr.bf16.mxu0 0
      %2695 = vmatpush2.bf16.msra.mxu0 0
      %2696 = vmatprep.subr.bf16.mxu0 0
      %2697 = vmatpush2.bf16.msra.mxu0 0
      %2698 = vmatprep.subr.bf16.mxu0 0
      %2699 = vmatpush2.bf16.msra.mxu0 0
      %2700 = vmatprep.subr.bf16.mxu0 0
      %2701 = vmatpush2.bf16.msra.mxu0 0
      %2702 = vmatprep.subr.bf16.mxu0 0
      %2703 = vmatpush2.bf16.msra.mxu0 0
      %2704 = vmatprep.subr.bf16.mxu0 0
      %2705 = vmatpush2.bf16.msra.mxu0 0
      %2706 = vmatprep.subr.bf16.mxu0 0
      %2707 = vmatpush2.bf16.msra.mxu0 0
      %2708 = vmatprep.mubr.bf16.mxu0 0
      %2709 = vmatmul.mubr.bf16.gmra.mxu0 %v2620
      %v2710 = vpop.f32.mrf.mxu0
      %v2711 = vadd.f32 0.0, %v2710
      %v2712 = vpop.f32.mrf.mxu0
      %v2713 = vpop.f32.mrf.mxu0
      %v2714 = vadd.f32 0.0, %v2713
      %v2715 = vpop.f32.mrf.mxu0
      %2716 = vmatprep.mubr.bf16.mxu0 0
      %2717 = vmatmul.mubr.bf16.gmra.mxu0 %v2623
      %v2718 = vpop.f32.mrf.mxu0
      %v2719 = vadd.f32 0.0, %v2718
      %v2720 = vpop.f32.mrf.mxu0
      %v2721 = vpop.f32.mrf.mxu0
      %v2722 = vadd.f32 0.0, %v2721
      %v2723 = vpop.f32.mrf.mxu0
      %2724 = vmatprep.mubr.bf16.mxu0 0
      %2725 = vmatmul.mubr.bf16.gmra.mxu0 %v2626
      %v2726 = vpop.f32.mrf.mxu0
      %v2727 = vadd.f32 0.0, %v2726
      %v2728 = vpop.f32.mrf.mxu0
      %v2729 = vpop.f32.mrf.mxu0
      %v2730 = vadd.f32 0.0, %v2729
      %v2731 = vpop.f32.mrf.mxu0
      %2732 = vmatprep.mubr.bf16.mxu0 0
      %2733 = vmatmul.mubr.bf16.gmra.mxu0 %v2629
      %v2734 = vpop.f32.mrf.mxu0
      %v2735 = vadd.f32 0.0, %v2734
      %v2736 = vpop.f32.mrf.mxu0
      %v2737 = vpop.f32.mrf.mxu0
      %v2738 = vadd.f32 0.0, %v2737
      %v2739 = vpop.f32.mrf.mxu0
      %2740 = vmatprep.mubr.bf16.mxu0 0
      %2741 = vmatmul.mubr.bf16.gmra.mxu0 %v2632
      %v2742 = vpop.f32.mrf.mxu0
      %v2743 = vadd.f32 0.0, %v2742
      %v2744 = vpop.f32.mrf.mxu0
      %v2745 = vpop.f32.mrf.mxu0
      %v2746 = vadd.f32 0.0, %v2745
      %v2747 = vpop.f32.mrf.mxu0
      %2748 = vmatprep.mubr.bf16.mxu0 0
      %2749 = vmatmul.mubr.bf16.gmra.mxu0 %v2635
      %v2750 = vpop.f32.mrf.mxu0
      %v2751 = vadd.f32 0.0, %v2750
      %v2752 = vpop.f32.mrf.mxu0
      %v2753 = vpop.f32.mrf.mxu0
      %v2754 = vadd.f32 0.0, %v2753
      %v2755 = vpop.f32.mrf.mxu0
      %2756 = vmatprep.mubr.bf16.mxu0 0
      %2757 = vmatmul.mubr.bf16.gmra.mxu0 %v2638
      %v2758 = vpop.f32.mrf.mxu0
      %v2759 = vadd.f32 0.0, %v2758
      %v2760 = vpop.f32.mrf.mxu0
      %v2761 = vpop.f32.mrf.mxu0
      %v2762 = vadd.f32 0.0, %v2761
      %v2763 = vpop.f32.mrf.mxu0
      %2764 = vmatprep.mubr.bf16.mxu0 0
      %2765 = vmatmul.mubr.bf16.gmra.mxu0 %v2641
      %v2766 = vpop.f32.mrf.mxu0
      %v2767 = vadd.f32 0.0, %v2766
      %v2768 = vpop.f32.mrf.mxu0
      %v2769 = vpop.f32.mrf.mxu0
      %v2770 = vadd.f32 0.0, %v2769
      %v2771 = vpop.f32.mrf.mxu0
      %2772 = vmatprep.mubr.bf16.mxu0 0
      %2773 = vmatmul.mubr.bf16.gmra.mxu0 %v2644
      %v2774 = vpop.f32.mrf.mxu0
      %v2775 = vadd.f32 0.0, %v2774
      %v2776 = vpop.f32.mrf.mxu0
      %v2777 = vpop.f32.mrf.mxu0
      %v2778 = vadd.f32 0.0, %v2777
      %v2779 = vpop.f32.mrf.mxu0
      %2780 = vmatprep.mubr.bf16.mxu0 0
      %2781 = vmatmul.mubr.bf16.gmra.mxu0 %v2647
      %v2782 = vpop.f32.mrf.mxu0
      %v2783 = vadd.f32 0.0, %v2782
      %v2784 = vpop.f32.mrf.mxu0
      %v2785 = vpop.f32.mrf.mxu0
      %v2786 = vadd.f32 0.0, %v2785
      %v2787 = vpop.f32.mrf.mxu0
      %2788 = vmatprep.mubr.bf16.mxu0 0
      %2789 = vmatmul.mubr.bf16.gmra.mxu0 %v2650
      %v2790 = vpop.f32.mrf.mxu0
      %v2791 = vadd.f32 0.0, %v2790
      %v2792 = vpop.f32.mrf.mxu0
      %v2793 = vpop.f32.mrf.mxu0
      %v2794 = vadd.f32 0.0, %v2793
      %v2795 = vpop.f32.mrf.mxu0
      %2796 = vmatprep.mubr.bf16.mxu0 0
      %2797 = vmatmul.mubr.bf16.gmra.mxu0 %v2653
      %v2798 = vpop.f32.mrf.mxu0
      %v2799 = vadd.f32 0.0, %v2798
      %v2800 = vpop.f32.mrf.mxu0
      %v2801 = vpop.f32.mrf.mxu0
      %v2802 = vadd.f32 0.0, %v2801
      %v2803 = vpop.f32.mrf.mxu0
      %2804 = vmatprep.mubr.bf16.mxu0 0
      %2805 = vmatmul.mubr.bf16.gmra.mxu0 %v2656
      %v2806 = vpop.f32.mrf.mxu0
      %v2807 = vadd.f32 0.0, %v2806
      %v2808 = vpop.f32.mrf.mxu0
      %v2809 = vpop.f32.mrf.mxu0
      %v2810 = vadd.f32 0.0, %v2809
      %v2811 = vpop.f32.mrf.mxu0
      %2812 = vmatprep.mubr.bf16.mxu0 0
      %2813 = vmatmul.mubr.bf16.gmra.mxu0 %v2659
      %v2814 = vpop.f32.mrf.mxu0
      %v2815 = vadd.f32 0.0, %v2814
      %v2816 = vpop.f32.mrf.mxu0
      %v2817 = vpop.f32.mrf.mxu0
      %v2818 = vadd.f32 0.0, %v2817
      %v2819 = vpop.f32.mrf.mxu0
      %2820 = vmatprep.mubr.bf16.mxu0 0
      %2821 = vmatmul.mubr.bf16.gmra.mxu0 %v2662
      %v2822 = vpop.f32.mrf.mxu0
      %v2823 = vadd.f32 0.0, %v2822
      %v2824 = vpop.f32.mrf.mxu0
      %v2825 = vpop.f32.mrf.mxu0
      %v2826 = vadd.f32 0.0, %v2825
      %v2827 = vpop.f32.mrf.mxu0
      %2828 = vmatprep.mubr.bf16.mxu0 0
      %2829 = vmatmul.mubr.bf16.gmra.mxu0 %v2665
      %v2830 = vpop.f32.mrf.mxu0
      %v2831 = vadd.f32 0.0, %v2830
      %v2832 = vpop.f32.mrf.mxu0
      %v2833 = vpop.f32.mrf.mxu0
      %v2834 = vadd.f32 0.0, %v2833
      %v2835 = vpop.f32.mrf.mxu0
      %2836 = vmatprep.mubr.bf16.mxu0 0
      %2837 = vmatmul.mubr.bf16.gmra.mxu0 %v2668
      %v2838 = vpop.f32.mrf.mxu0
      %v2839 = vadd.f32 0.0, %v2838
      %v2840 = vpop.f32.mrf.mxu0
      %v2841 = vpop.f32.mrf.mxu0
      %v2842 = vadd.f32 0.0, %v2841
      %v2843 = vpop.f32.mrf.mxu0
      %2844 = vmatprep.mubr.bf16.mxu0 0
      %2845 = vmatmul.mubr.bf16.gmra.mxu0 %v2671
      %v2846 = vpop.f32.mrf.mxu0
      %v2847 = vadd.f32 0.0, %v2846
      %v2848 = vpop.f32.mrf.mxu0
      %v2849 = vpop.f32.mrf.mxu0
      %v2850 = vadd.f32 0.0, %v2849
      %v2851 = vpop.f32.mrf.mxu0
      %2852 = vdwg.mxu0
      %v2853 = vadd.f32 %v2433, %v2711
      %v2854 = vadd.f32 %v2436, %v2714
      %v2855 = vadd.f32 %v2441, %v2719
      %v2856 = vadd.f32 %v2444, %v2722
      %v2857 = vadd.f32 %v2449, %v2727
      %v2858 = vadd.f32 %v2452, %v2730
      %v2859 = vadd.f32 %v2457, %v2735
      %v2860 = vadd.f32 %v2460, %v2738
      %v2861 = vadd.f32 %v2465, %v2743
      %v2862 = vadd.f32 %v2468, %v2746
      %v2863 = vadd.f32 %v2473, %v2751
      %v2864 = vadd.f32 %v2476, %v2754
      %v2865 = vadd.f32 %v2481, %v2759
      %v2866 = vadd.f32 %v2484, %v2762
      %v2867 = vadd.f32 %v2489, %v2767
      %v2868 = vadd.f32 %v2492, %v2770
      %v2869 = vadd.f32 %v2497, %v2775
      %v2870 = vadd.f32 %v2500, %v2778
      %v2871 = vadd.f32 %v2505, %v2783
      %v2872 = vadd.f32 %v2508, %v2786
      %v2873 = vadd.f32 %v2513, %v2791
      %v2874 = vadd.f32 %v2516, %v2794
      %v2875 = vadd.f32 %v2521, %v2799
      %v2876 = vadd.f32 %v2524, %v2802
      %v2877 = vadd.f32 %v2529, %v2807
      %v2878 = vadd.f32 %v2532, %v2810
      %v2879 = vadd.f32 %v2537, %v2815
      %v2880 = vadd.f32 %v2540, %v2818
      %v2881 = vadd.f32 %v2545, %v2823
      %v2882 = vadd.f32 %v2548, %v2826
      %v2883 = vadd.f32 %v2553, %v2831
      %v2884 = vadd.f32 %v2556, %v2834
      %v2885 = vadd.f32 %v2561, %v2839
      %v2886 = vadd.f32 %v2564, %v2842
      %v2887 = vadd.f32 %v2569, %v2847
      %v2888 = vadd.f32 %v2572, %v2850
      %v2889 = vld [vmem:[#allocation2 + $0x8] sm:$0xe]
      %v2890 = vld [vmem:[#allocation2 + $0xc] sm:$0xf]
      %v2891 = vld [vmem:[#allocation2 + $0x10] sm:$0xf]
      %v2892 = vld [vmem:[#allocation2 + $0x14] sm:$0xf]
      %v2893 = vld [vmem:[#allocation2 + $0x18] sm:$0xf]
      %v2894 = vld [vmem:[#allocation2 + $0x1c] sm:$0xf]
      %v2895 = vld [vmem:[#allocation2 + $0x20] sm:$0xf]
      %v2896 = vld [vmem:[#allocation2 + $0x24] sm:$0xf]
      %v2897 = vld [vmem:[#allocation2 + $0x28] sm:$0xf]
      %v2898 = vld [vmem:[#allocation2 + $0x2c] sm:$0xf]
      %v2899 = vld [vmem:[#allocation2 + $0x30] sm:$0xf]
      %v2900 = vld [vmem:[#allocation2 + $0x34] sm:$0xf]
      %v2901 = vld [vmem:[#allocation2 + $0x38] sm:$0xf]
      %v2902 = vld [vmem:[#allocation2 + $0x3c] sm:$0xf]
      %v2903 = vld [vmem:[#allocation2 + $0x40] sm:$0xf]
      %v2904 = vld [vmem:[#allocation2 + $0x44] sm:$0xf]
      %v2905 = vld [vmem:[#allocation2 + $0x48] sm:$0xf]
      %v2906 = vld [vmem:[#allocation2 + $0x4c] sm:$0xf]
      %v2907 = vld [vmem:[#allocation2 + $0x50] sm:$0xf]
      %v2908 = vld [vmem:[#allocation2 + $0x54] sm:$0xf]
      %v2909 = vld [vmem:[#allocation2 + $0x58] sm:$0xf]
      %v2910 = vld [vmem:[#allocation2 + $0x5c] sm:$0xf]
      %v2911 = vld [vmem:[#allocation2 + $0x60] sm:$0xf]
      %v2912 = vld [vmem:[#allocation2 + $0x64] sm:$0xf]
      %v2913 = vld [vmem:[#allocation2 + $0x68] sm:$0xf]
      %v2914 = vld [vmem:[#allocation2 + $0x6c] sm:$0xf]
      %v2915 = vld [vmem:[#allocation2 + $0x70] sm:$0xf]
      %v2916 = vld [vmem:[#allocation2 + $0x74] sm:$0xf]
      %v2917 = vld [vmem:[#allocation2 + $0x78] sm:$0xf]
      %v2918 = vld [vmem:[#allocation2 + $0x7c] sm:$0xf]
      %v2919 = vld [vmem:[#allocation2 + $0x80] sm:$0xf]
      %v2920 = vld [vmem:[#allocation2 + $0x84] sm:$0xf]
      %v2921 = vld [vmem:[#allocation2 + $0x88] sm:$0xf]
      %v2922 = vld [vmem:[#allocation2 + $0x8c] sm:$0xf]
      %v2923 = vld [vmem:[#allocation2 + $0x90] sm:$0xf]
      %v2924 = vld [vmem:[#allocation2 + $0x94] sm:$0xf]
      %v2925 = vld [vmem:[#allocation2 + $0x98] sm:$0x1]
      %s2926 = scalar_lea.vmem %s3, 12
      %v2927 = vld [vmem:[%s2926] sm:$0xf]
      %v2965 = vunpack.c.l.b16 %v2889
      %v2966 = vunpack.c.l.b16 %v2890
      %v2967 = vunpack.c.l.b16 %v2891
      %v2968 = vunpack.c.l.b16 %v2892
      %v2969 = vunpack.c.l.b16 %v2893
      %v2970 = vunpack.c.l.b16 %v2894
      %v2971 = vunpack.c.l.b16 %v2895
      %v2972 = vunpack.c.l.b16 %v2896
      %v2973 = vunpack.c.l.b16 %v2897
      %v2974 = vunpack.c.l.b16 %v2898
      %v2975 = vunpack.c.l.b16 %v2899
      %v2976 = vunpack.c.l.b16 %v2900
      %v2977 = vunpack.c.l.b16 %v2901
      %v2978 = vunpack.c.l.b16 %v2902
      %v2979 = vunpack.c.l.b16 %v2903
      %v2980 = vunpack.c.l.b16 %v2904
      %v2981 = vunpack.c.l.b16 %v2905
      %v2982 = vunpack.c.l.b16 %v2906
      %v2983 = vunpack.c.l.b16 %v2907
      %v2984 = vunpack.c.l.b16 %v2908
      %v2985 = vunpack.c.l.b16 %v2909
      %v2986 = vunpack.c.l.b16 %v2910
      %v2987 = vunpack.c.l.b16 %v2911
      %v2988 = vunpack.c.l.b16 %v2912
      %v2989 = vunpack.c.l.b16 %v2913
      %v2990 = vunpack.c.l.b16 %v2914
      %v2991 = vunpack.c.l.b16 %v2915
      %v2992 = vunpack.c.l.b16 %v2916
      %v2993 = vunpack.c.l.b16 %v2917
      %v2994 = vunpack.c.l.b16 %v2918
      %v2995 = vunpack.c.l.b16 %v2919
      %v2996 = vunpack.c.l.b16 %v2920
      %v2997 = vunpack.c.l.b16 %v2921
      %v2998 = vunpack.c.l.b16 %v2922
      %v2999 = vunpack.c.l.b16 %v2923
      %v3000 = vunpack.c.l.b16 %v2924
      %v3001 = vunpack.c.l.b16 %v2925
      %v3002 = vpack.c.b16 %v2966, %v2965
      %v3003 = vpack.c.b16 %v2968, %v2967
      %v3004 = vpack.c.b16 %v2970, %v2969
      %v3005 = vpack.c.b16 %v2972, %v2971
      %v3006 = vpack.c.b16 %v2974, %v2973
      %v3007 = vpack.c.b16 %v2976, %v2975
      %v3008 = vpack.c.b16 %v2978, %v2977
      %v3009 = vpack.c.b16 %v2980, %v2979
      %v3010 = vpack.c.b16 %v2982, %v2981
      %v3011 = vpack.c.b16 %v2984, %v2983
      %v3012 = vpack.c.b16 %v2986, %v2985
      %v3013 = vpack.c.b16 %v2988, %v2987
      %v3014 = vpack.c.b16 %v2990, %v2989
      %v3015 = vpack.c.b16 %v2992, %v2991
      %v3016 = vpack.c.b16 %v2994, %v2993
      %v3017 = vpack.c.b16 %v2996, %v2995
      %v3018 = vpack.c.b16 %v2998, %v2997
      %v3019 = vpack.c.b16 %v3000, %v2999
      %v3020 = vpack.c.b16 %v3001, %v3001
      %v3021 = vrot.slane %v3002, 1
      %v3022 = vrot.slane %v3003, 1
      %v3023 = vsel %vm2581, %v3021, %v3022
      %v3024 = vrot.slane %v3004, 1
      %v3025 = vsel %vm2581, %v3022, %v3024
      %v3026 = vrot.slane %v3005, 1
      %v3027 = vsel %vm2581, %v3024, %v3026
      %v3028 = vrot.slane %v3006, 1
      %v3029 = vsel %vm2581, %v3026, %v3028
      %v3030 = vrot.slane %v3007, 1
      %v3031 = vsel %vm2581, %v3028, %v3030
      %v3032 = vrot.slane %v3008, 1
      %v3033 = vsel %vm2581, %v3030, %v3032
      %v3034 = vrot.slane %v3009, 1
      %v3035 = vsel %vm2581, %v3032, %v3034
      %v3036 = vrot.slane %v3010, 1
      %v3037 = vsel %vm2581, %v3034, %v3036
      %v3038 = vrot.slane %v3011, 1
      %v3039 = vsel %vm2581, %v3036, %v3038
      %v3040 = vrot.slane %v3012, 1
      %v3041 = vsel %vm2581, %v3038, %v3040
      %v3042 = vrot.slane %v3013, 1
      %v3043 = vsel %vm2581, %v3040, %v3042
      %v3044 = vrot.slane %v3014, 1
      %v3045 = vsel %vm2581, %v3042, %v3044
      %v3046 = vrot.slane %v3015, 1
      %v3047 = vsel %vm2581, %v3044, %v3046
      %v3048 = vrot.slane %v3016, 1
      %v3049 = vsel %vm2581, %v3046, %v3048
      %v3050 = vrot.slane %v3017, 1
      %v3051 = vsel %vm2581, %v3048, %v3050
      %v3052 = vrot.slane %v3018, 1
      %v3053 = vsel %vm2581, %v3050, %v3052
      %v3054 = vrot.slane %v3019, 1
      %v3055 = vsel %vm2581, %v3052, %v3054
      %v3056 = vrot.slane %v3020, 1
      %v3057 = vsel %vm2581, %v3054, %v3056
      %v3059 = vsel %vm2123, %v3023, 0
      %v3062 = vsel %vm2123, %v3025, 0
      %v3065 = vsel %vm2123, %v3027, 0
      %v3068 = vsel %vm2123, %v3029, 0
      %v3071 = vsel %vm2123, %v3031, 0
      %v3074 = vsel %vm2123, %v3033, 0
      %v3077 = vsel %vm2123, %v3035, 0
      %v3080 = vsel %vm2123, %v3037, 0
      %v3083 = vsel %vm2123, %v3039, 0
      %v3086 = vsel %vm2123, %v3041, 0
      %v3089 = vsel %vm2123, %v3043, 0
      %v3092 = vsel %vm2123, %v3045, 0
      %v3095 = vsel %vm2123, %v3047, 0
      %v3098 = vsel %vm2123, %v3049, 0
      %v3101 = vsel %vm2123, %v3051, 0
      %v3104 = vsel %vm2123, %v3053, 0
      %v3107 = vsel %vm2123, %v3055, 0
      %v3110 = vsel %vm2123, %v3057, 0
      %v3113 = vsel %vm2178, %v2927, 0
      %3115 = vmatprep.subr.bf16.mxu0 0
      %3116 = vmatpush1.bf16.msra.mxu0 0
      %3117 = vmatprep.subr.bf16.mxu0 0
      %3118 = vmatpush1.bf16.msra.mxu0 0
      %3119 = vmatprep.subr.bf16.mxu0 0
      %3120 = vmatpush1.bf16.msra.mxu0 0
      %3121 = vmatprep.subr.bf16.mxu0 0
      %3122 = vmatpush1.bf16.msra.mxu0 0
      %3123 = vmatprep.subr.bf16.mxu0 0
      %3124 = vmatpush1.bf16.msra.mxu0 0
      %3125 = vmatprep.subr.bf16.mxu0 0
      %3126 = vmatpush1.bf16.msra.mxu0 0
      %3127 = vmatprep.subr.bf16.mxu0 0
      %3128 = vmatpush1.bf16.msra.mxu0 0
      %3129 = vmatprep.subr.bf16.mxu0 0
      %3130 = vmatpush1.bf16.msra.mxu0 %v3113
      %3131 = vmatprep.subr.bf16.mxu0 0
      %3132 = vmatpush2.bf16.msra.mxu0 0
      %3133 = vmatprep.subr.bf16.mxu0 0
      %3134 = vmatpush2.bf16.msra.mxu0 0
      %3135 = vmatprep.subr.bf16.mxu0 0
      %3136 = vmatpush2.bf16.msra.mxu0 0
      %3137 = vmatprep.subr.bf16.mxu0 0
      %3138 = vmatpush2.bf16.msra.mxu0 0
      %3139 = vmatprep.subr.bf16.mxu0 0
      %3140 = vmatpush2.bf16.msra.mxu0 0
      %3141 = vmatprep.subr.bf16.mxu0 0
      %3142 = vmatpush2.bf16.msra.mxu0 0
      %3143 = vmatprep.subr.bf16.mxu0 0
      %3144 = vmatpush2.bf16.msra.mxu0 0
      %3145 = vmatprep.subr.bf16.mxu0 0
      %3146 = vmatpush2.bf16.msra.mxu0 0
      %3147 = vmatprep.mubr.bf16.mxu0 0
      %3148 = vmatmul.mubr.bf16.gmra.mxu0 %v3059
      %v3149 = vpop.f32.mrf.mxu0
      %v3150 = vadd.f32 0.0, %v3149
      %v3151 = vpop.f32.mrf.mxu0
      %v3152 = vpop.f32.mrf.mxu0
      %v3153 = vadd.f32 0.0, %v3152
      %v3154 = vpop.f32.mrf.mxu0
      %3155 = vmatprep.mubr.bf16.mxu0 0
      %3156 = vmatmul.mubr.bf16.gmra.mxu0 %v3062
      %v3157 = vpop.f32.mrf.mxu0
      %v3158 = vadd.f32 0.0, %v3157
      %v3159 = vpop.f32.mrf.mxu0
      %v3160 = vpop.f32.mrf.mxu0
      %v3161 = vadd.f32 0.0, %v3160
      %v3162 = vpop.f32.mrf.mxu0
      %3163 = vmatprep.mubr.bf16.mxu0 0
      %3164 = vmatmul.mubr.bf16.gmra.mxu0 %v3065
      %v3165 = vpop.f32.mrf.mxu0
      %v3166 = vadd.f32 0.0, %v3165
      %v3167 = vpop.f32.mrf.mxu0
      %v3168 = vpop.f32.mrf.mxu0
      %v3169 = vadd.f32 0.0, %v3168
      %v3170 = vpop.f32.mrf.mxu0
      %3171 = vmatprep.mubr.bf16.mxu0 0
      %3172 = vmatmul.mubr.bf16.gmra.mxu0 %v3068
      %v3173 = vpop.f32.mrf.mxu0
      %v3174 = vadd.f32 0.0, %v3173
      %v3175 = vpop.f32.mrf.mxu0
      %v3176 = vpop.f32.mrf.mxu0
      %v3177 = vadd.f32 0.0, %v3176
      %v3178 = vpop.f32.mrf.mxu0
      %3179 = vmatprep.mubr.bf16.mxu0 0
      %3180 = vmatmul.mubr.bf16.gmra.mxu0 %v3071
      %v3181 = vpop.f32.mrf.mxu0
      %v3182 = vadd.f32 0.0, %v3181
      %v3183 = vpop.f32.mrf.mxu0
      %v3184 = vpop.f32.mrf.mxu0
      %v3185 = vadd.f32 0.0, %v3184
      %v3186 = vpop.f32.mrf.mxu0
      %3187 = vmatprep.mubr.bf16.mxu0 0
      %3188 = vmatmul.mubr.bf16.gmra.mxu0 %v3074
      %v3189 = vpop.f32.mrf.mxu0
      %v3190 = vadd.f32 0.0, %v3189
      %v3191 = vpop.f32.mrf.mxu0
      %v3192 = vpop.f32.mrf.mxu0
      %v3193 = vadd.f32 0.0, %v3192
      %v3194 = vpop.f32.mrf.mxu0
      %3195 = vmatprep.mubr.bf16.mxu0 0
      %3196 = vmatmul.mubr.bf16.gmra.mxu0 %v3077
      %v3197 = vpop.f32.mrf.mxu0
      %v3198 = vadd.f32 0.0, %v3197
      %v3199 = vpop.f32.mrf.mxu0
      %v3200 = vpop.f32.mrf.mxu0
      %v3201 = vadd.f32 0.0, %v3200
      %v3202 = vpop.f32.mrf.mxu0
      %3203 = vmatprep.mubr.bf16.mxu0 0
      %3204 = vmatmul.mubr.bf16.gmra.mxu0 %v3080
      %v3205 = vpop.f32.mrf.mxu0
      %v3206 = vadd.f32 0.0, %v3205
      %v3207 = vpop.f32.mrf.mxu0
      %v3208 = vpop.f32.mrf.mxu0
      %v3209 = vadd.f32 0.0, %v3208
      %v3210 = vpop.f32.mrf.mxu0
      %3211 = vmatprep.mubr.bf16.mxu0 0
      %3212 = vmatmul.mubr.bf16.gmra.mxu0 %v3083
      %v3213 = vpop.f32.mrf.mxu0
      %v3214 = vadd.f32 0.0, %v3213
      %v3215 = vpop.f32.mrf.mxu0
      %v3216 = vpop.f32.mrf.mxu0
      %v3217 = vadd.f32 0.0, %v3216
      %v3218 = vpop.f32.mrf.mxu0
      %3219 = vmatprep.mubr.bf16.mxu0 0
      %3220 = vmatmul.mubr.bf16.gmra.mxu0 %v3086
      %v3221 = vpop.f32.mrf.mxu0
      %v3222 = vadd.f32 0.0, %v3221
      %v3223 = vpop.f32.mrf.mxu0
      %v3224 = vpop.f32.mrf.mxu0
      %v3225 = vadd.f32 0.0, %v3224
      %v3226 = vpop.f32.mrf.mxu0
      %3227 = vmatprep.mubr.bf16.mxu0 0
      %3228 = vmatmul.mubr.bf16.gmra.mxu0 %v3089
      %v3229 = vpop.f32.mrf.mxu0
      %v3230 = vadd.f32 0.0, %v3229
      %v3231 = vpop.f32.mrf.mxu0
      %v3232 = vpop.f32.mrf.mxu0
      %v3233 = vadd.f32 0.0, %v3232
      %v3234 = vpop.f32.mrf.mxu0
      %3235 = vmatprep.mubr.bf16.mxu0 0
      %3236 = vmatmul.mubr.bf16.gmra.mxu0 %v3092
      %v3237 = vpop.f32.mrf.mxu0
      %v3238 = vadd.f32 0.0, %v3237
      %v3239 = vpop.f32.mrf.mxu0
      %v3240 = vpop.f32.mrf.mxu0
      %v3241 = vadd.f32 0.0, %v3240
      %v3242 = vpop.f32.mrf.mxu0
      %3243 = vmatprep.mubr.bf16.mxu0 0
      %3244 = vmatmul.mubr.bf16.gmra.mxu0 %v3095
      %v3245 = vpop.f32.mrf.mxu0
      %v3246 = vadd.f32 0.0, %v3245
      %v3247 = vpop.f32.mrf.mxu0
      %v3248 = vpop.f32.mrf.mxu0
      %v3249 = vadd.f32 0.0, %v3248
      %v3250 = vpop.f32.mrf.mxu0
      %3251 = vmatprep.mubr.bf16.mxu0 0
      %3252 = vmatmul.mubr.bf16.gmra.mxu0 %v3098
      %v3253 = vpop.f32.mrf.mxu0
      %v3254 = vadd.f32 0.0, %v3253
      %v3255 = vpop.f32.mrf.mxu0
      %v3256 = vpop.f32.mrf.mxu0
      %v3257 = vadd.f32 0.0, %v3256
      %v3258 = vpop.f32.mrf.mxu0
      %3259 = vmatprep.mubr.bf16.mxu0 0
      %3260 = vmatmul.mubr.bf16.gmra.mxu0 %v3101
      %v3261 = vpop.f32.mrf.mxu0
      %v3262 = vadd.f32 0.0, %v3261
      %v3263 = vpop.f32.mrf.mxu0
      %v3264 = vpop.f32.mrf.mxu0
      %v3265 = vadd.f32 0.0, %v3264
      %v3266 = vpop.f32.mrf.mxu0
      %3267 = vmatprep.mubr.bf16.mxu0 0
      %3268 = vmatmul.mubr.bf16.gmra.mxu0 %v3104
      %v3269 = vpop.f32.mrf.mxu0
      %v3270 = vadd.f32 0.0, %v3269
      %v3271 = vpop.f32.mrf.mxu0
      %v3272 = vpop.f32.mrf.mxu0
      %v3273 = vadd.f32 0.0, %v3272
      %v3274 = vpop.f32.mrf.mxu0
      %3275 = vmatprep.mubr.bf16.mxu0 0
      %3276 = vmatmul.mubr.bf16.gmra.mxu0 %v3107
      %v3277 = vpop.f32.mrf.mxu0
      %v3278 = vadd.f32 0.0, %v3277
      %v3279 = vpop.f32.mrf.mxu0
      %v3280 = vpop.f32.mrf.mxu0
      %v3281 = vadd.f32 0.0, %v3280
      %v3282 = vpop.f32.mrf.mxu0
      %3283 = vmatprep.mubr.bf16.mxu0 0
      %3284 = vmatmul.mubr.bf16.gmra.mxu0 %v3110
      %v3285 = vpop.f32.mrf.mxu0
      %v3286 = vadd.f32 0.0, %v3285
      %v3287 = vpop.f32.mrf.mxu0
      %v3288 = vpop.f32.mrf.mxu0
      %v3289 = vadd.f32 0.0, %v3288
      %v3290 = vpop.f32.mrf.mxu0
      %3291 = vdwg.mxu0
      %v3292 = vadd.f32 %v2853, %v3150
      %v3293 = vadd.f32 %v2854, %v3153
      %v3294 = vadd.f32 %v2855, %v3158
      %v3295 = vadd.f32 %v2856, %v3161
      %v3296 = vadd.f32 %v2857, %v3166
      %v3297 = vadd.f32 %v2858, %v3169
      %v3298 = vadd.f32 %v2859, %v3174
      %v3299 = vadd.f32 %v2860, %v3177
      %v3300 = vadd.f32 %v2861, %v3182
      %v3301 = vadd.f32 %v2862, %v3185
      %v3302 = vadd.f32 %v2863, %v3190
      %v3303 = vadd.f32 %v2864, %v3193
      %v3304 = vadd.f32 %v2865, %v3198
      %v3305 = vadd.f32 %v2866, %v3201
      %v3306 = vadd.f32 %v2867, %v3206
      %v3307 = vadd.f32 %v2868, %v3209
      %v3308 = vadd.f32 %v2869, %v3214
      %v3309 = vadd.f32 %v2870, %v3217
      %v3310 = vadd.f32 %v2871, %v3222
      %v3311 = vadd.f32 %v2872, %v3225
      %v3312 = vadd.f32 %v2873, %v3230
      %v3313 = vadd.f32 %v2874, %v3233
      %v3314 = vadd.f32 %v2875, %v3238
      %v3315 = vadd.f32 %v2876, %v3241
      %v3316 = vadd.f32 %v2877, %v3246
      %v3317 = vadd.f32 %v2878, %v3249
      %v3318 = vadd.f32 %v2879, %v3254
      %v3319 = vadd.f32 %v2880, %v3257
      %v3320 = vadd.f32 %v2881, %v3262
      %v3321 = vadd.f32 %v2882, %v3265
      %v3322 = vadd.f32 %v2883, %v3270
      %v3323 = vadd.f32 %v2884, %v3273
      %v3324 = vadd.f32 %v2885, %v3278
      %v3325 = vadd.f32 %v2886, %v3281
      %v3326 = vadd.f32 %v2887, %v3286
      %v3327 = vadd.f32 %v2888, %v3289
      %v3328 = vld [vmem:[#allocation2 + $0x98] sm:$0x3]
      %s3329 = scalar_lea.vmem %s3, 16
      %v3330 = vld [vmem:[%s3329] sm:$0xf]
      %v3332 = vunpack.c.l.b16 %v3328
      %v3333 = vpack.c.b16 %v3332, %v3332
      %vm3334 = vsmask.f32 6400
      %v3336 = vshrl.u32 %v3002, 16
      %v3338 = vrot.slane %v3336, 1
      %v3339 = vshll.u32 %v3002, 16
      %v3341 = vrot.slane %v3339, 2
      %v3342 = vor.u32 %v3338, %v3341
      %v3344 = vshrl.u32 %v3003, 16
      %v3346 = vrot.slane %v3344, 1
      %v3347 = vshll.u32 %v3003, 16
      %v3349 = vrot.slane %v3347, 2
      %v3350 = vor.u32 %v3346, %v3349
      %v3351 = vsel %vm3334, %v3342, %v3350
      %v3353 = vshrl.u32 %v3004, 16
      %v3355 = vrot.slane %v3353, 1
      %v3356 = vshll.u32 %v3004, 16
      %v3358 = vrot.slane %v3356, 2
      %v3359 = vor.u32 %v3355, %v3358
      %v3360 = vsel %vm3334, %v3350, %v3359
      %v3362 = vshrl.u32 %v3005, 16
      %v3364 = vrot.slane %v3362, 1
      %v3365 = vshll.u32 %v3005, 16
      %v3367 = vrot.slane %v3365, 2
      %v3368 = vor.u32 %v3364, %v3367
      %v3369 = vsel %vm3334, %v3359, %v3368
      %v3371 = vshrl.u32 %v3006, 16
      %v3373 = vrot.slane %v3371, 1
      %v3374 = vshll.u32 %v3006, 16
      %v3376 = vrot.slane %v3374, 2
      %v3377 = vor.u32 %v3373, %v3376
      %v3378 = vsel %vm3334, %v3368, %v3377
      %v3380 = vshrl.u32 %v3007, 16
      %v3382 = vrot.slane %v3380, 1
      %v3383 = vshll.u32 %v3007, 16
      %v3385 = vrot.slane %v3383, 2
      %v3386 = vor.u32 %v3382, %v3385
      %v3387 = vsel %vm3334, %v3377, %v3386
      %v3389 = vshrl.u32 %v3008, 16
      %v3391 = vrot.slane %v3389, 1
      %v3392 = vshll.u32 %v3008, 16
      %v3394 = vrot.slane %v3392, 2
      %v3395 = vor.u32 %v3391, %v3394
      %v3396 = vsel %vm3334, %v3386, %v3395
      %v3398 = vshrl.u32 %v3009, 16
      %v3400 = vrot.slane %v3398, 1
      %v3401 = vshll.u32 %v3009, 16
      %v3403 = vrot.slane %v3401, 2
      %v3404 = vor.u32 %v3400, %v3403
      %v3405 = vsel %vm3334, %v3395, %v3404
      %v3407 = vshrl.u32 %v3010, 16
      %v3409 = vrot.slane %v3407, 1
      %v3410 = vshll.u32 %v3010, 16
      %v3412 = vrot.slane %v3410, 2
      %v3413 = vor.u32 %v3409, %v3412
      %v3414 = vsel %vm3334, %v3404, %v3413
      %v3416 = vshrl.u32 %v3011, 16
      %v3418 = vrot.slane %v3416, 1
      %v3419 = vshll.u32 %v3011, 16
      %v3421 = vrot.slane %v3419, 2
      %v3422 = vor.u32 %v3418, %v3421
      %v3423 = vsel %vm3334, %v3413, %v3422
      %v3425 = vshrl.u32 %v3012, 16
      %v3427 = vrot.slane %v3425, 1
      %v3428 = vshll.u32 %v3012, 16
      %v3430 = vrot.slane %v3428, 2
      %v3431 = vor.u32 %v3427, %v3430
      %v3432 = vsel %vm3334, %v3422, %v3431
      %v3434 = vshrl.u32 %v3013, 16
      %v3436 = vrot.slane %v3434, 1
      %v3437 = vshll.u32 %v3013, 16
      %v3439 = vrot.slane %v3437, 2
      %v3440 = vor.u32 %v3436, %v3439
      %v3441 = vsel %vm3334, %v3431, %v3440
      %v3443 = vshrl.u32 %v3014, 16
      %v3445 = vrot.slane %v3443, 1
      %v3446 = vshll.u32 %v3014, 16
      %v3448 = vrot.slane %v3446, 2
      %v3449 = vor.u32 %v3445, %v3448
      %v3450 = vsel %vm3334, %v3440, %v3449
      %v3452 = vshrl.u32 %v3015, 16
      %v3454 = vrot.slane %v3452, 1
      %v3455 = vshll.u32 %v3015, 16
      %v3457 = vrot.slane %v3455, 2
      %v3458 = vor.u32 %v3454, %v3457
      %v3459 = vsel %vm3334, %v3449, %v3458
      %v3461 = vshrl.u32 %v3016, 16
      %v3463 = vrot.slane %v3461, 1
      %v3464 = vshll.u32 %v3016, 16
      %v3466 = vrot.slane %v3464, 2
      %v3467 = vor.u32 %v3463, %v3466
      %v3468 = vsel %vm3334, %v3458, %v3467
      %v3470 = vshrl.u32 %v3017, 16
      %v3472 = vrot.slane %v3470, 1
      %v3473 = vshll.u32 %v3017, 16
      %v3475 = vrot.slane %v3473, 2
      %v3476 = vor.u32 %v3472, %v3475
      %v3477 = vsel %vm3334, %v3467, %v3476
      %v3479 = vshrl.u32 %v3018, 16
      %v3481 = vrot.slane %v3479, 1
      %v3482 = vshll.u32 %v3018, 16
      %v3484 = vrot.slane %v3482, 2
      %v3485 = vor.u32 %v3481, %v3484
      %v3486 = vsel %vm3334, %v3476, %v3485
      %v3488 = vshrl.u32 %v3019, 16
      %v3490 = vrot.slane %v3488, 1
      %v3491 = vshll.u32 %v3019, 16
      %v3493 = vrot.slane %v3491, 2
      %v3494 = vor.u32 %v3490, %v3493
      %v3495 = vsel %vm3334, %v3485, %v3494
      %v3497 = vshrl.u32 %v3333, 16
      %v3499 = vrot.slane %v3497, 1
      %v3500 = vshll.u32 %v3333, 16
      %v3502 = vrot.slane %v3500, 2
      %v3503 = vor.u32 %v3499, %v3502
      %v3504 = vsel %vm3334, %v3494, %v3503
      %v3506 = vsel %vm2123, %v3351, 0
      %v3509 = vsel %vm2123, %v3360, 0
      %v3512 = vsel %vm2123, %v3369, 0
      %v3515 = vsel %vm2123, %v3378, 0
      %v3518 = vsel %vm2123, %v3387, 0
      %v3521 = vsel %vm2123, %v3396, 0
      %v3524 = vsel %vm2123, %v3405, 0
      %v3527 = vsel %vm2123, %v3414, 0
      %v3530 = vsel %vm2123, %v3423, 0
      %v3533 = vsel %vm2123, %v3432, 0
      %v3536 = vsel %vm2123, %v3441, 0
      %v3539 = vsel %vm2123, %v3450, 0
      %v3542 = vsel %vm2123, %v3459, 0
      %v3545 = vsel %vm2123, %v3468, 0
      %v3548 = vsel %vm2123, %v3477, 0
      %v3551 = vsel %vm2123, %v3486, 0
      %v3554 = vsel %vm2123, %v3495, 0
      %v3557 = vsel %vm2123, %v3504, 0
      %v3560 = vsel %vm2178, %v3330, 0
      %3562 = vmatprep.subr.bf16.mxu0 0
      %3563 = vmatpush1.bf16.msra.mxu0 0
      %3564 = vmatprep.subr.bf16.mxu0 0
      %3565 = vmatpush1.bf16.msra.mxu0 0
      %3566 = vmatprep.subr.bf16.mxu0 0
      %3567 = vmatpush1.bf16.msra.mxu0 0
      %3568 = vmatprep.subr.bf16.mxu0 0
      %3569 = vmatpush1.bf16.msra.mxu0 0
      %3570 = vmatprep.subr.bf16.mxu0 0
      %3571 = vmatpush1.bf16.msra.mxu0 0
      %3572 = vmatprep.subr.bf16.mxu0 0
      %3573 = vmatpush1.bf16.msra.mxu0 0
      %3574 = vmatprep.subr.bf16.mxu0 0
      %3575 = vmatpush1.bf16.msra.mxu0 0
      %3576 = vmatprep.subr.bf16.mxu0 0
      %3577 = vmatpush1.bf16.msra.mxu0 %v3560
      %3578 = vmatprep.subr.bf16.mxu0 0
      %3579 = vmatpush2.bf16.msra.mxu0 0
      %3580 = vmatprep.subr.bf16.mxu0 0
      %3581 = vmatpush2.bf16.msra.mxu0 0
      %3582 = vmatprep.subr.bf16.mxu0 0
      %3583 = vmatpush2.bf16.msra.mxu0 0
      %3584 = vmatprep.subr.bf16.mxu0 0
      %3585 = vmatpush2.bf16.msra.mxu0 0
      %3586 = vmatprep.subr.bf16.mxu0 0
      %3587 = vmatpush2.bf16.msra.mxu0 0
      %3588 = vmatprep.subr.bf16.mxu0 0
      %3589 = vmatpush2.bf16.msra.mxu0 0
      %3590 = vmatprep.subr.bf16.mxu0 0
      %3591 = vmatpush2.bf16.msra.mxu0 0
      %3592 = vmatprep.subr.bf16.mxu0 0
      %3593 = vmatpush2.bf16.msra.mxu0 0
      %3594 = vmatprep.mubr.bf16.mxu0 0
      %3595 = vmatmul.mubr.bf16.gmra.mxu0 %v3506
      %v3596 = vpop.f32.mrf.mxu0
      %v3597 = vadd.f32 0.0, %v3596
      %v3598 = vpop.f32.mrf.mxu0
      %v3599 = vpop.f32.mrf.mxu0
      %v3600 = vadd.f32 0.0, %v3599
      %v3601 = vpop.f32.mrf.mxu0
      %3602 = vmatprep.mubr.bf16.mxu0 0
      %3603 = vmatmul.mubr.bf16.gmra.mxu0 %v3509
      %v3604 = vpop.f32.mrf.mxu0
      %v3605 = vadd.f32 0.0, %v3604
      %v3606 = vpop.f32.mrf.mxu0
      %v3607 = vpop.f32.mrf.mxu0
      %v3608 = vadd.f32 0.0, %v3607
      %v3609 = vpop.f32.mrf.mxu0
      %3610 = vmatprep.mubr.bf16.mxu0 0
      %3611 = vmatmul.mubr.bf16.gmra.mxu0 %v3512
      %v3612 = vpop.f32.mrf.mxu0
      %v3613 = vadd.f32 0.0, %v3612
      %v3614 = vpop.f32.mrf.mxu0
      %v3615 = vpop.f32.mrf.mxu0
      %v3616 = vadd.f32 0.0, %v3615
      %v3617 = vpop.f32.mrf.mxu0
      %3618 = vmatprep.mubr.bf16.mxu0 0
      %3619 = vmatmul.mubr.bf16.gmra.mxu0 %v3515
      %v3620 = vpop.f32.mrf.mxu0
      %v3621 = vadd.f32 0.0, %v3620
      %v3622 = vpop.f32.mrf.mxu0
      %v3623 = vpop.f32.mrf.mxu0
      %v3624 = vadd.f32 0.0, %v3623
      %v3625 = vpop.f32.mrf.mxu0
      %3626 = vmatprep.mubr.bf16.mxu0 0
      %3627 = vmatmul.mubr.bf16.gmra.mxu0 %v3518
      %v3628 = vpop.f32.mrf.mxu0
      %v3629 = vadd.f32 0.0, %v3628
      %v3630 = vpop.f32.mrf.mxu0
      %v3631 = vpop.f32.mrf.mxu0
      %v3632 = vadd.f32 0.0, %v3631
      %v3633 = vpop.f32.mrf.mxu0
      %3634 = vmatprep.mubr.bf16.mxu0 0
      %3635 = vmatmul.mubr.bf16.gmra.mxu0 %v3521
      %v3636 = vpop.f32.mrf.mxu0
      %v3637 = vadd.f32 0.0, %v3636
      %v3638 = vpop.f32.mrf.mxu0
      %v3639 = vpop.f32.mrf.mxu0
      %v3640 = vadd.f32 0.0, %v3639
      %v3641 = vpop.f32.mrf.mxu0
      %3642 = vmatprep.mubr.bf16.mxu0 0
      %3643 = vmatmul.mubr.bf16.gmra.mxu0 %v3524
      %v3644 = vpop.f32.mrf.mxu0
      %v3645 = vadd.f32 0.0, %v3644
      %v3646 = vpop.f32.mrf.mxu0
      %v3647 = vpop.f32.mrf.mxu0
      %v3648 = vadd.f32 0.0, %v3647
      %v3649 = vpop.f32.mrf.mxu0
      %3650 = vmatprep.mubr.bf16.mxu0 0
      %3651 = vmatmul.mubr.bf16.gmra.mxu0 %v3527
      %v3652 = vpop.f32.mrf.mxu0
      %v3653 = vadd.f32 0.0, %v3652
      %v3654 = vpop.f32.mrf.mxu0
      %v3655 = vpop.f32.mrf.mxu0
      %v3656 = vadd.f32 0.0, %v3655
      %v3657 = vpop.f32.mrf.mxu0
      %3658 = vmatprep.mubr.bf16.mxu0 0
      %3659 = vmatmul.mubr.bf16.gmra.mxu0 %v3530
      %v3660 = vpop.f32.mrf.mxu0
      %v3661 = vadd.f32 0.0, %v3660
      %v3662 = vpop.f32.mrf.mxu0
      %v3663 = vpop.f32.mrf.mxu0
      %v3664 = vadd.f32 0.0, %v3663
      %v3665 = vpop.f32.mrf.mxu0
      %3666 = vmatprep.mubr.bf16.mxu0 0
      %3667 = vmatmul.mubr.bf16.gmra.mxu0 %v3533
      %v3668 = vpop.f32.mrf.mxu0
      %v3669 = vadd.f32 0.0, %v3668
      %v3670 = vpop.f32.mrf.mxu0
      %v3671 = vpop.f32.mrf.mxu0
      %v3672 = vadd.f32 0.0, %v3671
      %v3673 = vpop.f32.mrf.mxu0
      %3674 = vmatprep.mubr.bf16.mxu0 0
      %3675 = vmatmul.mubr.bf16.gmra.mxu0 %v3536
      %v3676 = vpop.f32.mrf.mxu0
      %v3677 = vadd.f32 0.0, %v3676
      %v3678 = vpop.f32.mrf.mxu0
      %v3679 = vpop.f32.mrf.mxu0
      %v3680 = vadd.f32 0.0, %v3679
      %v3681 = vpop.f32.mrf.mxu0
      %3682 = vmatprep.mubr.bf16.mxu0 0
      %3683 = vmatmul.mubr.bf16.gmra.mxu0 %v3539
      %v3684 = vpop.f32.mrf.mxu0
      %v3685 = vadd.f32 0.0, %v3684
      %v3686 = vpop.f32.mrf.mxu0
      %v3687 = vpop.f32.mrf.mxu0
      %v3688 = vadd.f32 0.0, %v3687
      %v3689 = vpop.f32.mrf.mxu0
      %3690 = vmatprep.mubr.bf16.mxu0 0
      %3691 = vmatmul.mubr.bf16.gmra.mxu0 %v3542
      %v3692 = vpop.f32.mrf.mxu0
      %v3693 = vadd.f32 0.0, %v3692
      %v3694 = vpop.f32.mrf.mxu0
      %v3695 = vpop.f32.mrf.mxu0
      %v3696 = vadd.f32 0.0, %v3695
      %v3697 = vpop.f32.mrf.mxu0
      %3698 = vmatprep.mubr.bf16.mxu0 0
      %3699 = vmatmul.mubr.bf16.gmra.mxu0 %v3545
      %v3700 = vpop.f32.mrf.mxu0
      %v3701 = vadd.f32 0.0, %v3700
      %v3702 = vpop.f32.mrf.mxu0
      %v3703 = vpop.f32.mrf.mxu0
      %v3704 = vadd.f32 0.0, %v3703
      %v3705 = vpop.f32.mrf.mxu0
      %3706 = vmatprep.mubr.bf16.mxu0 0
      %3707 = vmatmul.mubr.bf16.gmra.mxu0 %v3548
      %v3708 = vpop.f32.mrf.mxu0
      %v3709 = vadd.f32 0.0, %v3708
      %v3710 = vpop.f32.mrf.mxu0
      %v3711 = vpop.f32.mrf.mxu0
      %v3712 = vadd.f32 0.0, %v3711
      %v3713 = vpop.f32.mrf.mxu0
      %3714 = vmatprep.mubr.bf16.mxu0 0
      %3715 = vmatmul.mubr.bf16.gmra.mxu0 %v3551
      %v3716 = vpop.f32.mrf.mxu0
      %v3717 = vadd.f32 0.0, %v3716
      %v3718 = vpop.f32.mrf.mxu0
      %v3719 = vpop.f32.mrf.mxu0
      %v3720 = vadd.f32 0.0, %v3719
      %v3721 = vpop.f32.mrf.mxu0
      %3722 = vmatprep.mubr.bf16.mxu0 0
      %3723 = vmatmul.mubr.bf16.gmra.mxu0 %v3554
      %v3724 = vpop.f32.mrf.mxu0
      %v3725 = vadd.f32 0.0, %v3724
      %v3726 = vpop.f32.mrf.mxu0
      %v3727 = vpop.f32.mrf.mxu0
      %v3728 = vadd.f32 0.0, %v3727
      %v3729 = vpop.f32.mrf.mxu0
      %3730 = vmatprep.mubr.bf16.mxu0 0
      %3731 = vmatmul.mubr.bf16.gmra.mxu0 %v3557
      %v3732 = vpop.f32.mrf.mxu0
      %v3733 = vadd.f32 0.0, %v3732
      %v3734 = vpop.f32.mrf.mxu0
      %v3735 = vpop.f32.mrf.mxu0
      %v3736 = vadd.f32 0.0, %v3735
      %v3737 = vpop.f32.mrf.mxu0
      %3738 = vdwg.mxu0
      %v3739 = vadd.f32 %v3292, %v3597
      %v3740 = vadd.f32 %v3293, %v3600
      %v3741 = vadd.f32 %v3294, %v3605
      %v3742 = vadd.f32 %v3295, %v3608
      %v3743 = vadd.f32 %v3296, %v3613
      %v3744 = vadd.f32 %v3297, %v3616
      %v3745 = vadd.f32 %v3298, %v3621
      %v3746 = vadd.f32 %v3299, %v3624
      %v3747 = vadd.f32 %v3300, %v3629
      %v3748 = vadd.f32 %v3301, %v3632
      %v3749 = vadd.f32 %v3302, %v3637
      %v3750 = vadd.f32 %v3303, %v3640
      %v3751 = vadd.f32 %v3304, %v3645
      %v3752 = vadd.f32 %v3305, %v3648
      %v3753 = vadd.f32 %v3306, %v3653
      %v3754 = vadd.f32 %v3307, %v3656
      %v3755 = vadd.f32 %v3308, %v3661
      %v3756 = vadd.f32 %v3309, %v3664
      %v3757 = vadd.f32 %v3310, %v3669
      %v3758 = vadd.f32 %v3311, %v3672
      %v3759 = vadd.f32 %v3312, %v3677
      %v3760 = vadd.f32 %v3313, %v3680
      %v3761 = vadd.f32 %v3314, %v3685
      %v3762 = vadd.f32 %v3315, %v3688
      %v3763 = vadd.f32 %v3316, %v3693
      %v3764 = vadd.f32 %v3317, %v3696
      %v3765 = vadd.f32 %v3318, %v3701
      %v3766 = vadd.f32 %v3319, %v3704
      %v3767 = vadd.f32 %v3320, %v3709
      %v3768 = vadd.f32 %v3321, %v3712
      %v3769 = vadd.f32 %v3322, %v3717
      %v3770 = vadd.f32 %v3323, %v3720
      %v3771 = vadd.f32 %v3324, %v3725
      %v3772 = vadd.f32 %v3325, %v3728
      %v3773 = vadd.f32 %v3326, %v3733
      %v3774 = vadd.f32 %v3327, %v3736
      %v3775 = vld [vmem:[#allocation2 + $0x8] sm:$0xc]
      %s3776 = scalar_lea.vmem %s3, 20
      %v3777 = vld [vmem:[%s3776] sm:$0xf]
      %v3779 = vunpack.c.l.b16 %v3775
      %v3780 = vpack.c.b16 %v2966, %v3779
      %vm3781 = vcmask 1045504
      %v3782 = vrot.slane %v3780, 2
      %v3783 = vrot.slane %v3003, 2
      %v3784 = vsel %vm3781, %v3782, %v3783
      %v3785 = vrot.slane %v3004, 2
      %v3786 = vsel %vm3781, %v3783, %v3785
      %v3787 = vrot.slane %v3005, 2
      %v3788 = vsel %vm3781, %v3785, %v3787
      %v3789 = vrot.slane %v3006, 2
      %v3790 = vsel %vm3781, %v3787, %v3789
      %v3791 = vrot.slane %v3007, 2
      %v3792 = vsel %vm3781, %v3789, %v3791
      %v3793 = vrot.slane %v3008, 2
      %v3794 = vsel %vm3781, %v3791, %v3793
      %v3795 = vrot.slane %v3009, 2
      %v3796 = vsel %vm3781, %v3793, %v3795
      %v3797 = vrot.slane %v3010, 2
      %v3798 = vsel %vm3781, %v3795, %v3797
      %v3799 = vrot.slane %v3011, 2
      %v3800 = vsel %vm3781, %v3797, %v3799
      %v3801 = vrot.slane %v3012, 2
      %v3802 = vsel %vm3781, %v3799, %v3801
      %v3803 = vrot.slane %v3013, 2
      %v3804 = vsel %vm3781, %v3801, %v3803
      %v3805 = vrot.slane %v3014, 2
      %v3806 = vsel %vm3781, %v3803, %v3805
      %v3807 = vrot.slane %v3015, 2
      %v3808 = vsel %vm3781, %v3805, %v3807
      %v3809 = vrot.slane %v3016, 2
      %v3810 = vsel %vm3781, %v3807, %v3809
      %v3811 = vrot.slane %v3017, 2
      %v3812 = vsel %vm3781, %v3809, %v3811
      %v3813 = vrot.slane %v3018, 2
      %v3814 = vsel %vm3781, %v3811, %v3813
      %v3815 = vrot.slane %v3019, 2
      %v3816 = vsel %vm3781, %v3813, %v3815
      %v3817 = vrot.slane %v3333, 2
      %v3818 = vsel %vm3781, %v3815, %v3817
      %v3820 = vsel %vm2123, %v3784, 0
      %v3823 = vsel %vm2123, %v3786, 0
      %v3826 = vsel %vm2123, %v3788, 0
      %v3829 = vsel %vm2123, %v3790, 0
      %v3832 = vsel %vm2123, %v3792, 0
      %v3835 = vsel %vm2123, %v3794, 0
      %v3838 = vsel %vm2123, %v3796, 0
      %v3841 = vsel %vm2123, %v3798, 0
      %v3844 = vsel %vm2123, %v3800, 0
      %v3847 = vsel %vm2123, %v3802, 0
      %v3850 = vsel %vm2123, %v3804, 0
      %v3853 = vsel %vm2123, %v3806, 0
      %v3856 = vsel %vm2123, %v3808, 0
      %v3859 = vsel %vm2123, %v3810, 0
      %v3862 = vsel %vm2123, %v3812, 0
      %v3865 = vsel %vm2123, %v3814, 0
      %v3868 = vsel %vm2123, %v3816, 0
      %v3871 = vsel %vm2123, %v3818, 0
      %v3874 = vsel %vm2178, %v3777, 0
      %3876 = vmatprep.subr.bf16.mxu0 0
      %3877 = vmatpush1.bf16.msra.mxu0 0
      %3878 = vmatprep.subr.bf16.mxu0 0
      %3879 = vmatpush1.bf16.msra.mxu0 0
      %3880 = vmatprep.subr.bf16.mxu0 0
      %3881 = vmatpush1.bf16.msra.mxu0 0
      %3882 = vmatprep.subr.bf16.mxu0 0
      %3883 = vmatpush1.bf16.msra.mxu0 0
      %3884 = vmatprep.subr.bf16.mxu0 0
      %3885 = vmatpush1.bf16.msra.mxu0 0
      %3886 = vmatprep.subr.bf16.mxu0 0
      %3887 = vmatpush1.bf16.msra.mxu0 0
      %3888 = vmatprep.subr.bf16.mxu0 0
      %3889 = vmatpush1.bf16.msra.mxu0 0
      %3890 = vmatprep.subr.bf16.mxu0 0
      %3891 = vmatpush1.bf16.msra.mxu0 %v3874
      %3892 = vmatprep.subr.bf16.mxu0 0
      %3893 = vmatpush2.bf16.msra.mxu0 0
      %3894 = vmatprep.subr.bf16.mxu0 0
      %3895 = vmatpush2.bf16.msra.mxu0 0
      %3896 = vmatprep.subr.bf16.mxu0 0
      %3897 = vmatpush2.bf16.msra.mxu0 0
      %3898 = vmatprep.subr.bf16.mxu0 0
      %3899 = vmatpush2.bf16.msra.mxu0 0
      %3900 = vmatprep.subr.bf16.mxu0 0
      %3901 = vmatpush2.bf16.msra.mxu0 0
      %3902 = vmatprep.subr.bf16.mxu0 0
      %3903 = vmatpush2.bf16.msra.mxu0 0
      %3904 = vmatprep.subr.bf16.mxu0 0
      %3905 = vmatpush2.bf16.msra.mxu0 0
      %3906 = vmatprep.subr.bf16.mxu0 0
      %3907 = vmatpush2.bf16.msra.mxu0 0
      %3908 = vmatprep.mubr.bf16.mxu0 0
      %3909 = vmatmul.mubr.bf16.gmra.mxu0 %v3820
      %v3910 = vpop.f32.mrf.mxu0
      %v3911 = vadd.f32 0.0, %v3910
      %v3912 = vpop.f32.mrf.mxu0
      %v3913 = vpop.f32.mrf.mxu0
      %v3914 = vadd.f32 0.0, %v3913
      %v3915 = vpop.f32.mrf.mxu0
      %3916 = vmatprep.mubr.bf16.mxu0 0
      %3917 = vmatmul.mubr.bf16.gmra.mxu0 %v3823
      %v3918 = vpop.f32.mrf.mxu0
      %v3919 = vadd.f32 0.0, %v3918
      %v3920 = vpop.f32.mrf.mxu0
      %v3921 = vpop.f32.mrf.mxu0
      %v3922 = vadd.f32 0.0, %v3921
      %v3923 = vpop.f32.mrf.mxu0
      %3924 = vmatprep.mubr.bf16.mxu0 0
      %3925 = vmatmul.mubr.bf16.gmra.mxu0 %v3826
      %v3926 = vpop.f32.mrf.mxu0
      %v3927 = vadd.f32 0.0, %v3926
      %v3928 = vpop.f32.mrf.mxu0
      %v3929 = vpop.f32.mrf.mxu0
      %v3930 = vadd.f32 0.0, %v3929
      %v3931 = vpop.f32.mrf.mxu0
      %3932 = vmatprep.mubr.bf16.mxu0 0
      %3933 = vmatmul.mubr.bf16.gmra.mxu0 %v3829
      %v3934 = vpop.f32.mrf.mxu0
      %v3935 = vadd.f32 0.0, %v3934
      %v3936 = vpop.f32.mrf.mxu0
      %v3937 = vpop.f32.mrf.mxu0
      %v3938 = vadd.f32 0.0, %v3937
      %v3939 = vpop.f32.mrf.mxu0
      %3940 = vmatprep.mubr.bf16.mxu0 0
      %3941 = vmatmul.mubr.bf16.gmra.mxu0 %v3832
      %v3942 = vpop.f32.mrf.mxu0
      %v3943 = vadd.f32 0.0, %v3942
      %v3944 = vpop.f32.mrf.mxu0
      %v3945 = vpop.f32.mrf.mxu0
      %v3946 = vadd.f32 0.0, %v3945
      %v3947 = vpop.f32.mrf.mxu0
      %3948 = vmatprep.mubr.bf16.mxu0 0
      %3949 = vmatmul.mubr.bf16.gmra.mxu0 %v3835
      %v3950 = vpop.f32.mrf.mxu0
      %v3951 = vadd.f32 0.0, %v3950
      %v3952 = vpop.f32.mrf.mxu0
      %v3953 = vpop.f32.mrf.mxu0
      %v3954 = vadd.f32 0.0, %v3953
      %v3955 = vpop.f32.mrf.mxu0
      %3956 = vmatprep.mubr.bf16.mxu0 0
      %3957 = vmatmul.mubr.bf16.gmra.mxu0 %v3838
      %v3958 = vpop.f32.mrf.mxu0
      %v3959 = vadd.f32 0.0, %v3958
      %v3960 = vpop.f32.mrf.mxu0
      %v3961 = vpop.f32.mrf.mxu0
      %v3962 = vadd.f32 0.0, %v3961
      %v3963 = vpop.f32.mrf.mxu0
      %3964 = vmatprep.mubr.bf16.mxu0 0
      %3965 = vmatmul.mubr.bf16.gmra.mxu0 %v3841
      %v3966 = vpop.f32.mrf.mxu0
      %v3967 = vadd.f32 0.0, %v3966
      %v3968 = vpop.f32.mrf.mxu0
      %v3969 = vpop.f32.mrf.mxu0
      %v3970 = vadd.f32 0.0, %v3969
      %v3971 = vpop.f32.mrf.mxu0
      %3972 = vmatprep.mubr.bf16.mxu0 0
      %3973 = vmatmul.mubr.bf16.gmra.mxu0 %v3844
      %v3974 = vpop.f32.mrf.mxu0
      %v3975 = vadd.f32 0.0, %v3974
      %v3976 = vpop.f32.mrf.mxu0
      %v3977 = vpop.f32.mrf.mxu0
      %v3978 = vadd.f32 0.0, %v3977
      %v3979 = vpop.f32.mrf.mxu0
      %3980 = vmatprep.mubr.bf16.mxu0 0
      %3981 = vmatmul.mubr.bf16.gmra.mxu0 %v3847
      %v3982 = vpop.f32.mrf.mxu0
      %v3983 = vadd.f32 0.0, %v3982
      %v3984 = vpop.f32.mrf.mxu0
      %v3985 = vpop.f32.mrf.mxu0
      %v3986 = vadd.f32 0.0, %v3985
      %v3987 = vpop.f32.mrf.mxu0
      %3988 = vmatprep.mubr.bf16.mxu0 0
      %3989 = vmatmul.mubr.bf16.gmra.mxu0 %v3850
      %v3990 = vpop.f32.mrf.mxu0
      %v3991 = vadd.f32 0.0, %v3990
      %v3992 = vpop.f32.mrf.mxu0
      %v3993 = vpop.f32.mrf.mxu0
      %v3994 = vadd.f32 0.0, %v3993
      %v3995 = vpop.f32.mrf.mxu0
      %3996 = vmatprep.mubr.bf16.mxu0 0
      %3997 = vmatmul.mubr.bf16.gmra.mxu0 %v3853
      %v3998 = vpop.f32.mrf.mxu0
      %v3999 = vadd.f32 0.0, %v3998
      %v4000 = vpop.f32.mrf.mxu0
      %v4001 = vpop.f32.mrf.mxu0
      %v4002 = vadd.f32 0.0, %v4001
      %v4003 = vpop.f32.mrf.mxu0
      %4004 = vmatprep.mubr.bf16.mxu0 0
      %4005 = vmatmul.mubr.bf16.gmra.mxu0 %v3856
      %v4006 = vpop.f32.mrf.mxu0
      %v4007 = vadd.f32 0.0, %v4006
      %v4008 = vpop.f32.mrf.mxu0
      %v4009 = vpop.f32.mrf.mxu0
      %v4010 = vadd.f32 0.0, %v4009
      %v4011 = vpop.f32.mrf.mxu0
      %4012 = vmatprep.mubr.bf16.mxu0 0
      %4013 = vmatmul.mubr.bf16.gmra.mxu0 %v3859
      %v4014 = vpop.f32.mrf.mxu0
      %v4015 = vadd.f32 0.0, %v4014
      %v4016 = vpop.f32.mrf.mxu0
      %v4017 = vpop.f32.mrf.mxu0
      %v4018 = vadd.f32 0.0, %v4017
      %v4019 = vpop.f32.mrf.mxu0
      %4020 = vmatprep.mubr.bf16.mxu0 0
      %4021 = vmatmul.mubr.bf16.gmra.mxu0 %v3862
      %v4022 = vpop.f32.mrf.mxu0
      %v4023 = vadd.f32 0.0, %v4022
      %v4024 = vpop.f32.mrf.mxu0
      %v4025 = vpop.f32.mrf.mxu0
      %v4026 = vadd.f32 0.0, %v4025
      %v4027 = vpop.f32.mrf.mxu0
      %4028 = vmatprep.mubr.bf16.mxu0 0
      %4029 = vmatmul.mubr.bf16.gmra.mxu0 %v3865
      %v4030 = vpop.f32.mrf.mxu0
      %v4031 = vadd.f32 0.0, %v4030
      %v4032 = vpop.f32.mrf.mxu0
      %v4033 = vpop.f32.mrf.mxu0
      %v4034 = vadd.f32 0.0, %v4033
      %v4035 = vpop.f32.mrf.mxu0
      %4036 = vmatprep.mubr.bf16.mxu0 0
      %4037 = vmatmul.mubr.bf16.gmra.mxu0 %v3868
      %v4038 = vpop.f32.mrf.mxu0
      %v4039 = vadd.f32 0.0, %v4038
      %v4040 = vpop.f32.mrf.mxu0
      %v4041 = vpop.f32.mrf.mxu0
      %v4042 = vadd.f32 0.0, %v4041
      %v4043 = vpop.f32.mrf.mxu0
      %4044 = vmatprep.mubr.bf16.mxu0 0
      %4045 = vmatmul.mubr.bf16.gmra.mxu0 %v3871
      %v4046 = vpop.f32.mrf.mxu0
      %v4047 = vadd.f32 0.0, %v4046
      %v4048 = vpop.f32.mrf.mxu0
      %v4049 = vpop.f32.mrf.mxu0
      %v4050 = vadd.f32 0.0, %v4049
      %v4051 = vpop.f32.mrf.mxu0
      %4052 = vdwg.mxu0
      %v4053 = vadd.f32 %v3739, %v3911
      %v4054 = vadd.f32 %v3740, %v3914
      %v4055 = vadd.f32 %v3741, %v3919
      %v4056 = vadd.f32 %v3742, %v3922
      %v4057 = vadd.f32 %v3743, %v3927
      %v4058 = vadd.f32 %v3744, %v3930
      %v4059 = vadd.f32 %v3745, %v3935
      %v4060 = vadd.f32 %v3746, %v3938
      %v4061 = vadd.f32 %v3747, %v3943
      %v4062 = vadd.f32 %v3748, %v3946
      %v4063 = vadd.f32 %v3749, %v3951
      %v4064 = vadd.f32 %v3750, %v3954
      %v4065 = vadd.f32 %v3751, %v3959
      %v4066 = vadd.f32 %v3752, %v3962
      %v4067 = vadd.f32 %v3753, %v3967
      %v4068 = vadd.f32 %v3754, %v3970
      %v4069 = vadd.f32 %v3755, %v3975
      %v4070 = vadd.f32 %v3756, %v3978
      %v4071 = vadd.f32 %v3757, %v3983
      %v4072 = vadd.f32 %v3758, %v3986
      %v4073 = vadd.f32 %v3759, %v3991
      %v4074 = vadd.f32 %v3760, %v3994
      %v4075 = vadd.f32 %v3761, %v3999
      %v4076 = vadd.f32 %v3762, %v4002
      %v4077 = vadd.f32 %v3763, %v4007
      %v4078 = vadd.f32 %v3764, %v4010
      %v4079 = vadd.f32 %v3765, %v4015
      %v4080 = vadd.f32 %v3766, %v4018
      %v4081 = vadd.f32 %v3767, %v4023
      %v4082 = vadd.f32 %v3768, %v4026
      %v4083 = vadd.f32 %v3769, %v4031
      %v4084 = vadd.f32 %v3770, %v4034
      %v4085 = vadd.f32 %v3771, %v4039
      %v4086 = vadd.f32 %v3772, %v4042
      %v4087 = vadd.f32 %v3773, %v4047
      %v4088 = vadd.f32 %v3774, %v4050
      %v4089 = vld [vmem:[#allocation2 + $0x10] sm:$0xc]
      %v4090 = vld [vmem:[#allocation2 + $0x14] sm:$0xf]
      %v4091 = vld [vmem:[#allocation2 + $0x18] sm:$0xf]
      %v4092 = vld [vmem:[#allocation2 + $0x1c] sm:$0xf]
      %v4093 = vld [vmem:[#allocation2 + $0x20] sm:$0xf]
      %v4094 = vld [vmem:[#allocation2 + $0x24] sm:$0xf]
      %v4095 = vld [vmem:[#allocation2 + $0x28] sm:$0xf]
      %v4096 = vld [vmem:[#allocation2 + $0x2c] sm:$0xf]
      %v4097 = vld [vmem:[#allocation2 + $0x30] sm:$0xf]
      %v4098 = vld [vmem:[#allocation2 + $0x34] sm:$0xf]
      %v4099 = vld [vmem:[#allocation2 + $0x38] sm:$0xf]
      %v4100 = vld [vmem:[#allocation2 + $0x3c] sm:$0xf]
      %v4101 = vld [vmem:[#allocation2 + $0x40] sm:$0xf]
      %v4102 = vld [vmem:[#allocation2 + $0x44] sm:$0xf]
      %v4103 = vld [vmem:[#allocation2 + $0x48] sm:$0xf]
      %v4104 = vld [vmem:[#allocation2 + $0x4c] sm:$0xf]
      %v4105 = vld [vmem:[#allocation2 + $0x50] sm:$0xf]
      %v4106 = vld [vmem:[#allocation2 + $0x54] sm:$0xf]
      %v4107 = vld [vmem:[#allocation2 + $0x58] sm:$0xf]
      %v4108 = vld [vmem:[#allocation2 + $0x5c] sm:$0xf]
      %v4109 = vld [vmem:[#allocation2 + $0x60] sm:$0xf]
      %v4110 = vld [vmem:[#allocation2 + $0x64] sm:$0xf]
      %v4111 = vld [vmem:[#allocation2 + $0x68] sm:$0xf]
      %v4112 = vld [vmem:[#allocation2 + $0x6c] sm:$0xf]
      %v4113 = vld [vmem:[#allocation2 + $0x70] sm:$0xf]
      %v4114 = vld [vmem:[#allocation2 + $0x74] sm:$0xf]
      %v4115 = vld [vmem:[#allocation2 + $0x78] sm:$0xf]
      %v4116 = vld [vmem:[#allocation2 + $0x7c] sm:$0xf]
      %v4117 = vld [vmem:[#allocation2 + $0x80] sm:$0xf]
      %v4118 = vld [vmem:[#allocation2 + $0x84] sm:$0xf]
      %v4119 = vld [vmem:[#allocation2 + $0x88] sm:$0xf]
      %v4120 = vld [vmem:[#allocation2 + $0x8c] sm:$0xf]
      %v4121 = vld [vmem:[#allocation2 + $0x90] sm:$0xf]
      %v4122 = vld [vmem:[#allocation2 + $0x94] sm:$0xf]
      %v4123 = vld [vmem:[#allocation2 + $0x98] sm:$0xf]
      %v4124 = vld [vmem:[#allocation2 + $0x9c] sm:$0xf]
      %v4125 = vld [vmem:[#allocation2 + $0xa0] sm:$0x3]
      %s4126 = scalar_lea.vmem %s3, 24
      %v4127 = vld [vmem:[%s4126] sm:$0xf]
      %v4165 = vunpack.c.l.b16 %v4089
      %v4166 = vunpack.c.l.b16 %v4090
      %v4167 = vunpack.c.l.b16 %v4091
      %v4168 = vunpack.c.l.b16 %v4092
      %v4169 = vunpack.c.l.b16 %v4093
      %v4170 = vunpack.c.l.b16 %v4094
      %v4171 = vunpack.c.l.b16 %v4095
      %v4172 = vunpack.c.l.b16 %v4096
      %v4173 = vunpack.c.l.b16 %v4097
      %v4174 = vunpack.c.l.b16 %v4098
      %v4175 = vunpack.c.l.b16 %v4099
      %v4176 = vunpack.c.l.b16 %v4100
      %v4177 = vunpack.c.l.b16 %v4101
      %v4178 = vunpack.c.l.b16 %v4102
      %v4179 = vunpack.c.l.b16 %v4103
      %v4180 = vunpack.c.l.b16 %v4104
      %v4181 = vunpack.c.l.b16 %v4105
      %v4182 = vunpack.c.l.b16 %v4106
      %v4183 = vunpack.c.l.b16 %v4107
      %v4184 = vunpack.c.l.b16 %v4108
      %v4185 = vunpack.c.l.b16 %v4109
      %v4186 = vunpack.c.l.b16 %v4110
      %v4187 = vunpack.c.l.b16 %v4111
      %v4188 = vunpack.c.l.b16 %v4112
      %v4189 = vunpack.c.l.b16 %v4113
      %v4190 = vunpack.c.l.b16 %v4114
      %v4191 = vunpack.c.l.b16 %v4115
      %v4192 = vunpack.c.l.b16 %v4116
      %v4193 = vunpack.c.l.b16 %v4117
      %v4194 = vunpack.c.l.b16 %v4118
      %v4195 = vunpack.c.l.b16 %v4119
      %v4196 = vunpack.c.l.b16 %v4120
      %v4197 = vunpack.c.l.b16 %v4121
      %v4198 = vunpack.c.l.b16 %v4122
      %v4199 = vunpack.c.l.b16 %v4123
      %v4200 = vunpack.c.l.b16 %v4124
      %v4201 = vunpack.c.l.b16 %v4125
      %v4202 = vpack.c.b16 %v4166, %v4165
      %v4203 = vpack.c.b16 %v4168, %v4167
      %v4204 = vpack.c.b16 %v4170, %v4169
      %v4205 = vpack.c.b16 %v4172, %v4171
      %v4206 = vpack.c.b16 %v4174, %v4173
      %v4207 = vpack.c.b16 %v4176, %v4175
      %v4208 = vpack.c.b16 %v4178, %v4177
      %v4209 = vpack.c.b16 %v4180, %v4179
      %v4210 = vpack.c.b16 %v4182, %v4181
      %v4211 = vpack.c.b16 %v4184, %v4183
      %v4212 = vpack.c.b16 %v4186, %v4185
      %v4213 = vpack.c.b16 %v4188, %v4187
      %v4214 = vpack.c.b16 %v4190, %v4189
      %v4215 = vpack.c.b16 %v4192, %v4191
      %v4216 = vpack.c.b16 %v4194, %v4193
      %v4217 = vpack.c.b16 %v4196, %v4195
      %v4218 = vpack.c.b16 %v4198, %v4197
      %v4219 = vpack.c.b16 %v4200, %v4199
      %v4220 = vpack.c.b16 %v4201, %v4201
      %v4221 = vrot.slane %v4202, 2
      %v4222 = vrot.slane %v4203, 2
      %v4223 = vsel %vm3781, %v4221, %v4222
      %v4224 = vrot.slane %v4204, 2
      %v4225 = vsel %vm3781, %v4222, %v4224
      %v4226 = vrot.slane %v4205, 2
      %v4227 = vsel %vm3781, %v4224, %v4226
      %v4228 = vrot.slane %v4206, 2
      %v4229 = vsel %vm3781, %v4226, %v4228
      %v4230 = vrot.slane %v4207, 2
      %v4231 = vsel %vm3781, %v4228, %v4230
      %v4232 = vrot.slane %v4208, 2
      %v4233 = vsel %vm3781, %v4230, %v4232
      %v4234 = vrot.slane %v4209, 2
      %v4235 = vsel %vm3781, %v4232, %v4234
      %v4236 = vrot.slane %v4210, 2
      %v4237 = vsel %vm3781, %v4234, %v4236
      %v4238 = vrot.slane %v4211, 2
      %v4239 = vsel %vm3781, %v4236, %v4238
      %v4240 = vrot.slane %v4212, 2
      %v4241 = vsel %vm3781, %v4238, %v4240
      %v4242 = vrot.slane %v4213, 2
      %v4243 = vsel %vm3781, %v4240, %v4242
      %v4244 = vrot.slane %v4214, 2
      %v4245 = vsel %vm3781, %v4242, %v4244
      %v4246 = vrot.slane %v4215, 2
      %v4247 = vsel %vm3781, %v4244, %v4246
      %v4248 = vrot.slane %v4216, 2
      %v4249 = vsel %vm3781, %v4246, %v4248
      %v4250 = vrot.slane %v4217, 2
      %v4251 = vsel %vm3781, %v4248, %v4250
      %v4252 = vrot.slane %v4218, 2
      %v4253 = vsel %vm3781, %v4250, %v4252
      %v4254 = vrot.slane %v4219, 2
      %v4255 = vsel %vm3781, %v4252, %v4254
      %v4256 = vrot.slane %v4220, 2
      %v4257 = vsel %vm3781, %v4254, %v4256
      %v4259 = vsel %vm2123, %v4223, 0
      %v4262 = vsel %vm2123, %v4225, 0
      %v4265 = vsel %vm2123, %v4227, 0
      %v4268 = vsel %vm2123, %v4229, 0
      %v4271 = vsel %vm2123, %v4231, 0
      %v4274 = vsel %vm2123, %v4233, 0
      %v4277 = vsel %vm2123, %v4235, 0
      %v4280 = vsel %vm2123, %v4237, 0
      %v4283 = vsel %vm2123, %v4239, 0
      %v4286 = vsel %vm2123, %v4241, 0
      %v4289 = vsel %vm2123, %v4243, 0
      %v4292 = vsel %vm2123, %v4245, 0
      %v4295 = vsel %vm2123, %v4247, 0
      %v4298 = vsel %vm2123, %v4249, 0
      %v4301 = vsel %vm2123, %v4251, 0
      %v4304 = vsel %vm2123, %v4253, 0
      %v4307 = vsel %vm2123, %v4255, 0
      %v4310 = vsel %vm2123, %v4257, 0
      %v4313 = vsel %vm2178, %v4127, 0
      %4315 = vmatprep.subr.bf16.mxu0 0
      %4316 = vmatpush1.bf16.msra.mxu0 0
      %4317 = vmatprep.subr.bf16.mxu0 0
      %4318 = vmatpush1.bf16.msra.mxu0 0
      %4319 = vmatprep.subr.bf16.mxu0 0
      %4320 = vmatpush1.bf16.msra.mxu0 0
      %4321 = vmatprep.subr.bf16.mxu0 0
      %4322 = vmatpush1.bf16.msra.mxu0 0
      %4323 = vmatprep.subr.bf16.mxu0 0
      %4324 = vmatpush1.bf16.msra.mxu0 0
      %4325 = vmatprep.subr.bf16.mxu0 0
      %4326 = vmatpush1.bf16.msra.mxu0 0
      %4327 = vmatprep.subr.bf16.mxu0 0
      %4328 = vmatpush1.bf16.msra.mxu0 0
      %4329 = vmatprep.subr.bf16.mxu0 0
      %4330 = vmatpush1.bf16.msra.mxu0 %v4313
      %4331 = vmatprep.subr.bf16.mxu0 0
      %4332 = vmatpush2.bf16.msra.mxu0 0
      %4333 = vmatprep.subr.bf16.mxu0 0
      %4334 = vmatpush2.bf16.msra.mxu0 0
      %4335 = vmatprep.subr.bf16.mxu0 0
      %4336 = vmatpush2.bf16.msra.mxu0 0
      %4337 = vmatprep.subr.bf16.mxu0 0
      %4338 = vmatpush2.bf16.msra.mxu0 0
      %4339 = vmatprep.subr.bf16.mxu0 0
      %4340 = vmatpush2.bf16.msra.mxu0 0
      %4341 = vmatprep.subr.bf16.mxu0 0
      %4342 = vmatpush2.bf16.msra.mxu0 0
      %4343 = vmatprep.subr.bf16.mxu0 0
      %4344 = vmatpush2.bf16.msra.mxu0 0
      %4345 = vmatprep.subr.bf16.mxu0 0
      %4346 = vmatpush2.bf16.msra.mxu0 0
      %4347 = vmatprep.mubr.bf16.mxu0 0
      %4348 = vmatmul.mubr.bf16.gmra.mxu0 %v4259
      %v4349 = vpop.f32.mrf.mxu0
      %v4350 = vadd.f32 0.0, %v4349
      %v4351 = vpop.f32.mrf.mxu0
      %v4352 = vpop.f32.mrf.mxu0
      %v4353 = vadd.f32 0.0, %v4352
      %v4354 = vpop.f32.mrf.mxu0
      %4355 = vmatprep.mubr.bf16.mxu0 0
      %4356 = vmatmul.mubr.bf16.gmra.mxu0 %v4262
      %v4357 = vpop.f32.mrf.mxu0
      %v4358 = vadd.f32 0.0, %v4357
      %v4359 = vpop.f32.mrf.mxu0
      %v4360 = vpop.f32.mrf.mxu0
      %v4361 = vadd.f32 0.0, %v4360
      %v4362 = vpop.f32.mrf.mxu0
      %4363 = vmatprep.mubr.bf16.mxu0 0
      %4364 = vmatmul.mubr.bf16.gmra.mxu0 %v4265
      %v4365 = vpop.f32.mrf.mxu0
      %v4366 = vadd.f32 0.0, %v4365
      %v4367 = vpop.f32.mrf.mxu0
      %v4368 = vpop.f32.mrf.mxu0
      %v4369 = vadd.f32 0.0, %v4368
      %v4370 = vpop.f32.mrf.mxu0
      %4371 = vmatprep.mubr.bf16.mxu0 0
      %4372 = vmatmul.mubr.bf16.gmra.mxu0 %v4268
      %v4373 = vpop.f32.mrf.mxu0
      %v4374 = vadd.f32 0.0, %v4373
      %v4375 = vpop.f32.mrf.mxu0
      %v4376 = vpop.f32.mrf.mxu0
      %v4377 = vadd.f32 0.0, %v4376
      %v4378 = vpop.f32.mrf.mxu0
      %4379 = vmatprep.mubr.bf16.mxu0 0
      %4380 = vmatmul.mubr.bf16.gmra.mxu0 %v4271
      %v4381 = vpop.f32.mrf.mxu0
      %v4382 = vadd.f32 0.0, %v4381
      %v4383 = vpop.f32.mrf.mxu0
      %v4384 = vpop.f32.mrf.mxu0
      %v4385 = vadd.f32 0.0, %v4384
      %v4386 = vpop.f32.mrf.mxu0
      %4387 = vmatprep.mubr.bf16.mxu0 0
      %4388 = vmatmul.mubr.bf16.gmra.mxu0 %v4274
      %v4389 = vpop.f32.mrf.mxu0
      %v4390 = vadd.f32 0.0, %v4389
      %v4391 = vpop.f32.mrf.mxu0
      %v4392 = vpop.f32.mrf.mxu0
      %v4393 = vadd.f32 0.0, %v4392
      %v4394 = vpop.f32.mrf.mxu0
      %4395 = vmatprep.mubr.bf16.mxu0 0
      %4396 = vmatmul.mubr.bf16.gmra.mxu0 %v4277
      %v4397 = vpop.f32.mrf.mxu0
      %v4398 = vadd.f32 0.0, %v4397
      %v4399 = vpop.f32.mrf.mxu0
      %v4400 = vpop.f32.mrf.mxu0
      %v4401 = vadd.f32 0.0, %v4400
      %v4402 = vpop.f32.mrf.mxu0
      %4403 = vmatprep.mubr.bf16.mxu0 0
      %4404 = vmatmul.mubr.bf16.gmra.mxu0 %v4280
      %v4405 = vpop.f32.mrf.mxu0
      %v4406 = vadd.f32 0.0, %v4405
      %v4407 = vpop.f32.mrf.mxu0
      %v4408 = vpop.f32.mrf.mxu0
      %v4409 = vadd.f32 0.0, %v4408
      %v4410 = vpop.f32.mrf.mxu0
      %4411 = vmatprep.mubr.bf16.mxu0 0
      %4412 = vmatmul.mubr.bf16.gmra.mxu0 %v4283
      %v4413 = vpop.f32.mrf.mxu0
      %v4414 = vadd.f32 0.0, %v4413
      %v4415 = vpop.f32.mrf.mxu0
      %v4416 = vpop.f32.mrf.mxu0
      %v4417 = vadd.f32 0.0, %v4416
      %v4418 = vpop.f32.mrf.mxu0
      %4419 = vmatprep.mubr.bf16.mxu0 0
      %4420 = vmatmul.mubr.bf16.gmra.mxu0 %v4286
      %v4421 = vpop.f32.mrf.mxu0
      %v4422 = vadd.f32 0.0, %v4421
      %v4423 = vpop.f32.mrf.mxu0
      %v4424 = vpop.f32.mrf.mxu0
      %v4425 = vadd.f32 0.0, %v4424
      %v4426 = vpop.f32.mrf.mxu0
      %4427 = vmatprep.mubr.bf16.mxu0 0
      %4428 = vmatmul.mubr.bf16.gmra.mxu0 %v4289
      %v4429 = vpop.f32.mrf.mxu0
      %v4430 = vadd.f32 0.0, %v4429
      %v4431 = vpop.f32.mrf.mxu0
      %v4432 = vpop.f32.mrf.mxu0
      %v4433 = vadd.f32 0.0, %v4432
      %v4434 = vpop.f32.mrf.mxu0
      %4435 = vmatprep.mubr.bf16.mxu0 0
      %4436 = vmatmul.mubr.bf16.gmra.mxu0 %v4292
      %v4437 = vpop.f32.mrf.mxu0
      %v4438 = vadd.f32 0.0, %v4437
      %v4439 = vpop.f32.mrf.mxu0
      %v4440 = vpop.f32.mrf.mxu0
      %v4441 = vadd.f32 0.0, %v4440
      %v4442 = vpop.f32.mrf.mxu0
      %4443 = vmatprep.mubr.bf16.mxu0 0
      %4444 = vmatmul.mubr.bf16.gmra.mxu0 %v4295
      %v4445 = vpop.f32.mrf.mxu0
      %v4446 = vadd.f32 0.0, %v4445
      %v4447 = vpop.f32.mrf.mxu0
      %v4448 = vpop.f32.mrf.mxu0
      %v4449 = vadd.f32 0.0, %v4448
      %v4450 = vpop.f32.mrf.mxu0
      %4451 = vmatprep.mubr.bf16.mxu0 0
      %4452 = vmatmul.mubr.bf16.gmra.mxu0 %v4298
      %v4453 = vpop.f32.mrf.mxu0
      %v4454 = vadd.f32 0.0, %v4453
      %v4455 = vpop.f32.mrf.mxu0
      %v4456 = vpop.f32.mrf.mxu0
      %v4457 = vadd.f32 0.0, %v4456
      %v4458 = vpop.f32.mrf.mxu0
      %4459 = vmatprep.mubr.bf16.mxu0 0
      %4460 = vmatmul.mubr.bf16.gmra.mxu0 %v4301
      %v4461 = vpop.f32.mrf.mxu0
      %v4462 = vadd.f32 0.0, %v4461
      %v4463 = vpop.f32.mrf.mxu0
      %v4464 = vpop.f32.mrf.mxu0
      %v4465 = vadd.f32 0.0, %v4464
      %v4466 = vpop.f32.mrf.mxu0
      %4467 = vmatprep.mubr.bf16.mxu0 0
      %4468 = vmatmul.mubr.bf16.gmra.mxu0 %v4304
      %v4469 = vpop.f32.mrf.mxu0
      %v4470 = vadd.f32 0.0, %v4469
      %v4471 = vpop.f32.mrf.mxu0
      %v4472 = vpop.f32.mrf.mxu0
      %v4473 = vadd.f32 0.0, %v4472
      %v4474 = vpop.f32.mrf.mxu0
      %4475 = vmatprep.mubr.bf16.mxu0 0
      %4476 = vmatmul.mubr.bf16.gmra.mxu0 %v4307
      %v4477 = vpop.f32.mrf.mxu0
      %v4478 = vadd.f32 0.0, %v4477
      %v4479 = vpop.f32.mrf.mxu0
      %v4480 = vpop.f32.mrf.mxu0
      %v4481 = vadd.f32 0.0, %v4480
      %v4482 = vpop.f32.mrf.mxu0
      %4483 = vmatprep.mubr.bf16.mxu0 0
      %4484 = vmatmul.mubr.bf16.gmra.mxu0 %v4310
      %v4485 = vpop.f32.mrf.mxu0
      %v4486 = vadd.f32 0.0, %v4485
      %v4487 = vpop.f32.mrf.mxu0
      %v4488 = vpop.f32.mrf.mxu0
      %v4489 = vadd.f32 0.0, %v4488
      %v4490 = vpop.f32.mrf.mxu0
      %4491 = vdwg.mxu0
      %v4492 = vadd.f32 %v4053, %v4350
      %v4493 = vadd.f32 %v4054, %v4353
      %v4494 = vadd.f32 %v4055, %v4358
      %v4495 = vadd.f32 %v4056, %v4361
      %v4496 = vadd.f32 %v4057, %v4366
      %v4497 = vadd.f32 %v4058, %v4369
      %v4498 = vadd.f32 %v4059, %v4374
      %v4499 = vadd.f32 %v4060, %v4377
      %v4500 = vadd.f32 %v4061, %v4382
      %v4501 = vadd.f32 %v4062, %v4385
      %v4502 = vadd.f32 %v4063, %v4390
      %v4503 = vadd.f32 %v4064, %v4393
      %v4504 = vadd.f32 %v4065, %v4398
      %v4505 = vadd.f32 %v4066, %v4401
      %v4506 = vadd.f32 %v4067, %v4406
      %v4507 = vadd.f32 %v4068, %v4409
      %v4508 = vadd.f32 %v4069, %v4414
      %v4509 = vadd.f32 %v4070, %v4417
      %v4510 = vadd.f32 %v4071, %v4422
      %v4511 = vadd.f32 %v4072, %v4425
      %v4512 = vadd.f32 %v4073, %v4430
      %v4513 = vadd.f32 %v4074, %v4433
      %v4514 = vadd.f32 %v4075, %v4438
      %v4515 = vadd.f32 %v4076, %v4441
      %v4516 = vadd.f32 %v4077, %v4446
      %v4517 = vadd.f32 %v4078, %v4449
      %v4518 = vadd.f32 %v4079, %v4454
      %v4519 = vadd.f32 %v4080, %v4457
      %v4520 = vadd.f32 %v4081, %v4462
      %v4521 = vadd.f32 %v4082, %v4465
      %v4522 = vadd.f32 %v4083, %v4470
      %v4523 = vadd.f32 %v4084, %v4473
      %v4524 = vadd.f32 %v4085, %v4478
      %v4525 = vadd.f32 %v4086, %v4481
      %v4526 = vadd.f32 %v4087, %v4486
      %v4527 = vadd.f32 %v4088, %v4489
      %v4528 = vld [vmem:[#allocation2 + $0xa0] sm:$0x7]
      %s4529 = scalar_lea.vmem %s3, 28
      %v4530 = vld [vmem:[%s4529] sm:$0xf]
      %v4532 = vunpack.c.l.b16 %v4528
      %v4533 = vpack.c.b16 %v4532, %v4532
      %vm4534 = vsmask.f32 5376
      %v4536 = vshrl.u32 %v4202, 16
      %v4538 = vrot.slane %v4536, 2
      %v4539 = vshll.u32 %v4202, 16
      %v4541 = vrot.slane %v4539, 3
      %v4542 = vor.u32 %v4538, %v4541
      %v4544 = vshrl.u32 %v4203, 16
      %v4546 = vrot.slane %v4544, 2
      %v4547 = vshll.u32 %v4203, 16
      %v4549 = vrot.slane %v4547, 3
      %v4550 = vor.u32 %v4546, %v4549
      %v4551 = vsel %vm4534, %v4542, %v4550
      %v4553 = vshrl.u32 %v4204, 16
      %v4555 = vrot.slane %v4553, 2
      %v4556 = vshll.u32 %v4204, 16
      %v4558 = vrot.slane %v4556, 3
      %v4559 = vor.u32 %v4555, %v4558
      %v4560 = vsel %vm4534, %v4550, %v4559
      %v4562 = vshrl.u32 %v4205, 16
      %v4564 = vrot.slane %v4562, 2
      %v4565 = vshll.u32 %v4205, 16
      %v4567 = vrot.slane %v4565, 3
      %v4568 = vor.u32 %v4564, %v4567
      %v4569 = vsel %vm4534, %v4559, %v4568
      %v4571 = vshrl.u32 %v4206, 16
      %v4573 = vrot.slane %v4571, 2
      %v4574 = vshll.u32 %v4206, 16
      %v4576 = vrot.slane %v4574, 3
      %v4577 = vor.u32 %v4573, %v4576
      %v4578 = vsel %vm4534, %v4568, %v4577
      %v4580 = vshrl.u32 %v4207, 16
      %v4582 = vrot.slane %v4580, 2
      %v4583 = vshll.u32 %v4207, 16
      %v4585 = vrot.slane %v4583, 3
      %v4586 = vor.u32 %v4582, %v4585
      %v4587 = vsel %vm4534, %v4577, %v4586
      %v4589 = vshrl.u32 %v4208, 16
      %v4591 = vrot.slane %v4589, 2
      %v4592 = vshll.u32 %v4208, 16
      %v4594 = vrot.slane %v4592, 3
      %v4595 = vor.u32 %v4591, %v4594
      %v4596 = vsel %vm4534, %v4586, %v4595
      %v4598 = vshrl.u32 %v4209, 16
      %v4600 = vrot.slane %v4598, 2
      %v4601 = vshll.u32 %v4209, 16
      %v4603 = vrot.slane %v4601, 3
      %v4604 = vor.u32 %v4600, %v4603
      %v4605 = vsel %vm4534, %v4595, %v4604
      %v4607 = vshrl.u32 %v4210, 16
      %v4609 = vrot.slane %v4607, 2
      %v4610 = vshll.u32 %v4210, 16
      %v4612 = vrot.slane %v4610, 3
      %v4613 = vor.u32 %v4609, %v4612
      %v4614 = vsel %vm4534, %v4604, %v4613
      %v4616 = vshrl.u32 %v4211, 16
      %v4618 = vrot.slane %v4616, 2
      %v4619 = vshll.u32 %v4211, 16
      %v4621 = vrot.slane %v4619, 3
      %v4622 = vor.u32 %v4618, %v4621
      %v4623 = vsel %vm4534, %v4613, %v4622
      %v4625 = vshrl.u32 %v4212, 16
      %v4627 = vrot.slane %v4625, 2
      %v4628 = vshll.u32 %v4212, 16
      %v4630 = vrot.slane %v4628, 3
      %v4631 = vor.u32 %v4627, %v4630
      %v4632 = vsel %vm4534, %v4622, %v4631
      %v4634 = vshrl.u32 %v4213, 16
      %v4636 = vrot.slane %v4634, 2
      %v4637 = vshll.u32 %v4213, 16
      %v4639 = vrot.slane %v4637, 3
      %v4640 = vor.u32 %v4636, %v4639
      %v4641 = vsel %vm4534, %v4631, %v4640
      %v4643 = vshrl.u32 %v4214, 16
      %v4645 = vrot.slane %v4643, 2
      %v4646 = vshll.u32 %v4214, 16
      %v4648 = vrot.slane %v4646, 3
      %v4649 = vor.u32 %v4645, %v4648
      %v4650 = vsel %vm4534, %v4640, %v4649
      %v4652 = vshrl.u32 %v4215, 16
      %v4654 = vrot.slane %v4652, 2
      %v4655 = vshll.u32 %v4215, 16
      %v4657 = vrot.slane %v4655, 3
      %v4658 = vor.u32 %v4654, %v4657
      %v4659 = vsel %vm4534, %v4649, %v4658
      %v4661 = vshrl.u32 %v4216, 16
      %v4663 = vrot.slane %v4661, 2
      %v4664 = vshll.u32 %v4216, 16
      %v4666 = vrot.slane %v4664, 3
      %v4667 = vor.u32 %v4663, %v4666
      %v4668 = vsel %vm4534, %v4658, %v4667
      %v4670 = vshrl.u32 %v4217, 16
      %v4672 = vrot.slane %v4670, 2
      %v4673 = vshll.u32 %v4217, 16
      %v4675 = vrot.slane %v4673, 3
      %v4676 = vor.u32 %v4672, %v4675
      %v4677 = vsel %vm4534, %v4667, %v4676
      %v4679 = vshrl.u32 %v4218, 16
      %v4681 = vrot.slane %v4679, 2
      %v4682 = vshll.u32 %v4218, 16
      %v4684 = vrot.slane %v4682, 3
      %v4685 = vor.u32 %v4681, %v4684
      %v4686 = vsel %vm4534, %v4676, %v4685
      %v4688 = vshrl.u32 %v4219, 16
      %v4690 = vrot.slane %v4688, 2
      %v4691 = vshll.u32 %v4219, 16
      %v4693 = vrot.slane %v4691, 3
      %v4694 = vor.u32 %v4690, %v4693
      %v4695 = vsel %vm4534, %v4685, %v4694
      %v4697 = vshrl.u32 %v4533, 16
      %v4699 = vrot.slane %v4697, 2
      %v4700 = vshll.u32 %v4533, 16
      %v4702 = vrot.slane %v4700, 3
      %v4703 = vor.u32 %v4699, %v4702
      %v4704 = vsel %vm4534, %v4694, %v4703
      %v4706 = vsel %vm2123, %v4551, 0
      %v4709 = vsel %vm2123, %v4560, 0
      %v4712 = vsel %vm2123, %v4569, 0
      %v4715 = vsel %vm2123, %v4578, 0
      %v4718 = vsel %vm2123, %v4587, 0
      %v4721 = vsel %vm2123, %v4596, 0
      %v4724 = vsel %vm2123, %v4605, 0
      %v4727 = vsel %vm2123, %v4614, 0
      %v4730 = vsel %vm2123, %v4623, 0
      %v4733 = vsel %vm2123, %v4632, 0
      %v4736 = vsel %vm2123, %v4641, 0
      %v4739 = vsel %vm2123, %v4650, 0
      %v4742 = vsel %vm2123, %v4659, 0
      %v4745 = vsel %vm2123, %v4668, 0
      %v4748 = vsel %vm2123, %v4677, 0
      %v4751 = vsel %vm2123, %v4686, 0
      %v4754 = vsel %vm2123, %v4695, 0
      %v4757 = vsel %vm2123, %v4704, 0
      %v4760 = vsel %vm2178, %v4530, 0
      %4762 = vmatprep.subr.bf16.mxu0 0
      %4763 = vmatpush1.bf16.msra.mxu0 0
      %4764 = vmatprep.subr.bf16.mxu0 0
      %4765 = vmatpush1.bf16.msra.mxu0 0
      %4766 = vmatprep.subr.bf16.mxu0 0
      %4767 = vmatpush1.bf16.msra.mxu0 0
      %4768 = vmatprep.subr.bf16.mxu0 0
      %4769 = vmatpush1.bf16.msra.mxu0 0
      %4770 = vmatprep.subr.bf16.mxu0 0
      %4771 = vmatpush1.bf16.msra.mxu0 0
      %4772 = vmatprep.subr.bf16.mxu0 0
      %4773 = vmatpush1.bf16.msra.mxu0 0
      %4774 = vmatprep.subr.bf16.mxu0 0
      %4775 = vmatpush1.bf16.msra.mxu0 0
      %4776 = vmatprep.subr.bf16.mxu0 0
      %4777 = vmatpush1.bf16.msra.mxu0 %v4760
      %4778 = vmatprep.subr.bf16.mxu0 0
      %4779 = vmatpush2.bf16.msra.mxu0 0
      %4780 = vmatprep.subr.bf16.mxu0 0
      %4781 = vmatpush2.bf16.msra.mxu0 0
      %4782 = vmatprep.subr.bf16.mxu0 0
      %4783 = vmatpush2.bf16.msra.mxu0 0
      %4784 = vmatprep.subr.bf16.mxu0 0
      %4785 = vmatpush2.bf16.msra.mxu0 0
      %4786 = vmatprep.subr.bf16.mxu0 0
      %4787 = vmatpush2.bf16.msra.mxu0 0
      %4788 = vmatprep.subr.bf16.mxu0 0
      %4789 = vmatpush2.bf16.msra.mxu0 0
      %4790 = vmatprep.subr.bf16.mxu0 0
      %4791 = vmatpush2.bf16.msra.mxu0 0
      %4792 = vmatprep.subr.bf16.mxu0 0
      %4793 = vmatpush2.bf16.msra.mxu0 0
      %4794 = vmatprep.mubr.bf16.mxu0 0
      %4795 = vmatmul.mubr.bf16.gmra.mxu0 %v4706
      %v4796 = vpop.f32.mrf.mxu0
      %v4797 = vadd.f32 0.0, %v4796
      %v4798 = vpop.f32.mrf.mxu0
      %v4799 = vpop.f32.mrf.mxu0
      %v4800 = vadd.f32 0.0, %v4799
      %v4801 = vpop.f32.mrf.mxu0
      %4802 = vmatprep.mubr.bf16.mxu0 0
      %4803 = vmatmul.mubr.bf16.gmra.mxu0 %v4709
      %v4804 = vpop.f32.mrf.mxu0
      %v4805 = vadd.f32 0.0, %v4804
      %v4806 = vpop.f32.mrf.mxu0
      %v4807 = vpop.f32.mrf.mxu0
      %v4808 = vadd.f32 0.0, %v4807
      %v4809 = vpop.f32.mrf.mxu0
      %4810 = vmatprep.mubr.bf16.mxu0 0
      %4811 = vmatmul.mubr.bf16.gmra.mxu0 %v4712
      %v4812 = vpop.f32.mrf.mxu0
      %v4813 = vadd.f32 0.0, %v4812
      %v4814 = vpop.f32.mrf.mxu0
      %v4815 = vpop.f32.mrf.mxu0
      %v4816 = vadd.f32 0.0, %v4815
      %v4817 = vpop.f32.mrf.mxu0
      %4818 = vmatprep.mubr.bf16.mxu0 0
      %4819 = vmatmul.mubr.bf16.gmra.mxu0 %v4715
      %v4820 = vpop.f32.mrf.mxu0
      %v4821 = vadd.f32 0.0, %v4820
      %v4822 = vpop.f32.mrf.mxu0
      %v4823 = vpop.f32.mrf.mxu0
      %v4824 = vadd.f32 0.0, %v4823
      %v4825 = vpop.f32.mrf.mxu0
      %4826 = vmatprep.mubr.bf16.mxu0 0
      %4827 = vmatmul.mubr.bf16.gmra.mxu0 %v4718
      %v4828 = vpop.f32.mrf.mxu0
      %v4829 = vadd.f32 0.0, %v4828
      %v4830 = vpop.f32.mrf.mxu0
      %v4831 = vpop.f32.mrf.mxu0
      %v4832 = vadd.f32 0.0, %v4831
      %v4833 = vpop.f32.mrf.mxu0
      %4834 = vmatprep.mubr.bf16.mxu0 0
      %4835 = vmatmul.mubr.bf16.gmra.mxu0 %v4721
      %v4836 = vpop.f32.mrf.mxu0
      %v4837 = vadd.f32 0.0, %v4836
      %v4838 = vpop.f32.mrf.mxu0
      %v4839 = vpop.f32.mrf.mxu0
      %v4840 = vadd.f32 0.0, %v4839
      %v4841 = vpop.f32.mrf.mxu0
      %4842 = vmatprep.mubr.bf16.mxu0 0
      %4843 = vmatmul.mubr.bf16.gmra.mxu0 %v4724
      %v4844 = vpop.f32.mrf.mxu0
      %v4845 = vadd.f32 0.0, %v4844
      %v4846 = vpop.f32.mrf.mxu0
      %v4847 = vpop.f32.mrf.mxu0
      %v4848 = vadd.f32 0.0, %v4847
      %v4849 = vpop.f32.mrf.mxu0
      %4850 = vmatprep.mubr.bf16.mxu0 0
      %4851 = vmatmul.mubr.bf16.gmra.mxu0 %v4727
      %v4852 = vpop.f32.mrf.mxu0
      %v4853 = vadd.f32 0.0, %v4852
      %v4854 = vpop.f32.mrf.mxu0
      %v4855 = vpop.f32.mrf.mxu0
      %v4856 = vadd.f32 0.0, %v4855
      %v4857 = vpop.f32.mrf.mxu0
      %4858 = vmatprep.mubr.bf16.mxu0 0
      %4859 = vmatmul.mubr.bf16.gmra.mxu0 %v4730
      %v4860 = vpop.f32.mrf.mxu0
      %v4861 = vadd.f32 0.0, %v4860
      %v4862 = vpop.f32.mrf.mxu0
      %v4863 = vpop.f32.mrf.mxu0
      %v4864 = vadd.f32 0.0, %v4863
      %v4865 = vpop.f32.mrf.mxu0
      %4866 = vmatprep.mubr.bf16.mxu0 0
      %4867 = vmatmul.mubr.bf16.gmra.mxu0 %v4733
      %v4868 = vpop.f32.mrf.mxu0
      %v4869 = vadd.f32 0.0, %v4868
      %v4870 = vpop.f32.mrf.mxu0
      %v4871 = vpop.f32.mrf.mxu0
      %v4872 = vadd.f32 0.0, %v4871
      %v4873 = vpop.f32.mrf.mxu0
      %4874 = vmatprep.mubr.bf16.mxu0 0
      %4875 = vmatmul.mubr.bf16.gmra.mxu0 %v4736
      %v4876 = vpop.f32.mrf.mxu0
      %v4877 = vadd.f32 0.0, %v4876
      %v4878 = vpop.f32.mrf.mxu0
      %v4879 = vpop.f32.mrf.mxu0
      %v4880 = vadd.f32 0.0, %v4879
      %v4881 = vpop.f32.mrf.mxu0
      %4882 = vmatprep.mubr.bf16.mxu0 0
      %4883 = vmatmul.mubr.bf16.gmra.mxu0 %v4739
      %v4884 = vpop.f32.mrf.mxu0
      %v4885 = vadd.f32 0.0, %v4884
      %v4886 = vpop.f32.mrf.mxu0
      %v4887 = vpop.f32.mrf.mxu0
      %v4888 = vadd.f32 0.0, %v4887
      %v4889 = vpop.f32.mrf.mxu0
      %4890 = vmatprep.mubr.bf16.mxu0 0
      %4891 = vmatmul.mubr.bf16.gmra.mxu0 %v4742
      %v4892 = vpop.f32.mrf.mxu0
      %v4893 = vadd.f32 0.0, %v4892
      %v4894 = vpop.f32.mrf.mxu0
      %v4895 = vpop.f32.mrf.mxu0
      %v4896 = vadd.f32 0.0, %v4895
      %v4897 = vpop.f32.mrf.mxu0
      %4898 = vmatprep.mubr.bf16.mxu0 0
      %4899 = vmatmul.mubr.bf16.gmra.mxu0 %v4745
      %v4900 = vpop.f32.mrf.mxu0
      %v4901 = vadd.f32 0.0, %v4900
      %v4902 = vpop.f32.mrf.mxu0
      %v4903 = vpop.f32.mrf.mxu0
      %v4904 = vadd.f32 0.0, %v4903
      %v4905 = vpop.f32.mrf.mxu0
      %4906 = vmatprep.mubr.bf16.mxu0 0
      %4907 = vmatmul.mubr.bf16.gmra.mxu0 %v4748
      %v4908 = vpop.f32.mrf.mxu0
      %v4909 = vadd.f32 0.0, %v4908
      %v4910 = vpop.f32.mrf.mxu0
      %v4911 = vpop.f32.mrf.mxu0
      %v4912 = vadd.f32 0.0, %v4911
      %v4913 = vpop.f32.mrf.mxu0
      %4914 = vmatprep.mubr.bf16.mxu0 0
      %4915 = vmatmul.mubr.bf16.gmra.mxu0 %v4751
      %v4916 = vpop.f32.mrf.mxu0
      %v4917 = vadd.f32 0.0, %v4916
      %v4918 = vpop.f32.mrf.mxu0
      %v4919 = vpop.f32.mrf.mxu0
      %v4920 = vadd.f32 0.0, %v4919
      %v4921 = vpop.f32.mrf.mxu0
      %4922 = vmatprep.mubr.bf16.mxu0 0
      %4923 = vmatmul.mubr.bf16.gmra.mxu0 %v4754
      %v4924 = vpop.f32.mrf.mxu0
      %v4925 = vadd.f32 0.0, %v4924
      %v4926 = vpop.f32.mrf.mxu0
      %v4927 = vpop.f32.mrf.mxu0
      %v4928 = vadd.f32 0.0, %v4927
      %v4929 = vpop.f32.mrf.mxu0
      %4930 = vmatprep.mubr.bf16.mxu0 0
      %4931 = vmatmul.mubr.bf16.gmra.mxu0 %v4757
      %v4932 = vpop.f32.mrf.mxu0
      %v4933 = vadd.f32 0.0, %v4932
      %v4934 = vpop.f32.mrf.mxu0
      %v4935 = vpop.f32.mrf.mxu0
      %v4936 = vadd.f32 0.0, %v4935
      %v4937 = vpop.f32.mrf.mxu0
      %4938 = vdwg.mxu0
      %v4939 = vadd.f32 %v4492, %v4797
      %v4940 = vadd.f32 %v4493, %v4800
      %v4941 = vadd.f32 %v4494, %v4805
      %v4942 = vadd.f32 %v4495, %v4808
      %v4943 = vadd.f32 %v4496, %v4813
      %v4944 = vadd.f32 %v4497, %v4816
      %v4945 = vadd.f32 %v4498, %v4821
      %v4946 = vadd.f32 %v4499, %v4824
      %v4947 = vadd.f32 %v4500, %v4829
      %v4948 = vadd.f32 %v4501, %v4832
      %v4949 = vadd.f32 %v4502, %v4837
      %v4950 = vadd.f32 %v4503, %v4840
      %v4951 = vadd.f32 %v4504, %v4845
      %v4952 = vadd.f32 %v4505, %v4848
      %v4953 = vadd.f32 %v4506, %v4853
      %v4954 = vadd.f32 %v4507, %v4856
      %v4955 = vadd.f32 %v4508, %v4861
      %v4956 = vadd.f32 %v4509, %v4864
      %v4957 = vadd.f32 %v4510, %v4869
      %v4958 = vadd.f32 %v4511, %v4872
      %v4959 = vadd.f32 %v4512, %v4877
      %v4960 = vadd.f32 %v4513, %v4880
      %v4961 = vadd.f32 %v4514, %v4885
      %v4962 = vadd.f32 %v4515, %v4888
      %v4963 = vadd.f32 %v4516, %v4893
      %v4964 = vadd.f32 %v4517, %v4896
      %v4965 = vadd.f32 %v4518, %v4901
      %v4966 = vadd.f32 %v4519, %v4904
      %v4967 = vadd.f32 %v4520, %v4909
      %v4968 = vadd.f32 %v4521, %v4912
      %v4969 = vadd.f32 %v4522, %v4917
      %v4970 = vadd.f32 %v4523, %v4920
      %v4971 = vadd.f32 %v4524, %v4925
      %v4972 = vadd.f32 %v4525, %v4928
      %v4973 = vadd.f32 %v4526, %v4933
      %v4974 = vadd.f32 %v4527, %v4936
      %v4975 = vld [vmem:[#allocation2 + $0x10] sm:$0x8]
      %s4976 = scalar_lea.vmem %s3, 32
      %v4977 = vld [vmem:[%s4976] sm:$0xf]
      %v4979 = vunpack.c.l.b16 %v4975
      %v4980 = vpack.c.b16 %v4166, %v4979
      %vm4981 = vcmask 1044480
      %v4982 = vrot.slane %v4980, 3
      %v4983 = vrot.slane %v4203, 3
      %v4984 = vsel %vm4981, %v4982, %v4983
      %v4985 = vrot.slane %v4204, 3
      %v4986 = vsel %vm4981, %v4983, %v4985
      %v4987 = vrot.slane %v4205, 3
      %v4988 = vsel %vm4981, %v4985, %v4987
      %v4989 = vrot.slane %v4206, 3
      %v4990 = vsel %vm4981, %v4987, %v4989
      %v4991 = vrot.slane %v4207, 3
      %v4992 = vsel %vm4981, %v4989, %v4991
      %v4993 = vrot.slane %v4208, 3
      %v4994 = vsel %vm4981, %v4991, %v4993
      %v4995 = vrot.slane %v4209, 3
      %v4996 = vsel %vm4981, %v4993, %v4995
      %v4997 = vrot.slane %v4210, 3
      %v4998 = vsel %vm4981, %v4995, %v4997
      %v4999 = vrot.slane %v4211, 3
      %v5000 = vsel %vm4981, %v4997, %v4999
      %v5001 = vrot.slane %v4212, 3
      %v5002 = vsel %vm4981, %v4999, %v5001
      %v5003 = vrot.slane %v4213, 3
      %v5004 = vsel %vm4981, %v5001, %v5003
      %v5005 = vrot.slane %v4214, 3
      %v5006 = vsel %vm4981, %v5003, %v5005
      %v5007 = vrot.slane %v4215, 3
      %v5008 = vsel %vm4981, %v5005, %v5007
      %v5009 = vrot.slane %v4216, 3
      %v5010 = vsel %vm4981, %v5007, %v5009
      %v5011 = vrot.slane %v4217, 3
      %v5012 = vsel %vm4981, %v5009, %v5011
      %v5013 = vrot.slane %v4218, 3
      %v5014 = vsel %vm4981, %v5011, %v5013
      %v5015 = vrot.slane %v4219, 3
      %v5016 = vsel %vm4981, %v5013, %v5015
      %v5017 = vrot.slane %v4533, 3
      %v5018 = vsel %vm4981, %v5015, %v5017
      %v5020 = vsel %vm2123, %v4984, 0
      %v5023 = vsel %vm2123, %v4986, 0
      %v5026 = vsel %vm2123, %v4988, 0
      %v5029 = vsel %vm2123, %v4990, 0
      %v5032 = vsel %vm2123, %v4992, 0
      %v5035 = vsel %vm2123, %v4994, 0
      %v5038 = vsel %vm2123, %v4996, 0
      %v5041 = vsel %vm2123, %v4998, 0
      %v5044 = vsel %vm2123, %v5000, 0
      %v5047 = vsel %vm2123, %v5002, 0
      %v5050 = vsel %vm2123, %v5004, 0
      %v5053 = vsel %vm2123, %v5006, 0
      %v5056 = vsel %vm2123, %v5008, 0
      %v5059 = vsel %vm2123, %v5010, 0
      %v5062 = vsel %vm2123, %v5012, 0
      %v5065 = vsel %vm2123, %v5014, 0
      %v5068 = vsel %vm2123, %v5016, 0
      %v5071 = vsel %vm2123, %v5018, 0
      %v5074 = vsel %vm2178, %v4977, 0
      %5076 = vmatprep.subr.bf16.mxu0 0
      %5077 = vmatpush1.bf16.msra.mxu0 0
      %5078 = vmatprep.subr.bf16.mxu0 0
      %5079 = vmatpush1.bf16.msra.mxu0 0
      %5080 = vmatprep.subr.bf16.mxu0 0
      %5081 = vmatpush1.bf16.msra.mxu0 0
      %5082 = vmatprep.subr.bf16.mxu0 0
      %5083 = vmatpush1.bf16.msra.mxu0 0
      %5084 = vmatprep.subr.bf16.mxu0 0
      %5085 = vmatpush1.bf16.msra.mxu0 0
      %5086 = vmatprep.subr.bf16.mxu0 0
      %5087 = vmatpush1.bf16.msra.mxu0 0
      %5088 = vmatprep.subr.bf16.mxu0 0
      %5089 = vmatpush1.bf16.msra.mxu0 0
      %5090 = vmatprep.subr.bf16.mxu0 0
      %5091 = vmatpush1.bf16.msra.mxu0 %v5074
      %5092 = vmatprep.subr.bf16.mxu0 0
      %5093 = vmatpush2.bf16.msra.mxu0 0
      %5094 = vmatprep.subr.bf16.mxu0 0
      %5095 = vmatpush2.bf16.msra.mxu0 0
      %5096 = vmatprep.subr.bf16.mxu0 0
      %5097 = vmatpush2.bf16.msra.mxu0 0
      %5098 = vmatprep.subr.bf16.mxu0 0
      %5099 = vmatpush2.bf16.msra.mxu0 0
      %5100 = vmatprep.subr.bf16.mxu0 0
      %5101 = vmatpush2.bf16.msra.mxu0 0
      %5102 = vmatprep.subr.bf16.mxu0 0
      %5103 = vmatpush2.bf16.msra.mxu0 0
      %5104 = vmatprep.subr.bf16.mxu0 0
      %5105 = vmatpush2.bf16.msra.mxu0 0
      %5106 = vmatprep.subr.bf16.mxu0 0
      %5107 = vmatpush2.bf16.msra.mxu0 0
      %5108 = vmatprep.mubr.bf16.mxu0 0
      %5109 = vmatmul.mubr.bf16.gmra.mxu0 %v5020
      %v5110 = vpop.f32.mrf.mxu0
      %v5111 = vadd.f32 0.0, %v5110
      %v5112 = vpop.f32.mrf.mxu0
      %v5113 = vpop.f32.mrf.mxu0
      %v5114 = vadd.f32 0.0, %v5113
      %v5115 = vpop.f32.mrf.mxu0
      %5116 = vmatprep.mubr.bf16.mxu0 0
      %5117 = vmatmul.mubr.bf16.gmra.mxu0 %v5023
      %v5118 = vpop.f32.mrf.mxu0
      %v5119 = vadd.f32 0.0, %v5118
      %v5120 = vpop.f32.mrf.mxu0
      %v5121 = vpop.f32.mrf.mxu0
      %v5122 = vadd.f32 0.0, %v5121
      %v5123 = vpop.f32.mrf.mxu0
      %5124 = vmatprep.mubr.bf16.mxu0 0
      %5125 = vmatmul.mubr.bf16.gmra.mxu0 %v5026
      %v5126 = vpop.f32.mrf.mxu0
      %v5127 = vadd.f32 0.0, %v5126
      %v5128 = vpop.f32.mrf.mxu0
      %v5129 = vpop.f32.mrf.mxu0
      %v5130 = vadd.f32 0.0, %v5129
      %v5131 = vpop.f32.mrf.mxu0
      %5132 = vmatprep.mubr.bf16.mxu0 0
      %5133 = vmatmul.mubr.bf16.gmra.mxu0 %v5029
      %v5134 = vpop.f32.mrf.mxu0
      %v5135 = vadd.f32 0.0, %v5134
      %v5136 = vpop.f32.mrf.mxu0
      %v5137 = vpop.f32.mrf.mxu0
      %v5138 = vadd.f32 0.0, %v5137
      %v5139 = vpop.f32.mrf.mxu0
      %5140 = vmatprep.mubr.bf16.mxu0 0
      %5141 = vmatmul.mubr.bf16.gmra.mxu0 %v5032
      %v5142 = vpop.f32.mrf.mxu0
      %v5143 = vadd.f32 0.0, %v5142
      %v5144 = vpop.f32.mrf.mxu0
      %v5145 = vpop.f32.mrf.mxu0
      %v5146 = vadd.f32 0.0, %v5145
      %v5147 = vpop.f32.mrf.mxu0
      %5148 = vmatprep.mubr.bf16.mxu0 0
      %5149 = vmatmul.mubr.bf16.gmra.mxu0 %v5035
      %v5150 = vpop.f32.mrf.mxu0
      %v5151 = vadd.f32 0.0, %v5150
      %v5152 = vpop.f32.mrf.mxu0
      %v5153 = vpop.f32.mrf.mxu0
      %v5154 = vadd.f32 0.0, %v5153
      %v5155 = vpop.f32.mrf.mxu0
      %5156 = vmatprep.mubr.bf16.mxu0 0
      %5157 = vmatmul.mubr.bf16.gmra.mxu0 %v5038
      %v5158 = vpop.f32.mrf.mxu0
      %v5159 = vadd.f32 0.0, %v5158
      %v5160 = vpop.f32.mrf.mxu0
      %v5161 = vpop.f32.mrf.mxu0
      %v5162 = vadd.f32 0.0, %v5161
      %v5163 = vpop.f32.mrf.mxu0
      %5164 = vmatprep.mubr.bf16.mxu0 0
      %5165 = vmatmul.mubr.bf16.gmra.mxu0 %v5041
      %v5166 = vpop.f32.mrf.mxu0
      %v5167 = vadd.f32 0.0, %v5166
      %v5168 = vpop.f32.mrf.mxu0
      %v5169 = vpop.f32.mrf.mxu0
      %v5170 = vadd.f32 0.0, %v5169
      %v5171 = vpop.f32.mrf.mxu0
      %5172 = vmatprep.mubr.bf16.mxu0 0
      %5173 = vmatmul.mubr.bf16.gmra.mxu0 %v5044
      %v5174 = vpop.f32.mrf.mxu0
      %v5175 = vadd.f32 0.0, %v5174
      %v5176 = vpop.f32.mrf.mxu0
      %v5177 = vpop.f32.mrf.mxu0
      %v5178 = vadd.f32 0.0, %v5177
      %v5179 = vpop.f32.mrf.mxu0
      %5180 = vmatprep.mubr.bf16.mxu0 0
      %5181 = vmatmul.mubr.bf16.gmra.mxu0 %v5047
      %v5182 = vpop.f32.mrf.mxu0
      %v5183 = vadd.f32 0.0, %v5182
      %v5184 = vpop.f32.mrf.mxu0
      %v5185 = vpop.f32.mrf.mxu0
      %v5186 = vadd.f32 0.0, %v5185
      %v5187 = vpop.f32.mrf.mxu0
      %5188 = vmatprep.mubr.bf16.mxu0 0
      %5189 = vmatmul.mubr.bf16.gmra.mxu0 %v5050
      %v5190 = vpop.f32.mrf.mxu0
      %v5191 = vadd.f32 0.0, %v5190
      %v5192 = vpop.f32.mrf.mxu0
      %v5193 = vpop.f32.mrf.mxu0
      %v5194 = vadd.f32 0.0, %v5193
      %v5195 = vpop.f32.mrf.mxu0
      %5196 = vmatprep.mubr.bf16.mxu0 0
      %5197 = vmatmul.mubr.bf16.gmra.mxu0 %v5053
      %v5198 = vpop.f32.mrf.mxu0
      %v5199 = vadd.f32 0.0, %v5198
      %v5200 = vpop.f32.mrf.mxu0
      %v5201 = vpop.f32.mrf.mxu0
      %v5202 = vadd.f32 0.0, %v5201
      %v5203 = vpop.f32.mrf.mxu0
      %5204 = vmatprep.mubr.bf16.mxu0 0
      %5205 = vmatmul.mubr.bf16.gmra.mxu0 %v5056
      %v5206 = vpop.f32.mrf.mxu0
      %v5207 = vadd.f32 0.0, %v5206
      %v5208 = vpop.f32.mrf.mxu0
      %v5209 = vpop.f32.mrf.mxu0
      %v5210 = vadd.f32 0.0, %v5209
      %v5211 = vpop.f32.mrf.mxu0
      %5212 = vmatprep.mubr.bf16.mxu0 0
      %5213 = vmatmul.mubr.bf16.gmra.mxu0 %v5059
      %v5214 = vpop.f32.mrf.mxu0
      %v5215 = vadd.f32 0.0, %v5214
      %v5216 = vpop.f32.mrf.mxu0
      %v5217 = vpop.f32.mrf.mxu0
      %v5218 = vadd.f32 0.0, %v5217
      %v5219 = vpop.f32.mrf.mxu0
      %5220 = vmatprep.mubr.bf16.mxu0 0
      %5221 = vmatmul.mubr.bf16.gmra.mxu0 %v5062
      %v5222 = vpop.f32.mrf.mxu0
      %v5223 = vadd.f32 0.0, %v5222
      %v5224 = vpop.f32.mrf.mxu0
      %v5225 = vpop.f32.mrf.mxu0
      %v5226 = vadd.f32 0.0, %v5225
      %v5227 = vpop.f32.mrf.mxu0
      %5228 = vmatprep.mubr.bf16.mxu0 0
      %5229 = vmatmul.mubr.bf16.gmra.mxu0 %v5065
      %v5230 = vpop.f32.mrf.mxu0
      %v5231 = vadd.f32 0.0, %v5230
      %v5232 = vpop.f32.mrf.mxu0
      %v5233 = vpop.f32.mrf.mxu0
      %v5234 = vadd.f32 0.0, %v5233
      %v5235 = vpop.f32.mrf.mxu0
      %5236 = vmatprep.mubr.bf16.mxu0 0
      %5237 = vmatmul.mubr.bf16.gmra.mxu0 %v5068
      %v5238 = vpop.f32.mrf.mxu0
      %v5239 = vadd.f32 0.0, %v5238
      %v5240 = vpop.f32.mrf.mxu0
      %v5241 = vpop.f32.mrf.mxu0
      %v5242 = vadd.f32 0.0, %v5241
      %v5243 = vpop.f32.mrf.mxu0
      %5244 = vmatprep.mubr.bf16.mxu0 0
      %5245 = vmatmul.mubr.bf16.gmra.mxu0 %v5071
      %v5246 = vpop.f32.mrf.mxu0
      %v5247 = vadd.f32 0.0, %v5246
      %v5248 = vpop.f32.mrf.mxu0
      %v5249 = vpop.f32.mrf.mxu0
      %v5250 = vadd.f32 0.0, %v5249
      %v5251 = vpop.f32.mrf.mxu0
      %5252 = vdwg.mxu0
      %v5253 = vadd.f32 %v4939, %v5111
      %v5254 = vadd.f32 %v4940, %v5114
      %v5255 = vadd.f32 %v4941, %v5119
      %v5256 = vadd.f32 %v4942, %v5122
      %v5257 = vadd.f32 %v4943, %v5127
      %v5258 = vadd.f32 %v4944, %v5130
      %v5259 = vadd.f32 %v4945, %v5135
      %v5260 = vadd.f32 %v4946, %v5138
      %v5261 = vadd.f32 %v4947, %v5143
      %v5262 = vadd.f32 %v4948, %v5146
      %v5263 = vadd.f32 %v4949, %v5151
      %v5264 = vadd.f32 %v4950, %v5154
      %v5265 = vadd.f32 %v4951, %v5159
      %v5266 = vadd.f32 %v4952, %v5162
      %v5267 = vadd.f32 %v4953, %v5167
      %v5268 = vadd.f32 %v4954, %v5170
      %v5269 = vadd.f32 %v4955, %v5175
      %v5270 = vadd.f32 %v4956, %v5178
      %v5271 = vadd.f32 %v4957, %v5183
      %v5272 = vadd.f32 %v4958, %v5186
      %v5273 = vadd.f32 %v4959, %v5191
      %v5274 = vadd.f32 %v4960, %v5194
      %v5275 = vadd.f32 %v4961, %v5199
      %v5276 = vadd.f32 %v4962, %v5202
      %v5277 = vadd.f32 %v4963, %v5207
      %v5278 = vadd.f32 %v4964, %v5210
      %v5279 = vadd.f32 %v4965, %v5215
      %v5280 = vadd.f32 %v4966, %v5218
      %v5281 = vadd.f32 %v4967, %v5223
      %v5282 = vadd.f32 %v4968, %v5226
      %v5283 = vadd.f32 %v4969, %v5231
      %v5284 = vadd.f32 %v4970, %v5234
      %v5285 = vadd.f32 %v4971, %v5239
      %v5286 = vadd.f32 %v4972, %v5242
      %v5287 = vadd.f32 %v4973, %v5247
      %v5288 = vadd.f32 %v4974, %v5250
      %v5289 = vsel %vm883, 1, 0
      %v5290 = vsel %vm884, 1, 0
      %v5291 = vsel %vm885, 1, 0
      %v5292 = vsel %vm886, 1, 0
      %v5293 = vsel %vm887, 1, 0
      %v5294 = vsel %vm888, 1, 0
      %v5295 = vsel %vm889, 1, 0
      %v5296 = vsel %vm890, 1, 0
      %v5297 = vsel %vm891, 1, 0
      %v5298 = vsel %vm892, 1, 0
      %v5299 = vsel %vm893, 1, 0
      %v5300 = vsel %vm894, 1, 0
      %v5301 = vsel %vm895, 1, 0
      %v5302 = vsel %vm896, 1, 0
      %v5303 = vsel %vm897, 1, 0
      %v5304 = vsel %vm898, 1, 0
      %v5305 = vsel %vm899, 1, 0
      %v5306 = vsel %vm900, 1, 0
      %v5307 = vsel %vm901, 1, 0
      %v5308 = vsel %vm902, 1, 0
      %v5309 = vsel %vm903, 1, 0
      %v5310 = vsel %vm904, 1, 0
      %v5311 = vsel %vm905, 1, 0
      %v5312 = vsel %vm906, 1, 0
      %v5313 = vsel %vm907, 1, 0
      %v5314 = vsel %vm908, 1, 0
      %v5315 = vsel %vm909, 1, 0
      %v5316 = vsel %vm910, 1, 0
      %v5317 = vsel %vm911, 1, 0
      %v5318 = vsel %vm912, 1, 0
      %v5319 = vsel %vm913, 1, 0
      %v5320 = vsel %vm914, 1, 0
      %v5321 = vsel %vm915, 1, 0
      %v5322 = vsel %vm916, 1, 0
      %v5323 = vsel %vm917, 1, 0
      %v5324 = vsel %vm918, 1, 0
      %vm5325 = vcmp.eq.s32.totalorder %v5289, 1
      %vm5326 = vcmp.eq.s32.totalorder %v5290, 1
      %vm5327 = vcmp.eq.s32.totalorder %v5291, 1
      %vm5328 = vcmp.eq.s32.totalorder %v5292, 1
      %vm5329 = vcmp.eq.s32.totalorder %v5293, 1
      %vm5330 = vcmp.eq.s32.totalorder %v5294, 1
      %vm5331 = vcmp.eq.s32.totalorder %v5295, 1
      %vm5332 = vcmp.eq.s32.totalorder %v5296, 1
      %vm5333 = vcmp.eq.s32.totalorder %v5297, 1
      %vm5334 = vcmp.eq.s32.totalorder %v5298, 1
      %vm5335 = vcmp.eq.s32.totalorder %v5299, 1
      %vm5336 = vcmp.eq.s32.totalorder %v5300, 1
      %vm5337 = vcmp.eq.s32.totalorder %v5301, 1
      %vm5338 = vcmp.eq.s32.totalorder %v5302, 1
      %vm5339 = vcmp.eq.s32.totalorder %v5303, 1
      %vm5340 = vcmp.eq.s32.totalorder %v5304, 1
      %vm5341 = vcmp.eq.s32.totalorder %v5305, 1
      %vm5342 = vcmp.eq.s32.totalorder %v5306, 1
      %vm5343 = vcmp.eq.s32.totalorder %v5307, 1
      %vm5344 = vcmp.eq.s32.totalorder %v5308, 1
      %vm5345 = vcmp.eq.s32.totalorder %v5309, 1
      %vm5346 = vcmp.eq.s32.totalorder %v5310, 1
      %vm5347 = vcmp.eq.s32.totalorder %v5311, 1
      %vm5348 = vcmp.eq.s32.totalorder %v5312, 1
      %vm5349 = vcmp.eq.s32.totalorder %v5313, 1
      %vm5350 = vcmp.eq.s32.totalorder %v5314, 1
      %vm5351 = vcmp.eq.s32.totalorder %v5315, 1
      %vm5352 = vcmp.eq.s32.totalorder %v5316, 1
      %vm5353 = vcmp.eq.s32.totalorder %v5317, 1
      %vm5354 = vcmp.eq.s32.totalorder %v5318, 1
      %vm5355 = vcmp.eq.s32.totalorder %v5319, 1
      %vm5356 = vcmp.eq.s32.totalorder %v5320, 1
      %vm5357 = vcmp.eq.s32.totalorder %v5321, 1
      %vm5358 = vcmp.eq.s32.totalorder %v5322, 1
      %vm5359 = vcmp.eq.s32.totalorder %v5323, 1
      %vm5360 = vcmp.eq.s32.totalorder %v5324, 1
      %v5361 = vsel %vm5325, %v5253, 0.0
      %v5362 = vsel %vm5326, %v5254, 0.0
      %v5363 = vsel %vm5327, %v5255, 0.0
      %v5364 = vsel %vm5328, %v5256, 0.0
      %v5365 = vsel %vm5329, %v5257, 0.0
      %v5366 = vsel %vm5330, %v5258, 0.0
      %v5367 = vsel %vm5331, %v5259, 0.0
      %v5368 = vsel %vm5332, %v5260, 0.0
      %v5369 = vsel %vm5333, %v5261, 0.0
      %v5370 = vsel %vm5334, %v5262, 0.0
      %v5371 = vsel %vm5335, %v5263, 0.0
      %v5372 = vsel %vm5336, %v5264, 0.0
      %v5373 = vsel %vm5337, %v5265, 0.0
      %v5374 = vsel %vm5338, %v5266, 0.0
      %v5375 = vsel %vm5339, %v5267, 0.0
      %v5376 = vsel %vm5340, %v5268, 0.0
      %v5377 = vsel %vm5341, %v5269, 0.0
      %v5378 = vsel %vm5342, %v5270, 0.0
      %v5379 = vsel %vm5343, %v5271, 0.0
      %v5380 = vsel %vm5344, %v5272, 0.0
      %v5381 = vsel %vm5345, %v5273, 0.0
      %v5382 = vsel %vm5346, %v5274, 0.0
      %v5383 = vsel %vm5347, %v5275, 0.0
      %v5384 = vsel %vm5348, %v5276, 0.0
      %v5385 = vsel %vm5349, %v5277, 0.0
      %v5386 = vsel %vm5350, %v5278, 0.0
      %v5387 = vsel %vm5351, %v5279, 0.0
      %v5388 = vsel %vm5352, %v5280, 0.0
      %v5389 = vsel %vm5353, %v5281, 0.0
      %v5390 = vsel %vm5354, %v5282, 0.0
      %v5391 = vsel %vm5355, %v5283, 0.0
      %v5392 = vsel %vm5356, %v5284, 0.0
      %v5393 = vsel %vm5357, %v5285, 0.0
      %v5394 = vsel %vm5358, %v5286, 0.0
      %v5395 = vsel %vm5359, %v5287, 0.0
      %v5396 = vsel %vm5360, %v5288, 0.0
      %5397 = vst.msk [vmem:[%s262] sm:$0xf] %vm1798, 0
      %5398 = vst.msk [vmem:[%s262 + $0x4] sm:$0xf] %vm1798, 0
      %vm5399 = vcmask 58368
      %vm5400 = vsmask.f32 1280
      %vm5401 = vmand %vm5399, %vm5400
      %v5402 = vld [vmem:[%s262 + $0x8] sm:$0x3]
      %v5403 = vsel %vm5401, 0, %v5402
      %5404 = vst [vmem:[%s262 + $0x8] sm:$0x3] %v5403
      %v5405 = vpack.c.bf16 %v5362, %v5361
      %v5406 = vpack.c.bf16 %v5364, %v5363
      %v5407 = vpack.c.bf16 %v5366, %v5365
      %v5408 = vpack.c.bf16 %v5368, %v5367
      %v5409 = vpack.c.bf16 %v5370, %v5369
      %v5410 = vpack.c.bf16 %v5372, %v5371
      %v5411 = vpack.c.bf16 %v5374, %v5373
      %v5412 = vpack.c.bf16 %v5376, %v5375
      %v5413 = vpack.c.bf16 %v5378, %v5377
      %v5414 = vpack.c.bf16 %v5380, %v5379
      %v5415 = vpack.c.bf16 %v5382, %v5381
      %v5416 = vpack.c.bf16 %v5384, %v5383
      %v5417 = vpack.c.bf16 %v5386, %v5385
      %v5418 = vpack.c.bf16 %v5388, %v5387
      %v5419 = vpack.c.bf16 %v5390, %v5389
      %v5420 = vpack.c.bf16 %v5392, %v5391
      %v5421 = vpack.c.bf16 %v5394, %v5393
      %v5422 = vpack.c.bf16 %v5396, %v5395
      %v5441 = vunpack.c.l.b16 %v5405
      %v5442 = vunpack.c.h.b16 %v5405
      %v5443 = vunpack.c.l.b16 %v5406
      %v5444 = vunpack.c.h.b16 %v5406
      %v5445 = vunpack.c.l.b16 %v5407
      %v5446 = vunpack.c.h.b16 %v5407
      %v5447 = vunpack.c.l.b16 %v5408
      %v5448 = vunpack.c.h.b16 %v5408
      %v5449 = vunpack.c.l.b16 %v5409
      %v5450 = vunpack.c.h.b16 %v5409
      %v5451 = vunpack.c.l.b16 %v5410
      %v5452 = vunpack.c.h.b16 %v5410
      %v5453 = vunpack.c.l.b16 %v5411
      %v5454 = vunpack.c.h.b16 %v5411
      %v5455 = vunpack.c.l.b16 %v5412
      %v5456 = vunpack.c.h.b16 %v5412
      %v5457 = vunpack.c.l.b16 %v5413
      %v5458 = vunpack.c.h.b16 %v5413
      %v5459 = vunpack.c.l.b16 %v5414
      %v5460 = vunpack.c.h.b16 %v5414
      %v5461 = vunpack.c.l.b16 %v5415
      %v5462 = vunpack.c.h.b16 %v5415
      %v5463 = vunpack.c.l.b16 %v5416
      %v5464 = vunpack.c.h.b16 %v5416
      %v5465 = vunpack.c.l.b16 %v5417
      %v5466 = vunpack.c.h.b16 %v5417
      %v5467 = vunpack.c.l.b16 %v5418
      %v5468 = vunpack.c.h.b16 %v5418
      %v5469 = vunpack.c.l.b16 %v5419
      %v5470 = vunpack.c.h.b16 %v5419
      %v5471 = vunpack.c.l.b16 %v5420
      %v5472 = vunpack.c.h.b16 %v5420
      %v5473 = vunpack.c.l.b16 %v5421
      %v5474 = vunpack.c.h.b16 %v5421
      %v5475 = vunpack.c.l.b16 %v5422
      %v5476 = vunpack.c.h.b16 %v5422
      %v5477 = vpack.c.b16 %v5441, %v5441
      %v5478 = vpack.c.b16 %v5442, %v5442
      %v5479 = vpack.c.b16 %v5443, %v5443
      %v5480 = vpack.c.b16 %v5444, %v5444
      %v5481 = vpack.c.b16 %v5445, %v5445
      %v5482 = vpack.c.b16 %v5446, %v5446
      %v5483 = vpack.c.b16 %v5447, %v5447
      %v5484 = vpack.c.b16 %v5448, %v5448
      %v5485 = vpack.c.b16 %v5449, %v5449
      %v5486 = vpack.c.b16 %v5450, %v5450
      %v5487 = vpack.c.b16 %v5451, %v5451
      %v5488 = vpack.c.b16 %v5452, %v5452
      %v5489 = vpack.c.b16 %v5453, %v5453
      %v5490 = vpack.c.b16 %v5454, %v5454
      %v5491 = vpack.c.b16 %v5455, %v5455
      %v5492 = vpack.c.b16 %v5456, %v5456
      %v5493 = vpack.c.b16 %v5457, %v5457
      %v5494 = vpack.c.b16 %v5458, %v5458
      %v5495 = vpack.c.b16 %v5459, %v5459
      %v5496 = vpack.c.b16 %v5460, %v5460
      %v5497 = vpack.c.b16 %v5461, %v5461
      %v5498 = vpack.c.b16 %v5462, %v5462
      %v5499 = vpack.c.b16 %v5463, %v5463
      %v5500 = vpack.c.b16 %v5464, %v5464
      %v5501 = vpack.c.b16 %v5465, %v5465
      %v5502 = vpack.c.b16 %v5466, %v5466
      %v5503 = vpack.c.b16 %v5467, %v5467
      %v5504 = vpack.c.b16 %v5468, %v5468
      %v5505 = vpack.c.b16 %v5469, %v5469
      %v5506 = vpack.c.b16 %v5470, %v5470
      %v5507 = vpack.c.b16 %v5471, %v5471
      %v5508 = vpack.c.b16 %v5472, %v5472
      %v5509 = vpack.c.b16 %v5473, %v5473
      %v5510 = vpack.c.b16 %v5474, %v5474
      %v5511 = vpack.c.b16 %v5475, %v5475
      %v5512 = vpack.c.b16 %v5476, %v5476
      %vm5513 = vsmask.f32 5392
      %vm5514 = vmor %vm5400, %vm5513
      %v5516 = vshrl.u32 %v5477, 16
      %v5518 = vrot.slane %v5516, 6
      %v5519 = vshll.u32 %v5477, 16
      %v5521 = vrot.slane %v5519, 7
      %v5522 = vor.u32 %v5518, %v5521
      %v5523 = vrot.slane %v5522, 4
      %v5525 = vshrl.u32 %v5478, 16
      %v5527 = vrot.slane %v5525, 6
      %v5528 = vshll.u32 %v5478, 16
      %v5530 = vrot.slane %v5528, 7
      %v5531 = vor.u32 %v5527, %v5530
      %v5532 = vsel %vm5514, %v5523, %v5531
      %v5533 = vrot.slane %v5531, 4
      %v5535 = vshrl.u32 %v5479, 16
      %v5537 = vrot.slane %v5535, 6
      %v5538 = vshll.u32 %v5479, 16
      %v5540 = vrot.slane %v5538, 7
      %v5541 = vor.u32 %v5537, %v5540
      %v5542 = vsel %vm5514, %v5533, %v5541
      %v5543 = vrot.slane %v5541, 4
      %v5545 = vshrl.u32 %v5480, 16
      %v5547 = vrot.slane %v5545, 6
      %v5548 = vshll.u32 %v5480, 16
      %v5550 = vrot.slane %v5548, 7
      %v5551 = vor.u32 %v5547, %v5550
      %v5552 = vsel %vm5514, %v5543, %v5551
      %v5553 = vrot.slane %v5551, 4
      %v5555 = vshrl.u32 %v5481, 16
      %v5557 = vrot.slane %v5555, 6
      %v5558 = vshll.u32 %v5481, 16
      %v5560 = vrot.slane %v5558, 7
      %v5561 = vor.u32 %v5557, %v5560
      %v5562 = vsel %vm5514, %v5553, %v5561
      %v5563 = vrot.slane %v5561, 4
      %v5565 = vshrl.u32 %v5482, 16
      %v5567 = vrot.slane %v5565, 6
      %v5568 = vshll.u32 %v5482, 16
      %v5570 = vrot.slane %v5568, 7
      %v5571 = vor.u32 %v5567, %v5570
      %v5572 = vsel %vm5514, %v5563, %v5571
      %v5573 = vrot.slane %v5571, 4
      %v5575 = vshrl.u32 %v5483, 16
      %v5577 = vrot.slane %v5575, 6
      %v5578 = vshll.u32 %v5483, 16
      %v5580 = vrot.slane %v5578, 7
      %v5581 = vor.u32 %v5577, %v5580
      %v5582 = vsel %vm5514, %v5573, %v5581
      %v5583 = vrot.slane %v5581, 4
      %v5585 = vshrl.u32 %v5484, 16
      %v5587 = vrot.slane %v5585, 6
      %v5588 = vshll.u32 %v5484, 16
      %v5590 = vrot.slane %v5588, 7
      %v5591 = vor.u32 %v5587, %v5590
      %v5592 = vsel %vm5514, %v5583, %v5591
      %v5593 = vrot.slane %v5591, 4
      %v5595 = vshrl.u32 %v5485, 16
      %v5597 = vrot.slane %v5595, 6
      %v5598 = vshll.u32 %v5485, 16
      %v5600 = vrot.slane %v5598, 7
      %v5601 = vor.u32 %v5597, %v5600
      %v5602 = vsel %vm5514, %v5593, %v5601
      %v5603 = vrot.slane %v5601, 4
      %v5605 = vshrl.u32 %v5486, 16
      %v5607 = vrot.slane %v5605, 6
      %v5608 = vshll.u32 %v5486, 16
      %v5610 = vrot.slane %v5608, 7
      %v5611 = vor.u32 %v5607, %v5610
      %v5612 = vsel %vm5514, %v5603, %v5611
      %v5613 = vrot.slane %v5611, 4
      %v5615 = vshrl.u32 %v5487, 16
      %v5617 = vrot.slane %v5615, 6
      %v5618 = vshll.u32 %v5487, 16
      %v5620 = vrot.slane %v5618, 7
      %v5621 = vor.u32 %v5617, %v5620
      %v5622 = vsel %vm5514, %v5613, %v5621
      %v5623 = vrot.slane %v5621, 4
      %v5625 = vshrl.u32 %v5488, 16
      %v5627 = vrot.slane %v5625, 6
      %v5628 = vshll.u32 %v5488, 16
      %v5630 = vrot.slane %v5628, 7
      %v5631 = vor.u32 %v5627, %v5630
      %v5632 = vsel %vm5514, %v5623, %v5631
      %v5633 = vrot.slane %v5631, 4
      %v5635 = vshrl.u32 %v5489, 16
      %v5637 = vrot.slane %v5635, 6
      %v5638 = vshll.u32 %v5489, 16
      %v5640 = vrot.slane %v5638, 7
      %v5641 = vor.u32 %v5637, %v5640
      %v5642 = vsel %vm5514, %v5633, %v5641
      %v5643 = vrot.slane %v5641, 4
      %v5645 = vshrl.u32 %v5490, 16
      %v5647 = vrot.slane %v5645, 6
      %v5648 = vshll.u32 %v5490, 16
      %v5650 = vrot.slane %v5648, 7
      %v5651 = vor.u32 %v5647, %v5650
      %v5652 = vsel %vm5514, %v5643, %v5651
      %v5653 = vrot.slane %v5651, 4
      %v5655 = vshrl.u32 %v5491, 16
      %v5657 = vrot.slane %v5655, 6
      %v5658 = vshll.u32 %v5491, 16
      %v5660 = vrot.slane %v5658, 7
      %v5661 = vor.u32 %v5657, %v5660
      %v5662 = vsel %vm5514, %v5653, %v5661
      %v5663 = vrot.slane %v5661, 4
      %v5665 = vshrl.u32 %v5492, 16
      %v5667 = vrot.slane %v5665, 6
      %v5668 = vshll.u32 %v5492, 16
      %v5670 = vrot.slane %v5668, 7
      %v5671 = vor.u32 %v5667, %v5670
      %v5672 = vsel %vm5514, %v5663, %v5671
      %v5673 = vrot.slane %v5671, 4
      %v5675 = vshrl.u32 %v5493, 16
      %v5677 = vrot.slane %v5675, 6
      %v5678 = vshll.u32 %v5493, 16
      %v5680 = vrot.slane %v5678, 7
      %v5681 = vor.u32 %v5677, %v5680
      %v5682 = vsel %vm5514, %v5673, %v5681
      %v5683 = vrot.slane %v5681, 4
      %v5685 = vshrl.u32 %v5494, 16
      %v5687 = vrot.slane %v5685, 6
      %v5688 = vshll.u32 %v5494, 16
      %v5690 = vrot.slane %v5688, 7
      %v5691 = vor.u32 %v5687, %v5690
      %v5692 = vsel %vm5514, %v5683, %v5691
      %v5693 = vrot.slane %v5691, 4
      %v5695 = vshrl.u32 %v5495, 16
      %v5697 = vrot.slane %v5695, 6
      %v5698 = vshll.u32 %v5495, 16
      %v5700 = vrot.slane %v5698, 7
      %v5701 = vor.u32 %v5697, %v5700
      %v5702 = vsel %vm5514, %v5693, %v5701
      %v5703 = vrot.slane %v5701, 4
      %v5705 = vshrl.u32 %v5496, 16
      %v5707 = vrot.slane %v5705, 6
      %v5708 = vshll.u32 %v5496, 16
      %v5710 = vrot.slane %v5708, 7
      %v5711 = vor.u32 %v5707, %v5710
      %v5712 = vsel %vm5514, %v5703, %v5711
      %v5713 = vrot.slane %v5711, 4
      %v5715 = vshrl.u32 %v5497, 16
      %v5717 = vrot.slane %v5715, 6
      %v5718 = vshll.u32 %v5497, 16
      %v5720 = vrot.slane %v5718, 7
      %v5721 = vor.u32 %v5717, %v5720
      %v5722 = vsel %vm5514, %v5713, %v5721
      %v5723 = vrot.slane %v5721, 4
      %v5725 = vshrl.u32 %v5498, 16
      %v5727 = vrot.slane %v5725, 6
      %v5728 = vshll.u32 %v5498, 16
      %v5730 = vrot.slane %v5728, 7
      %v5731 = vor.u32 %v5727, %v5730
      %v5732 = vsel %vm5514, %v5723, %v5731
      %v5733 = vrot.slane %v5731, 4
      %v5735 = vshrl.u32 %v5499, 16
      %v5737 = vrot.slane %v5735, 6
      %v5738 = vshll.u32 %v5499, 16
      %v5740 = vrot.slane %v5738, 7
      %v5741 = vor.u32 %v5737, %v5740
      %v5742 = vsel %vm5514, %v5733, %v5741
      %v5743 = vrot.slane %v5741, 4
      %v5745 = vshrl.u32 %v5500, 16
      %v5747 = vrot.slane %v5745, 6
      %v5748 = vshll.u32 %v5500, 16
      %v5750 = vrot.slane %v5748, 7
      %v5751 = vor.u32 %v5747, %v5750
      %v5752 = vsel %vm5514, %v5743, %v5751
      %v5753 = vrot.slane %v5751, 4
      %v5755 = vshrl.u32 %v5501, 16
      %v5757 = vrot.slane %v5755, 6
      %v5758 = vshll.u32 %v5501, 16
      %v5760 = vrot.slane %v5758, 7
      %v5761 = vor.u32 %v5757, %v5760
      %v5762 = vsel %vm5514, %v5753, %v5761
      %v5763 = vrot.slane %v5761, 4
      %v5765 = vshrl.u32 %v5502, 16
      %v5767 = vrot.slane %v5765, 6
      %v5768 = vshll.u32 %v5502, 16
      %v5770 = vrot.slane %v5768, 7
      %v5771 = vor.u32 %v5767, %v5770
      %v5772 = vsel %vm5514, %v5763, %v5771
      %v5773 = vrot.slane %v5771, 4
      %v5775 = vshrl.u32 %v5503, 16
      %v5777 = vrot.slane %v5775, 6
      %v5778 = vshll.u32 %v5503, 16
      %v5780 = vrot.slane %v5778, 7
      %v5781 = vor.u32 %v5777, %v5780
      %v5782 = vsel %vm5514, %v5773, %v5781
      %v5783 = vrot.slane %v5781, 4
      %v5785 = vshrl.u32 %v5504, 16
      %v5787 = vrot.slane %v5785, 6
      %v5788 = vshll.u32 %v5504, 16
      %v5790 = vrot.slane %v5788, 7
      %v5791 = vor.u32 %v5787, %v5790
      %v5792 = vsel %vm5514, %v5783, %v5791
      %v5793 = vrot.slane %v5791, 4
      %v5795 = vshrl.u32 %v5505, 16
      %v5797 = vrot.slane %v5795, 6
      %v5798 = vshll.u32 %v5505, 16
      %v5800 = vrot.slane %v5798, 7
      %v5801 = vor.u32 %v5797, %v5800
      %v5802 = vsel %vm5514, %v5793, %v5801
      %v5803 = vrot.slane %v5801, 4
      %v5805 = vshrl.u32 %v5506, 16
      %v5807 = vrot.slane %v5805, 6
      %v5808 = vshll.u32 %v5506, 16
      %v5810 = vrot.slane %v5808, 7
      %v5811 = vor.u32 %v5807, %v5810
      %v5812 = vsel %vm5514, %v5803, %v5811
      %v5813 = vrot.slane %v5811, 4
      %v5815 = vshrl.u32 %v5507, 16
      %v5817 = vrot.slane %v5815, 6
      %v5818 = vshll.u32 %v5507, 16
      %v5820 = vrot.slane %v5818, 7
      %v5821 = vor.u32 %v5817, %v5820
      %v5822 = vsel %vm5514, %v5813, %v5821
      %v5823 = vrot.slane %v5821, 4
      %v5825 = vshrl.u32 %v5508, 16
      %v5827 = vrot.slane %v5825, 6
      %v5828 = vshll.u32 %v5508, 16
      %v5830 = vrot.slane %v5828, 7
      %v5831 = vor.u32 %v5827, %v5830
      %v5832 = vsel %vm5514, %v5823, %v5831
      %v5833 = vrot.slane %v5831, 4
      %v5835 = vshrl.u32 %v5509, 16
      %v5837 = vrot.slane %v5835, 6
      %v5838 = vshll.u32 %v5509, 16
      %v5840 = vrot.slane %v5838, 7
      %v5841 = vor.u32 %v5837, %v5840
      %v5842 = vsel %vm5514, %v5833, %v5841
      %v5843 = vrot.slane %v5841, 4
      %v5845 = vshrl.u32 %v5510, 16
      %v5847 = vrot.slane %v5845, 6
      %v5848 = vshll.u32 %v5510, 16
      %v5850 = vrot.slane %v5848, 7
      %v5851 = vor.u32 %v5847, %v5850
      %v5852 = vsel %vm5514, %v5843, %v5851
      %v5853 = vrot.slane %v5851, 4
      %v5855 = vshrl.u32 %v5511, 16
      %v5857 = vrot.slane %v5855, 6
      %v5858 = vshll.u32 %v5511, 16
      %v5860 = vrot.slane %v5858, 7
      %v5861 = vor.u32 %v5857, %v5860
      %v5862 = vsel %vm5514, %v5853, %v5861
      %v5863 = vrot.slane %v5861, 4
      %v5865 = vshrl.u32 %v5512, 16
      %v5867 = vrot.slane %v5865, 6
      %v5868 = vshll.u32 %v5512, 16
      %v5870 = vrot.slane %v5868, 7
      %v5871 = vor.u32 %v5867, %v5870
      %v5872 = vsel %vm5514, %v5863, %v5871
      %v5873 = vrot.slane %v5871, 4
      %vm5911 = vcmask 60417
      %vm5912 = vsmask.f32 7942
      %vm5913 = vmand %vm5911, %vm5912
      %v5914 = vld [vmem:[%s262 + $0x8] sm:$0xe]
      %v5915 = vsel %vm5913, %v5522, %v5914
      %5916 = vst [vmem:[%s262 + $0x8] sm:$0xe] %v5915
      %5917 = vst.msk [vmem:[%s262 + $0xc] sm:$0xf] %vm1798, %v5532
      %5918 = vst.msk [vmem:[%s262 + $0x10] sm:$0xf] %vm1798, %v5542
      %5919 = vst.msk [vmem:[%s262 + $0x14] sm:$0xf] %vm1798, %v5552
      %5920 = vst.msk [vmem:[%s262 + $0x18] sm:$0xf] %vm1798, %v5562
      %5921 = vst.msk [vmem:[%s262 + $0x1c] sm:$0xf] %vm1798, %v5572
      %5922 = vst.msk [vmem:[%s262 + $0x20] sm:$0xf] %vm1798, %v5582
      %5923 = vst.msk [vmem:[%s262 + $0x24] sm:$0xf] %vm1798, %v5592
      %5924 = vst.msk [vmem:[%s262 + $0x28] sm:$0xf] %vm1798, %v5602
      %5925 = vst.msk [vmem:[%s262 + $0x2c] sm:$0xf] %vm1798, %v5612
      %5926 = vst.msk [vmem:[%s262 + $0x30] sm:$0xf] %vm1798, %v5622
      %5927 = vst.msk [vmem:[%s262 + $0x34] sm:$0xf] %vm1798, %v5632
      %5928 = vst.msk [vmem:[%s262 + $0x38] sm:$0xf] %vm1798, %v5642
      %5929 = vst.msk [vmem:[%s262 + $0x3c] sm:$0xf] %vm1798, %v5652
      %5930 = vst.msk [vmem:[%s262 + $0x40] sm:$0xf] %vm1798, %v5662
      %5931 = vst.msk [vmem:[%s262 + $0x44] sm:$0xf] %vm1798, %v5672
      %5932 = vst.msk [vmem:[%s262 + $0x48] sm:$0xf] %vm1798, %v5682
      %5933 = vst.msk [vmem:[%s262 + $0x4c] sm:$0xf] %vm1798, %v5692
      %5934 = vst.msk [vmem:[%s262 + $0x50] sm:$0xf] %vm1798, %v5702
      %5935 = vst.msk [vmem:[%s262 + $0x54] sm:$0xf] %vm1798, %v5712
      %5936 = vst.msk [vmem:[%s262 + $0x58] sm:$0xf] %vm1798, %v5722
      %5937 = vst.msk [vmem:[%s262 + $0x5c] sm:$0xf] %vm1798, %v5732
      %5938 = vst.msk [vmem:[%s262 + $0x60] sm:$0xf] %vm1798, %v5742
      %5939 = vst.msk [vmem:[%s262 + $0x64] sm:$0xf] %vm1798, %v5752
      %5940 = vst.msk [vmem:[%s262 + $0x68] sm:$0xf] %vm1798, %v5762
      %5941 = vst.msk [vmem:[%s262 + $0x6c] sm:$0xf] %vm1798, %v5772
      %5942 = vst.msk [vmem:[%s262 + $0x70] sm:$0xf] %vm1798, %v5782
      %5943 = vst.msk [vmem:[%s262 + $0x74] sm:$0xf] %vm1798, %v5792
      %5944 = vst.msk [vmem:[%s262 + $0x78] sm:$0xf] %vm1798, %v5802
      %5945 = vst.msk [vmem:[%s262 + $0x7c] sm:$0xf] %vm1798, %v5812
      %5946 = vst.msk [vmem:[%s262 + $0x80] sm:$0xf] %vm1798, %v5822
      %5947 = vst.msk [vmem:[%s262 + $0x84] sm:$0xf] %vm1798, %v5832
      %5948 = vst.msk [vmem:[%s262 + $0x88] sm:$0xf] %vm1798, %v5842
      %5949 = vst.msk [vmem:[%s262 + $0x8c] sm:$0xf] %vm1798, %v5852
      %5950 = vst.msk [vmem:[%s262 + $0x90] sm:$0xf] %vm1798, %v5862
      %5951 = vst.msk [vmem:[%s262 + $0x94] sm:$0xf] %vm1798, %v5872
      %v5952 = vld [vmem:[%s262 + $0x98] sm:$0x3]
      %v5953 = vsel %vm5401, %v5873, %v5952
      %5954 = vst [vmem:[%s262 + $0x98] sm:$0x3] %v5953
      %v5955 = vld [vmem:[%s262 + $0x98] sm:$0xe]
      %v5956 = vsel %vm5913, 0, %v5955
      %5957 = vst [vmem:[%s262 + $0x98] sm:$0xe] %v5956
      %5958 = vst.msk [vmem:[%s262 + $0x9c] sm:$0xf] %vm1798, 0
      %5959 = vst.msk [vmem:[%s262 + $0xa0] sm:$0x7] %vm1839, 0
      %v5960 = vsel %vm2123, %v5361, 0.0
      %v5961 = vsel %vm2123, %v5362, 0.0
      %v5962 = vadd.f32 %v5960, %v5961
      %v5963 = vsel %vm2123, %v5363, 0.0
      %v5964 = vadd.f32 %v5962, %v5963
      %v5965 = vsel %vm2123, %v5364, 0.0
      %v5966 = vadd.f32 %v5964, %v5965
      %v5967 = vsel %vm2123, %v5365, 0.0
      %v5968 = vadd.f32 %v5966, %v5967
      %v5969 = vsel %vm2123, %v5366, 0.0
      %v5970 = vadd.f32 %v5968, %v5969
      %v5971 = vsel %vm2123, %v5367, 0.0
      %v5972 = vadd.f32 %v5970, %v5971
      %v5973 = vsel %vm2123, %v5368, 0.0
      %v5974 = vadd.f32 %v5972, %v5973
      %v5975 = vsel %vm2123, %v5369, 0.0
      %v5976 = vadd.f32 %v5974, %v5975
      %v5977 = vsel %vm2123, %v5370, 0.0
      %v5978 = vadd.f32 %v5976, %v5977
      %v5979 = vsel %vm2123, %v5371, 0.0
      %v5980 = vadd.f32 %v5978, %v5979
      %v5981 = vsel %vm2123, %v5372, 0.0
      %v5982 = vadd.f32 %v5980, %v5981
      %v5983 = vsel %vm2123, %v5373, 0.0
      %v5984 = vadd.f32 %v5982, %v5983
      %v5985 = vsel %vm2123, %v5374, 0.0
      %v5986 = vadd.f32 %v5984, %v5985
      %v5987 = vsel %vm2123, %v5375, 0.0
      %v5988 = vadd.f32 %v5986, %v5987
      %v5989 = vsel %vm2123, %v5376, 0.0
      %v5990 = vadd.f32 %v5988, %v5989
      %v5991 = vsel %vm2123, %v5377, 0.0
      %v5992 = vadd.f32 %v5990, %v5991
      %v5993 = vsel %vm2123, %v5378, 0.0
      %v5994 = vadd.f32 %v5992, %v5993
      %v5995 = vsel %vm2123, %v5379, 0.0
      %v5996 = vadd.f32 %v5994, %v5995
      %v5997 = vsel %vm2123, %v5380, 0.0
      %v5998 = vadd.f32 %v5996, %v5997
      %v5999 = vsel %vm2123, %v5381, 0.0
      %v6000 = vadd.f32 %v5998, %v5999
      %v6001 = vsel %vm2123, %v5382, 0.0
      %v6002 = vadd.f32 %v6000, %v6001
      %v6003 = vsel %vm2123, %v5383, 0.0
      %v6004 = vadd.f32 %v6002, %v6003
      %v6005 = vsel %vm2123, %v5384, 0.0
      %v6006 = vadd.f32 %v6004, %v6005
      %v6007 = vsel %vm2123, %v5385, 0.0
      %v6008 = vadd.f32 %v6006, %v6007
      %v6009 = vsel %vm2123, %v5386, 0.0
      %v6010 = vadd.f32 %v6008, %v6009
      %v6011 = vsel %vm2123, %v5387, 0.0
      %v6012 = vadd.f32 %v6010, %v6011
      %v6013 = vsel %vm2123, %v5388, 0.0
      %v6014 = vadd.f32 %v6012, %v6013
      %v6015 = vsel %vm2123, %v5389, 0.0
      %v6016 = vadd.f32 %v6014, %v6015
      %v6017 = vsel %vm2123, %v5390, 0.0
      %v6018 = vadd.f32 %v6016, %v6017
      %v6019 = vsel %vm2123, %v5391, 0.0
      %v6020 = vadd.f32 %v6018, %v6019
      %v6021 = vsel %vm2123, %v5392, 0.0
      %v6022 = vadd.f32 %v6020, %v6021
      %v6023 = vsel %vm2123, %v5393, 0.0
      %v6024 = vadd.f32 %v6022, %v6023
      %v6025 = vsel %vm2123, %v5394, 0.0
      %v6026 = vadd.f32 %v6024, %v6025
      %v6027 = vsel %vm2123, %v5395, 0.0
      %v6028 = vadd.f32 %v6026, %v6027
      %v6029 = vsel %vm2123, %v5396, 0.0
      %v6030 = vadd.f32 %v6028, %v6029
      %v6031 = vrot.slane %v6030, 4
      %v6032 = vadd.f32 %v6030, %v6031
      %v6033 = vrot.slane %v6032, 2
      %v6034 = vadd.f32 %v6032, %v6033
      %v6035 = vrot.slane %v6034, 1
      %v6036 = vadd.f32 %v6034, %v6035
      %v6037 = vadd.f32 %v6036, 0.0
      %v6038 = vmul.f32 %v5361, %v5361
      %v6039 = vmul.f32 %v5362, %v5362
      %v6040 = vmul.f32 %v5363, %v5363
      %v6041 = vmul.f32 %v5364, %v5364
      %v6042 = vmul.f32 %v5365, %v5365
      %v6043 = vmul.f32 %v5366, %v5366
      %v6044 = vmul.f32 %v5367, %v5367
      %v6045 = vmul.f32 %v5368, %v5368
      %v6046 = vmul.f32 %v5369, %v5369
      %v6047 = vmul.f32 %v5370, %v5370
      %v6048 = vmul.f32 %v5371, %v5371
      %v6049 = vmul.f32 %v5372, %v5372
      %v6050 = vmul.f32 %v5373, %v5373
      %v6051 = vmul.f32 %v5374, %v5374
      %v6052 = vmul.f32 %v5375, %v5375
      %v6053 = vmul.f32 %v5376, %v5376
      %v6054 = vmul.f32 %v5377, %v5377
      %v6055 = vmul.f32 %v5378, %v5378
      %v6056 = vmul.f32 %v5379, %v5379
      %v6057 = vmul.f32 %v5380, %v5380
      %v6058 = vmul.f32 %v5381, %v5381
      %v6059 = vmul.f32 %v5382, %v5382
      %v6060 = vmul.f32 %v5383, %v5383
      %v6061 = vmul.f32 %v5384, %v5384
      %v6062 = vmul.f32 %v5385, %v5385
      %v6063 = vmul.f32 %v5386, %v5386
      %v6064 = vmul.f32 %v5387, %v5387
      %v6065 = vmul.f32 %v5388, %v5388
      %v6066 = vmul.f32 %v5389, %v5389
      %v6067 = vmul.f32 %v5390, %v5390
      %v6068 = vmul.f32 %v5391, %v5391
      %v6069 = vmul.f32 %v5392, %v5392
      %v6070 = vmul.f32 %v5393, %v5393
      %v6071 = vmul.f32 %v5394, %v5394
      %v6072 = vmul.f32 %v5395, %v5395
      %v6073 = vmul.f32 %v5396, %v5396
      %v6074 = vsel %vm2123, %v6038, 0.0
      %v6075 = vsel %vm2123, %v6039, 0.0
      %v6076 = vadd.f32 %v6074, %v6075
      %v6077 = vsel %vm2123, %v6040, 0.0
      %v6078 = vadd.f32 %v6076, %v6077
      %v6079 = vsel %vm2123, %v6041, 0.0
      %v6080 = vadd.f32 %v6078, %v6079
      %v6081 = vsel %vm2123, %v6042, 0.0
      %v6082 = vadd.f32 %v6080, %v6081
      %v6083 = vsel %vm2123, %v6043, 0.0
      %v6084 = vadd.f32 %v6082, %v6083
      %v6085 = vsel %vm2123, %v6044, 0.0
      %v6086 = vadd.f32 %v6084, %v6085
      %v6087 = vsel %vm2123, %v6045, 0.0
      %v6088 = vadd.f32 %v6086, %v6087
      %v6089 = vsel %vm2123, %v6046, 0.0
      %v6090 = vadd.f32 %v6088, %v6089
      %v6091 = vsel %vm2123, %v6047, 0.0
      %v6092 = vadd.f32 %v6090, %v6091
      %v6093 = vsel %vm2123, %v6048, 0.0
      %v6094 = vadd.f32 %v6092, %v6093
      %v6095 = vsel %vm2123, %v6049, 0.0
      %v6096 = vadd.f32 %v6094, %v6095
      %v6097 = vsel %vm2123, %v6050, 0.0
      %v6098 = vadd.f32 %v6096, %v6097
      %v6099 = vsel %vm2123, %v6051, 0.0
      %v6100 = vadd.f32 %v6098, %v6099
      %v6101 = vsel %vm2123, %v6052, 0.0
      %v6102 = vadd.f32 %v6100, %v6101
      %v6103 = vsel %vm2123, %v6053, 0.0
      %v6104 = vadd.f32 %v6102, %v6103
      %v6105 = vsel %vm2123, %v6054, 0.0
      %v6106 = vadd.f32 %v6104, %v6105
      %v6107 = vsel %vm2123, %v6055, 0.0
      %v6108 = vadd.f32 %v6106, %v6107
      %v6109 = vsel %vm2123, %v6056, 0.0
      %v6110 = vadd.f32 %v6108, %v6109
      %v6111 = vsel %vm2123, %v6057, 0.0
      %v6112 = vadd.f32 %v6110, %v6111
      %v6113 = vsel %vm2123, %v6058, 0.0
      %v6114 = vadd.f32 %v6112, %v6113
      %v6115 = vsel %vm2123, %v6059, 0.0
      %v6116 = vadd.f32 %v6114, %v6115
      %v6117 = vsel %vm2123, %v6060, 0.0
      %v6118 = vadd.f32 %v6116, %v6117
      %v6119 = vsel %vm2123, %v6061, 0.0
      %v6120 = vadd.f32 %v6118, %v6119
      %v6121 = vsel %vm2123, %v6062, 0.0
      %v6122 = vadd.f32 %v6120, %v6121
      %v6123 = vsel %vm2123, %v6063, 0.0
      %v6124 = vadd.f32 %v6122, %v6123
      %v6125 = vsel %vm2123, %v6064, 0.0
      %v6126 = vadd.f32 %v6124, %v6125
      %v6127 = vsel %vm2123, %v6065, 0.0
      %v6128 = vadd.f32 %v6126, %v6127
      %v6129 = vsel %vm2123, %v6066, 0.0
      %v6130 = vadd.f32 %v6128, %v6129
      %v6131 = vsel %vm2123, %v6067, 0.0
      %v6132 = vadd.f32 %v6130, %v6131
      %v6133 = vsel %vm2123, %v6068, 0.0
      %v6134 = vadd.f32 %v6132, %v6133
      %v6135 = vsel %vm2123, %v6069, 0.0
      %v6136 = vadd.f32 %v6134, %v6135
      %v6137 = vsel %vm2123, %v6070, 0.0
      %v6138 = vadd.f32 %v6136, %v6137
      %v6139 = vsel %vm2123, %v6071, 0.0
      %v6140 = vadd.f32 %v6138, %v6139
      %v6141 = vsel %vm2123, %v6072, 0.0
      %v6142 = vadd.f32 %v6140, %v6141
      %v6143 = vsel %vm2123, %v6073, 0.0
      %v6144 = vadd.f32 %v6142, %v6143
      %v6145 = vrot.slane %v6144, 4
      %v6146 = vadd.f32 %v6144, %v6145
      %v6147 = vrot.slane %v6146, 2
      %v6148 = vadd.f32 %v6146, %v6147
      %v6149 = vrot.slane %v6148, 1
      %v6150 = vadd.f32 %v6148, %v6149
      %v6151 = vadd.f32 %v6150, 0.0
      %vm6152 = vcmask 57344
      %6153 = vst.msk [vmem:[%s265] sm:$0x1] %vm6152, %v6037
      %6154 = vst.msk [vmem:[%s268] sm:$0x1] %vm6152, %v6151
      %p6155 = scmp.lt.s32.totalorder %s18, 1
      %s6156 = scalar_select %p6155, %s18, 1
      %s6157 = smul.addr %s6156, 41
      %s6158 = smul.addr %s6157, 4
      %s6159 = scalar_lea.vmem %s4, %s6158
      %p6160 = scmp.lt.s32.totalorder %s18, 1
      %s6161 = scalar_select %p6160, %s18, 1
      %s6162 = scalar_lea.vmem %s5, %s6161
      %p6163 = scmp.lt.s32.totalorder %s18, 1
      %s6164 = scalar_select %p6163, %s18, 1
      %s6165 = scalar_lea.vmem %s6, %s6164
      // Predicated region
      $region37: #{conv3x3_forward.4} parent=35 // pred_check
        %p6166 = pneg %p125
      $region38: #{conv3x3_forward.4} parent=35 // pred_check_branch
        %6168 = sbr.rel (%p6166) target = $region40
      $region39: #{conv3x3_forward.4} parent=35 // pred_region
        _
      $region40: #{conv3x3_forward.4} parent=35 // pred_fallthru
        _
      // Predicated region
      $region41: #{conv3x3_forward.4} parent=35 // pred_check
        %p6169 = pneg %p151
      $region42: #{conv3x3_forward.4} parent=35 // pred_check_branch
        %6171 = sbr.rel (%p6169) target = $region44
      $region43: #{conv3x3_forward.4} parent=35 // pred_region
        _
      $region44: #{conv3x3_forward.4} parent=35 // pred_fallthru
        _
      // Predicated region
      $region45: #{conv3x3_forward.4} parent=35 // pred_check
        %p6172 = pneg %p177
      $region46: #{conv3x3_forward.4} parent=35 // pred_check_branch
        %6174 = sbr.rel (%p6172) target = $region48
      $region47: #{conv3x3_forward.4} parent=35 // pred_region
        _
      $region48: #{conv3x3_forward.4} parent=35 // pred_fallthru
        _
    $region36: #{conv3x3_forward.4} parent=5 // pred_fallthru
      _
    %p6175 = scmp.le.s32.totalorder 2, %s13
    // Predicated region
    $region49: #{conv3x3_forward.4} parent=5 // pred_check
      %p6176 = pneg %p6175
    $region50: #{conv3x3_forward.4} parent=5 // pred_check_branch
      %6178 = sbr.rel (%p6176) target = $region52
    $region51: #{conv3x3_forward.4} parent=5 // pred_region
      %s6179 = ssub.s32 %s13, 2
      // Predicated region
      $region53: #{conv3x3_forward.4} parent=51 // pred_check
        %p6180 = pneg %p131
      $region54: #{conv3x3_forward.4} parent=51 // pred_check_branch
        %6182 = sbr.rel (%p6180) target = $region56
      $region55: #{conv3x3_forward.4} parent=51 // pred_region
        %p6183 = scmp.lt.s32.totalorder %s19, 1
        %s6184 = scalar_select %p6183, %s19, 1
        %s6185 = smul.addr %s6184, 41
        %s6186 = smul.addr %s6185, 4
        %s6187 = scalar_lea.vmem %s4, %s6186
      $region56: #{conv3x3_forward.4} parent=51 // pred_fallthru
        _
      // Predicated region
      $region57: #{conv3x3_forward.4} parent=51 // pred_check
        %p6188 = pneg %p157
      $region58: #{conv3x3_forward.4} parent=51 // pred_check_branch
        %6190 = sbr.rel (%p6188) target = $region60
      $region59: #{conv3x3_forward.4} parent=51 // pred_region
        %p6191 = scmp.lt.s32.totalorder %s19, 1
        %s6192 = scalar_select %p6191, %s19, 1
        %s6193 = scalar_lea.vmem %s5, %s6192
      $region60: #{conv3x3_forward.4} parent=51 // pred_fallthru
        _
      // Predicated region
      $region61: #{conv3x3_forward.4} parent=51 // pred_check
        %p6194 = pneg %p183
      $region62: #{conv3x3_forward.4} parent=51 // pred_check_branch
        %6196 = sbr.rel (%p6194) target = $region64
      $region63: #{conv3x3_forward.4} parent=51 // pred_region
        %p6197 = scmp.lt.s32.totalorder %s19, 1
        %s6198 = scalar_select %p6197, %s19, 1
        %s6199 = scalar_lea.vmem %s6, %s6198
      $region64: #{conv3x3_forward.4} parent=51 // pred_fallthru
        _
    $region52: #{conv3x3_forward.4} parent=5 // pred_fallthru
      _
  $region6: #{conv3x3_forward.4} parent=0 // loop_footer
    %s17 = sadd.s32 1, %s13
  $region7: #{conv3x3_forward.4} parent=0 // loop_footer_branch
    %12 = sbr.rel target = $region3
  $region8: #{conv3x3_forward.4} parent=0 // loop_exit
    _

</llo_original>
